<compile_context>
chip_gen: v5e
topology: v5e:2x2
jax: 0.10.0
libtpu: 0.0.40
codegen_flags: <defaults>
</compile_context>

<pallas_src>
import math

import jax
import jax.numpy as jnp
from jax.experimental import pallas as pl
from jax.experimental.pallas import tpu as pltpu


_LANE = 128      # TPU vreg lane width
_ROW0 = 8        # sublane-aligned row at which the activation is staged in scratch


def _round_up(x, m):
    return ((x + m - 1) // m) * m


def _pad_lane(n):
    return _round_up(max(n, 1), _LANE)


# ----------------------------------------------------------------------------
# Segment kernel: all layers of a segment for one batch element, activations
# resident in VMEM/vregs, one MXU matmul per layer.
# ----------------------------------------------------------------------------
def _make_segment_kernel(layer_meta, t_rows, max_pad, emit_sigmoid):
    """layer_meta: tuple of (kind, k, dil, cin_pad) per layer."""
    n = len(layer_meta)
    n_out = 2 if emit_sigmoid else 1
    r0 = _ROW0

    def kernel(*refs):
        x_ref = refs[0]
        wrefs = refs[1:1 + 2 * n]
        out_refs = refs[1 + 2 * n:1 + 2 * n + n_out]
        scratch = refs[1 + 2 * n + n_out]

        # Zero only the conv halo rows (interior rows are overwritten each
        # layer; halo rows are never written).  Done every grid step because
        # the batch axis is "parallel" => per-core scratch, so a
        # pl.when(program_id==0) init would miss cores that never see b==0.
        if max_pad > 0:
            zeros = jnp.zeros((max_pad, scratch.shape[1]), scratch.dtype)
            scratch[r0 - max_pad:r0, :] = zeros
            scratch[r0 + t_rows:r0 + t_rows + max_pad, :] = zeros

        h = x_ref[...].astype(jnp.float32)            # (T, Cin0_pad)

        for li, (kind, k, dil, cin) in enumerate(layer_meta):
            w_ref = wrefs[2 * li]                     # (k*cin, Nout) bf16
            b_ref = wrefs[2 * li + 1]                 # (1, Nout)     f32

            if k == 1:
                lhs = h.astype(jnp.bfloat16)
            else:
                pad = (k - 1) // 2 * dil
                # stage the activation once; taps are shifted sublane reads,
                # concatenated at 128-lane boundaries (register placement only)
                scratch[r0:r0 + t_rows, 0:cin] = h
                taps = [
                    scratch[r0 - pad + j * dil:r0 - pad + j * dil + t_rows, 0:cin]
                    for j in range(k)
                ]
                lhs = jnp.concatenate(taps, axis=1).astype(jnp.bfloat16)

            acc = jnp.dot(lhs, w_ref[...],
                          preferred_element_type=jnp.float32) + b_ref[...]

            if kind == "hc":
                g = jax.nn.sigmoid(acc[:, :cin])      # gate (EUP, f32)
                h = h + g * (acc[:, cin:] - h)        # fused highway mix
            else:                                     # conv / folded deconv
                h = acc

        out_refs[0][...] = h.astype(out_refs[0].dtype)
        if emit_sigmoid:                              # final Z = sigmoid(Z_logit)
            out_refs[1][...] = jax.nn.sigmoid(h).astype(out_refs[1].dtype)

    return kernel


# ----------------------------------------------------------------------------
# Segment runner: one pallas_call per run of layers (grid over batch)
# ----------------------------------------------------------------------------
def _run_segment(x, seg, emit_sigmoid):
    """x: (B, T, Cin0_pad).  seg: list of pre-packed layer dicts."""
    B, t_rows, cin0 = x.shape
    assert cin0 == seg[0]["cin_p"]

    layer_meta = tuple((p["kind"], p["k"], p["dil"], p["cin_p"]) for p in seg)

    max_pad = 0
    max_cin = _LANE
    for p in seg:
        if p["k"] > 1:
            max_pad = max(max_pad, (p["k"] - 1) // 2 * p["dil"])
            max_cin = max(max_cin, p["cin_p"])
    assert max_pad <= _ROW0, "conv halo exceeds staging row offset"

    cout = seg[-1]["act_out_p"]
    scratch_rows = _round_up(_ROW0 + t_rows + max_pad, 8)
    scratch_cols = max_cin                      # already a multiple of 128

    in_specs = [pl.BlockSpec((None, t_rows, cin0), lambda b: (b, 0, 0))]
    args = []
    for p in seg:
        for arr in (p["W"], p["b"]):
            args.append(arr)
            # constant index_map => the weight DMA is issued once across the grid
            in_specs.append(
                pl.BlockSpec(arr.shape, lambda b, _nd=arr.ndim: (0,) * _nd))

    if emit_sigmoid:
        out_shape = (jax.ShapeDtypeStruct((B, t_rows, cout), jnp.float32),
                     jax.ShapeDtypeStruct((B, t_rows, cout), jnp.float32))
        out_specs = (pl.BlockSpec((None, t_rows, cout), lambda b: (b, 0, 0)),
                     pl.BlockSpec((None, t_rows, cout), lambda b: (b, 0, 0)))
    else:
        out_shape = jax.ShapeDtypeStruct((B, t_rows, cout), jnp.bfloat16)
        out_specs = pl.BlockSpec((None, t_rows, cout), lambda b: (b, 0, 0))

    return pl.pallas_call(
        _make_segment_kernel(layer_meta, t_rows, max_pad, emit_sigmoid),
        out_shape=out_shape,
        grid=(B,),
        in_specs=in_specs,
        out_specs=out_specs,
        scratch_shapes=[pltpu.VMEM((scratch_rows, scratch_cols), jnp.float32)],
        compiler_params=pltpu.CompilerParams(
            dimension_semantics=("parallel",),      # v7x: batch across 2 TCs
            vmem_limit_bytes=64 * 1024 * 1024),
    )(x, *args)


# ----------------------------------------------------------------------------
# SSRN parameters: PyTorch-layout synthetic init + one-time pre-packing
# ----------------------------------------------------------------------------
def ssrn_layer_defs(c, f, f_prime):
    # mirrors nn.Sequential in SSRN.__init__ (BasicBlock == highway)
    return [
        ("conv",   f,       c,       1, 1),
        ("hc",     c,       c,       3, 1),
        ("hc",     c,       c,       3, 3),
        ("deconv", c,       c,       2, 1),
        ("hc",     c,       c,       3, 1),
        ("hc",     c,       c,       3, 3),
        ("deconv", c,       c,       2, 1),
        ("hc",     c,       c,       3, 1),
        ("hc",     c,       c,       3, 3),
        ("conv",   c,       2 * c,   1, 1),
        ("hc",     2 * c,   2 * c,   3, 1),
        ("hc",     2 * c,   2 * c,   3, 1),
        ("conv",   2 * c,   f_prime, 1, 1),
        ("hc",     f_prime, f_prime, 1, 1),
        ("conv",   f_prime, f_prime, 1, 1),
    ]


def init_ssrn_params(key, c, f, f_prime):
    """Synthetic weights in native PyTorch Conv1d / ConvTranspose1d layouts."""
    params = []
    for (kind, cin, cout, k, dil) in ssrn_layer_defs(c, f, f_prime):
        key, kw, kb = jax.random.split(key, 3)
        if kind == "conv":
            scale = 1.0 / math.sqrt(cin * k)
            W = scale * jax.random.normal(kw, (cout, cin, k), jnp.float32)
            b = 0.01 * jax.random.normal(kb, (cout,), jnp.float32)
        elif kind == "hc":
            d = cin  # cin == cout for highway blocks
            scale = 1.0 / math.sqrt(d * k)
            W = scale * jax.random.normal(kw, (2 * d, d, k), jnp.float32)
            b = 0.01 * jax.random.normal(kb, (2 * d,), jnp.float32)
        else:  # deconv: ConvTranspose1d weight layout (Cin, Cout, k=2)
            scale = 1.0 / math.sqrt(cin * k)
            W = scale * jax.random.normal(kw, (cin, cout, k), jnp.float32)
            b = 0.01 * jax.random.normal(kb, (cout,), jnp.float32)
        params.append((kind, {"W": W, "b": b, "k": k, "dilation": dil}))
    return params


def prepack_params(params):
    """One-time packing: taps stacked along K, highway gates concatenated along
    N, all channel dims zero-padded to lane multiples (128), matmul operands
    pre-cast to bf16 (biases stay f32)."""
    packed = []
    for kind, p in params:
        W, b, k, dil = p["W"], p["b"], p["k"], p["dilation"]
        if kind == "conv":
            cout, cin, kk = W.shape
            cin_p, cout_p = _pad_lane(cin), _pad_lane(cout)
            Wt = jnp.transpose(W, (2, 1, 0))                        # (k,Cin,Cout)
            Wt = jnp.pad(Wt, ((0, 0), (0, cin_p - cin), (0, cout_p - cout)))
            Wp = Wt.reshape(kk * cin_p, cout_p).astype(jnp.bfloat16)
            bp = jnp.pad(b, (0, cout_p - cout)).reshape(1, cout_p).astype(jnp.float32)
            packed.append(dict(kind="conv", k=kk, dil=dil, cin_p=cin_p,
                               act_out_p=cout_p, cout_real=cout, W=Wp, b=bp))
        elif kind == "hc":
            C = W.shape[1]
            cp = _pad_lane(C)
            W1 = jnp.transpose(W[:C], (2, 1, 0))                    # H1 (k,Cin,Cout)
            W2 = jnp.transpose(W[C:], (2, 1, 0))                    # H2
            W1 = jnp.pad(W1, ((0, 0), (0, cp - C), (0, cp - C)))
            W2 = jnp.pad(W2, ((0, 0), (0, cp - C), (0, cp - C)))
            Wp = jnp.concatenate([W1, W2], axis=2)                  # (k,cp,2cp)
            Wp = Wp.reshape(k * cp, 2 * cp).astype(jnp.bfloat16)
            b1 = jnp.pad(b[:C], (0, cp - C))
            b2 = jnp.pad(b[C:], (0, cp - C))
            bp = jnp.concatenate([b1, b2]).reshape(1, 2 * cp).astype(jnp.float32)
            packed.append(dict(kind="hc", k=k, dil=dil, cin_p=cp,
                               act_out_p=cp, cout_real=C, W=Wp, b=bp))
        else:  # deconv(k=2, stride=2) folded into a 1x1 matmul, (tap,ch) columns
            cin, cout, kk = W.shape
            cin_p, cout_p = _pad_lane(cin), _pad_lane(cout)
            Wt = jnp.transpose(W, (0, 2, 1))                        # (Cin,k,Cout)
            Wt = jnp.pad(Wt, ((0, cin_p - cin), (0, 0), (0, cout_p - cout)))
            Wp = Wt.reshape(cin_p, kk * cout_p).astype(jnp.bfloat16)
            bp = jnp.tile(jnp.pad(b, (0, cout_p - cout)), kk)
            bp = bp.reshape(1, kk * cout_p).astype(jnp.float32)
            packed.append(dict(kind="conv", k=1, dil=1, cin_p=cin_p,
                               act_out_p=kk * cout_p, cout_real=cout,
                               is_deconv=True, deconv_cout_p=cout_p, W=Wp, b=bp))
    return packed


# ----------------------------------------------------------------------------
# Forward: 3 fused Pallas segments (split at the two stride-2 deconvs)
# ----------------------------------------------------------------------------
def ssrn_forward(x_bft, packed):
    """x: (B, f, T)  ->  (Z_logit, Z) each (B, f_prime, 4*T)."""
    B, f, T = x_bft.shape
    f_pad = packed[0]["cin_p"]
    h = jnp.transpose(x_bft, (0, 2, 1)).astype(jnp.float32)   # channels-last
    if f_pad > f:
        h = jnp.pad(h, ((0, 0), (0, 0), (0, f_pad - f)))

    # segment boundaries: each segment ends at a deconv; last segment ends the net
    seg_bounds, start = [], 0
    for i, p in enumerate(packed):
        if p.get("is_deconv", False):
            seg_bounds.append((start, i + 1))
            start = i + 1
    seg_bounds.append((start, len(packed)))

    out = None
    for si, (lo, hi) in enumerate(seg_bounds):
        seg = packed[lo:hi]
        last = si == len(seg_bounds) - 1
        out = _run_segment(h, seg, emit_sigmoid=last)
        if not last:
            # stride-2 deconv interleave: (B,T,2*C) -> (B,2T,C).  Row-major
            # reshape == bitcast in XLA (no data movement).
            cp = seg[-1]["deconv_cout_p"]
            Bc, Tc, _ = out.shape
            h = out.reshape(Bc, 2 * Tc, cp)

    z_logit_p, z_p = out                                 # (B, 4T, f'_pad) f32
    f_prime = packed[-1]["cout_real"]
    # drop channel padding + return to NCW in one fused XLA copy
    Z_logit = jnp.transpose(z_logit_p[:, :, :f_prime], (0, 2, 1))
    Z = jnp.transpose(z_p[:, :, :f_prime], (0, 2, 1))
    return Z_logit, Z


# ----------------------------------------------------------------------------
# Pure-JAX/XLA reference (independent math, original PyTorch-layout weights)
# ----------------------------------------------------------------------------
def _ref_conv1d_same(x, W, b, dil):
    # x: (B,T,Cin) f32, W: (Cout,Cin,k) torch layout
    k = W.shape[-1]
    pad = (k - 1) // 2 * dil
    rhs = jnp.transpose(W, (2, 1, 0))                    # (k, Cin, Cout) == HIO
    y = jax.lax.conv_general_dilated(
        x, rhs, window_strides=(1,), padding=[(pad, pad)],
        rhs_dilation=(dil,), dimension_numbers=("NHC", "HIO", "NHC"))
    return y + b


def ssrn_reference(x_bft, params):
    h = jnp.transpose(x_bft, (0, 2, 1)).astype(jnp.float32)
    for kind, p in params:
        W, b, dil = p["W"], p["b"], p["dilation"]
        if kind == "conv":
            h = _ref_conv1d_same(h, W, b, dil)
        elif kind == "hc":
            C = W.shape[1]
            hh = _ref_conv1d_same(h, W, b, dil)
            g = jax.nn.sigmoid(hh[..., :C])
            h = g * hh[..., C:] + (1.0 - g) * h
        else:  # ConvTranspose1d(k=2, stride=2): out[:, 2t+j] = x[:, t] @ W[:, :, j]
            Bc, Tc, _ = h.shape
            y = jnp.einsum("btc,cok->btko", h, W)        # (B,T,k,Cout)
            h = y.reshape(Bc, Tc * W.shape[-1], W.shape[1]) + b
    Z_logit = jnp.transpose(h, (0, 2, 1))
    return Z_logit, jax.nn.sigmoid(Z_logit)


# ----------------------------------------------------------------------------
if __name__ == "__main__":
    # small synthetic hyper-params: c (SSRN dim) = 32, n_mels f = 16,
    # f_prime = 1 + n_fft//2 with n_fft = 64  ->  33
    B, f, T = 2, 16, 8
    c, f_prime = 32, 1 + 64 // 2

    key = jax.random.PRNGKey(0)
    key, kx = jax.random.split(key)
    x = jax.random.uniform(kx, (B, f, T), jnp.float32)   # predicted mel spectrogram

    params = init_ssrn_params(key, c, f, f_prime)
    packed = prepack_params(params)                      # one-time prepacking

    fwd = jax.jit(lambda inp: ssrn_forward(inp, packed))
    Z_logit, Z = fwd(x)
    jax.block_until_ready((Z_logit, Z))

    assert Z_logit.shape == (B, f_prime, 4 * T), Z_logit.shape
    assert Z.shape == (B, f_prime, 4 * T), Z.shape
    assert bool(jnp.all(jnp.isfinite(Z_logit)))
    assert bool(jnp.all((Z >= 0.0) & (Z <= 1.0)))

    # correctness vs an independent XLA reference (loose tol: bf16 MXU kernel
    # vs default-precision XLA conv over 15 layers)
    Zl_ref, _ = ssrn_reference(x, params)
    err = float(jnp.max(jnp.abs(Z_logit - Zl_ref)))
    assert err < 0.25, f"max |Z_logit - ref| = {err}"

    print("KERNEL_OK")
</pallas_src>

<mosaic_0001>
module attributes {stable_mosaic.version = 11 : i64} {
  func.func @kernel(%arg0: i32, %arg1: memref<1x16x128xbf16, #tpu.memory_space<vmem>>, %arg2: memref<384x256xbf16, #tpu.memory_space<vmem>>, %arg3: memref<1x256xf32, #tpu.memory_space<vmem>>, %arg4: memref<384x256xbf16, #tpu.memory_space<vmem>>, %arg5: memref<1x256xf32, #tpu.memory_space<vmem>>, %arg6: memref<128x256xbf16, #tpu.memory_space<vmem>>, %arg7: memref<1x256xf32, #tpu.memory_space<vmem>>, %arg8: memref<1x16x256xbf16, #tpu.memory_space<vmem>>, %arg9: memref<32x128xf32, #tpu.memory_space<vmem>>) attributes {dimension_semantics = [#tpu.dimension_semantics<parallel>], iteration_bounds = array<i64: 2>, scalar_prefetch = 0 : i64, scratch_operands = 1 : i64, tpu.core_type = #tpu.core_type<tc>, window_params = [{transform_indices = @transform_0, window_bounds = array<i64: 1, 16, 128>}, {pipeline_mode = #tpu.pipeline_mode<synchronous>, transform_indices = @transform_1, window_bounds = array<i64: 384, 256>}, {pipeline_mode = #tpu.pipeline_mode<synchronous>, transform_indices = @transform_2, window_bounds = array<i64: 1, 256>}, {pipeline_mode = #tpu.pipeline_mode<synchronous>, transform_indices = @transform_3, window_bounds = array<i64: 384, 256>}, {pipeline_mode = #tpu.pipeline_mode<synchronous>, transform_indices = @transform_4, window_bounds = array<i64: 1, 256>}, {pipeline_mode = #tpu.pipeline_mode<synchronous>, transform_indices = @transform_5, window_bounds = array<i64: 128, 256>}, {pipeline_mode = #tpu.pipeline_mode<synchronous>, transform_indices = @transform_6, window_bounds = array<i64: 1, 256>}, {transform_indices = @transform_7, window_bounds = array<i64: 1, 16, 256>}]} {
    %cst = arith.constant 0.000000e+00 : f32
    %0 = vector.broadcast %cst : f32 to vector<3x128xf32>
    %c5 = arith.constant 5 : index
    %c0 = arith.constant 0 : index
    %1 = vector.load %arg9[%c5, %c0] : memref<32x128xf32, #tpu.memory_space<vmem>>, vector<3x128xf32>
    tpu.vector_store %arg9[%c5, %c0], %0 {strides = array<i32>} : memref<32x128xf32, #tpu.memory_space<vmem>>, vector<3x128xf32>,
    %c24 = arith.constant 24 : index
    %c0_0 = arith.constant 0 : index
    %2 = vector.load %arg9[%c24, %c0_0] : memref<32x128xf32, #tpu.memory_space<vmem>>, vector<3x128xf32>
    tpu.vector_store %arg9[%c24, %c0_0], %0 {strides = array<i32>} : memref<32x128xf32, #tpu.memory_space<vmem>>, vector<3x128xf32>,
    %c0_1 = arith.constant 0 : index
    %c0_2 = arith.constant 0 : index
    %c0_3 = arith.constant 0 : index
    %3 = vector.load %arg1[%c0_1, %c0_2, %c0_3] : memref<1x16x128xbf16, #tpu.memory_space<vmem>>, vector<1x16x128xbf16>
    %4 = vector.shape_cast %3 : vector<1x16x128xbf16> to vector<16x128xbf16>
    %5 = arith.extf %4 : vector<16x128xbf16> to vector<16x128xf32>
    %c8 = arith.constant 8 : index
    %c0_4 = arith.constant 0 : index
    %6 = vector.load %arg9[%c8, %c0_4] : memref<32x128xf32, #tpu.memory_space<vmem>>, vector<16x128xf32>
    tpu.vector_store %arg9[%c8, %c0_4], %5 {strides = array<i32>} : memref<32x128xf32, #tpu.memory_space<vmem>>, vector<16x128xf32>,
    %c7 = arith.constant 7 : index
    %c0_5 = arith.constant 0 : index
    %7 = vector.load %arg9[%c7, %c0_5] : memref<32x128xf32, #tpu.memory_space<vmem>>, vector<16x128xf32>
    %c8_6 = arith.constant 8 : index
    %c0_7 = arith.constant 0 : index
    %8 = vector.load %arg9[%c8_6, %c0_7] : memref<32x128xf32, #tpu.memory_space<vmem>>, vector<16x128xf32>
    %c9 = arith.constant 9 : index
    %c0_8 = arith.constant 0 : index
    %9 = vector.load %arg9[%c9, %c0_8] : memref<32x128xf32, #tpu.memory_space<vmem>>, vector<16x128xf32>
    %10 = tpu.concatenate %7, %8, %9 in 1 : vector<16x128xf32>, vector<16x128xf32>, vector<16x128xf32> -> vector<16x384xf32>
    %11 = arith.truncf %10 : vector<16x384xf32> to vector<16x384xbf16>
    %c0_9 = arith.constant 0 : index
    %c0_10 = arith.constant 0 : index
    %12 = vector.load %arg2[%c0_9, %c0_10] : memref<384x256xbf16, #tpu.memory_space<vmem>>, vector<384x256xbf16>
    %cst_11 = arith.constant dense<0.000000e+00> : vector<16x256xf32>
    %13 = tpu.matmul %11, %12, %cst_11 {dimension_numbers = #tpu.dot_dimension_numbers<[1], [0], [0], [1], [0, 0, 1, 1], [], []>} : vector<16x384xbf16>, vector<384x256xbf16>, vector<16x256xf32> -> vector<16x256xf32>
    %c0_12 = arith.constant 0 : index
    %c0_13 = arith.constant 0 : index
    %14 = vector.load %arg3[%c0_12, %c0_13] : memref<1x256xf32, #tpu.memory_space<vmem>>, vector<1x256xf32>
    %15 = vector.broadcast %14 : vector<1x256xf32> to vector<16x256xf32>
    %16 = arith.addf %13, %15 : vector<16x256xf32>
    %17 = vector.extract_strided_slice %16 {offsets = [0, 0], sizes = [16, 128], strides = [1, 1]} : vector<16x256xf32> to vector<16x128xf32>
    %18 = arith.negf %17 : vector<16x128xf32>
    %19 = math.exp %18 : vector<16x128xf32>
    %cst_14 = arith.constant 1.000000e+00 : f32
    %20 = vector.broadcast %cst_14 : f32 to vector<16x128xf32>
    %21 = arith.addf %20, %19 : vector<16x128xf32>
    %22 = arith.divf %20, %21 : vector<16x128xf32>
    %23 = vector.extract_strided_slice %16 {offsets = [0, 128], sizes = [16, 128], strides = [1, 1]} : vector<16x256xf32> to vector<16x128xf32>
    %24 = arith.subf %23, %5 : vector<16x128xf32>
    %25 = arith.mulf %22, %24 : vector<16x128xf32>
    %26 = arith.addf %5, %25 : vector<16x128xf32>
    %c8_15 = arith.constant 8 : index
    %c0_16 = arith.constant 0 : index
    %27 = vector.load %arg9[%c8_15, %c0_16] : memref<32x128xf32, #tpu.memory_space<vmem>>, vector<16x128xf32>
    tpu.vector_store %arg9[%c8_15, %c0_16], %26 {strides = array<i32>} : memref<32x128xf32, #tpu.memory_space<vmem>>, vector<16x128xf32>,
    %c5_17 = arith.constant 5 : index
    %c0_18 = arith.constant 0 : index
    %28 = vector.load %arg9[%c5_17, %c0_18] : memref<32x128xf32, #tpu.memory_space<vmem>>, vector<16x128xf32>
    %c8_19 = arith.constant 8 : index
    %c0_20 = arith.constant 0 : index
    %29 = vector.load %arg9[%c8_19, %c0_20] : memref<32x128xf32, #tpu.memory_space<vmem>>, vector<16x128xf32>
    %c11 = arith.constant 11 : index
    %c0_21 = arith.constant 0 : index
    %30 = vector.load %arg9[%c11, %c0_21] : memref<32x128xf32, #tpu.memory_space<vmem>>, vector<16x128xf32>
    %31 = tpu.concatenate %28, %29, %30 in 1 : vector<16x128xf32>, vector<16x128xf32>, vector<16x128xf32> -> vector<16x384xf32>
    %32 = arith.truncf %31 : vector<16x384xf32> to vector<16x384xbf16>
    %c0_22 = arith.constant 0 : index
    %c0_23 = arith.constant 0 : index
    %33 = vector.load %arg4[%c0_22, %c0_23] : memref<384x256xbf16, #tpu.memory_space<vmem>>, vector<384x256xbf16>
    %cst_24 = arith.constant dense<0.000000e+00> : vector<16x256xf32>
    %34 = tpu.matmul %32, %33, %cst_24 {dimension_numbers = #tpu.dot_dimension_numbers<[1], [0], [0], [1], [0, 0, 1, 1], [], []>} : vector<16x384xbf16>, vector<384x256xbf16>, vector<16x256xf32> -> vector<16x256xf32>
    %c0_25 = arith.constant 0 : index
    %c0_26 = arith.constant 0 : index
    %35 = vector.load %arg5[%c0_25, %c0_26] : memref<1x256xf32, #tpu.memory_space<vmem>>, vector<1x256xf32>
    %36 = vector.broadcast %35 : vector<1x256xf32> to vector<16x256xf32>
    %37 = arith.addf %34, %36 : vector<16x256xf32>
    %38 = vector.extract_strided_slice %37 {offsets = [0, 0], sizes = [16, 128], strides = [1, 1]} : vector<16x256xf32> to vector<16x128xf32>
    %39 = arith.negf %38 : vector<16x128xf32>
    %40 = math.exp %39 : vector<16x128xf32>
    %cst_27 = arith.constant 1.000000e+00 : f32
    %41 = vector.broadcast %cst_27 : f32 to vector<16x128xf32>
    %42 = arith.addf %41, %40 : vector<16x128xf32>
    %43 = arith.divf %41, %42 : vector<16x128xf32>
    %44 = vector.extract_strided_slice %37 {offsets = [0, 128], sizes = [16, 128], strides = [1, 1]} : vector<16x256xf32> to vector<16x128xf32>
    %45 = arith.subf %44, %26 : vector<16x128xf32>
    %46 = arith.mulf %43, %45 : vector<16x128xf32>
    %47 = arith.addf %26, %46 : vector<16x128xf32>
    %48 = arith.truncf %47 : vector<16x128xf32> to vector<16x128xbf16>
    %c0_28 = arith.constant 0 : index
    %c0_29 = arith.constant 0 : index
    %49 = vector.load %arg6[%c0_28, %c0_29] : memref<128x256xbf16, #tpu.memory_space<vmem>>, vector<128x256xbf16>
    %cst_30 = arith.constant dense<0.000000e+00> : vector<16x256xf32>
    %50 = tpu.matmul %48, %49, %cst_30 {dimension_numbers = #tpu.dot_dimension_numbers<[1], [0], [0], [1], [0, 0, 1, 1], [], []>} : vector<16x128xbf16>, vector<128x256xbf16>, vector<16x256xf32> -> vector<16x256xf32>
    %c0_31 = arith.constant 0 : index
    %c0_32 = arith.constant 0 : index
    %51 = vector.load %arg7[%c0_31, %c0_32] : memref<1x256xf32, #tpu.memory_space<vmem>>, vector<1x256xf32>
    %52 = vector.broadcast %51 : vector<1x256xf32> to vector<16x256xf32>
    %53 = arith.addf %50, %52 : vector<16x256xf32>
    %54 = arith.truncf %53 : vector<16x256xf32> to vector<16x256xbf16>
    %c0_33 = arith.constant 0 : index
    %c0_34 = arith.constant 0 : index
    %c0_35 = arith.constant 0 : index
    %55 = vector.load %arg8[%c0_33, %c0_34, %c0_35] : memref<1x16x256xbf16, #tpu.memory_space<vmem>>, vector<1x16x256xbf16>
    %56 = vector.shape_cast %55 : vector<1x16x256xbf16> to vector<16x256xbf16>
    %57 = vector.shape_cast %54 : vector<16x256xbf16> to vector<1x16x256xbf16>
    tpu.vector_store %arg8[%c0_33, %c0_34, %c0_35], %57 {strides = array<i32>} : memref<1x16x256xbf16, #tpu.memory_space<vmem>>, vector<1x16x256xbf16>,
    return
  }
  func.func @transform_0(%arg0: i32) -> (i32, i32, i32) {
    %c0_i32 = arith.constant 0 : i32
    %c0_i32_0 = arith.constant 0 : i32
    %c0_i32_1 = arith.constant 0 : i32
    return %arg0, %c0_i32, %c0_i32_0 : i32, i32, i32
  }
  func.func @transform_1(%arg0: i32) -> (i32, i32) {
    %c0_i32 = arith.constant 0 : i32
    %c0_i32_0 = arith.constant 0 : i32
    %c0_i32_1 = arith.constant 0 : i32
    return %c0_i32, %c0_i32_0 : i32, i32
  }
  func.func @transform_2(%arg0: i32) -> (i32, i32) {
    %c0_i32 = arith.constant 0 : i32
    %c0_i32_0 = arith.constant 0 : i32
    %c0_i32_1 = arith.constant 0 : i32
    return %c0_i32, %c0_i32_0 : i32, i32
  }
  func.func @transform_3(%arg0: i32) -> (i32, i32) {
    %c0_i32 = arith.constant 0 : i32
    %c0_i32_0 = arith.constant 0 : i32
    %c0_i32_1 = arith.constant 0 : i32
    return %c0_i32, %c0_i32_0 : i32, i32
  }
  func.func @transform_4(%arg0: i32) -> (i32, i32) {
    %c0_i32 = arith.constant 0 : i32
    %c0_i32_0 = arith.constant 0 : i32
    %c0_i32_1 = arith.constant 0 : i32
    return %c0_i32, %c0_i32_0 : i32, i32
  }
  func.func @transform_5(%arg0: i32) -> (i32, i32) {
    %c0_i32 = arith.constant 0 : i32
    %c0_i32_0 = arith.constant 0 : i32
    %c0_i32_1 = arith.constant 0 : i32
    return %c0_i32, %c0_i32_0 : i32, i32
  }
  func.func @transform_6(%arg0: i32) -> (i32, i32) {
    %c0_i32 = arith.constant 0 : i32
    %c0_i32_0 = arith.constant 0 : i32
    %c0_i32_1 = arith.constant 0 : i32
    return %c0_i32, %c0_i32_0 : i32, i32
  }
  func.func @transform_7(%arg0: i32) -> (i32, i32, i32) {
    %c0_i32 = arith.constant 0 : i32
    %c0_i32_0 = arith.constant 0 : i32
    %c0_i32_1 = arith.constant 0 : i32
    return %arg0, %c0_i32, %c0_i32_0 : i32, i32, i32
  }
}

module attributes {stable_mosaic.version = 11 : i64} {
  func.func @kernel(%arg0: i32, %arg1: memref<1x8x128xf32, #tpu.memory_space<vmem>>, %arg2: memref<128x128xbf16, #tpu.memory_space<vmem>>, %arg3: memref<1x128xf32, #tpu.memory_space<vmem>>, %arg4: memref<384x256xbf16, #tpu.memory_space<vmem>>, %arg5: memref<1x256xf32, #tpu.memory_space<vmem>>, %arg6: memref<384x256xbf16, #tpu.memory_space<vmem>>, %arg7: memref<1x256xf32, #tpu.memory_space<vmem>>, %arg8: memref<128x256xbf16, #tpu.memory_space<vmem>>, %arg9: memref<1x256xf32, #tpu.memory_space<vmem>>, %arg10: memref<1x8x256xbf16, #tpu.memory_space<vmem>>, %arg11: memref<24x128xf32, #tpu.memory_space<vmem>>) attributes {dimension_semantics = [#tpu.dimension_semantics<parallel>], iteration_bounds = array<i64: 2>, scalar_prefetch = 0 : i64, scratch_operands = 1 : i64, tpu.core_type = #tpu.core_type<tc>, window_params = [{transform_indices = @transform_0, window_bounds = array<i64: 1, 8, 128>}, {pipeline_mode = #tpu.pipeline_mode<synchronous>, transform_indices = @transform_1, window_bounds = array<i64: 128, 128>}, {pipeline_mode = #tpu.pipeline_mode<synchronous>, transform_indices = @transform_2, window_bounds = array<i64: 1, 128>}, {pipeline_mode = #tpu.pipeline_mode<synchronous>, transform_indices = @transform_3, window_bounds = array<i64: 384, 256>}, {pipeline_mode = #tpu.pipeline_mode<synchronous>, transform_indices = @transform_4, window_bounds = array<i64: 1, 256>}, {pipeline_mode = #tpu.pipeline_mode<synchronous>, transform_indices = @transform_5, window_bounds = array<i64: 384, 256>}, {pipeline_mode = #tpu.pipeline_mode<synchronous>, transform_indices = @transform_6, window_bounds = array<i64: 1, 256>}, {pipeline_mode = #tpu.pipeline_mode<synchronous>, transform_indices = @transform_7, window_bounds = array<i64: 128, 256>}, {pipeline_mode = #tpu.pipeline_mode<synchronous>, transform_indices = @transform_8, window_bounds = array<i64: 1, 256>}, {transform_indices = @transform_9, window_bounds = array<i64: 1, 8, 256>}]} {
    %cst = arith.constant 0.000000e+00 : f32
    %0 = vector.broadcast %cst : f32 to vector<3x128xf32>
    %c5 = arith.constant 5 : index
    %c0 = arith.constant 0 : index
    %1 = vector.load %arg11[%c5, %c0] : memref<24x128xf32, #tpu.memory_space<vmem>>, vector<3x128xf32>
    tpu.vector_store %arg11[%c5, %c0], %0 {strides = array<i32>} : memref<24x128xf32, #tpu.memory_space<vmem>>, vector<3x128xf32>,
    %c16 = arith.constant 16 : index
    %c0_0 = arith.constant 0 : index
    %2 = vector.load %arg11[%c16, %c0_0] : memref<24x128xf32, #tpu.memory_space<vmem>>, vector<3x128xf32>
    tpu.vector_store %arg11[%c16, %c0_0], %0 {strides = array<i32>} : memref<24x128xf32, #tpu.memory_space<vmem>>, vector<3x128xf32>,
    %c0_1 = arith.constant 0 : index
    %c0_2 = arith.constant 0 : index
    %c0_3 = arith.constant 0 : index
    %3 = vector.load %arg1[%c0_1, %c0_2, %c0_3] : memref<1x8x128xf32, #tpu.memory_space<vmem>>, vector<1x8x128xf32>
    %4 = vector.shape_cast %3 : vector<1x8x128xf32> to vector<8x128xf32>
    %5 = arith.truncf %4 : vector<8x128xf32> to vector<8x128xbf16>
    %c0_4 = arith.constant 0 : index
    %c0_5 = arith.constant 0 : index
    %6 = vector.load %arg2[%c0_4, %c0_5] : memref<128x128xbf16, #tpu.memory_space<vmem>>, vector<128x128xbf16>
    %cst_6 = arith.constant dense<0.000000e+00> : vector<8x128xf32>
    %7 = tpu.matmul %5, %6, %cst_6 {dimension_numbers = #tpu.dot_dimension_numbers<[1], [0], [0], [1], [0, 0, 1, 1], [], []>} : vector<8x128xbf16>, vector<128x128xbf16>, vector<8x128xf32> -> vector<8x128xf32>
    %c0_7 = arith.constant 0 : index
    %c0_8 = arith.constant 0 : index
    %8 = vector.load %arg3[%c0_7, %c0_8] : memref<1x128xf32, #tpu.memory_space<vmem>>, vector<1x128xf32>
    %9 = vector.broadcast %8 : vector<1x128xf32> to vector<8x128xf32>
    %10 = arith.addf %7, %9 : vector<8x128xf32>
    %c8 = arith.constant 8 : index
    %c0_9 = arith.constant 0 : index
    %11 = vector.load %arg11[%c8, %c0_9] : memref<24x128xf32, #tpu.memory_space<vmem>>, vector<8x128xf32>
    tpu.vector_store %arg11[%c8, %c0_9], %10 {strides = array<i32>} : memref<24x128xf32, #tpu.memory_space<vmem>>, vector<8x128xf32>,
    %c7 = arith.constant 7 : index
    %c0_10 = arith.constant 0 : index
    %12 = vector.load %arg11[%c7, %c0_10] : memref<24x128xf32, #tpu.memory_space<vmem>>, vector<8x128xf32>
    %c8_11 = arith.constant 8 : index
    %c0_12 = arith.constant 0 : index
    %13 = vector.load %arg11[%c8_11, %c0_12] : memref<24x128xf32, #tpu.memory_space<vmem>>, vector<8x128xf32>
    %c9 = arith.constant 9 : index
    %c0_13 = arith.constant 0 : index
    %14 = vector.load %arg11[%c9, %c0_13] : memref<24x128xf32, #tpu.memory_space<vmem>>, vector<8x128xf32>
    %15 = tpu.concatenate %12, %13, %14 in 1 : vector<8x128xf32>, vector<8x128xf32>, vector<8x128xf32> -> vector<8x384xf32>
    %16 = arith.truncf %15 : vector<8x384xf32> to vector<8x384xbf16>
    %c0_14 = arith.constant 0 : index
    %c0_15 = arith.constant 0 : index
    %17 = vector.load %arg4[%c0_14, %c0_15] : memref<384x256xbf16, #tpu.memory_space<vmem>>, vector<384x256xbf16>
    %cst_16 = arith.constant dense<0.000000e+00> : vector<8x256xf32>
    %18 = tpu.matmul %16, %17, %cst_16 {dimension_numbers = #tpu.dot_dimension_numbers<[1], [0], [0], [1], [0, 0, 1, 1], [], []>} : vector<8x384xbf16>, vector<384x256xbf16>, vector<8x256xf32> -> vector<8x256xf32>
    %c0_17 = arith.constant 0 : index
    %c0_18 = arith.constant 0 : index
    %19 = vector.load %arg5[%c0_17, %c0_18] : memref<1x256xf32, #tpu.memory_space<vmem>>, vector<1x256xf32>
    %20 = vector.broadcast %19 : vector<1x256xf32> to vector<8x256xf32>
    %21 = arith.addf %18, %20 : vector<8x256xf32>
    %22 = vector.extract_strided_slice %21 {offsets = [0, 0], sizes = [8, 128], strides = [1, 1]} : vector<8x256xf32> to vector<8x128xf32>
    %23 = arith.negf %22 : vector<8x128xf32>
    %24 = math.exp %23 : vector<8x128xf32>
    %cst_19 = arith.constant 1.000000e+00 : f32
    %25 = vector.broadcast %cst_19 : f32 to vector<8x128xf32>
    %26 = arith.addf %25, %24 : vector<8x128xf32>
    %27 = arith.divf %25, %26 : vector<8x128xf32>
    %28 = vector.extract_strided_slice %21 {offsets = [0, 128], sizes = [8, 128], strides = [1, 1]} : vector<8x256xf32> to vector<8x128xf32>
    %29 = arith.subf %28, %10 : vector<8x128xf32>
    %30 = arith.mulf %27, %29 : vector<8x128xf32>
    %31 = arith.addf %10, %30 : vector<8x128xf32>
    %c8_20 = arith.constant 8 : index
    %c0_21 = arith.constant 0 : index
    %32 = vector.load %arg11[%c8_20, %c0_21] : memref<24x128xf32, #tpu.memory_space<vmem>>, vector<8x128xf32>
    tpu.vector_store %arg11[%c8_20, %c0_21], %31 {strides = array<i32>} : memref<24x128xf32, #tpu.memory_space<vmem>>, vector<8x128xf32>,
    %c5_22 = arith.constant 5 : index
    %c0_23 = arith.constant 0 : index
    %33 = vector.load %arg11[%c5_22, %c0_23] : memref<24x128xf32, #tpu.memory_space<vmem>>, vector<8x128xf32>
    %c8_24 = arith.constant 8 : index
    %c0_25 = arith.constant 0 : index
    %34 = vector.load %arg11[%c8_24, %c0_25] : memref<24x128xf32, #tpu.memory_space<vmem>>, vector<8x128xf32>
    %c11 = arith.constant 11 : index
    %c0_26 = arith.constant 0 : index
    %35 = vector.load %arg11[%c11, %c0_26] : memref<24x128xf32, #tpu.memory_space<vmem>>, vector<8x128xf32>
    %36 = tpu.concatenate %33, %34, %35 in 1 : vector<8x128xf32>, vector<8x128xf32>, vector<8x128xf32> -> vector<8x384xf32>
    %37 = arith.truncf %36 : vector<8x384xf32> to vector<8x384xbf16>
    %c0_27 = arith.constant 0 : index
    %c0_28 = arith.constant 0 : index
    %38 = vector.load %arg6[%c0_27, %c0_28] : memref<384x256xbf16, #tpu.memory_space<vmem>>, vector<384x256xbf16>
    %cst_29 = arith.constant dense<0.000000e+00> : vector<8x256xf32>
    %39 = tpu.matmul %37, %38, %cst_29 {dimension_numbers = #tpu.dot_dimension_numbers<[1], [0], [0], [1], [0, 0, 1, 1], [], []>} : vector<8x384xbf16>, vector<384x256xbf16>, vector<8x256xf32> -> vector<8x256xf32>
    %c0_30 = arith.constant 0 : index
    %c0_31 = arith.constant 0 : index
    %40 = vector.load %arg7[%c0_30, %c0_31] : memref<1x256xf32, #tpu.memory_space<vmem>>, vector<1x256xf32>
    %41 = vector.broadcast %40 : vector<1x256xf32> to vector<8x256xf32>
    %42 = arith.addf %39, %41 : vector<8x256xf32>
    %43 = vector.extract_strided_slice %42 {offsets = [0, 0], sizes = [8, 128], strides = [1, 1]} : vector<8x256xf32> to vector<8x128xf32>
    %44 = arith.negf %43 : vector<8x128xf32>
    %45 = math.exp %44 : vector<8x128xf32>
    %cst_32 = arith.constant 1.000000e+00 : f32
    %46 = vector.broadcast %cst_32 : f32 to vector<8x128xf32>
    %47 = arith.addf %46, %45 : vector<8x128xf32>
    %48 = arith.divf %46, %47 : vector<8x128xf32>
    %49 = vector.extract_strided_slice %42 {offsets = [0, 128], sizes = [8, 128], strides = [1, 1]} : vector<8x256xf32> to vector<8x128xf32>
    %50 = arith.subf %49, %31 : vector<8x128xf32>
    %51 = arith.mulf %48, %50 : vector<8x128xf32>
    %52 = arith.addf %31, %51 : vector<8x128xf32>
    %53 = arith.truncf %52 : vector<8x128xf32> to vector<8x128xbf16>
    %c0_33 = arith.constant 0 : index
    %c0_34 = arith.constant 0 : index
    %54 = vector.load %arg8[%c0_33, %c0_34] : memref<128x256xbf16, #tpu.memory_space<vmem>>, vector<128x256xbf16>
    %cst_35 = arith.constant dense<0.000000e+00> : vector<8x256xf32>
    %55 = tpu.matmul %53, %54, %cst_35 {dimension_numbers = #tpu.dot_dimension_numbers<[1], [0], [0], [1], [0, 0, 1, 1], [], []>} : vector<8x128xbf16>, vector<128x256xbf16>, vector<8x256xf32> -> vector<8x256xf32>
    %c0_36 = arith.constant 0 : index
    %c0_37 = arith.constant 0 : index
    %56 = vector.load %arg9[%c0_36, %c0_37] : memref<1x256xf32, #tpu.memory_space<vmem>>, vector<1x256xf32>
    %57 = vector.broadcast %56 : vector<1x256xf32> to vector<8x256xf32>
    %58 = arith.addf %55, %57 : vector<8x256xf32>
    %59 = arith.truncf %58 : vector<8x256xf32> to vector<8x256xbf16>
    %c0_38 = arith.constant 0 : index
    %c0_39 = arith.constant 0 : index
    %c0_40 = arith.constant 0 : index
    %60 = vector.load %arg10[%c0_38, %c0_39, %c0_40] : memref<1x8x256xbf16, #tpu.memory_space<vmem>>, vector<1x8x256xbf16>
    %61 = vector.shape_cast %60 : vector<1x8x256xbf16> to vector<8x256xbf16>
    %62 = vector.shape_cast %59 : vector<8x256xbf16> to vector<1x8x256xbf16>
    tpu.vector_store %arg10[%c0_38, %c0_39, %c0_40], %62 {strides = array<i32>} : memref<1x8x256xbf16, #tpu.memory_space<vmem>>, vector<1x8x256xbf16>,
    return
  }
  func.func @transform_0(%arg0: i32) -> (i32, i32, i32) {
    %c0_i32 = arith.constant 0 : i32
    %c0_i32_0 = arith.constant 0 : i32
    %c0_i32_1 = arith.constant 0 : i32
    return %arg0, %c0_i32, %c0_i32_0 : i32, i32, i32
  }
  func.func @transform_1(%arg0: i32) -> (i32, i32) {
    %c0_i32 = arith.constant 0 : i32
    %c0_i32_0 = arith.constant 0 : i32
    %c0_i32_1 = arith.constant 0 : i32
    return %c0_i32, %c0_i32_0 : i32, i32
  }
  func.func @transform_2(%arg0: i32) -> (i32, i32) {
    %c0_i32 = arith.constant 0 : i32
    %c0_i32_0 = arith.constant 0 : i32
    %c0_i32_1 = arith.constant 0 : i32
    return %c0_i32, %c0_i32_0 : i32, i32
  }
  func.func @transform_3(%arg0: i32) -> (i32, i32) {
    %c0_i32 = arith.constant 0 : i32
    %c0_i32_0 = arith.constant 0 : i32
    %c0_i32_1 = arith.constant 0 : i32
    return %c0_i32, %c0_i32_0 : i32, i32
  }
  func.func @transform_4(%arg0: i32) -> (i32, i32) {
    %c0_i32 = arith.constant 0 : i32
    %c0_i32_0 = arith.constant 0 : i32
    %c0_i32_1 = arith.constant 0 : i32
    return %c0_i32, %c0_i32_0 : i32, i32
  }
  func.func @transform_5(%arg0: i32) -> (i32, i32) {
    %c0_i32 = arith.constant 0 : i32
    %c0_i32_0 = arith.constant 0 : i32
    %c0_i32_1 = arith.constant 0 : i32
    return %c0_i32, %c0_i32_0 : i32, i32
  }
  func.func @transform_6(%arg0: i32) -> (i32, i32) {
    %c0_i32 = arith.constant 0 : i32
    %c0_i32_0 = arith.constant 0 : i32
    %c0_i32_1 = arith.constant 0 : i32
    return %c0_i32, %c0_i32_0 : i32, i32
  }
  func.func @transform_7(%arg0: i32) -> (i32, i32) {
    %c0_i32 = arith.constant 0 : i32
    %c0_i32_0 = arith.constant 0 : i32
    %c0_i32_1 = arith.constant 0 : i32
    return %c0_i32, %c0_i32_0 : i32, i32
  }
  func.func @transform_8(%arg0: i32) -> (i32, i32) {
    %c0_i32 = arith.constant 0 : i32
    %c0_i32_0 = arith.constant 0 : i32
    %c0_i32_1 = arith.constant 0 : i32
    return %c0_i32, %c0_i32_0 : i32, i32
  }
  func.func @transform_9(%arg0: i32) -> (i32, i32, i32) {
    %c0_i32 = arith.constant 0 : i32
    %c0_i32_0 = arith.constant 0 : i32
    %c0_i32_1 = arith.constant 0 : i32
    return %arg0, %c0_i32, %c0_i32_0 : i32, i32, i32
  }
}

module attributes {stable_mosaic.version = 11 : i64} {
  func.func @kernel(%arg0: i32, %arg1: memref<1x32x128xbf16, #tpu.memory_space<vmem>>, %arg2: memref<384x256xbf16, #tpu.memory_space<vmem>>, %arg3: memref<1x256xf32, #tpu.memory_space<vmem>>, %arg4: memref<384x256xbf16, #tpu.memory_space<vmem>>, %arg5: memref<1x256xf32, #tpu.memory_space<vmem>>, %arg6: memref<128x128xbf16, #tpu.memory_space<vmem>>, %arg7: memref<1x128xf32, #tpu.memory_space<vmem>>, %arg8: memref<384x256xbf16, #tpu.memory_space<vmem>>, %arg9: memref<1x256xf32, #tpu.memory_space<vmem>>, %arg10: memref<384x256xbf16, #tpu.memory_space<vmem>>, %arg11: memref<1x256xf32, #tpu.memory_space<vmem>>, %arg12: memref<128x128xbf16, #tpu.memory_space<vmem>>, %arg13: memref<1x128xf32, #tpu.memory_space<vmem>>, %arg14: memref<128x256xbf16, #tpu.memory_space<vmem>>, %arg15: memref<1x256xf32, #tpu.memory_space<vmem>>, %arg16: memref<128x128xbf16, #tpu.memory_space<vmem>>, %arg17: memref<1x128xf32, #tpu.memory_space<vmem>>, %arg18: memref<1x32x128xf32, #tpu.memory_space<vmem>>, %arg19: memref<1x32x128xf32, #tpu.memory_space<vmem>>, %arg20: memref<48x128xf32, #tpu.memory_space<vmem>>) attributes {dimension_semantics = [#tpu.dimension_semantics<parallel>], iteration_bounds = array<i64: 2>, scalar_prefetch = 0 : i64, scratch_operands = 1 : i64, tpu.core_type = #tpu.core_type<tc>, window_params = [{transform_indices = @transform_0, window_bounds = array<i64: 1, 32, 128>}, {pipeline_mode = #tpu.pipeline_mode<synchronous>, transform_indices = @transform_1, window_bounds = array<i64: 384, 256>}, {pipeline_mode = #tpu.pipeline_mode<synchronous>, transform_indices = @transform_2, window_bounds = array<i64: 1, 256>}, {pipeline_mode = #tpu.pipeline_mode<synchronous>, transform_indices = @transform_3, window_bounds = array<i64: 384, 256>}, {pipeline_mode = #tpu.pipeline_mode<synchronous>, transform_indices = @transform_4, window_bounds = array<i64: 1, 256>}, {pipeline_mode = #tpu.pipeline_mode<synchronous>, transform_indices = @transform_5, window_bounds = array<i64: 128, 128>}, {pipeline_mode = #tpu.pipeline_mode<synchronous>, transform_indices = @transform_6, window_bounds = array<i64: 1, 128>}, {pipeline_mode = #tpu.pipeline_mode<synchronous>, transform_indices = @transform_7, window_bounds = array<i64: 384, 256>}, {pipeline_mode = #tpu.pipeline_mode<synchronous>, transform_indices = @transform_8, window_bounds = array<i64: 1, 256>}, {pipeline_mode = #tpu.pipeline_mode<synchronous>, transform_indices = @transform_9, window_bounds = array<i64: 384, 256>}, {pipeline_mode = #tpu.pipeline_mode<synchronous>, transform_indices = @transform_10, window_bounds = array<i64: 1, 256>}, {pipeline_mode = #tpu.pipeline_mode<synchronous>, transform_indices = @transform_11, window_bounds = array<i64: 128, 128>}, {pipeline_mode = #tpu.pipeline_mode<synchronous>, transform_indices = @transform_12, window_bounds = array<i64: 1, 128>}, {pipeline_mode = #tpu.pipeline_mode<synchronous>, transform_indices = @transform_13, window_bounds = array<i64: 128, 256>}, {pipeline_mode = #tpu.pipeline_mode<synchronous>, transform_indices = @transform_14, window_bounds = array<i64: 1, 256>}, {pipeline_mode = #tpu.pipeline_mode<synchronous>, transform_indices = @transform_15, window_bounds = array<i64: 128, 128>}, {pipeline_mode = #tpu.pipeline_mode<synchronous>, transform_indices = @transform_16, window_bounds = array<i64: 1, 128>}, {transform_indices = @transform_17, window_bounds = array<i64: 1, 32, 128>}, {transform_indices = @transform_18, window_bounds = array<i64: 1, 32, 128>}]} {
    %cst = arith.constant 0.000000e+00 : f32
    %0 = vector.broadcast %cst : f32 to vector<3x128xf32>
    %c5 = arith.constant 5 : index
    %c0 = arith.constant 0 : index
    %1 = vector.load %arg20[%c5, %c0] : memref<48x128xf32, #tpu.memory_space<vmem>>, vector<3x128xf32>
    tpu.vector_store %arg20[%c5, %c0], %0 {strides = array<i32>} : memref<48x128xf32, #tpu.memory_space<vmem>>, vector<3x128xf32>,
    %c40 = arith.constant 40 : index
    %c0_0 = arith.constant 0 : index
    %2 = vector.load %arg20[%c40, %c0_0] : memref<48x128xf32, #tpu.memory_space<vmem>>, vector<3x128xf32>
    tpu.vector_store %arg20[%c40, %c0_0], %0 {strides = array<i32>} : memref<48x128xf32, #tpu.memory_space<vmem>>, vector<3x128xf32>,
    %c0_1 = arith.constant 0 : index
    %c0_2 = arith.constant 0 : index
    %c0_3 = arith.constant 0 : index
    %3 = vector.load %arg1[%c0_1, %c0_2, %c0_3] : memref<1x32x128xbf16, #tpu.memory_space<vmem>>, vector<1x32x128xbf16>
    %4 = vector.shape_cast %3 : vector<1x32x128xbf16> to vector<32x128xbf16>
    %5 = arith.extf %4 : vector<32x128xbf16> to vector<32x128xf32>
    %c8 = arith.constant 8 : index
    %c0_4 = arith.constant 0 : index
    %6 = vector.load %arg20[%c8, %c0_4] : memref<48x128xf32, #tpu.memory_space<vmem>>, vector<32x128xf32>
    tpu.vector_store %arg20[%c8, %c0_4], %5 {strides = array<i32>} : memref<48x128xf32, #tpu.memory_space<vmem>>, vector<32x128xf32>,
    %c7 = arith.constant 7 : index
    %c0_5 = arith.constant 0 : index
    %7 = vector.load %arg20[%c7, %c0_5] : memref<48x128xf32, #tpu.memory_space<vmem>>, vector<32x128xf32>
    %c8_6 = arith.constant 8 : index
    %c0_7 = arith.constant 0 : index
    %8 = vector.load %arg20[%c8_6, %c0_7] : memref<48x128xf32, #tpu.memory_space<vmem>>, vector<32x128xf32>
    %c9 = arith.constant 9 : index
    %c0_8 = arith.constant 0 : index
    %9 = vector.load %arg20[%c9, %c0_8] : memref<48x128xf32, #tpu.memory_space<vmem>>, vector<32x128xf32>
    %10 = tpu.concatenate %7, %8, %9 in 1 : vector<32x128xf32>, vector<32x128xf32>, vector<32x128xf32> -> vector<32x384xf32>
    %11 = arith.truncf %10 : vector<32x384xf32> to vector<32x384xbf16>
    %c0_9 = arith.constant 0 : index
    %c0_10 = arith.constant 0 : index
    %12 = vector.load %arg2[%c0_9, %c0_10] : memref<384x256xbf16, #tpu.memory_space<vmem>>, vector<384x256xbf16>
    %cst_11 = arith.constant dense<0.000000e+00> : vector<32x256xf32>
    %13 = tpu.matmul %11, %12, %cst_11 {dimension_numbers = #tpu.dot_dimension_numbers<[1], [0], [0], [1], [0, 0, 1, 1], [], []>} : vector<32x384xbf16>, vector<384x256xbf16>, vector<32x256xf32> -> vector<32x256xf32>
    %c0_12 = arith.constant 0 : index
    %c0_13 = arith.constant 0 : index
    %14 = vector.load %arg3[%c0_12, %c0_13] : memref<1x256xf32, #tpu.memory_space<vmem>>, vector<1x256xf32>
    %15 = vector.broadcast %14 : vector<1x256xf32> to vector<32x256xf32>
    %16 = arith.addf %13, %15 : vector<32x256xf32>
    %17 = vector.extract_strided_slice %16 {offsets = [0, 0], sizes = [32, 128], strides = [1, 1]} : vector<32x256xf32> to vector<32x128xf32>
    %18 = arith.negf %17 : vector<32x128xf32>
    %19 = math.exp %18 : vector<32x128xf32>
    %cst_14 = arith.constant 1.000000e+00 : f32
    %20 = vector.broadcast %cst_14 : f32 to vector<32x128xf32>
    %21 = arith.addf %20, %19 : vector<32x128xf32>
    %22 = arith.divf %20, %21 : vector<32x128xf32>
    %23 = vector.extract_strided_slice %16 {offsets = [0, 128], sizes = [32, 128], strides = [1, 1]} : vector<32x256xf32> to vector<32x128xf32>
    %24 = arith.subf %23, %5 : vector<32x128xf32>
    %25 = arith.mulf %22, %24 : vector<32x128xf32>
    %26 = arith.addf %5, %25 : vector<32x128xf32>
    %c8_15 = arith.constant 8 : index
    %c0_16 = arith.constant 0 : index
    %27 = vector.load %arg20[%c8_15, %c0_16] : memref<48x128xf32, #tpu.memory_space<vmem>>, vector<32x128xf32>
    tpu.vector_store %arg20[%c8_15, %c0_16], %26 {strides = array<i32>} : memref<48x128xf32, #tpu.memory_space<vmem>>, vector<32x128xf32>,
    %c5_17 = arith.constant 5 : index
    %c0_18 = arith.constant 0 : index
    %28 = vector.load %arg20[%c5_17, %c0_18] : memref<48x128xf32, #tpu.memory_space<vmem>>, vector<32x128xf32>
    %c8_19 = arith.constant 8 : index
    %c0_20 = arith.constant 0 : index
    %29 = vector.load %arg20[%c8_19, %c0_20] : memref<48x128xf32, #tpu.memory_space<vmem>>, vector<32x128xf32>
    %c11 = arith.constant 11 : index
    %c0_21 = arith.constant 0 : index
    %30 = vector.load %arg20[%c11, %c0_21] : memref<48x128xf32, #tpu.memory_space<vmem>>, vector<32x128xf32>
    %31 = tpu.concatenate %28, %29, %30 in 1 : vector<32x128xf32>, vector<32x128xf32>, vector<32x128xf32> -> vector<32x384xf32>
    %32 = arith.truncf %31 : vector<32x384xf32> to vector<32x384xbf16>
    %c0_22 = arith.constant 0 : index
    %c0_23 = arith.constant 0 : index
    %33 = vector.load %arg4[%c0_22, %c0_23] : memref<384x256xbf16, #tpu.memory_space<vmem>>, vector<384x256xbf16>
    %cst_24 = arith.constant dense<0.000000e+00> : vector<32x256xf32>
    %34 = tpu.matmul %32, %33, %cst_24 {dimension_numbers = #tpu.dot_dimension_numbers<[1], [0], [0], [1], [0, 0, 1, 1], [], []>} : vector<32x384xbf16>, vector<384x256xbf16>, vector<32x256xf32> -> vector<32x256xf32>
    %c0_25 = arith.constant 0 : index
    %c0_26 = arith.constant 0 : index
    %35 = vector.load %arg5[%c0_25, %c0_26] : memref<1x256xf32, #tpu.memory_space<vmem>>, vector<1x256xf32>
    %36 = vector.broadcast %35 : vector<1x256xf32> to vector<32x256xf32>
    %37 = arith.addf %34, %36 : vector<32x256xf32>
    %38 = vector.extract_strided_slice %37 {offsets = [0, 0], sizes = [32, 128], strides = [1, 1]} : vector<32x256xf32> to vector<32x128xf32>
    %39 = arith.negf %38 : vector<32x128xf32>
    %40 = math.exp %39 : vector<32x128xf32>
    %cst_27 = arith.constant 1.000000e+00 : f32
    %41 = vector.broadcast %cst_27 : f32 to vector<32x128xf32>
    %42 = arith.addf %41, %40 : vector<32x128xf32>
    %43 = arith.divf %41, %42 : vector<32x128xf32>
    %44 = vector.extract_strided_slice %37 {offsets = [0, 128], sizes = [32, 128], strides = [1, 1]} : vector<32x256xf32> to vector<32x128xf32>
    %45 = arith.subf %44, %26 : vector<32x128xf32>
    %46 = arith.mulf %43, %45 : vector<32x128xf32>
    %47 = arith.addf %26, %46 : vector<32x128xf32>
    %48 = arith.truncf %47 : vector<32x128xf32> to vector<32x128xbf16>
    %c0_28 = arith.constant 0 : index
    %c0_29 = arith.constant 0 : index
    %49 = vector.load %arg6[%c0_28, %c0_29] : memref<128x128xbf16, #tpu.memory_space<vmem>>, vector<128x128xbf16>
    %cst_30 = arith.constant dense<0.000000e+00> : vector<32x128xf32>
    %50 = tpu.matmul %48, %49, %cst_30 {dimension_numbers = #tpu.dot_dimension_numbers<[1], [0], [0], [1], [0, 0, 1, 1], [], []>} : vector<32x128xbf16>, vector<128x128xbf16>, vector<32x128xf32> -> vector<32x128xf32>
    %c0_31 = arith.constant 0 : index
    %c0_32 = arith.constant 0 : index
    %51 = vector.load %arg7[%c0_31, %c0_32] : memref<1x128xf32, #tpu.memory_space<vmem>>, vector<1x128xf32>
    %52 = vector.broadcast %51 : vector<1x128xf32> to vector<32x128xf32>
    %53 = arith.addf %50, %52 : vector<32x128xf32>
    %c8_33 = arith.constant 8 : index
    %c0_34 = arith.constant 0 : index
    %54 = vector.load %arg20[%c8_33, %c0_34] : memref<48x128xf32, #tpu.memory_space<vmem>>, vector<32x128xf32>
    tpu.vector_store %arg20[%c8_33, %c0_34], %53 {strides = array<i32>} : memref<48x128xf32, #tpu.memory_space<vmem>>, vector<32x128xf32>,
    %c7_35 = arith.constant 7 : index
    %c0_36 = arith.constant 0 : index
    %55 = vector.load %arg20[%c7_35, %c0_36] : memref<48x128xf32, #tpu.memory_space<vmem>>, vector<32x128xf32>
    %c8_37 = arith.constant 8 : index
    %c0_38 = arith.constant 0 : index
    %56 = vector.load %arg20[%c8_37, %c0_38] : memref<48x128xf32, #tpu.memory_space<vmem>>, vector<32x128xf32>
    %c9_39 = arith.constant 9 : index
    %c0_40 = arith.constant 0 : index
    %57 = vector.load %arg20[%c9_39, %c0_40] : memref<48x128xf32, #tpu.memory_space<vmem>>, vector<32x128xf32>
    %58 = tpu.concatenate %55, %56, %57 in 1 : vector<32x128xf32>, vector<32x128xf32>, vector<32x128xf32> -> vector<32x384xf32>
    %59 = arith.truncf %58 : vector<32x384xf32> to vector<32x384xbf16>
    %c0_41 = arith.constant 0 : index
    %c0_42 = arith.constant 0 : index
    %60 = vector.load %arg8[%c0_41, %c0_42] : memref<384x256xbf16, #tpu.memory_space<vmem>>, vector<384x256xbf16>
    %cst_43 = arith.constant dense<0.000000e+00> : vector<32x256xf32>
    %61 = tpu.matmul %59, %60, %cst_43 {dimension_numbers = #tpu.dot_dimension_numbers<[1], [0], [0], [1], [0, 0, 1, 1], [], []>} : vector<32x384xbf16>, vector<384x256xbf16>, vector<32x256xf32> -> vector<32x256xf32>
    %c0_44 = arith.constant 0 : index
    %c0_45 = arith.constant 0 : index
    %62 = vector.load %arg9[%c0_44, %c0_45] : memref<1x256xf32, #tpu.memory_space<vmem>>, vector<1x256xf32>
    %63 = vector.broadcast %62 : vector<1x256xf32> to vector<32x256xf32>
    %64 = arith.addf %61, %63 : vector<32x256xf32>
    %65 = vector.extract_strided_slice %64 {offsets = [0, 0], sizes = [32, 128], strides = [1, 1]} : vector<32x256xf32> to vector<32x128xf32>
    %66 = arith.negf %65 : vector<32x128xf32>
    %67 = math.exp %66 : vector<32x128xf32>
    %cst_46 = arith.constant 1.000000e+00 : f32
    %68 = vector.broadcast %cst_46 : f32 to vector<32x128xf32>
    %69 = arith.addf %68, %67 : vector<32x128xf32>
    %70 = arith.divf %68, %69 : vector<32x128xf32>
    %71 = vector.extract_strided_slice %64 {offsets = [0, 128], sizes = [32, 128], strides = [1, 1]} : vector<32x256xf32> to vector<32x128xf32>
    %72 = arith.subf %71, %53 : vector<32x128xf32>
    %73 = arith.mulf %70, %72 : vector<32x128xf32>
    %74 = arith.addf %53, %73 : vector<32x128xf32>
    %c8_47 = arith.constant 8 : index
    %c0_48 = arith.constant 0 : index
    %75 = vector.load %arg20[%c8_47, %c0_48] : memref<48x128xf32, #tpu.memory_space<vmem>>, vector<32x128xf32>
    tpu.vector_store %arg20[%c8_47, %c0_48], %74 {strides = array<i32>} : memref<48x128xf32, #tpu.memory_space<vmem>>, vector<32x128xf32>,
    %c7_49 = arith.constant 7 : index
    %c0_50 = arith.constant 0 : index
    %76 = vector.load %arg20[%c7_49, %c0_50] : memref<48x128xf32, #tpu.memory_space<vmem>>, vector<32x128xf32>
    %c8_51 = arith.constant 8 : index
    %c0_52 = arith.constant 0 : index
    %77 = vector.load %arg20[%c8_51, %c0_52] : memref<48x128xf32, #tpu.memory_space<vmem>>, vector<32x128xf32>
    %c9_53 = arith.constant 9 : index
    %c0_54 = arith.constant 0 : index
    %78 = vector.load %arg20[%c9_53, %c0_54] : memref<48x128xf32, #tpu.memory_space<vmem>>, vector<32x128xf32>
    %79 = tpu.concatenate %76, %77, %78 in 1 : vector<32x128xf32>, vector<32x128xf32>, vector<32x128xf32> -> vector<32x384xf32>
    %80 = arith.truncf %79 : vector<32x384xf32> to vector<32x384xbf16>
    %c0_55 = arith.constant 0 : index
    %c0_56 = arith.constant 0 : index
    %81 = vector.load %arg10[%c0_55, %c0_56] : memref<384x256xbf16, #tpu.memory_space<vmem>>, vector<384x256xbf16>
    %cst_57 = arith.constant dense<0.000000e+00> : vector<32x256xf32>
    %82 = tpu.matmul %80, %81, %cst_57 {dimension_numbers = #tpu.dot_dimension_numbers<[1], [0], [0], [1], [0, 0, 1, 1], [], []>} : vector<32x384xbf16>, vector<384x256xbf16>, vector<32x256xf32> -> vector<32x256xf32>
    %c0_58 = arith.constant 0 : index
    %c0_59 = arith.constant 0 : index
    %83 = vector.load %arg11[%c0_58, %c0_59] : memref<1x256xf32, #tpu.memory_space<vmem>>, vector<1x256xf32>
    %84 = vector.broadcast %83 : vector<1x256xf32> to vector<32x256xf32>
    %85 = arith.addf %82, %84 : vector<32x256xf32>
    %86 = vector.extract_strided_slice %85 {offsets = [0, 0], sizes = [32, 128], strides = [1, 1]} : vector<32x256xf32> to vector<32x128xf32>
    %87 = arith.negf %86 : vector<32x128xf32>
    %88 = math.exp %87 : vector<32x128xf32>
    %cst_60 = arith.constant 1.000000e+00 : f32
    %89 = vector.broadcast %cst_60 : f32 to vector<32x128xf32>
    %90 = arith.addf %89, %88 : vector<32x128xf32>
    %91 = arith.divf %89, %90 : vector<32x128xf32>
    %92 = vector.extract_strided_slice %85 {offsets = [0, 128], sizes = [32, 128], strides = [1, 1]} : vector<32x256xf32> to vector<32x128xf32>
    %93 = arith.subf %92, %74 : vector<32x128xf32>
    %94 = arith.mulf %91, %93 : vector<32x128xf32>
    %95 = arith.addf %74, %94 : vector<32x128xf32>
    %96 = arith.truncf %95 : vector<32x128xf32> to vector<32x128xbf16>
    %c0_61 = arith.constant 0 : index
    %c0_62 = arith.constant 0 : index
    %97 = vector.load %arg12[%c0_61, %c0_62] : memref<128x128xbf16, #tpu.memory_space<vmem>>, vector<128x128xbf16>
    %cst_63 = arith.constant dense<0.000000e+00> : vector<32x128xf32>
    %98 = tpu.matmul %96, %97, %cst_63 {dimension_numbers = #tpu.dot_dimension_numbers<[1], [0], [0], [1], [0, 0, 1, 1], [], []>} : vector<32x128xbf16>, vector<128x128xbf16>, vector<32x128xf32> -> vector<32x128xf32>
    %c0_64 = arith.constant 0 : index
    %c0_65 = arith.constant 0 : index
    %99 = vector.load %arg13[%c0_64, %c0_65] : memref<1x128xf32, #tpu.memory_space<vmem>>, vector<1x128xf32>
    %100 = vector.broadcast %99 : vector<1x128xf32> to vector<32x128xf32>
    %101 = arith.addf %98, %100 : vector<32x128xf32>
    %102 = arith.truncf %101 : vector<32x128xf32> to vector<32x128xbf16>
    %c0_66 = arith.constant 0 : index
    %c0_67 = arith.constant 0 : index
    %103 = vector.load %arg14[%c0_66, %c0_67] : memref<128x256xbf16, #tpu.memory_space<vmem>>, vector<128x256xbf16>
    %cst_68 = arith.constant dense<0.000000e+00> : vector<32x256xf32>
    %104 = tpu.matmul %102, %103, %cst_68 {dimension_numbers = #tpu.dot_dimension_numbers<[1], [0], [0], [1], [0, 0, 1, 1], [], []>} : vector<32x128xbf16>, vector<128x256xbf16>, vector<32x256xf32> -> vector<32x256xf32>
    %c0_69 = arith.constant 0 : index
    %c0_70 = arith.constant 0 : index
    %105 = vector.load %arg15[%c0_69, %c0_70] : memref<1x256xf32, #tpu.memory_space<vmem>>, vector<1x256xf32>
    %106 = vector.broadcast %105 : vector<1x256xf32> to vector<32x256xf32>
    %107 = arith.addf %104, %106 : vector<32x256xf32>
    %108 = vector.extract_strided_slice %107 {offsets = [0, 0], sizes = [32, 128], strides = [1, 1]} : vector<32x256xf32> to vector<32x128xf32>
    %109 = arith.negf %108 : vector<32x128xf32>
    %110 = math.exp %109 : vector<32x128xf32>
    %cst_71 = arith.constant 1.000000e+00 : f32
    %111 = vector.broadcast %cst_71 : f32 to vector<32x128xf32>
    %112 = arith.addf %111, %110 : vector<32x128xf32>
    %113 = arith.divf %111, %112 : vector<32x128xf32>
    %114 = vector.extract_strided_slice %107 {offsets = [0, 128], sizes = [32, 128], strides = [1, 1]} : vector<32x256xf32> to vector<32x128xf32>
    %115 = arith.subf %114, %101 : vector<32x128xf32>
    %116 = arith.mulf %113, %115 : vector<32x128xf32>
    %117 = arith.addf %101, %116 : vector<32x128xf32>
    %118 = arith.truncf %117 : vector<32x128xf32> to vector<32x128xbf16>
    %c0_72 = arith.constant 0 : index
    %c0_73 = arith.constant 0 : index
    %119 = vector.load %arg16[%c0_72, %c0_73] : memref<128x128xbf16, #tpu.memory_space<vmem>>, vector<128x128xbf16>
    %cst_74 = arith.constant dense<0.000000e+00> : vector<32x128xf32>
    %120 = tpu.matmul %118, %119, %cst_74 {dimension_numbers = #tpu.dot_dimension_numbers<[1], [0], [0], [1], [0, 0, 1, 1], [], []>} : vector<32x128xbf16>, vector<128x128xbf16>, vector<32x128xf32> -> vector<32x128xf32>
    %c0_75 = arith.constant 0 : index
    %c0_76 = arith.constant 0 : index
    %121 = vector.load %arg17[%c0_75, %c0_76] : memref<1x128xf32, #tpu.memory_space<vmem>>, vector<1x128xf32>
    %122 = vector.broadcast %121 : vector<1x128xf32> to vector<32x128xf32>
    %123 = arith.addf %120, %122 : vector<32x128xf32>
    %c0_77 = arith.constant 0 : index
    %c0_78 = arith.constant 0 : index
    %c0_79 = arith.constant 0 : index
    %124 = vector.load %arg18[%c0_77, %c0_78, %c0_79] : memref<1x32x128xf32, #tpu.memory_space<vmem>>, vector<1x32x128xf32>
    %125 = vector.shape_cast %124 : vector<1x32x128xf32> to vector<32x128xf32>
    %126 = vector.shape_cast %123 : vector<32x128xf32> to vector<1x32x128xf32>
    tpu.vector_store %arg18[%c0_77, %c0_78, %c0_79], %126 {strides = array<i32>} : memref<1x32x128xf32, #tpu.memory_space<vmem>>, vector<1x32x128xf32>,
    %127 = arith.negf %123 : vector<32x128xf32>
    %128 = math.exp %127 : vector<32x128xf32>
    %cst_80 = arith.constant 1.000000e+00 : f32
    %129 = vector.broadcast %cst_80 : f32 to vector<32x128xf32>
    %130 = arith.addf %129, %128 : vector<32x128xf32>
    %131 = arith.divf %129, %130 : vector<32x128xf32>
    %c0_81 = arith.constant 0 : index
    %c0_82 = arith.constant 0 : index
    %c0_83 = arith.constant 0 : index
    %132 = vector.load %arg19[%c0_81, %c0_82, %c0_83] : memref<1x32x128xf32, #tpu.memory_space<vmem>>, vector<1x32x128xf32>
    %133 = vector.shape_cast %132 : vector<1x32x128xf32> to vector<32x128xf32>
    %134 = vector.shape_cast %131 : vector<32x128xf32> to vector<1x32x128xf32>
    tpu.vector_store %arg19[%c0_81, %c0_82, %c0_83], %134 {strides = array<i32>} : memref<1x32x128xf32, #tpu.memory_space<vmem>>, vector<1x32x128xf32>,
    return
  }
  func.func @transform_0(%arg0: i32) -> (i32, i32, i32) {
    %c0_i32 = arith.constant 0 : i32
    %c0_i32_0 = arith.constant 0 : i32
    %c0_i32_1 = arith.constant 0 : i32
    return %arg0, %c0_i32, %c0_i32_0 : i32, i32, i32
  }
  func.func @transform_1(%arg0: i32) -> (i32, i32) {
    %c0_i32 = arith.constant 0 : i32
    %c0_i32_0 = arith.constant 0 : i32
    %c0_i32_1 = arith.constant 0 : i32
    return %c0_i32, %c0_i32_0 : i32, i32
  }
  func.func @transform_2(%arg0: i32) -> (i32, i32) {
    %c0_i32 = arith.constant 0 : i32
    %c0_i32_0 = arith.constant 0 : i32
    %c0_i32_1 = arith.constant 0 : i32
    return %c0_i32, %c0_i32_0 : i32, i32
  }
  func.func @transform_3(%arg0: i32) -> (i32, i32) {
    %c0_i32 = arith.constant 0 : i32
    %c0_i32_0 = arith.constant 0 : i32
    %c0_i32_1 = arith.constant 0 : i32
    return %c0_i32, %c0_i32_0 : i32, i32
  }
  func.func @transform_4(%arg0: i32) -> (i32, i32) {
    %c0_i32 = arith.constant 0 : i32
    %c0_i32_0 = arith.constant 0 : i32
    %c0_i32_1 = arith.constant 0 : i32
    return %c0_i32, %c0_i32_0 : i32, i32
  }
  func.func @transform_5(%arg0: i32) -> (i32, i32) {
    %c0_i32 = arith.constant 0 : i32
    %c0_i32_0 = arith.constant 0 : i32
    %c0_i32_1 = arith.constant 0 : i32
    return %c0_i32, %c0_i32_0 : i32, i32
  }
  func.func @transform_6(%arg0: i32) -> (i32, i32) {
    %c0_i32 = arith.constant 0 : i32
    %c0_i32_0 = arith.constant 0 : i32
    %c0_i32_1 = arith.constant 0 : i32
    return %c0_i32, %c0_i32_0 : i32, i32
  }
  func.func @transform_7(%arg0: i32) -> (i32, i32) {
    %c0_i32 = arith.constant 0 : i32
    %c0_i32_0 = arith.constant 0 : i32
    %c0_i32_1 = arith.constant 0 : i32
    return %c0_i32, %c0_i32_0 : i32, i32
  }
  func.func @transform_8(%arg0: i32) -> (i32, i32) {
    %c0_i32 = arith.constant 0 : i32
    %c0_i32_0 = arith.constant 0 : i32
    %c0_i32_1 = arith.constant 0 : i32
    return %c0_i32, %c0_i32_0 : i32, i32
  }
  func.func @transform_9(%arg0: i32) -> (i32, i32) {
    %c0_i32 = arith.constant 0 : i32
    %c0_i32_0 = arith.constant 0 : i32
    %c0_i32_1 = arith.constant 0 : i32
    return %c0_i32, %c0_i32_0 : i32, i32
  }
  func.func @transform_10(%arg0: i32) -> (i32, i32) {
    %c0_i32 = arith.constant 0 : i32
    %c0_i32_0 = arith.constant 0 : i32
    %c0_i32_1 = arith.constant 0 : i32
    return %c0_i32, %c0_i32_0 : i32, i32
  }
  func.func @transform_11(%arg0: i32) -> (i32, i32) {
    %c0_i32 = arith.constant 0 : i32
    %c0_i32_0 = arith.constant 0 : i32
    %c0_i32_1 = arith.constant 0 : i32
    return %c0_i32, %c0_i32_0 : i32, i32
  }
  func.func @transform_12(%arg0: i32) -> (i32, i32) {
    %c0_i32 = arith.constant 0 : i32
    %c0_i32_0 = arith.constant 0 : i32
    %c0_i32_1 = arith.constant 0 : i32
    return %c0_i32, %c0_i32_0 : i32, i32
  }
  func.func @transform_13(%arg0: i32) -> (i32, i32) {
    %c0_i32 = arith.constant 0 : i32
    %c0_i32_0 = arith.constant 0 : i32
    %c0_i32_1 = arith.constant 0 : i32
    return %c0_i32, %c0_i32_0 : i32, i32
  }
  func.func @transform_14(%arg0: i32) -> (i32, i32) {
    %c0_i32 = arith.constant 0 : i32
    %c0_i32_0 = arith.constant 0 : i32
    %c0_i32_1 = arith.constant 0 : i32
    return %c0_i32, %c0_i32_0 : i32, i32
  }
  func.func @transform_15(%arg0: i32) -> (i32, i32) {
    %c0_i32 = arith.constant 0 : i32
    %c0_i32_0 = arith.constant 0 : i32
    %c0_i32_1 = arith.constant 0 : i32
    return %c0_i32, %c0_i32_0 : i32, i32
  }
  func.func @transform_16(%arg0: i32) -> (i32, i32) {
    %c0_i32 = arith.constant 0 : i32
    %c0_i32_0 = arith.constant 0 : i32
    %c0_i32_1 = arith.constant 0 : i32
    return %c0_i32, %c0_i32_0 : i32, i32
  }
  func.func @transform_17(%arg0: i32) -> (i32, i32, i32) {
    %c0_i32 = arith.constant 0 : i32
    %c0_i32_0 = arith.constant 0 : i32
    %c0_i32_1 = arith.constant 0 : i32
    return %arg0, %c0_i32, %c0_i32_0 : i32, i32, i32
  }
  func.func @transform_18(%arg0: i32) -> (i32, i32, i32) {
    %c0_i32 = arith.constant 0 : i32
    %c0_i32_0 = arith.constant 0 : i32
    %c0_i32_1 = arith.constant 0 : i32
    return %arg0, %c0_i32, %c0_i32_0 : i32, i32, i32
  }
}

</mosaic_0001>

<llo_original>
// kernel: _lambda_.3
$region0: #{_lambda_.3}
  #allocation0 [shape = 'u32[]', space=smem, size = 0x4, offset = 0x4, fixed_abs, tag = 'smem constant byte address 0x4 - core index']
  #allocation1 [shape = 'u32[72,128]{1,0:T(1,128)}', space=vmem, size = 0x9000, scoped, tag = 'internal scratch']
  #allocation2 [shape = 'f32[24,128]{1,0:T(8,128)}', space=vmem, size = 0x3000, scoped, tag = 'scratch operand']
  %s0 = inlined_call_operand.vmem [shape: f32[2,8,128], index: 0, kind: input, shape index: {}]
  %s1 = inlined_call_operand.hbm [shape: bf16[128,128], index: 1, kind: input, shape index: {}]
  %s2 = inlined_call_operand.vmem [shape: f32[1,128], index: 2, kind: input, shape index: {}]
  %s3 = inlined_call_operand.hbm [shape: bf16[384,256], index: 3, kind: input, shape index: {}]
  %s4 = inlined_call_operand.vmem [shape: f32[1,256], index: 4, kind: input, shape index: {}]
  %s5 = inlined_call_operand.hbm [shape: bf16[384,256], index: 5, kind: input, shape index: {}]
  %s6 = inlined_call_operand.vmem [shape: f32[1,256], index: 6, kind: input, shape index: {}]
  %s7 = inlined_call_operand.hbm [shape: bf16[128,256], index: 7, kind: input, shape index: {}]
  %s8 = inlined_call_operand.vmem [shape: f32[1,256], index: 8, kind: input, shape index: {}]
  %s9 = inlined_call_operand.vmem [shape: bf16[2,8,256], index: 9, kind: output, shape index: {}]
  %s10 = sld [smem:[#allocation0]]
  $region85: #{_lambda_.3} parent=0
    _
  %s12 = ssub.s32 1, %s10
  %s13 = scalar_select 0, %s12, %s10
  $region1: #{_lambda_.3} parent=0
    #allocation3 [shape = 'u8[32768]{0}', space=vmem, size = 0x8000, scoped, tag = 'input window, operand 1, single buffered']
    #allocation4 [shape = 's32[2]{0}', space=sflag, size = 0x8, scoped, tag = 'scoped memory for _lambda_.3']
    #allocation5 [shape = 'u8[196608]{0}', space=vmem, size = 0x30000, scoped, tag = 'input window, operand 3, single buffered']
    #allocation6 [shape = 's32[1]{0}', space=sflag, size = 0x4, scoped, tag = 'scoped memory for _lambda_.3']
    #allocation7 [shape = 'u8[196608]{0}', space=vmem, size = 0x30000, scoped, tag = 'input window, operand 5, single buffered']
    #allocation8 [shape = 'u8[65536]{0}', space=vmem, size = 0x10000, scoped, tag = 'input window, operand 7, single buffered']
    #allocation9 [shape = 's32[1]{0}', space=sflag, size = 0x4, scoped, tag = 'scoped memory for _lambda_.3']
    %14 = vsyncpa [#allocation4], 0
    %15 = vsyncpa [#allocation6], 0
    %16 = vsyncpa [#allocation9], 0
    loop: start=0, step=1, limit=4
    $region2: #{_lambda_.3} parent=1 // loop_pre_header
      _
    $region3: #{_lambda_.3} parent=1 // loop_header
      %s18 = sphi 0, %s22
      %p19 = scmp.ge.s32.totalorder %s18, 4
      %s28 = sphi 0, %s30
      %s31 = sphi 0, %s28
      %s32 = sphi 0, %s31
      %s48 = sphi 0, %s32
      %s52 = sphi 0, %s52
      %s54 = sphi 0, %s52
      %s55 = sphi 0, %s54
      %s69 = sphi 0, %s55
      %s73 = sphi 0, %s73
      %s75 = sphi 0, %s73
      %s76 = sphi 0, %s75
      %s90 = sphi 0, %s76
      %s94 = sphi 0, %s94
      %s96 = sphi 0, %s94
      %s97 = sphi 0, %s96
      %s111 = sphi 0, %s97
      %s115 = sphi 0, %s115
      %s117 = sphi 0, %s115
      %s118 = sphi 0, %s117
      %s132 = sphi 0, %s118
      %s136 = sphi 0, %s136
      %s138 = sphi 0, %s136
      %s139 = sphi 0, %s138
      %s153 = sphi 0, %s139
      %s157 = sphi 0, %s157
      %s159 = sphi 0, %s157
      %s160 = sphi 0, %s159
      %s174 = sphi 0, %s160
      %s178 = sphi 0, %s178
      %s180 = sphi 0, %s178
      %s181 = sphi 0, %s180
      %s195 = sphi 0, %s181
      %s199 = sphi 0, %s199
      %s201 = sphi 0, %s199
      %s202 = sphi 0, %s201
      %s216 = sphi 0, %s202
      %s222 = sphi 0, %s224
      %s225 = sphi 0, %s222
      %s226 = sphi 0, %s225
      %s242 = sphi 0, %s226
    $region4: #{_lambda_.3} parent=1 // loop_header_branch
      %21 = sbr.rel (%p19) target = $region8
    $region5: #{_lambda_.3} parent=1 // loop_body
      %s23 = ssub.s32 %s18, 1
      %s24 = ssub.s32 %s18, 2
      %s25 = sadd.s32 %s18, 1
      %s26 = ssub.s32 %s18, %s25
      %p27 = scmp.eq.s32.totalorder %s26, 0
      %s29 = sadd.s32 %s28, 1
      %s30 = scalar_select %p27, %s28, %s29
      %p33 = pneg %p27
      %p34 = scmp.eq.s32.totalorder %s18, 1
      %p35 = por %p33, %p34
      %p36 = scmp.ne.s32.totalorder %s28, %s31
      %p37 = scmp.eq.s32.totalorder %s18, 0
      %p38 = por %p36, %p37
      %p39 = scmp.ne.s32.totalorder %s28, %s31
      %p40 = scmp.eq.s32.totalorder %s23, 1
      %p41 = por %p39, %p40
      %p42 = scmp.ne.s32.totalorder %s31, %s32
      %p43 = scmp.eq.s32.totalorder %s23, 0
      %p44 = por %p42, %p43
      %p45 = scmp.ne.s32.totalorder %s31, %s32
      %p46 = scmp.eq.s32.totalorder %s24, 1
      %p47 = por %p45, %p46
      %p49 = scmp.ne.s32.totalorder %s32, %s48
      %p50 = scmp.eq.s32.totalorder %s24, 0
      %p51 = por %p49, %p50
      %s53 = sadd.s32 %s52, 1
      %p56 = scmp.eq.s32.totalorder %s18, 1
      %p57 = scmp.ne.s32.totalorder %s52, %s54
      %p58 = scmp.eq.s32.totalorder %s18, 0
      %p59 = por %p57, %p58
      %p60 = scmp.ne.s32.totalorder %s52, %s54
      %p61 = scmp.eq.s32.totalorder %s23, 1
      %p62 = por %p60, %p61
      %p63 = scmp.ne.s32.totalorder %s54, %s55
      %p64 = scmp.eq.s32.totalorder %s23, 0
      %p65 = por %p63, %p64
      %p66 = scmp.ne.s32.totalorder %s54, %s55
      %p67 = scmp.eq.s32.totalorder %s24, 1
      %p68 = por %p66, %p67
      %p70 = scmp.ne.s32.totalorder %s55, %s69
      %p71 = scmp.eq.s32.totalorder %s24, 0
      %p72 = por %p70, %p71
      %s74 = sadd.s32 %s73, 1
      %p77 = scmp.eq.s32.totalorder %s18, 1
      %p78 = scmp.ne.s32.totalorder %s73, %s75
      %p79 = scmp.eq.s32.totalorder %s18, 0
      %p80 = por %p78, %p79
      %p81 = scmp.ne.s32.totalorder %s73, %s75
      %p82 = scmp.eq.s32.totalorder %s23, 1
      %p83 = por %p81, %p82
      %p84 = scmp.ne.s32.totalorder %s75, %s76
      %p85 = scmp.eq.s32.totalorder %s23, 0
      %p86 = por %p84, %p85
      %p87 = scmp.ne.s32.totalorder %s75, %s76
      %p88 = scmp.eq.s32.totalorder %s24, 1
      %p89 = por %p87, %p88
      %p91 = scmp.ne.s32.totalorder %s76, %s90
      %p92 = scmp.eq.s32.totalorder %s24, 0
      %p93 = por %p91, %p92
      %s95 = sadd.s32 %s94, 1
      %p98 = scmp.eq.s32.totalorder %s18, 1
      %p99 = scmp.ne.s32.totalorder %s94, %s96
      %p100 = scmp.eq.s32.totalorder %s18, 0
      %p101 = por %p99, %p100
      %p102 = scmp.ne.s32.totalorder %s94, %s96
      %p103 = scmp.eq.s32.totalorder %s23, 1
      %p104 = por %p102, %p103
      %p105 = scmp.ne.s32.totalorder %s96, %s97
      %p106 = scmp.eq.s32.totalorder %s23, 0
      %p107 = por %p105, %p106
      %p108 = scmp.ne.s32.totalorder %s96, %s97
      %p109 = scmp.eq.s32.totalorder %s24, 1
      %p110 = por %p108, %p109
      %p112 = scmp.ne.s32.totalorder %s97, %s111
      %p113 = scmp.eq.s32.totalorder %s24, 0
      %p114 = por %p112, %p113
      %s116 = sadd.s32 %s115, 1
      %p119 = scmp.eq.s32.totalorder %s18, 1
      %p120 = scmp.ne.s32.totalorder %s115, %s117
      %p121 = scmp.eq.s32.totalorder %s18, 0
      %p122 = por %p120, %p121
      %p123 = scmp.ne.s32.totalorder %s115, %s117
      %p124 = scmp.eq.s32.totalorder %s23, 1
      %p125 = por %p123, %p124
      %p126 = scmp.ne.s32.totalorder %s117, %s118
      %p127 = scmp.eq.s32.totalorder %s23, 0
      %p128 = por %p126, %p127
      %p129 = scmp.ne.s32.totalorder %s117, %s118
      %p130 = scmp.eq.s32.totalorder %s24, 1
      %p131 = por %p129, %p130
      %p133 = scmp.ne.s32.totalorder %s118, %s132
      %p134 = scmp.eq.s32.totalorder %s24, 0
      %p135 = por %p133, %p134
      %s137 = sadd.s32 %s136, 1
      %p140 = scmp.eq.s32.totalorder %s18, 1
      %p141 = scmp.ne.s32.totalorder %s136, %s138
      %p142 = scmp.eq.s32.totalorder %s18, 0
      %p143 = por %p141, %p142
      %p144 = scmp.ne.s32.totalorder %s136, %s138
      %p145 = scmp.eq.s32.totalorder %s23, 1
      %p146 = por %p144, %p145
      %p147 = scmp.ne.s32.totalorder %s138, %s139
      %p148 = scmp.eq.s32.totalorder %s23, 0
      %p149 = por %p147, %p148
      %p150 = scmp.ne.s32.totalorder %s138, %s139
      %p151 = scmp.eq.s32.totalorder %s24, 1
      %p152 = por %p150, %p151
      %p154 = scmp.ne.s32.totalorder %s139, %s153
      %p155 = scmp.eq.s32.totalorder %s24, 0
      %p156 = por %p154, %p155
      %s158 = sadd.s32 %s157, 1
      %p161 = scmp.eq.s32.totalorder %s18, 1
      %p162 = scmp.ne.s32.totalorder %s157, %s159
      %p163 = scmp.eq.s32.totalorder %s18, 0
      %p164 = por %p162, %p163
      %p165 = scmp.ne.s32.totalorder %s157, %s159
      %p166 = scmp.eq.s32.totalorder %s23, 1
      %p167 = por %p165, %p166
      %p168 = scmp.ne.s32.totalorder %s159, %s160
      %p169 = scmp.eq.s32.totalorder %s23, 0
      %p170 = por %p168, %p169
      %p171 = scmp.ne.s32.totalorder %s159, %s160
      %p172 = scmp.eq.s32.totalorder %s24, 1
      %p173 = por %p171, %p172
      %p175 = scmp.ne.s32.totalorder %s160, %s174
      %p176 = scmp.eq.s32.totalorder %s24, 0
      %p177 = por %p175, %p176
      %s179 = sadd.s32 %s178, 1
      %p182 = scmp.eq.s32.totalorder %s18, 1
      %p183 = scmp.ne.s32.totalorder %s178, %s180
      %p184 = scmp.eq.s32.totalorder %s18, 0
      %p185 = por %p183, %p184
      %p186 = scmp.ne.s32.totalorder %s178, %s180
      %p187 = scmp.eq.s32.totalorder %s23, 1
      %p188 = por %p186, %p187
      %p189 = scmp.ne.s32.totalorder %s180, %s181
      %p190 = scmp.eq.s32.totalorder %s23, 0
      %p191 = por %p189, %p190
      %p192 = scmp.ne.s32.totalorder %s180, %s181
      %p193 = scmp.eq.s32.totalorder %s24, 1
      %p194 = por %p192, %p193
      %p196 = scmp.ne.s32.totalorder %s181, %s195
      %p197 = scmp.eq.s32.totalorder %s24, 0
      %p198 = por %p196, %p197
      %s200 = sadd.s32 %s199, 1
      %p203 = scmp.eq.s32.totalorder %s18, 1
      %p204 = scmp.ne.s32.totalorder %s199, %s201
      %p205 = scmp.eq.s32.totalorder %s18, 0
      %p206 = por %p204, %p205
      %p207 = scmp.ne.s32.totalorder %s199, %s201
      %p208 = scmp.eq.s32.totalorder %s23, 1
      %p209 = por %p207, %p208
      %p210 = scmp.ne.s32.totalorder %s201, %s202
      %p211 = scmp.eq.s32.totalorder %s23, 0
      %p212 = por %p210, %p211
      %p213 = scmp.ne.s32.totalorder %s201, %s202
      %p214 = scmp.eq.s32.totalorder %s24, 1
      %p215 = por %p213, %p214
      %p217 = scmp.ne.s32.totalorder %s202, %s216
      %p218 = scmp.eq.s32.totalorder %s24, 0
      %p219 = por %p217, %p218
      %s220 = ssub.s32 %s18, %s25
      %p221 = scmp.eq.s32.totalorder %s220, 0
      %s223 = sadd.s32 %s222, 1
      %s224 = scalar_select %p221, %s222, %s223
      %p227 = pneg %p221
      %p228 = scmp.eq.s32.totalorder %s18, 1
      %p229 = por %p227, %p228
      %p230 = scmp.ne.s32.totalorder %s222, %s225
      %p231 = scmp.eq.s32.totalorder %s18, 0
      %p232 = por %p230, %p231
      %p233 = scmp.ne.s32.totalorder %s222, %s225
      %p234 = scmp.eq.s32.totalorder %s23, 1
      %p235 = por %p233, %p234
      %p236 = scmp.ne.s32.totalorder %s225, %s226
      %p237 = scmp.eq.s32.totalorder %s23, 0
      %p238 = por %p236, %p237
      %p239 = scmp.ne.s32.totalorder %s225, %s226
      %p240 = scmp.eq.s32.totalorder %s24, 1
      %p241 = por %p239, %p240
      %p243 = scmp.ne.s32.totalorder %s226, %s242
      %p244 = scmp.eq.s32.totalorder %s24, 0
      %p245 = por %p243, %p244
      %p246 = scmp.le.s32.totalorder 1, %s18
      %p247 = scmp.lt.s32.totalorder %s18, 3
      %p248 = pnand %p246, %p247
      %p249 = pneg %p248
      // Predicated region
      $region9: #{_lambda_.3} parent=5 // pred_check
        _
      $region10: #{_lambda_.3} parent=5 // pred_check_branch
        %251 = sbr.rel (%p248) target = $region12
      $region11: #{_lambda_.3} parent=5 // pred_region
        %s252 = ssub.s32 %s18, 1
        // Predicated region
        $region13: #{_lambda_.3} parent=11 // pred_check
          %p253 = pneg %p65
        $region14: #{_lambda_.3} parent=11 // pred_check_branch
          %255 = sbr.rel (%p253) target = $region16
        $region15: #{_lambda_.3} parent=11 // pred_region
          %257 = vsyncadd [#allocation4], 0
          %s258 = sshll.u32 %s1, 4
          %s259 = int_to_ptr.hbm [resolvable:$true] %s258
          %s260 = sshll.u32 [#allocation3], 4
          %s261 = int_to_ptr.vmem [resolvable:$true] %s260
          %266 = dma.hbm_to_vmem [thread:$0]  %s259, 1024, %s261, [#allocation4], 64, 64, 4
        $region16: #{_lambda_.3} parent=11 // pred_fallthru
          _
        // Predicated region
        $region17: #{_lambda_.3} parent=11 // pred_check
          %p267 = pneg %p86
        $region18: #{_lambda_.3} parent=11 // pred_check_branch
          %269 = sbr.rel (%p267) target = $region20
        $region19: #{_lambda_.3} parent=11 // pred_region
          _
        $region20: #{_lambda_.3} parent=11 // pred_fallthru
          _
        // Predicated region
        $region21: #{_lambda_.3} parent=11 // pred_check
          %p270 = pneg %p107
        $region22: #{_lambda_.3} parent=11 // pred_check_branch
          %272 = sbr.rel (%p270) target = $region24
        $region23: #{_lambda_.3} parent=11 // pred_region
          %274 = vsyncadd [#allocation6], 0
          %s275 = sshll.u32 %s3, 4
          %s276 = int_to_ptr.hbm [resolvable:$true] %s275
          %s277 = sshll.u32 [#allocation5], 4
          %s278 = int_to_ptr.vmem [resolvable:$true] %s277
          %283 = dma.hbm_to_vmem [thread:$0]  %s276, 6144, %s278, [#allocation6], 128, 128, 8
        $region24: #{_lambda_.3} parent=11 // pred_fallthru
          _
        // Predicated region
        $region25: #{_lambda_.3} parent=11 // pred_check
          %p284 = pneg %p128
        $region26: #{_lambda_.3} parent=11 // pred_check_branch
          %286 = sbr.rel (%p284) target = $region28
        $region27: #{_lambda_.3} parent=11 // pred_region
          _
        $region28: #{_lambda_.3} parent=11 // pred_fallthru
          _
        // Predicated region
        $region29: #{_lambda_.3} parent=11 // pred_check
          %p287 = pneg %p149
        $region30: #{_lambda_.3} parent=11 // pred_check_branch
          %289 = sbr.rel (%p287) target = $region32
        $region31: #{_lambda_.3} parent=11 // pred_region
          %291 = vsyncadd [#allocation6], 0
          %s292 = sshll.u32 %s5, 4
          %s293 = int_to_ptr.hbm [resolvable:$true] %s292
          %s294 = sshll.u32 [#allocation7], 4
          %s295 = int_to_ptr.vmem [resolvable:$true] %s294
          %300 = dma.hbm_to_vmem [thread:$0]  %s293, 6144, %s295, [#allocation6], 128, 128, 8
        $region32: #{_lambda_.3} parent=11 // pred_fallthru
          _
        // Predicated region
        $region33: #{_lambda_.3} parent=11 // pred_check
          %p301 = pneg %p170
        $region34: #{_lambda_.3} parent=11 // pred_check_branch
          %303 = sbr.rel (%p301) target = $region36
        $region35: #{_lambda_.3} parent=11 // pred_region
          _
        $region36: #{_lambda_.3} parent=11 // pred_fallthru
          _
        // Predicated region
        $region37: #{_lambda_.3} parent=11 // pred_check
          %p304 = pneg %p191
        $region38: #{_lambda_.3} parent=11 // pred_check_branch
          %306 = sbr.rel (%p304) target = $region40
        $region39: #{_lambda_.3} parent=11 // pred_region
          %308 = vsyncadd [#allocation9], 0
          %s309 = sshll.u32 %s7, 4
          %s310 = int_to_ptr.hbm [resolvable:$true] %s309
          %s311 = sshll.u32 [#allocation8], 4
          %s312 = int_to_ptr.vmem [resolvable:$true] %s311
          %317 = dma.hbm_to_vmem [thread:$0]  %s310, 2048, %s312, [#allocation9], 128, 128, 8
        $region40: #{_lambda_.3} parent=11 // pred_fallthru
          _
        // Predicated region
        $region41: #{_lambda_.3} parent=11 // pred_check
          %p318 = pneg %p212
        $region42: #{_lambda_.3} parent=11 // pred_check_branch
          %320 = sbr.rel (%p318) target = $region44
        $region43: #{_lambda_.3} parent=11 // pred_region
          _
        $region44: #{_lambda_.3} parent=11 // pred_fallthru
          _
      $region12: #{_lambda_.3} parent=5 // pred_fallthru
        _
      %p321 = scmp.lt.s32.totalorder %s18, 2
      // Predicated region
      $region45: #{_lambda_.3} parent=5 // pred_check
        %p322 = pneg %p321
      $region46: #{_lambda_.3} parent=5 // pred_check_branch
        %324 = sbr.rel (%p322) target = $region48
      $region47: #{_lambda_.3} parent=5 // pred_region
        // Predicated region
        $region49: #{_lambda_.3} parent=47 // pred_check
          %p325 = pneg %p38
        $region50: #{_lambda_.3} parent=47 // pred_check_branch
          %327 = sbr.rel (%p325) target = $region52
        $region51: #{_lambda_.3} parent=47 // pred_region
          %p328 = scmp.lt.s32.totalorder %s18, 1
          %s329 = scalar_select %p328, %s18, 1
          %s330 = smul.addr %s329, 8
          %s331 = scalar_lea.vmem %s0, %s330
        $region52: #{_lambda_.3} parent=47 // pred_fallthru
          _
      $region48: #{_lambda_.3} parent=5 // pred_fallthru
        _
      %p332 = scmp.le.s32.totalorder 1, %s18
      %p333 = scmp.lt.s32.totalorder %s18, 3
      %p334 = pnand %p332, %p333
      %p335 = pneg %p334
      // Predicated region
      $region53: #{_lambda_.3} parent=5 // pred_check
        _
      $region54: #{_lambda_.3} parent=5 // pred_check_branch
        %337 = sbr.rel (%p334) target = $region56
      $region55: #{_lambda_.3} parent=5 // pred_region
        %s338 = ssub.s32 %s18, 1
        // Predicated region
        $region57: #{_lambda_.3} parent=55 // pred_check
          %p339 = pneg %p65
        $region58: #{_lambda_.3} parent=55 // pred_check_branch
          %341 = sbr.rel (%p339) target = $region60
        $region59: #{_lambda_.3} parent=55 // pred_region
          %343 = dma.done [#allocation4], 1024
        $region60: #{_lambda_.3} parent=55 // pred_fallthru
          _
        // Predicated region
        $region61: #{_lambda_.3} parent=55 // pred_check
          %p344 = pneg %p107
        $region62: #{_lambda_.3} parent=55 // pred_check_branch
          %346 = sbr.rel (%p344) target = $region64
        $region63: #{_lambda_.3} parent=55 // pred_region
          %348 = dma.done [#allocation6], 6144
        $region64: #{_lambda_.3} parent=55 // pred_fallthru
          _
        // Predicated region
        $region65: #{_lambda_.3} parent=55 // pred_check
          %p349 = pneg %p149
        $region66: #{_lambda_.3} parent=55 // pred_check_branch
          %351 = sbr.rel (%p349) target = $region68
        $region67: #{_lambda_.3} parent=55 // pred_region
          %353 = dma.done [#allocation6], 6144
        $region68: #{_lambda_.3} parent=55 // pred_fallthru
          _
        // Predicated region
        $region69: #{_lambda_.3} parent=55 // pred_check
          %p354 = pneg %p191
        $region70: #{_lambda_.3} parent=55 // pred_check_branch
          %356 = sbr.rel (%p354) target = $region72
        $region71: #{_lambda_.3} parent=55 // pred_region
          %358 = dma.done [#allocation9], 2048
        $region72: #{_lambda_.3} parent=55 // pred_fallthru
          _
        %p359 = scmp.lt.s32.totalorder %s23, 1
        %s360 = scalar_select %p359, %s23, 1
        %s361 = smul.addr %s360, 8
        %s362 = scalar_lea.vmem %s0, %s361
        %p363 = pneg %p44
        %p364 = pneg %p41
        %p365 = pneg %p65
        %p366 = pneg %p62
        %p367 = pneg %p86
        %p368 = pneg %p83
        %p369 = pneg %p107
        %p370 = pneg %p104
        %p371 = pneg %p128
        %p372 = pneg %p125
        %p373 = pneg %p149
        %p374 = pneg %p146
        %p375 = pneg %p170
        %p376 = pneg %p167
        %p377 = pneg %p191
        %p378 = pneg %p188
        %p379 = pneg %p212
        %p380 = pneg %p209
        %p381 = pneg %p238
        %p382 = pneg %p235
        %p383 = scmp.lt.s32.totalorder %s23, 1
        %s384 = scalar_select %p383, %s23, 1
        %s385 = smul.addr %s384, 2
        %s386 = smul.addr %s385, 4
        %s387 = scalar_lea.vmem %s9, %s386
        %p388 = scmp.lt.s32.totalorder %s23, 1
        %s389 = scalar_select %p388, %s23, 1
        %s390 = smul.addr %s389, 8
        %s391 = scalar_lea.vmem %s0, %s390
        %p392 = scmp.lt.s32.totalorder %s23, 1
        %s393 = scalar_select %p392, %s23, 1
        %s394 = smul.addr %s393, 2
        %s395 = smul.addr %s394, 4
        %s396 = scalar_lea.vmem %s9, %s395
        %397 = vst [vmem:[#allocation2 + $0x5] sm:$0x7] 0.0
        %398 = vst [vmem:[#allocation2 + $0x10] sm:$0x7] 0.0
        %v399 = vld [vmem:[%s391] sm:$0xff]
        %v400 = vpack.c.bf16 %v399, %v399
        %v401 = vld [vmem:[#allocation3] sm:$0xf]
        %v402 = vld [vmem:[#allocation3 + $0x4] sm:$0xf]
        %v403 = vld [vmem:[#allocation3 + $0x8] sm:$0xf]
        %v404 = vld [vmem:[#allocation3 + $0xc] sm:$0xf]
        %v405 = vld [vmem:[#allocation3 + $0x10] sm:$0xf]
        %v406 = vld [vmem:[#allocation3 + $0x14] sm:$0xf]
        %v407 = vld [vmem:[#allocation3 + $0x18] sm:$0xf]
        %v408 = vld [vmem:[#allocation3 + $0x1c] sm:$0xf]
        %v409 = vld [vmem:[#allocation3 + $0x20] sm:$0xf]
        %v410 = vld [vmem:[#allocation3 + $0x24] sm:$0xf]
        %v411 = vld [vmem:[#allocation3 + $0x28] sm:$0xf]
        %v412 = vld [vmem:[#allocation3 + $0x2c] sm:$0xf]
        %v413 = vld [vmem:[#allocation3 + $0x30] sm:$0xf]
        %v414 = vld [vmem:[#allocation3 + $0x34] sm:$0xf]
        %v415 = vld [vmem:[#allocation3 + $0x38] sm:$0xf]
        %v416 = vld [vmem:[#allocation3 + $0x3c] sm:$0xf]
        %v417 = vld [vmem:[%s2] sm:$0x1]
        %v419 = vperm.slane %v417, 0
        %v437 = vunpack.c.l.b16 %v401
        %v438 = vunpack.c.l.b16 %v402
        %v439 = vunpack.c.l.b16 %v403
        %v440 = vunpack.c.l.b16 %v404
        %v441 = vunpack.c.l.b16 %v405
        %v442 = vunpack.c.l.b16 %v406
        %v443 = vunpack.c.l.b16 %v407
        %v444 = vunpack.c.l.b16 %v408
        %v445 = vunpack.c.l.b16 %v409
        %v446 = vunpack.c.l.b16 %v410
        %v447 = vunpack.c.l.b16 %v411
        %v448 = vunpack.c.l.b16 %v412
        %v449 = vunpack.c.l.b16 %v413
        %v450 = vunpack.c.l.b16 %v414
        %v451 = vunpack.c.l.b16 %v415
        %v452 = vunpack.c.l.b16 %v416
        %v453 = vpack.c.b16 %v438, %v437
        %v454 = vpack.c.b16 %v440, %v439
        %v455 = vpack.c.b16 %v442, %v441
        %v456 = vpack.c.b16 %v444, %v443
        %v457 = vpack.c.b16 %v446, %v445
        %v458 = vpack.c.b16 %v448, %v447
        %v459 = vpack.c.b16 %v450, %v449
        %v460 = vpack.c.b16 %v452, %v451
        %469 = vmatpush.bf16.msra.mxu0 %v460
        %470 = vmatpush.bf16.msra.mxu0 %v459
        %471 = vmatpush.bf16.msra.mxu0 %v458
        %472 = vmatpush.bf16.msra.mxu0 %v457
        %473 = vmatpush.bf16.msra.mxu0 %v456
        %474 = vmatpush.bf16.msra.mxu0 %v455
        %475 = vmatpush.bf16.msra.mxu0 %v454
        %476 = vmatpush.bf16.msra.mxu0 %v453
        %477 = vmatmul.bf16.gmra.mxu0 %v400
        %v478 = vpop.f32.mrf.mxu0
        %v479 = vadd.f32 %v419, %v478
        %v480 = vpop.f32.mrf.mxu0
        %481 = vdwg.mxu0
        %482 = vst [vmem:[#allocation2 + $0x8] sm:$0xff] %v479
        %v483 = vld [vmem:[#allocation2 + $0x7] sm:$0xff]
        %v484 = vld [vmem:[#allocation2 + $0x8] sm:$0xff]
        %v485 = vld [vmem:[#allocation2 + $0x9] sm:$0xff]
        %v486 = vpack.c.bf16 %v483, %v483
        %v487 = vpack.c.bf16 %v484, %v484
        %v488 = vpack.c.bf16 %v485, %v485
        %v489 = vld [vmem:[#allocation5] sm:$0xff]
        %v490 = vld [vmem:[#allocation5 + $0x8] sm:$0xff]
        %v491 = vld [vmem:[#allocation5 + $0x10] sm:$0xff]
        %v492 = vld [vmem:[#allocation5 + $0x18] sm:$0xff]
        %v493 = vld [vmem:[#allocation5 + $0x20] sm:$0xff]
        %v494 = vld [vmem:[#allocation5 + $0x28] sm:$0xff]
        %v495 = vld [vmem:[#allocation5 + $0x30] sm:$0xff]
        %v496 = vld [vmem:[#allocation5 + $0x38] sm:$0xff]
        %v497 = vld [vmem:[#allocation5 + $0x40] sm:$0xff]
        %v498 = vld [vmem:[#allocation5 + $0x48] sm:$0xff]
        %v499 = vld [vmem:[#allocation5 + $0x50] sm:$0xff]
        %v500 = vld [vmem:[#allocation5 + $0x58] sm:$0xff]
        %v501 = vld [vmem:[#allocation5 + $0x60] sm:$0xff]
        %v502 = vld [vmem:[#allocation5 + $0x68] sm:$0xff]
        %v503 = vld [vmem:[#allocation5 + $0x70] sm:$0xff]
        %v504 = vld [vmem:[#allocation5 + $0x78] sm:$0xff]
        %v505 = vld [vmem:[#allocation5 + $0x80] sm:$0xff]
        %v506 = vld [vmem:[#allocation5 + $0x88] sm:$0xff]
        %v507 = vld [vmem:[#allocation5 + $0x90] sm:$0xff]
        %v508 = vld [vmem:[#allocation5 + $0x98] sm:$0xff]
        %v509 = vld [vmem:[#allocation5 + $0xa0] sm:$0xff]
        %v510 = vld [vmem:[#allocation5 + $0xa8] sm:$0xff]
        %v511 = vld [vmem:[#allocation5 + $0xb0] sm:$0xff]
        %v512 = vld [vmem:[#allocation5 + $0xb8] sm:$0xff]
        %v513 = vld [vmem:[#allocation5 + $0xc0] sm:$0xff]
        %v514 = vld [vmem:[#allocation5 + $0xc8] sm:$0xff]
        %v515 = vld [vmem:[#allocation5 + $0xd0] sm:$0xff]
        %v516 = vld [vmem:[#allocation5 + $0xd8] sm:$0xff]
        %v517 = vld [vmem:[#allocation5 + $0xe0] sm:$0xff]
        %v518 = vld [vmem:[#allocation5 + $0xe8] sm:$0xff]
        %v519 = vld [vmem:[#allocation5 + $0xf0] sm:$0xff]
        %v520 = vld [vmem:[#allocation5 + $0xf8] sm:$0xff]
        %v521 = vld [vmem:[#allocation5 + $0x100] sm:$0xff]
        %v522 = vld [vmem:[#allocation5 + $0x108] sm:$0xff]
        %v523 = vld [vmem:[#allocation5 + $0x110] sm:$0xff]
        %v524 = vld [vmem:[#allocation5 + $0x118] sm:$0xff]
        %v525 = vld [vmem:[#allocation5 + $0x120] sm:$0xff]
        %v526 = vld [vmem:[#allocation5 + $0x128] sm:$0xff]
        %v527 = vld [vmem:[#allocation5 + $0x130] sm:$0xff]
        %v528 = vld [vmem:[#allocation5 + $0x138] sm:$0xff]
        %v529 = vld [vmem:[#allocation5 + $0x140] sm:$0xff]
        %v530 = vld [vmem:[#allocation5 + $0x148] sm:$0xff]
        %v531 = vld [vmem:[#allocation5 + $0x150] sm:$0xff]
        %v532 = vld [vmem:[#allocation5 + $0x158] sm:$0xff]
        %v533 = vld [vmem:[#allocation5 + $0x160] sm:$0xff]
        %v534 = vld [vmem:[#allocation5 + $0x168] sm:$0xff]
        %v535 = vld [vmem:[#allocation5 + $0x170] sm:$0xff]
        %v536 = vld [vmem:[#allocation5 + $0x178] sm:$0xff]
        %v537 = vld [vmem:[%s4] sm:$0x3]
        %v539 = vperm.slane %v537, 0
        %v540 = vperm.slane %v537, 1
        %v591 = vunpack.c.l.b16 %v489
        %v592 = vunpack.c.h.b16 %v489
        %v593 = vunpack.c.l.b16 %v490
        %v594 = vunpack.c.h.b16 %v490
        %v595 = vunpack.c.l.b16 %v491
        %v596 = vunpack.c.h.b16 %v491
        %v597 = vunpack.c.l.b16 %v492
        %v598 = vunpack.c.h.b16 %v492
        %v599 = vunpack.c.l.b16 %v493
        %v600 = vunpack.c.h.b16 %v493
        %v601 = vunpack.c.l.b16 %v494
        %v602 = vunpack.c.h.b16 %v494
        %v603 = vunpack.c.l.b16 %v495
        %v604 = vunpack.c.h.b16 %v495
        %v605 = vunpack.c.l.b16 %v496
        %v606 = vunpack.c.h.b16 %v496
        %v607 = vunpack.c.l.b16 %v497
        %v608 = vunpack.c.h.b16 %v497
        %v609 = vunpack.c.l.b16 %v498
        %v610 = vunpack.c.h.b16 %v498
        %v611 = vunpack.c.l.b16 %v499
        %v612 = vunpack.c.h.b16 %v499
        %v613 = vunpack.c.l.b16 %v500
        %v614 = vunpack.c.h.b16 %v500
        %v615 = vunpack.c.l.b16 %v501
        %v616 = vunpack.c.h.b16 %v501
        %v617 = vunpack.c.l.b16 %v502
        %v618 = vunpack.c.h.b16 %v502
        %v619 = vunpack.c.l.b16 %v503
        %v620 = vunpack.c.h.b16 %v503
        %v621 = vunpack.c.l.b16 %v504
        %v622 = vunpack.c.h.b16 %v504
        %v623 = vunpack.c.l.b16 %v505
        %v624 = vunpack.c.h.b16 %v505
        %v625 = vunpack.c.l.b16 %v506
        %v626 = vunpack.c.h.b16 %v506
        %v627 = vunpack.c.l.b16 %v507
        %v628 = vunpack.c.h.b16 %v507
        %v629 = vunpack.c.l.b16 %v508
        %v630 = vunpack.c.h.b16 %v508
        %v631 = vunpack.c.l.b16 %v509
        %v632 = vunpack.c.h.b16 %v509
        %v633 = vunpack.c.l.b16 %v510
        %v634 = vunpack.c.h.b16 %v510
        %v635 = vunpack.c.l.b16 %v511
        %v636 = vunpack.c.h.b16 %v511
        %v637 = vunpack.c.l.b16 %v512
        %v638 = vunpack.c.h.b16 %v512
        %v639 = vunpack.c.l.b16 %v513
        %v640 = vunpack.c.h.b16 %v513
        %v641 = vunpack.c.l.b16 %v514
        %v642 = vunpack.c.h.b16 %v514
        %v643 = vunpack.c.l.b16 %v515
        %v644 = vunpack.c.h.b16 %v515
        %v645 = vunpack.c.l.b16 %v516
        %v646 = vunpack.c.h.b16 %v516
        %v647 = vunpack.c.l.b16 %v517
        %v648 = vunpack.c.h.b16 %v517
        %v649 = vunpack.c.l.b16 %v518
        %v650 = vunpack.c.h.b16 %v518
        %v651 = vunpack.c.l.b16 %v519
        %v652 = vunpack.c.h.b16 %v519
        %v653 = vunpack.c.l.b16 %v520
        %v654 = vunpack.c.h.b16 %v520
        %v655 = vunpack.c.l.b16 %v521
        %v656 = vunpack.c.h.b16 %v521
        %v657 = vunpack.c.l.b16 %v522
        %v658 = vunpack.c.h.b16 %v522
        %v659 = vunpack.c.l.b16 %v523
        %v660 = vunpack.c.h.b16 %v523
        %v661 = vunpack.c.l.b16 %v524
        %v662 = vunpack.c.h.b16 %v524
        %v663 = vunpack.c.l.b16 %v525
        %v664 = vunpack.c.h.b16 %v525
        %v665 = vunpack.c.l.b16 %v526
        %v666 = vunpack.c.h.b16 %v526
        %v667 = vunpack.c.l.b16 %v527
        %v668 = vunpack.c.h.b16 %v527
        %v669 = vunpack.c.l.b16 %v528
        %v670 = vunpack.c.h.b16 %v528
        %v671 = vunpack.c.l.b16 %v529
        %v672 = vunpack.c.h.b16 %v529
        %v673 = vunpack.c.l.b16 %v530
        %v674 = vunpack.c.h.b16 %v530
        %v675 = vunpack.c.l.b16 %v531
        %v676 = vunpack.c.h.b16 %v531
        %v677 = vunpack.c.l.b16 %v532
        %v678 = vunpack.c.h.b16 %v532
        %v679 = vunpack.c.l.b16 %v533
        %v680 = vunpack.c.h.b16 %v533
        %v681 = vunpack.c.l.b16 %v534
        %v682 = vunpack.c.h.b16 %v534
        %v683 = vunpack.c.l.b16 %v535
        %v684 = vunpack.c.h.b16 %v535
        %v685 = vunpack.c.l.b16 %v536
        %v686 = vunpack.c.h.b16 %v536
        %v687 = vpack.c.b16 %v593, %v591
        %v688 = vpack.c.b16 %v594, %v592
        %v689 = vpack.c.b16 %v597, %v595
        %v690 = vpack.c.b16 %v598, %v596
        %v691 = vpack.c.b16 %v601, %v599
        %v692 = vpack.c.b16 %v602, %v600
        %v693 = vpack.c.b16 %v605, %v603
        %v694 = vpack.c.b16 %v606, %v604
        %v695 = vpack.c.b16 %v609, %v607
        %v696 = vpack.c.b16 %v610, %v608
        %v697 = vpack.c.b16 %v613, %v611
        %v698 = vpack.c.b16 %v614, %v612
        %v699 = vpack.c.b16 %v617, %v615
        %v700 = vpack.c.b16 %v618, %v616
        %v701 = vpack.c.b16 %v621, %v619
        %v702 = vpack.c.b16 %v622, %v620
        %v703 = vpack.c.b16 %v625, %v623
        %v704 = vpack.c.b16 %v626, %v624
        %v705 = vpack.c.b16 %v629, %v627
        %v706 = vpack.c.b16 %v630, %v628
        %v707 = vpack.c.b16 %v633, %v631
        %v708 = vpack.c.b16 %v634, %v632
        %v709 = vpack.c.b16 %v637, %v635
        %v710 = vpack.c.b16 %v638, %v636
        %v711 = vpack.c.b16 %v641, %v639
        %v712 = vpack.c.b16 %v642, %v640
        %v713 = vpack.c.b16 %v645, %v643
        %v714 = vpack.c.b16 %v646, %v644
        %v715 = vpack.c.b16 %v649, %v647
        %v716 = vpack.c.b16 %v650, %v648
        %v717 = vpack.c.b16 %v653, %v651
        %v718 = vpack.c.b16 %v654, %v652
        %v719 = vpack.c.b16 %v657, %v655
        %v720 = vpack.c.b16 %v658, %v656
        %v721 = vpack.c.b16 %v661, %v659
        %v722 = vpack.c.b16 %v662, %v660
        %v723 = vpack.c.b16 %v665, %v663
        %v724 = vpack.c.b16 %v666, %v664
        %v725 = vpack.c.b16 %v669, %v667
        %v726 = vpack.c.b16 %v670, %v668
        %v727 = vpack.c.b16 %v673, %v671
        %v728 = vpack.c.b16 %v674, %v672
        %v729 = vpack.c.b16 %v677, %v675
        %v730 = vpack.c.b16 %v678, %v676
        %v731 = vpack.c.b16 %v681, %v679
        %v732 = vpack.c.b16 %v682, %v680
        %v733 = vpack.c.b16 %v685, %v683
        %v734 = vpack.c.b16 %v686, %v684
        %783 = vmatpush.bf16.msra.mxu0 %v701
        %784 = vmatpush.bf16.msra.mxu0 %v699
        %785 = vmatpush.bf16.msra.mxu0 %v697
        %786 = vmatpush.bf16.msra.mxu0 %v695
        %787 = vmatpush.bf16.msra.mxu0 %v693
        %788 = vmatpush.bf16.msra.mxu0 %v691
        %789 = vmatpush.bf16.msra.mxu0 %v689
        %790 = vmatpush.bf16.msra.mxu0 %v687
        %791 = vmatmul.bf16.gmra.mxu0 %v486
        %v792 = vpop.f32.mrf.mxu0
        %v793 = vadd.f32 %v539, %v792
        %v794 = vpop.f32.mrf.mxu0
        %795 = vdwg.mxu0
        %796 = vmatpush.bf16.msra.mxu0 %v717
        %797 = vmatpush.bf16.msra.mxu0 %v715
        %798 = vmatpush.bf16.msra.mxu0 %v713
        %799 = vmatpush.bf16.msra.mxu0 %v711
        %800 = vmatpush.bf16.msra.mxu0 %v709
        %801 = vmatpush.bf16.msra.mxu0 %v707
        %802 = vmatpush.bf16.msra.mxu0 %v705
        %803 = vmatpush.bf16.msra.mxu0 %v703
        %804 = vmatmul.bf16.gmra.mxu0 %v487
        %v805 = vpop.f32.mrf.mxu0
        %v806 = vadd.f32 %v793, %v805
        %v807 = vpop.f32.mrf.mxu0
        %808 = vdwg.mxu0
        %809 = vmatpush.bf16.msra.mxu0 %v733
        %810 = vmatpush.bf16.msra.mxu0 %v731
        %811 = vmatpush.bf16.msra.mxu0 %v729
        %812 = vmatpush.bf16.msra.mxu0 %v727
        %813 = vmatpush.bf16.msra.mxu0 %v725
        %814 = vmatpush.bf16.msra.mxu0 %v723
        %815 = vmatpush.bf16.msra.mxu0 %v721
        %816 = vmatpush.bf16.msra.mxu0 %v719
        %817 = vmatmul.bf16.gmra.mxu0 %v488
        %v818 = vpop.f32.mrf.mxu0
        %v819 = vadd.f32 %v806, %v818
        %v820 = vpop.f32.mrf.mxu0
        %821 = vdwg.mxu0
        %822 = vmatpush.bf16.msra.mxu0 %v702
        %823 = vmatpush.bf16.msra.mxu0 %v700
        %824 = vmatpush.bf16.msra.mxu0 %v698
        %825 = vmatpush.bf16.msra.mxu0 %v696
        %826 = vmatpush.bf16.msra.mxu0 %v694
        %827 = vmatpush.bf16.msra.mxu0 %v692
        %828 = vmatpush.bf16.msra.mxu0 %v690
        %829 = vmatpush.bf16.msra.mxu0 %v688
        %830 = vmatmul.bf16.gmra.mxu0 %v486
        %v831 = vpop.f32.mrf.mxu0
        %v832 = vadd.f32 %v540, %v831
        %v833 = vpop.f32.mrf.mxu0
        %834 = vdwg.mxu0
        %835 = vmatpush.bf16.msra.mxu0 %v718
        %836 = vmatpush.bf16.msra.mxu0 %v716
        %837 = vmatpush.bf16.msra.mxu0 %v714
        %838 = vmatpush.bf16.msra.mxu0 %v712
        %839 = vmatpush.bf16.msra.mxu0 %v710
        %840 = vmatpush.bf16.msra.mxu0 %v708
        %841 = vmatpush.bf16.msra.mxu0 %v706
        %842 = vmatpush.bf16.msra.mxu0 %v704
        %843 = vmatmul.bf16.gmra.mxu0 %v487
        %v844 = vpop.f32.mrf.mxu0
        %v845 = vadd.f32 %v832, %v844
        %v846 = vpop.f32.mrf.mxu0
        %847 = vdwg.mxu0
        %848 = vmatpush.bf16.msra.mxu0 %v734
        %849 = vmatpush.bf16.msra.mxu0 %v732
        %850 = vmatpush.bf16.msra.mxu0 %v730
        %851 = vmatpush.bf16.msra.mxu0 %v728
        %852 = vmatpush.bf16.msra.mxu0 %v726
        %853 = vmatpush.bf16.msra.mxu0 %v724
        %854 = vmatpush.bf16.msra.mxu0 %v722
        %855 = vmatpush.bf16.msra.mxu0 %v720
        %856 = vmatmul.bf16.gmra.mxu0 %v488
        %v857 = vpop.f32.mrf.mxu0
        %v858 = vadd.f32 %v845, %v857
        %v859 = vpop.f32.mrf.mxu0
        %860 = vdwg.mxu0
        %v861 = vxor.u32 %v819, 2147483648
        %v862 = vmul.f32 %v861, 1.442695
        %v863 = vpow.pop %v862
        %v864 = vadd.f32 %v863, 1.0
        %v865 = vrcp.pop %v864
        %v866 = vmul.f32 %v864, %v865
        %v867 = vsub.f32 1.0, %v866
        %v868 = vmul.f32 %v865, %v867
        %v869 = vadd.f32 %v865, %v868
        %vm870 = vweird.f32 %v864
        %vm871 = vweird.f32 %v865
        %vm872 = vmor %vm870, %vm871
        %v873 = vsel %vm872, %v865, %v869
        %v874 = vand.u32 2147483647, %v864
        %vm875 = vcmp.eq.f32.partialorder %v874, 8.507059e+37
        %v876 = vand.u32 %v864, 2147483648
        %v877 = vor.u32 1.1754944e-38, %v876
        %v878 = vsel %vm875, %v877, %v873
        %v879 = vmul.f32 1.0, %v878
        %v880 = vsub.f32 %v858, %v479
        %v881 = vmul.f32 %v879, %v880
        %v882 = vadd.f32 %v479, %v881
        %883 = vst [vmem:[#allocation2 + $0x8] sm:$0xff] %v882
        %v884 = vld [vmem:[#allocation2 + $0x5] sm:$0xff]
        %v885 = vld [vmem:[#allocation2 + $0x8] sm:$0xff]
        %v886 = vld [vmem:[#allocation2 + $0xb] sm:$0xff]
        %v887 = vpack.c.bf16 %v884, %v884
        %v888 = vpack.c.bf16 %v885, %v885
        %v889 = vpack.c.bf16 %v886, %v886
        %v890 = vld [vmem:[#allocation7] sm:$0xff]
        %v891 = vld [vmem:[#allocation7 + $0x8] sm:$0xff]
        %v892 = vld [vmem:[#allocation7 + $0x10] sm:$0xff]
        %v893 = vld [vmem:[#allocation7 + $0x18] sm:$0xff]
        %v894 = vld [vmem:[#allocation7 + $0x20] sm:$0xff]
        %v895 = vld [vmem:[#allocation7 + $0x28] sm:$0xff]
        %v896 = vld [vmem:[#allocation7 + $0x30] sm:$0xff]
        %v897 = vld [vmem:[#allocation7 + $0x38] sm:$0xff]
        %v898 = vld [vmem:[#allocation7 + $0x40] sm:$0xff]
        %v899 = vld [vmem:[#allocation7 + $0x48] sm:$0xff]
        %v900 = vld [vmem:[#allocation7 + $0x50] sm:$0xff]
        %v901 = vld [vmem:[#allocation7 + $0x58] sm:$0xff]
        %v902 = vld [vmem:[#allocation7 + $0x60] sm:$0xff]
        %v903 = vld [vmem:[#allocation7 + $0x68] sm:$0xff]
        %v904 = vld [vmem:[#allocation7 + $0x70] sm:$0xff]
        %v905 = vld [vmem:[#allocation7 + $0x78] sm:$0xff]
        %v906 = vld [vmem:[#allocation7 + $0x80] sm:$0xff]
        %v907 = vld [vmem:[#allocation7 + $0x88] sm:$0xff]
        %v908 = vld [vmem:[#allocation7 + $0x90] sm:$0xff]
        %v909 = vld [vmem:[#allocation7 + $0x98] sm:$0xff]
        %v910 = vld [vmem:[#allocation7 + $0xa0] sm:$0xff]
        %v911 = vld [vmem:[#allocation7 + $0xa8] sm:$0xff]
        %v912 = vld [vmem:[#allocation7 + $0xb0] sm:$0xff]
        %v913 = vld [vmem:[#allocation7 + $0xb8] sm:$0xff]
        %v914 = vld [vmem:[#allocation7 + $0xc0] sm:$0xff]
        %v915 = vld [vmem:[#allocation7 + $0xc8] sm:$0xff]
        %v916 = vld [vmem:[#allocation7 + $0xd0] sm:$0xff]
        %v917 = vld [vmem:[#allocation7 + $0xd8] sm:$0xff]
        %v918 = vld [vmem:[#allocation7 + $0xe0] sm:$0xff]
        %v919 = vld [vmem:[#allocation7 + $0xe8] sm:$0xff]
        %v920 = vld [vmem:[#allocation7 + $0xf0] sm:$0xff]
        %v921 = vld [vmem:[#allocation7 + $0xf8] sm:$0xff]
        %v922 = vld [vmem:[#allocation7 + $0x100] sm:$0xff]
        %v923 = vld [vmem:[#allocation7 + $0x108] sm:$0xff]
        %v924 = vld [vmem:[#allocation7 + $0x110] sm:$0xff]
        %v925 = vld [vmem:[#allocation7 + $0x118] sm:$0xff]
        %v926 = vld [vmem:[#allocation7 + $0x120] sm:$0xff]
        %v927 = vld [vmem:[#allocation7 + $0x128] sm:$0xff]
        %v928 = vld [vmem:[#allocation7 + $0x130] sm:$0xff]
        %v929 = vld [vmem:[#allocation7 + $0x138] sm:$0xff]
        %v930 = vld [vmem:[#allocation7 + $0x140] sm:$0xff]
        %v931 = vld [vmem:[#allocation7 + $0x148] sm:$0xff]
        %v932 = vld [vmem:[#allocation7 + $0x150] sm:$0xff]
        %v933 = vld [vmem:[#allocation7 + $0x158] sm:$0xff]
        %v934 = vld [vmem:[#allocation7 + $0x160] sm:$0xff]
        %v935 = vld [vmem:[#allocation7 + $0x168] sm:$0xff]
        %v936 = vld [vmem:[#allocation7 + $0x170] sm:$0xff]
        %v937 = vld [vmem:[#allocation7 + $0x178] sm:$0xff]
        %v938 = vld [vmem:[%s6] sm:$0x3]
        %v940 = vperm.slane %v938, 0
        %v941 = vperm.slane %v938, 1
        %v992 = vunpack.c.l.b16 %v890
        %v993 = vunpack.c.h.b16 %v890
        %v994 = vunpack.c.l.b16 %v891
        %v995 = vunpack.c.h.b16 %v891
        %v996 = vunpack.c.l.b16 %v892
        %v997 = vunpack.c.h.b16 %v892
        %v998 = vunpack.c.l.b16 %v893
        %v999 = vunpack.c.h.b16 %v893
        %v1000 = vunpack.c.l.b16 %v894
        %v1001 = vunpack.c.h.b16 %v894
        %v1002 = vunpack.c.l.b16 %v895
        %v1003 = vunpack.c.h.b16 %v895
        %v1004 = vunpack.c.l.b16 %v896
        %v1005 = vunpack.c.h.b16 %v896
        %v1006 = vunpack.c.l.b16 %v897
        %v1007 = vunpack.c.h.b16 %v897
        %v1008 = vunpack.c.l.b16 %v898
        %v1009 = vunpack.c.h.b16 %v898
        %v1010 = vunpack.c.l.b16 %v899
        %v1011 = vunpack.c.h.b16 %v899
        %v1012 = vunpack.c.l.b16 %v900
        %v1013 = vunpack.c.h.b16 %v900
        %v1014 = vunpack.c.l.b16 %v901
        %v1015 = vunpack.c.h.b16 %v901
        %v1016 = vunpack.c.l.b16 %v902
        %v1017 = vunpack.c.h.b16 %v902
        %v1018 = vunpack.c.l.b16 %v903
        %v1019 = vunpack.c.h.b16 %v903
        %v1020 = vunpack.c.l.b16 %v904
        %v1021 = vunpack.c.h.b16 %v904
        %v1022 = vunpack.c.l.b16 %v905
        %v1023 = vunpack.c.h.b16 %v905
        %v1024 = vunpack.c.l.b16 %v906
        %v1025 = vunpack.c.h.b16 %v906
        %v1026 = vunpack.c.l.b16 %v907
        %v1027 = vunpack.c.h.b16 %v907
        %v1028 = vunpack.c.l.b16 %v908
        %v1029 = vunpack.c.h.b16 %v908
        %v1030 = vunpack.c.l.b16 %v909
        %v1031 = vunpack.c.h.b16 %v909
        %v1032 = vunpack.c.l.b16 %v910
        %v1033 = vunpack.c.h.b16 %v910
        %v1034 = vunpack.c.l.b16 %v911
        %v1035 = vunpack.c.h.b16 %v911
        %v1036 = vunpack.c.l.b16 %v912
        %v1037 = vunpack.c.h.b16 %v912
        %v1038 = vunpack.c.l.b16 %v913
        %v1039 = vunpack.c.h.b16 %v913
        %v1040 = vunpack.c.l.b16 %v914
        %v1041 = vunpack.c.h.b16 %v914
        %v1042 = vunpack.c.l.b16 %v915
        %v1043 = vunpack.c.h.b16 %v915
        %v1044 = vunpack.c.l.b16 %v916
        %v1045 = vunpack.c.h.b16 %v916
        %v1046 = vunpack.c.l.b16 %v917
        %v1047 = vunpack.c.h.b16 %v917
        %v1048 = vunpack.c.l.b16 %v918
        %v1049 = vunpack.c.h.b16 %v918
        %v1050 = vunpack.c.l.b16 %v919
        %v1051 = vunpack.c.h.b16 %v919
        %v1052 = vunpack.c.l.b16 %v920
        %v1053 = vunpack.c.h.b16 %v920
        %v1054 = vunpack.c.l.b16 %v921
        %v1055 = vunpack.c.h.b16 %v921
        %v1056 = vunpack.c.l.b16 %v922
        %v1057 = vunpack.c.h.b16 %v922
        %v1058 = vunpack.c.l.b16 %v923
        %v1059 = vunpack.c.h.b16 %v923
        %v1060 = vunpack.c.l.b16 %v924
        %v1061 = vunpack.c.h.b16 %v924
        %v1062 = vunpack.c.l.b16 %v925
        %v1063 = vunpack.c.h.b16 %v925
        %v1064 = vunpack.c.l.b16 %v926
        %v1065 = vunpack.c.h.b16 %v926
        %v1066 = vunpack.c.l.b16 %v927
        %v1067 = vunpack.c.h.b16 %v927
        %v1068 = vunpack.c.l.b16 %v928
        %v1069 = vunpack.c.h.b16 %v928
        %v1070 = vunpack.c.l.b16 %v929
        %v1071 = vunpack.c.h.b16 %v929
        %v1072 = vunpack.c.l.b16 %v930
        %v1073 = vunpack.c.h.b16 %v930
        %v1074 = vunpack.c.l.b16 %v931
        %v1075 = vunpack.c.h.b16 %v931
        %v1076 = vunpack.c.l.b16 %v932
        %v1077 = vunpack.c.h.b16 %v932
        %v1078 = vunpack.c.l.b16 %v933
        %v1079 = vunpack.c.h.b16 %v933
        %v1080 = vunpack.c.l.b16 %v934
        %v1081 = vunpack.c.h.b16 %v934
        %v1082 = vunpack.c.l.b16 %v935
        %v1083 = vunpack.c.h.b16 %v935
        %v1084 = vunpack.c.l.b16 %v936
        %v1085 = vunpack.c.h.b16 %v936
        %v1086 = vunpack.c.l.b16 %v937
        %v1087 = vunpack.c.h.b16 %v937
        %v1088 = vpack.c.b16 %v994, %v992
        %v1089 = vpack.c.b16 %v995, %v993
        %v1090 = vpack.c.b16 %v998, %v996
        %v1091 = vpack.c.b16 %v999, %v997
        %v1092 = vpack.c.b16 %v1002, %v1000
        %v1093 = vpack.c.b16 %v1003, %v1001
        %v1094 = vpack.c.b16 %v1006, %v1004
        %v1095 = vpack.c.b16 %v1007, %v1005
        %v1096 = vpack.c.b16 %v1010, %v1008
        %v1097 = vpack.c.b16 %v1011, %v1009
        %v1098 = vpack.c.b16 %v1014, %v1012
        %v1099 = vpack.c.b16 %v1015, %v1013
        %v1100 = vpack.c.b16 %v1018, %v1016
        %v1101 = vpack.c.b16 %v1019, %v1017
        %v1102 = vpack.c.b16 %v1022, %v1020
        %v1103 = vpack.c.b16 %v1023, %v1021
        %v1104 = vpack.c.b16 %v1026, %v1024
        %v1105 = vpack.c.b16 %v1027, %v1025
        %v1106 = vpack.c.b16 %v1030, %v1028
        %v1107 = vpack.c.b16 %v1031, %v1029
        %v1108 = vpack.c.b16 %v1034, %v1032
        %v1109 = vpack.c.b16 %v1035, %v1033
        %v1110 = vpack.c.b16 %v1038, %v1036
        %v1111 = vpack.c.b16 %v1039, %v1037
        %v1112 = vpack.c.b16 %v1042, %v1040
        %v1113 = vpack.c.b16 %v1043, %v1041
        %v1114 = vpack.c.b16 %v1046, %v1044
        %v1115 = vpack.c.b16 %v1047, %v1045
        %v1116 = vpack.c.b16 %v1050, %v1048
        %v1117 = vpack.c.b16 %v1051, %v1049
        %v1118 = vpack.c.b16 %v1054, %v1052
        %v1119 = vpack.c.b16 %v1055, %v1053
        %v1120 = vpack.c.b16 %v1058, %v1056
        %v1121 = vpack.c.b16 %v1059, %v1057
        %v1122 = vpack.c.b16 %v1062, %v1060
        %v1123 = vpack.c.b16 %v1063, %v1061
        %v1124 = vpack.c.b16 %v1066, %v1064
        %v1125 = vpack.c.b16 %v1067, %v1065
        %v1126 = vpack.c.b16 %v1070, %v1068
        %v1127 = vpack.c.b16 %v1071, %v1069
        %v1128 = vpack.c.b16 %v1074, %v1072
        %v1129 = vpack.c.b16 %v1075, %v1073
        %v1130 = vpack.c.b16 %v1078, %v1076
        %v1131 = vpack.c.b16 %v1079, %v1077
        %v1132 = vpack.c.b16 %v1082, %v1080
        %v1133 = vpack.c.b16 %v1083, %v1081
        %v1134 = vpack.c.b16 %v1086, %v1084
        %v1135 = vpack.c.b16 %v1087, %v1085
        %1184 = vmatpush.bf16.msra.mxu0 %v1102
        %1185 = vmatpush.bf16.msra.mxu0 %v1100
        %1186 = vmatpush.bf16.msra.mxu0 %v1098
        %1187 = vmatpush.bf16.msra.mxu0 %v1096
        %1188 = vmatpush.bf16.msra.mxu0 %v1094
        %1189 = vmatpush.bf16.msra.mxu0 %v1092
        %1190 = vmatpush.bf16.msra.mxu0 %v1090
        %1191 = vmatpush.bf16.msra.mxu0 %v1088
        %1192 = vmatmul.bf16.gmra.mxu0 %v887
        %v1193 = vpop.f32.mrf.mxu0
        %v1194 = vadd.f32 %v940, %v1193
        %v1195 = vpop.f32.mrf.mxu0
        %1196 = vdwg.mxu0
        %1197 = vmatpush.bf16.msra.mxu0 %v1118
        %1198 = vmatpush.bf16.msra.mxu0 %v1116
        %1199 = vmatpush.bf16.msra.mxu0 %v1114
        %1200 = vmatpush.bf16.msra.mxu0 %v1112
        %1201 = vmatpush.bf16.msra.mxu0 %v1110
        %1202 = vmatpush.bf16.msra.mxu0 %v1108
        %1203 = vmatpush.bf16.msra.mxu0 %v1106
        %1204 = vmatpush.bf16.msra.mxu0 %v1104
        %1205 = vmatmul.bf16.gmra.mxu0 %v888
        %v1206 = vpop.f32.mrf.mxu0
        %v1207 = vadd.f32 %v1194, %v1206
        %v1208 = vpop.f32.mrf.mxu0
        %1209 = vdwg.mxu0
        %1210 = vmatpush.bf16.msra.mxu0 %v1134
        %1211 = vmatpush.bf16.msra.mxu0 %v1132
        %1212 = vmatpush.bf16.msra.mxu0 %v1130
        %1213 = vmatpush.bf16.msra.mxu0 %v1128
        %1214 = vmatpush.bf16.msra.mxu0 %v1126
        %1215 = vmatpush.bf16.msra.mxu0 %v1124
        %1216 = vmatpush.bf16.msra.mxu0 %v1122
        %1217 = vmatpush.bf16.msra.mxu0 %v1120
        %1218 = vmatmul.bf16.gmra.mxu0 %v889
        %v1219 = vpop.f32.mrf.mxu0
        %v1220 = vadd.f32 %v1207, %v1219
        %v1221 = vpop.f32.mrf.mxu0
        %1222 = vdwg.mxu0
        %1223 = vmatpush.bf16.msra.mxu0 %v1103
        %1224 = vmatpush.bf16.msra.mxu0 %v1101
        %1225 = vmatpush.bf16.msra.mxu0 %v1099
        %1226 = vmatpush.bf16.msra.mxu0 %v1097
        %1227 = vmatpush.bf16.msra.mxu0 %v1095
        %1228 = vmatpush.bf16.msra.mxu0 %v1093
        %1229 = vmatpush.bf16.msra.mxu0 %v1091
        %1230 = vmatpush.bf16.msra.mxu0 %v1089
        %1231 = vmatmul.bf16.gmra.mxu0 %v887
        %v1232 = vpop.f32.mrf.mxu0
        %v1233 = vadd.f32 %v941, %v1232
        %v1234 = vpop.f32.mrf.mxu0
        %1235 = vdwg.mxu0
        %1236 = vmatpush.bf16.msra.mxu0 %v1119
        %1237 = vmatpush.bf16.msra.mxu0 %v1117
        %1238 = vmatpush.bf16.msra.mxu0 %v1115
        %1239 = vmatpush.bf16.msra.mxu0 %v1113
        %1240 = vmatpush.bf16.msra.mxu0 %v1111
        %1241 = vmatpush.bf16.msra.mxu0 %v1109
        %1242 = vmatpush.bf16.msra.mxu0 %v1107
        %1243 = vmatpush.bf16.msra.mxu0 %v1105
        %1244 = vmatmul.bf16.gmra.mxu0 %v888
        %v1245 = vpop.f32.mrf.mxu0
        %v1246 = vadd.f32 %v1233, %v1245
        %v1247 = vpop.f32.mrf.mxu0
        %1248 = vdwg.mxu0
        %1249 = vmatpush.bf16.msra.mxu0 %v1135
        %1250 = vmatpush.bf16.msra.mxu0 %v1133
        %1251 = vmatpush.bf16.msra.mxu0 %v1131
        %1252 = vmatpush.bf16.msra.mxu0 %v1129
        %1253 = vmatpush.bf16.msra.mxu0 %v1127
        %1254 = vmatpush.bf16.msra.mxu0 %v1125
        %1255 = vmatpush.bf16.msra.mxu0 %v1123
        %1256 = vmatpush.bf16.msra.mxu0 %v1121
        %1257 = vmatmul.bf16.gmra.mxu0 %v889
        %v1258 = vpop.f32.mrf.mxu0
        %v1259 = vadd.f32 %v1246, %v1258
        %v1260 = vpop.f32.mrf.mxu0
        %1261 = vdwg.mxu0
        %v1262 = vxor.u32 %v1220, 2147483648
        %v1263 = vmul.f32 %v1262, 1.442695
        %v1264 = vpow.pop %v1263
        %v1265 = vadd.f32 %v1264, 1.0
        %v1266 = vrcp.pop %v1265
        %v1267 = vmul.f32 %v1265, %v1266
        %v1268 = vsub.f32 1.0, %v1267
        %v1269 = vmul.f32 %v1266, %v1268
        %v1270 = vadd.f32 %v1266, %v1269
        %vm1271 = vweird.f32 %v1265
        %vm1272 = vweird.f32 %v1266
        %vm1273 = vmor %vm1271, %vm1272
        %v1274 = vsel %vm1273, %v1266, %v1270
        %v1275 = vand.u32 2147483647, %v1265
        %vm1276 = vcmp.eq.f32.partialorder %v1275, 8.507059e+37
        %v1277 = vand.u32 %v1265, 2147483648
        %v1278 = vor.u32 1.1754944e-38, %v1277
        %v1279 = vsel %vm1276, %v1278, %v1274
        %v1280 = vmul.f32 1.0, %v1279
        %v1281 = vsub.f32 %v1259, %v882
        %v1282 = vmul.f32 %v1280, %v1281
        %v1283 = vadd.f32 %v882, %v1282
        %v1284 = vpack.c.bf16 %v1283, %v1283
        %v1285 = vld [vmem:[#allocation8] sm:$0xff]
        %v1286 = vld [vmem:[#allocation8 + $0x8] sm:$0xff]
        %v1287 = vld [vmem:[#allocation8 + $0x10] sm:$0xff]
        %v1288 = vld [vmem:[#allocation8 + $0x18] sm:$0xff]
        %v1289 = vld [vmem:[#allocation8 + $0x20] sm:$0xff]
        %v1290 = vld [vmem:[#allocation8 + $0x28] sm:$0xff]
        %v1291 = vld [vmem:[#allocation8 + $0x30] sm:$0xff]
        %v1292 = vld [vmem:[#allocation8 + $0x38] sm:$0xff]
        %v1293 = vld [vmem:[#allocation8 + $0x40] sm:$0xff]
        %v1294 = vld [vmem:[#allocation8 + $0x48] sm:$0xff]
        %v1295 = vld [vmem:[#allocation8 + $0x50] sm:$0xff]
        %v1296 = vld [vmem:[#allocation8 + $0x58] sm:$0xff]
        %v1297 = vld [vmem:[#allocation8 + $0x60] sm:$0xff]
        %v1298 = vld [vmem:[#allocation8 + $0x68] sm:$0xff]
        %v1299 = vld [vmem:[#allocation8 + $0x70] sm:$0xff]
        %v1300 = vld [vmem:[#allocation8 + $0x78] sm:$0xff]
        %v1301 = vld [vmem:[%s8] sm:$0x3]
        %v1303 = vperm.slane %v1301, 0
        %v1304 = vperm.slane %v1301, 1
        %v1323 = vunpack.c.l.b16 %v1285
        %v1324 = vunpack.c.h.b16 %v1285
        %v1325 = vunpack.c.l.b16 %v1286
        %v1326 = vunpack.c.h.b16 %v1286
        %v1327 = vunpack.c.l.b16 %v1287
        %v1328 = vunpack.c.h.b16 %v1287
        %v1329 = vunpack.c.l.b16 %v1288
        %v1330 = vunpack.c.h.b16 %v1288
        %v1331 = vunpack.c.l.b16 %v1289
        %v1332 = vunpack.c.h.b16 %v1289
        %v1333 = vunpack.c.l.b16 %v1290
        %v1334 = vunpack.c.h.b16 %v1290
        %v1335 = vunpack.c.l.b16 %v1291
        %v1336 = vunpack.c.h.b16 %v1291
        %v1337 = vunpack.c.l.b16 %v1292
        %v1338 = vunpack.c.h.b16 %v1292
        %v1339 = vunpack.c.l.b16 %v1293
        %v1340 = vunpack.c.h.b16 %v1293
        %v1341 = vunpack.c.l.b16 %v1294
        %v1342 = vunpack.c.h.b16 %v1294
        %v1343 = vunpack.c.l.b16 %v1295
        %v1344 = vunpack.c.h.b16 %v1295
        %v1345 = vunpack.c.l.b16 %v1296
        %v1346 = vunpack.c.h.b16 %v1296
        %v1347 = vunpack.c.l.b16 %v1297
        %v1348 = vunpack.c.h.b16 %v1297
        %v1349 = vunpack.c.l.b16 %v1298
        %v1350 = vunpack.c.h.b16 %v1298
        %v1351 = vunpack.c.l.b16 %v1299
        %v1352 = vunpack.c.h.b16 %v1299
        %v1353 = vunpack.c.l.b16 %v1300
        %v1354 = vunpack.c.h.b16 %v1300
        %v1355 = vpack.c.b16 %v1325, %v1323
        %v1356 = vpack.c.b16 %v1326, %v1324
        %v1357 = vpack.c.b16 %v1329, %v1327
        %v1358 = vpack.c.b16 %v1330, %v1328
        %v1359 = vpack.c.b16 %v1333, %v1331
        %v1360 = vpack.c.b16 %v1334, %v1332
        %v1361 = vpack.c.b16 %v1337, %v1335
        %v1362 = vpack.c.b16 %v1338, %v1336
        %v1363 = vpack.c.b16 %v1341, %v1339
        %v1364 = vpack.c.b16 %v1342, %v1340
        %v1365 = vpack.c.b16 %v1345, %v1343
        %v1366 = vpack.c.b16 %v1346, %v1344
        %v1367 = vpack.c.b16 %v1349, %v1347
        %v1368 = vpack.c.b16 %v1350, %v1348
        %v1369 = vpack.c.b16 %v1353, %v1351
        %v1370 = vpack.c.b16 %v1354, %v1352
        %1387 = vmatpush.bf16.msra.mxu0 %v1369
        %1388 = vmatpush.bf16.msra.mxu0 %v1367
        %1389 = vmatpush.bf16.msra.mxu0 %v1365
        %1390 = vmatpush.bf16.msra.mxu0 %v1363
        %1391 = vmatpush.bf16.msra.mxu0 %v1361
        %1392 = vmatpush.bf16.msra.mxu0 %v1359
        %1393 = vmatpush.bf16.msra.mxu0 %v1357
        %1394 = vmatpush.bf16.msra.mxu0 %v1355
        %1395 = vmatmul.bf16.gmra.mxu0 %v1284
        %v1396 = vpop.f32.mrf.mxu0
        %v1397 = vadd.f32 %v1303, %v1396
        %v1398 = vpop.f32.mrf.mxu0
        %1399 = vdwg.mxu0
        %1400 = vmatpush.bf16.msra.mxu0 %v1370
        %1401 = vmatpush.bf16.msra.mxu0 %v1368
        %1402 = vmatpush.bf16.msra.mxu0 %v1366
        %1403 = vmatpush.bf16.msra.mxu0 %v1364
        %1404 = vmatpush.bf16.msra.mxu0 %v1362
        %1405 = vmatpush.bf16.msra.mxu0 %v1360
        %1406 = vmatpush.bf16.msra.mxu0 %v1358
        %1407 = vmatpush.bf16.msra.mxu0 %v1356
        %1408 = vmatmul.bf16.gmra.mxu0 %v1284
        %v1409 = vpop.f32.mrf.mxu0
        %v1410 = vadd.f32 %v1304, %v1409
        %v1411 = vpop.f32.mrf.mxu0
        %1412 = vdwg.mxu0
        %v1413 = vpack.c.bf16 %v1410, %v1397
        %1414 = vst [vmem:[%s396] sm:$0xff] %v1413
        %p1415 = scmp.lt.s32.totalorder %s23, 1
        %s1416 = scalar_select %p1415, %s23, 1
        %s1417 = smul.addr %s1416, 2
        %s1418 = smul.addr %s1417, 4
        %s1419 = scalar_lea.vmem %s9, %s1418
        // Predicated region
        $region73: #{_lambda_.3} parent=55 // pred_check
          %p1420 = pneg %p235
        $region74: #{_lambda_.3} parent=55 // pred_check_branch
          %1422 = sbr.rel (%p1420) target = $region76
        $region75: #{_lambda_.3} parent=55 // pred_region
          _
        $region76: #{_lambda_.3} parent=55 // pred_fallthru
          _
      $region56: #{_lambda_.3} parent=5 // pred_fallthru
        _
      %p1423 = scmp.le.s32.totalorder 2, %s18
      // Predicated region
      $region77: #{_lambda_.3} parent=5 // pred_check
        %p1424 = pneg %p1423
      $region78: #{_lambda_.3} parent=5 // pred_check_branch
        %1426 = sbr.rel (%p1424) target = $region80
      $region79: #{_lambda_.3} parent=5 // pred_region
        %s1427 = ssub.s32 %s18, 2
        // Predicated region
        $region81: #{_lambda_.3} parent=79 // pred_check
          %p1428 = pneg %p241
        $region82: #{_lambda_.3} parent=79 // pred_check_branch
          %1430 = sbr.rel (%p1428) target = $region84
        $region83: #{_lambda_.3} parent=79 // pred_region
          %p1431 = scmp.lt.s32.totalorder %s24, 1
          %s1432 = scalar_select %p1431, %s24, 1
          %s1433 = smul.addr %s1432, 2
          %s1434 = smul.addr %s1433, 4
          %s1435 = scalar_lea.vmem %s9, %s1434
        $region84: #{_lambda_.3} parent=79 // pred_fallthru
          _
      $region80: #{_lambda_.3} parent=5 // pred_fallthru
        _
    $region6: #{_lambda_.3} parent=1 // loop_footer
      %s22 = sadd.s32 1, %s18
    $region7: #{_lambda_.3} parent=1 // loop_footer_branch
      %17 = sbr.rel target = $region3
    $region8: #{_lambda_.3} parent=1 // loop_exit
      _
    %1436 = vsyncpa [#allocation4], 1
    %s1437 = scalar_lea.sflag [#allocation4], 1
    %1438 = vsyncpa %s1437, 1
    %1439 = vsyncpa [#allocation6], 1
    %1440 = vsyncpa [#allocation9], 1

// kernel: _lambda_.4
$region0: #{_lambda_.4}
  #allocation0 [shape = 'u32[]', space=smem, size = 0x4, offset = 0x4, fixed_abs, tag = 'smem constant byte address 0x4 - core index']
  #allocation1 [shape = 'u32[72,128]{1,0:T(1,128)}', space=vmem, size = 0x9000, scoped, tag = 'internal scratch']
  #allocation2 [shape = 'f32[32,128]{1,0:T(8,128)}', space=vmem, size = 0x4000, scoped, tag = 'scratch operand']
  %s0 = inlined_call_operand.vmem [shape: bf16[2,16,128], index: 0, kind: input, shape index: {}]
  %s1 = inlined_call_operand.hbm [shape: bf16[384,256], index: 1, kind: input, shape index: {}]
  %s2 = inlined_call_operand.vmem [shape: f32[1,256], index: 2, kind: input, shape index: {}]
  %s3 = inlined_call_operand.hbm [shape: bf16[384,256], index: 3, kind: input, shape index: {}]
  %s4 = inlined_call_operand.vmem [shape: f32[1,256], index: 4, kind: input, shape index: {}]
  %s5 = inlined_call_operand.hbm [shape: bf16[128,256], index: 5, kind: input, shape index: {}]
  %s6 = inlined_call_operand.vmem [shape: f32[1,256], index: 6, kind: input, shape index: {}]
  %s7 = inlined_call_operand.vmem [shape: bf16[2,16,256], index: 7, kind: output, shape index: {}]
  %s8 = sld [smem:[#allocation0]]
  $region73: #{_lambda_.4} parent=0
    _
  %s10 = ssub.s32 1, %s8
  %s11 = scalar_select 0, %s10, %s8
  $region1: #{_lambda_.4} parent=0
    #allocation3 [shape = 'u8[196608]{0}', space=vmem, size = 0x30000, scoped, tag = 'input window, operand 1, single buffered']
    #allocation4 [shape = 's32[2]{0}', space=sflag, size = 0x8, scoped, tag = 'scoped memory for _lambda_.4']
    #allocation5 [shape = 'u8[196608]{0}', space=vmem, size = 0x30000, scoped, tag = 'input window, operand 3, single buffered']
    #allocation6 [shape = 's32[1]{0}', space=sflag, size = 0x4, scoped, tag = 'scoped memory for _lambda_.4']
    #allocation7 [shape = 'u8[65536]{0}', space=vmem, size = 0x10000, scoped, tag = 'input window, operand 5, single buffered']
    %12 = vsyncpa [#allocation4], 0
    %13 = vsyncpa [#allocation6], 0
    loop: start=0, step=1, limit=4
    $region2: #{_lambda_.4} parent=1 // loop_pre_header
      _
    $region3: #{_lambda_.4} parent=1 // loop_header
      %s15 = sphi 0, %s19
      %p16 = scmp.ge.s32.totalorder %s15, 4
      %s25 = sphi 0, %s27
      %s28 = sphi 0, %s25
      %s29 = sphi 0, %s28
      %s45 = sphi 0, %s29
      %s49 = sphi 0, %s49
      %s51 = sphi 0, %s49
      %s52 = sphi 0, %s51
      %s66 = sphi 0, %s52
      %s70 = sphi 0, %s70
      %s72 = sphi 0, %s70
      %s73 = sphi 0, %s72
      %s87 = sphi 0, %s73
      %s91 = sphi 0, %s91
      %s93 = sphi 0, %s91
      %s94 = sphi 0, %s93
      %s108 = sphi 0, %s94
      %s112 = sphi 0, %s112
      %s114 = sphi 0, %s112
      %s115 = sphi 0, %s114
      %s129 = sphi 0, %s115
      %s133 = sphi 0, %s133
      %s135 = sphi 0, %s133
      %s136 = sphi 0, %s135
      %s150 = sphi 0, %s136
      %s154 = sphi 0, %s154
      %s156 = sphi 0, %s154
      %s157 = sphi 0, %s156
      %s171 = sphi 0, %s157
      %s177 = sphi 0, %s179
      %s180 = sphi 0, %s177
      %s181 = sphi 0, %s180
      %s197 = sphi 0, %s181
    $region4: #{_lambda_.4} parent=1 // loop_header_branch
      %18 = sbr.rel (%p16) target = $region8
    $region5: #{_lambda_.4} parent=1 // loop_body
      %s20 = ssub.s32 %s15, 1
      %s21 = ssub.s32 %s15, 2
      %s22 = sadd.s32 %s15, 1
      %s23 = ssub.s32 %s15, %s22
      %p24 = scmp.eq.s32.totalorder %s23, 0
      %s26 = sadd.s32 %s25, 1
      %s27 = scalar_select %p24, %s25, %s26
      %p30 = pneg %p24
      %p31 = scmp.eq.s32.totalorder %s15, 1
      %p32 = por %p30, %p31
      %p33 = scmp.ne.s32.totalorder %s25, %s28
      %p34 = scmp.eq.s32.totalorder %s15, 0
      %p35 = por %p33, %p34
      %p36 = scmp.ne.s32.totalorder %s25, %s28
      %p37 = scmp.eq.s32.totalorder %s20, 1
      %p38 = por %p36, %p37
      %p39 = scmp.ne.s32.totalorder %s28, %s29
      %p40 = scmp.eq.s32.totalorder %s20, 0
      %p41 = por %p39, %p40
      %p42 = scmp.ne.s32.totalorder %s28, %s29
      %p43 = scmp.eq.s32.totalorder %s21, 1
      %p44 = por %p42, %p43
      %p46 = scmp.ne.s32.totalorder %s29, %s45
      %p47 = scmp.eq.s32.totalorder %s21, 0
      %p48 = por %p46, %p47
      %s50 = sadd.s32 %s49, 1
      %p53 = scmp.eq.s32.totalorder %s15, 1
      %p54 = scmp.ne.s32.totalorder %s49, %s51
      %p55 = scmp.eq.s32.totalorder %s15, 0
      %p56 = por %p54, %p55
      %p57 = scmp.ne.s32.totalorder %s49, %s51
      %p58 = scmp.eq.s32.totalorder %s20, 1
      %p59 = por %p57, %p58
      %p60 = scmp.ne.s32.totalorder %s51, %s52
      %p61 = scmp.eq.s32.totalorder %s20, 0
      %p62 = por %p60, %p61
      %p63 = scmp.ne.s32.totalorder %s51, %s52
      %p64 = scmp.eq.s32.totalorder %s21, 1
      %p65 = por %p63, %p64
      %p67 = scmp.ne.s32.totalorder %s52, %s66
      %p68 = scmp.eq.s32.totalorder %s21, 0
      %p69 = por %p67, %p68
      %s71 = sadd.s32 %s70, 1
      %p74 = scmp.eq.s32.totalorder %s15, 1
      %p75 = scmp.ne.s32.totalorder %s70, %s72
      %p76 = scmp.eq.s32.totalorder %s15, 0
      %p77 = por %p75, %p76
      %p78 = scmp.ne.s32.totalorder %s70, %s72
      %p79 = scmp.eq.s32.totalorder %s20, 1
      %p80 = por %p78, %p79
      %p81 = scmp.ne.s32.totalorder %s72, %s73
      %p82 = scmp.eq.s32.totalorder %s20, 0
      %p83 = por %p81, %p82
      %p84 = scmp.ne.s32.totalorder %s72, %s73
      %p85 = scmp.eq.s32.totalorder %s21, 1
      %p86 = por %p84, %p85
      %p88 = scmp.ne.s32.totalorder %s73, %s87
      %p89 = scmp.eq.s32.totalorder %s21, 0
      %p90 = por %p88, %p89
      %s92 = sadd.s32 %s91, 1
      %p95 = scmp.eq.s32.totalorder %s15, 1
      %p96 = scmp.ne.s32.totalorder %s91, %s93
      %p97 = scmp.eq.s32.totalorder %s15, 0
      %p98 = por %p96, %p97
      %p99 = scmp.ne.s32.totalorder %s91, %s93
      %p100 = scmp.eq.s32.totalorder %s20, 1
      %p101 = por %p99, %p100
      %p102 = scmp.ne.s32.totalorder %s93, %s94
      %p103 = scmp.eq.s32.totalorder %s20, 0
      %p104 = por %p102, %p103
      %p105 = scmp.ne.s32.totalorder %s93, %s94
      %p106 = scmp.eq.s32.totalorder %s21, 1
      %p107 = por %p105, %p106
      %p109 = scmp.ne.s32.totalorder %s94, %s108
      %p110 = scmp.eq.s32.totalorder %s21, 0
      %p111 = por %p109, %p110
      %s113 = sadd.s32 %s112, 1
      %p116 = scmp.eq.s32.totalorder %s15, 1
      %p117 = scmp.ne.s32.totalorder %s112, %s114
      %p118 = scmp.eq.s32.totalorder %s15, 0
      %p119 = por %p117, %p118
      %p120 = scmp.ne.s32.totalorder %s112, %s114
      %p121 = scmp.eq.s32.totalorder %s20, 1
      %p122 = por %p120, %p121
      %p123 = scmp.ne.s32.totalorder %s114, %s115
      %p124 = scmp.eq.s32.totalorder %s20, 0
      %p125 = por %p123, %p124
      %p126 = scmp.ne.s32.totalorder %s114, %s115
      %p127 = scmp.eq.s32.totalorder %s21, 1
      %p128 = por %p126, %p127
      %p130 = scmp.ne.s32.totalorder %s115, %s129
      %p131 = scmp.eq.s32.totalorder %s21, 0
      %p132 = por %p130, %p131
      %s134 = sadd.s32 %s133, 1
      %p137 = scmp.eq.s32.totalorder %s15, 1
      %p138 = scmp.ne.s32.totalorder %s133, %s135
      %p139 = scmp.eq.s32.totalorder %s15, 0
      %p140 = por %p138, %p139
      %p141 = scmp.ne.s32.totalorder %s133, %s135
      %p142 = scmp.eq.s32.totalorder %s20, 1
      %p143 = por %p141, %p142
      %p144 = scmp.ne.s32.totalorder %s135, %s136
      %p145 = scmp.eq.s32.totalorder %s20, 0
      %p146 = por %p144, %p145
      %p147 = scmp.ne.s32.totalorder %s135, %s136
      %p148 = scmp.eq.s32.totalorder %s21, 1
      %p149 = por %p147, %p148
      %p151 = scmp.ne.s32.totalorder %s136, %s150
      %p152 = scmp.eq.s32.totalorder %s21, 0
      %p153 = por %p151, %p152
      %s155 = sadd.s32 %s154, 1
      %p158 = scmp.eq.s32.totalorder %s15, 1
      %p159 = scmp.ne.s32.totalorder %s154, %s156
      %p160 = scmp.eq.s32.totalorder %s15, 0
      %p161 = por %p159, %p160
      %p162 = scmp.ne.s32.totalorder %s154, %s156
      %p163 = scmp.eq.s32.totalorder %s20, 1
      %p164 = por %p162, %p163
      %p165 = scmp.ne.s32.totalorder %s156, %s157
      %p166 = scmp.eq.s32.totalorder %s20, 0
      %p167 = por %p165, %p166
      %p168 = scmp.ne.s32.totalorder %s156, %s157
      %p169 = scmp.eq.s32.totalorder %s21, 1
      %p170 = por %p168, %p169
      %p172 = scmp.ne.s32.totalorder %s157, %s171
      %p173 = scmp.eq.s32.totalorder %s21, 0
      %p174 = por %p172, %p173
      %s175 = ssub.s32 %s15, %s22
      %p176 = scmp.eq.s32.totalorder %s175, 0
      %s178 = sadd.s32 %s177, 1
      %s179 = scalar_select %p176, %s177, %s178
      %p182 = pneg %p176
      %p183 = scmp.eq.s32.totalorder %s15, 1
      %p184 = por %p182, %p183
      %p185 = scmp.ne.s32.totalorder %s177, %s180
      %p186 = scmp.eq.s32.totalorder %s15, 0
      %p187 = por %p185, %p186
      %p188 = scmp.ne.s32.totalorder %s177, %s180
      %p189 = scmp.eq.s32.totalorder %s20, 1
      %p190 = por %p188, %p189
      %p191 = scmp.ne.s32.totalorder %s180, %s181
      %p192 = scmp.eq.s32.totalorder %s20, 0
      %p193 = por %p191, %p192
      %p194 = scmp.ne.s32.totalorder %s180, %s181
      %p195 = scmp.eq.s32.totalorder %s21, 1
      %p196 = por %p194, %p195
      %p198 = scmp.ne.s32.totalorder %s181, %s197
      %p199 = scmp.eq.s32.totalorder %s21, 0
      %p200 = por %p198, %p199
      %p201 = scmp.le.s32.totalorder 1, %s15
      %p202 = scmp.lt.s32.totalorder %s15, 3
      %p203 = pnand %p201, %p202
      %p204 = pneg %p203
      // Predicated region
      $region9: #{_lambda_.4} parent=5 // pred_check
        _
      $region10: #{_lambda_.4} parent=5 // pred_check_branch
        %206 = sbr.rel (%p203) target = $region12
      $region11: #{_lambda_.4} parent=5 // pred_region
        %s207 = ssub.s32 %s15, 1
        // Predicated region
        $region13: #{_lambda_.4} parent=11 // pred_check
          %p208 = pneg %p62
        $region14: #{_lambda_.4} parent=11 // pred_check_branch
          %210 = sbr.rel (%p208) target = $region16
        $region15: #{_lambda_.4} parent=11 // pred_region
          %212 = vsyncadd [#allocation4], 0
          %s213 = sshll.u32 %s1, 4
          %s214 = int_to_ptr.hbm [resolvable:$true] %s213
          %s215 = sshll.u32 [#allocation3], 4
          %s216 = int_to_ptr.vmem [resolvable:$true] %s215
          %221 = dma.hbm_to_vmem [thread:$0]  %s214, 6144, %s216, [#allocation4], 128, 128, 8
        $region16: #{_lambda_.4} parent=11 // pred_fallthru
          _
        // Predicated region
        $region17: #{_lambda_.4} parent=11 // pred_check
          %p222 = pneg %p83
        $region18: #{_lambda_.4} parent=11 // pred_check_branch
          %224 = sbr.rel (%p222) target = $region20
        $region19: #{_lambda_.4} parent=11 // pred_region
          _
        $region20: #{_lambda_.4} parent=11 // pred_fallthru
          _
        // Predicated region
        $region21: #{_lambda_.4} parent=11 // pred_check
          %p225 = pneg %p104
        $region22: #{_lambda_.4} parent=11 // pred_check_branch
          %227 = sbr.rel (%p225) target = $region24
        $region23: #{_lambda_.4} parent=11 // pred_region
          %229 = vsyncadd [#allocation6], 0
          %s230 = sshll.u32 %s3, 4
          %s231 = int_to_ptr.hbm [resolvable:$true] %s230
          %s232 = sshll.u32 [#allocation5], 4
          %s233 = int_to_ptr.vmem [resolvable:$true] %s232
          %238 = dma.hbm_to_vmem [thread:$0]  %s231, 6144, %s233, [#allocation6], 128, 128, 8
        $region24: #{_lambda_.4} parent=11 // pred_fallthru
          _
        // Predicated region
        $region25: #{_lambda_.4} parent=11 // pred_check
          %p239 = pneg %p125
        $region26: #{_lambda_.4} parent=11 // pred_check_branch
          %241 = sbr.rel (%p239) target = $region28
        $region27: #{_lambda_.4} parent=11 // pred_region
          _
        $region28: #{_lambda_.4} parent=11 // pred_fallthru
          _
        // Predicated region
        $region29: #{_lambda_.4} parent=11 // pred_check
          %p242 = pneg %p146
        $region30: #{_lambda_.4} parent=11 // pred_check_branch
          %244 = sbr.rel (%p242) target = $region32
        $region31: #{_lambda_.4} parent=11 // pred_region
          %246 = vsyncadd [#allocation6], 0
          %s247 = sshll.u32 %s5, 4
          %s248 = int_to_ptr.hbm [resolvable:$true] %s247
          %s249 = sshll.u32 [#allocation7], 4
          %s250 = int_to_ptr.vmem [resolvable:$true] %s249
          %255 = dma.hbm_to_vmem [thread:$0]  %s248, 2048, %s250, [#allocation6], 128, 128, 8
        $region32: #{_lambda_.4} parent=11 // pred_fallthru
          _
        // Predicated region
        $region33: #{_lambda_.4} parent=11 // pred_check
          %p256 = pneg %p167
        $region34: #{_lambda_.4} parent=11 // pred_check_branch
          %258 = sbr.rel (%p256) target = $region36
        $region35: #{_lambda_.4} parent=11 // pred_region
          _
        $region36: #{_lambda_.4} parent=11 // pred_fallthru
          _
      $region12: #{_lambda_.4} parent=5 // pred_fallthru
        _
      %p259 = scmp.lt.s32.totalorder %s15, 2
      // Predicated region
      $region37: #{_lambda_.4} parent=5 // pred_check
        %p260 = pneg %p259
      $region38: #{_lambda_.4} parent=5 // pred_check_branch
        %262 = sbr.rel (%p260) target = $region40
      $region39: #{_lambda_.4} parent=5 // pred_region
        // Predicated region
        $region41: #{_lambda_.4} parent=39 // pred_check
          %p263 = pneg %p35
        $region42: #{_lambda_.4} parent=39 // pred_check_branch
          %265 = sbr.rel (%p263) target = $region44
        $region43: #{_lambda_.4} parent=39 // pred_region
          %p266 = scmp.lt.s32.totalorder %s15, 1
          %s267 = scalar_select %p266, %s15, 1
          %s268 = smul.addr %s267, 2
          %s269 = smul.addr %s268, 4
          %s270 = scalar_lea.vmem %s0, %s269
        $region44: #{_lambda_.4} parent=39 // pred_fallthru
          _
      $region40: #{_lambda_.4} parent=5 // pred_fallthru
        _
      %p271 = scmp.le.s32.totalorder 1, %s15
      %p272 = scmp.lt.s32.totalorder %s15, 3
      %p273 = pnand %p271, %p272
      %p274 = pneg %p273
      // Predicated region
      $region45: #{_lambda_.4} parent=5 // pred_check
        _
      $region46: #{_lambda_.4} parent=5 // pred_check_branch
        %276 = sbr.rel (%p273) target = $region48
      $region47: #{_lambda_.4} parent=5 // pred_region
        %s277 = ssub.s32 %s15, 1
        // Predicated region
        $region49: #{_lambda_.4} parent=47 // pred_check
          %p278 = pneg %p62
        $region50: #{_lambda_.4} parent=47 // pred_check_branch
          %280 = sbr.rel (%p278) target = $region52
        $region51: #{_lambda_.4} parent=47 // pred_region
          %282 = dma.done [#allocation4], 6144
        $region52: #{_lambda_.4} parent=47 // pred_fallthru
          _
        // Predicated region
        $region53: #{_lambda_.4} parent=47 // pred_check
          %p283 = pneg %p104
        $region54: #{_lambda_.4} parent=47 // pred_check_branch
          %285 = sbr.rel (%p283) target = $region56
        $region55: #{_lambda_.4} parent=47 // pred_region
          %287 = dma.done [#allocation6], 6144
        $region56: #{_lambda_.4} parent=47 // pred_fallthru
          _
        // Predicated region
        $region57: #{_lambda_.4} parent=47 // pred_check
          %p288 = pneg %p146
        $region58: #{_lambda_.4} parent=47 // pred_check_branch
          %290 = sbr.rel (%p288) target = $region60
        $region59: #{_lambda_.4} parent=47 // pred_region
          %292 = dma.done [#allocation6], 2048
        $region60: #{_lambda_.4} parent=47 // pred_fallthru
          _
        %p293 = scmp.lt.s32.totalorder %s20, 1
        %s294 = scalar_select %p293, %s20, 1
        %s295 = smul.addr %s294, 2
        %s296 = smul.addr %s295, 4
        %s297 = scalar_lea.vmem %s0, %s296
        %p298 = pneg %p41
        %p299 = pneg %p38
        %p300 = pneg %p62
        %p301 = pneg %p59
        %p302 = pneg %p83
        %p303 = pneg %p80
        %p304 = pneg %p104
        %p305 = pneg %p101
        %p306 = pneg %p125
        %p307 = pneg %p122
        %p308 = pneg %p146
        %p309 = pneg %p143
        %p310 = pneg %p167
        %p311 = pneg %p164
        %p312 = pneg %p193
        %p313 = pneg %p190
        %p314 = scmp.lt.s32.totalorder %s20, 1
        %s315 = scalar_select %p314, %s20, 1
        %s316 = smul.addr %s315, 4
        %s317 = smul.addr %s316, 4
        %s318 = scalar_lea.vmem %s7, %s317
        %p319 = scmp.lt.s32.totalorder %s20, 1
        %s320 = scalar_select %p319, %s20, 1
        %s321 = smul.addr %s320, 2
        %s322 = smul.addr %s321, 4
        %s323 = scalar_lea.vmem %s0, %s322
        %p324 = scmp.lt.s32.totalorder %s20, 1
        %s325 = scalar_select %p324, %s20, 1
        %s326 = smul.addr %s325, 4
        %s327 = smul.addr %s326, 4
        %s328 = scalar_lea.vmem %s7, %s327
        %329 = vst [vmem:[#allocation2 + $0x5] sm:$0x7] 0.0
        %330 = vst [vmem:[#allocation2 + $0x18] sm:$0x7] 0.0
        %v331 = vld [vmem:[%s323] sm:$0xf]
        %v332 = vld [vmem:[%s323 + $0x4] sm:$0xf]
        %v333 = vunpack.c.l.bf16 %v331
        %v334 = vunpack.c.l.bf16 %v332
        %335 = vst [vmem:[#allocation2 + $0x8] sm:$0xff] %v333
        %336 = vst [vmem:[#allocation2 + $0x10] sm:$0xff] %v334
        %v337 = vld [vmem:[#allocation2 + $0x7] sm:$0xff]
        %v338 = vld [vmem:[#allocation2 + $0xf] sm:$0xff]
        %v339 = vld [vmem:[#allocation2 + $0x8] sm:$0xff]
        %v340 = vld [vmem:[#allocation2 + $0x10] sm:$0xff]
        %v341 = vld [vmem:[#allocation2 + $0x9] sm:$0xff]
        %v342 = vld [vmem:[#allocation2 + $0x11] sm:$0xff]
        %v343 = vpack.c.bf16 %v338, %v337
        %v344 = vpack.c.bf16 %v340, %v339
        %v345 = vpack.c.bf16 %v342, %v341
        %v346 = vld [vmem:[#allocation3] sm:$0xff]
        %v347 = vld [vmem:[#allocation3 + $0x8] sm:$0xff]
        %v348 = vld [vmem:[#allocation3 + $0x10] sm:$0xff]
        %v349 = vld [vmem:[#allocation3 + $0x18] sm:$0xff]
        %v350 = vld [vmem:[#allocation3 + $0x20] sm:$0xff]
        %v351 = vld [vmem:[#allocation3 + $0x28] sm:$0xff]
        %v352 = vld [vmem:[#allocation3 + $0x30] sm:$0xff]
        %v353 = vld [vmem:[#allocation3 + $0x38] sm:$0xff]
        %v354 = vld [vmem:[#allocation3 + $0x40] sm:$0xff]
        %v355 = vld [vmem:[#allocation3 + $0x48] sm:$0xff]
        %v356 = vld [vmem:[#allocation3 + $0x50] sm:$0xff]
        %v357 = vld [vmem:[#allocation3 + $0x58] sm:$0xff]
        %v358 = vld [vmem:[#allocation3 + $0x60] sm:$0xff]
        %v359 = vld [vmem:[#allocation3 + $0x68] sm:$0xff]
        %v360 = vld [vmem:[#allocation3 + $0x70] sm:$0xff]
        %v361 = vld [vmem:[#allocation3 + $0x78] sm:$0xff]
        %v362 = vld [vmem:[#allocation3 + $0x80] sm:$0xff]
        %v363 = vld [vmem:[#allocation3 + $0x88] sm:$0xff]
        %v364 = vld [vmem:[#allocation3 + $0x90] sm:$0xff]
        %v365 = vld [vmem:[#allocation3 + $0x98] sm:$0xff]
        %v366 = vld [vmem:[#allocation3 + $0xa0] sm:$0xff]
        %v367 = vld [vmem:[#allocation3 + $0xa8] sm:$0xff]
        %v368 = vld [vmem:[#allocation3 + $0xb0] sm:$0xff]
        %v369 = vld [vmem:[#allocation3 + $0xb8] sm:$0xff]
        %v370 = vld [vmem:[#allocation3 + $0xc0] sm:$0xff]
        %v371 = vld [vmem:[#allocation3 + $0xc8] sm:$0xff]
        %v372 = vld [vmem:[#allocation3 + $0xd0] sm:$0xff]
        %v373 = vld [vmem:[#allocation3 + $0xd8] sm:$0xff]
        %v374 = vld [vmem:[#allocation3 + $0xe0] sm:$0xff]
        %v375 = vld [vmem:[#allocation3 + $0xe8] sm:$0xff]
        %v376 = vld [vmem:[#allocation3 + $0xf0] sm:$0xff]
        %v377 = vld [vmem:[#allocation3 + $0xf8] sm:$0xff]
        %v378 = vld [vmem:[#allocation3 + $0x100] sm:$0xff]
        %v379 = vld [vmem:[#allocation3 + $0x108] sm:$0xff]
        %v380 = vld [vmem:[#allocation3 + $0x110] sm:$0xff]
        %v381 = vld [vmem:[#allocation3 + $0x118] sm:$0xff]
        %v382 = vld [vmem:[#allocation3 + $0x120] sm:$0xff]
        %v383 = vld [vmem:[#allocation3 + $0x128] sm:$0xff]
        %v384 = vld [vmem:[#allocation3 + $0x130] sm:$0xff]
        %v385 = vld [vmem:[#allocation3 + $0x138] sm:$0xff]
        %v386 = vld [vmem:[#allocation3 + $0x140] sm:$0xff]
        %v387 = vld [vmem:[#allocation3 + $0x148] sm:$0xff]
        %v388 = vld [vmem:[#allocation3 + $0x150] sm:$0xff]
        %v389 = vld [vmem:[#allocation3 + $0x158] sm:$0xff]
        %v390 = vld [vmem:[#allocation3 + $0x160] sm:$0xff]
        %v391 = vld [vmem:[#allocation3 + $0x168] sm:$0xff]
        %v392 = vld [vmem:[#allocation3 + $0x170] sm:$0xff]
        %v393 = vld [vmem:[#allocation3 + $0x178] sm:$0xff]
        %v394 = vld [vmem:[%s2] sm:$0x3]
        %v396 = vperm.slane %v394, 0
        %v397 = vperm.slane %v394, 1
        %v448 = vunpack.c.l.b16 %v346
        %v449 = vunpack.c.h.b16 %v346
        %v450 = vunpack.c.l.b16 %v347
        %v451 = vunpack.c.h.b16 %v347
        %v452 = vunpack.c.l.b16 %v348
        %v453 = vunpack.c.h.b16 %v348
        %v454 = vunpack.c.l.b16 %v349
        %v455 = vunpack.c.h.b16 %v349
        %v456 = vunpack.c.l.b16 %v350
        %v457 = vunpack.c.h.b16 %v350
        %v458 = vunpack.c.l.b16 %v351
        %v459 = vunpack.c.h.b16 %v351
        %v460 = vunpack.c.l.b16 %v352
        %v461 = vunpack.c.h.b16 %v352
        %v462 = vunpack.c.l.b16 %v353
        %v463 = vunpack.c.h.b16 %v353
        %v464 = vunpack.c.l.b16 %v354
        %v465 = vunpack.c.h.b16 %v354
        %v466 = vunpack.c.l.b16 %v355
        %v467 = vunpack.c.h.b16 %v355
        %v468 = vunpack.c.l.b16 %v356
        %v469 = vunpack.c.h.b16 %v356
        %v470 = vunpack.c.l.b16 %v357
        %v471 = vunpack.c.h.b16 %v357
        %v472 = vunpack.c.l.b16 %v358
        %v473 = vunpack.c.h.b16 %v358
        %v474 = vunpack.c.l.b16 %v359
        %v475 = vunpack.c.h.b16 %v359
        %v476 = vunpack.c.l.b16 %v360
        %v477 = vunpack.c.h.b16 %v360
        %v478 = vunpack.c.l.b16 %v361
        %v479 = vunpack.c.h.b16 %v361
        %v480 = vunpack.c.l.b16 %v362
        %v481 = vunpack.c.h.b16 %v362
        %v482 = vunpack.c.l.b16 %v363
        %v483 = vunpack.c.h.b16 %v363
        %v484 = vunpack.c.l.b16 %v364
        %v485 = vunpack.c.h.b16 %v364
        %v486 = vunpack.c.l.b16 %v365
        %v487 = vunpack.c.h.b16 %v365
        %v488 = vunpack.c.l.b16 %v366
        %v489 = vunpack.c.h.b16 %v366
        %v490 = vunpack.c.l.b16 %v367
        %v491 = vunpack.c.h.b16 %v367
        %v492 = vunpack.c.l.b16 %v368
        %v493 = vunpack.c.h.b16 %v368
        %v494 = vunpack.c.l.b16 %v369
        %v495 = vunpack.c.h.b16 %v369
        %v496 = vunpack.c.l.b16 %v370
        %v497 = vunpack.c.h.b16 %v370
        %v498 = vunpack.c.l.b16 %v371
        %v499 = vunpack.c.h.b16 %v371
        %v500 = vunpack.c.l.b16 %v372
        %v501 = vunpack.c.h.b16 %v372
        %v502 = vunpack.c.l.b16 %v373
        %v503 = vunpack.c.h.b16 %v373
        %v504 = vunpack.c.l.b16 %v374
        %v505 = vunpack.c.h.b16 %v374
        %v506 = vunpack.c.l.b16 %v375
        %v507 = vunpack.c.h.b16 %v375
        %v508 = vunpack.c.l.b16 %v376
        %v509 = vunpack.c.h.b16 %v376
        %v510 = vunpack.c.l.b16 %v377
        %v511 = vunpack.c.h.b16 %v377
        %v512 = vunpack.c.l.b16 %v378
        %v513 = vunpack.c.h.b16 %v378
        %v514 = vunpack.c.l.b16 %v379
        %v515 = vunpack.c.h.b16 %v379
        %v516 = vunpack.c.l.b16 %v380
        %v517 = vunpack.c.h.b16 %v380
        %v518 = vunpack.c.l.b16 %v381
        %v519 = vunpack.c.h.b16 %v381
        %v520 = vunpack.c.l.b16 %v382
        %v521 = vunpack.c.h.b16 %v382
        %v522 = vunpack.c.l.b16 %v383
        %v523 = vunpack.c.h.b16 %v383
        %v524 = vunpack.c.l.b16 %v384
        %v525 = vunpack.c.h.b16 %v384
        %v526 = vunpack.c.l.b16 %v385
        %v527 = vunpack.c.h.b16 %v385
        %v528 = vunpack.c.l.b16 %v386
        %v529 = vunpack.c.h.b16 %v386
        %v530 = vunpack.c.l.b16 %v387
        %v531 = vunpack.c.h.b16 %v387
        %v532 = vunpack.c.l.b16 %v388
        %v533 = vunpack.c.h.b16 %v388
        %v534 = vunpack.c.l.b16 %v389
        %v535 = vunpack.c.h.b16 %v389
        %v536 = vunpack.c.l.b16 %v390
        %v537 = vunpack.c.h.b16 %v390
        %v538 = vunpack.c.l.b16 %v391
        %v539 = vunpack.c.h.b16 %v391
        %v540 = vunpack.c.l.b16 %v392
        %v541 = vunpack.c.h.b16 %v392
        %v542 = vunpack.c.l.b16 %v393
        %v543 = vunpack.c.h.b16 %v393
        %v544 = vpack.c.b16 %v450, %v448
        %v545 = vpack.c.b16 %v451, %v449
        %v546 = vpack.c.b16 %v454, %v452
        %v547 = vpack.c.b16 %v455, %v453
        %v548 = vpack.c.b16 %v458, %v456
        %v549 = vpack.c.b16 %v459, %v457
        %v550 = vpack.c.b16 %v462, %v460
        %v551 = vpack.c.b16 %v463, %v461
        %v552 = vpack.c.b16 %v466, %v464
        %v553 = vpack.c.b16 %v467, %v465
        %v554 = vpack.c.b16 %v470, %v468
        %v555 = vpack.c.b16 %v471, %v469
        %v556 = vpack.c.b16 %v474, %v472
        %v557 = vpack.c.b16 %v475, %v473
        %v558 = vpack.c.b16 %v478, %v476
        %v559 = vpack.c.b16 %v479, %v477
        %v560 = vpack.c.b16 %v482, %v480
        %v561 = vpack.c.b16 %v483, %v481
        %v562 = vpack.c.b16 %v486, %v484
        %v563 = vpack.c.b16 %v487, %v485
        %v564 = vpack.c.b16 %v490, %v488
        %v565 = vpack.c.b16 %v491, %v489
        %v566 = vpack.c.b16 %v494, %v492
        %v567 = vpack.c.b16 %v495, %v493
        %v568 = vpack.c.b16 %v498, %v496
        %v569 = vpack.c.b16 %v499, %v497
        %v570 = vpack.c.b16 %v502, %v500
        %v571 = vpack.c.b16 %v503, %v501
        %v572 = vpack.c.b16 %v506, %v504
        %v573 = vpack.c.b16 %v507, %v505
        %v574 = vpack.c.b16 %v510, %v508
        %v575 = vpack.c.b16 %v511, %v509
        %v576 = vpack.c.b16 %v514, %v512
        %v577 = vpack.c.b16 %v515, %v513
        %v578 = vpack.c.b16 %v518, %v516
        %v579 = vpack.c.b16 %v519, %v517
        %v580 = vpack.c.b16 %v522, %v520
        %v581 = vpack.c.b16 %v523, %v521
        %v582 = vpack.c.b16 %v526, %v524
        %v583 = vpack.c.b16 %v527, %v525
        %v584 = vpack.c.b16 %v530, %v528
        %v585 = vpack.c.b16 %v531, %v529
        %v586 = vpack.c.b16 %v534, %v532
        %v587 = vpack.c.b16 %v535, %v533
        %v588 = vpack.c.b16 %v538, %v536
        %v589 = vpack.c.b16 %v539, %v537
        %v590 = vpack.c.b16 %v542, %v540
        %v591 = vpack.c.b16 %v543, %v541
        %640 = vmatpush.bf16.msra.mxu0 %v558
        %641 = vmatpush.bf16.msra.mxu0 %v556
        %642 = vmatpush.bf16.msra.mxu0 %v554
        %643 = vmatpush.bf16.msra.mxu0 %v552
        %644 = vmatpush.bf16.msra.mxu0 %v550
        %645 = vmatpush.bf16.msra.mxu0 %v548
        %646 = vmatpush.bf16.msra.mxu0 %v546
        %647 = vmatpush.bf16.msra.mxu0 %v544
        %648 = vmatmul.bf16.gmra.mxu0 %v343
        %v649 = vpop.f32.mrf.mxu0
        %v650 = vadd.f32 %v396, %v649
        %v651 = vpop.f32.mrf.mxu0
        %v652 = vadd.f32 %v396, %v651
        %653 = vdwg.mxu0
        %654 = vmatpush.bf16.msra.mxu0 %v574
        %655 = vmatpush.bf16.msra.mxu0 %v572
        %656 = vmatpush.bf16.msra.mxu0 %v570
        %657 = vmatpush.bf16.msra.mxu0 %v568
        %658 = vmatpush.bf16.msra.mxu0 %v566
        %659 = vmatpush.bf16.msra.mxu0 %v564
        %660 = vmatpush.bf16.msra.mxu0 %v562
        %661 = vmatpush.bf16.msra.mxu0 %v560
        %662 = vmatmul.bf16.gmra.mxu0 %v344
        %v663 = vpop.f32.mrf.mxu0
        %v664 = vadd.f32 %v650, %v663
        %v665 = vpop.f32.mrf.mxu0
        %v666 = vadd.f32 %v652, %v665
        %667 = vdwg.mxu0
        %668 = vmatpush.bf16.msra.mxu0 %v590
        %669 = vmatpush.bf16.msra.mxu0 %v588
        %670 = vmatpush.bf16.msra.mxu0 %v586
        %671 = vmatpush.bf16.msra.mxu0 %v584
        %672 = vmatpush.bf16.msra.mxu0 %v582
        %673 = vmatpush.bf16.msra.mxu0 %v580
        %674 = vmatpush.bf16.msra.mxu0 %v578
        %675 = vmatpush.bf16.msra.mxu0 %v576
        %676 = vmatmul.bf16.gmra.mxu0 %v345
        %v677 = vpop.f32.mrf.mxu0
        %v678 = vadd.f32 %v664, %v677
        %v679 = vpop.f32.mrf.mxu0
        %v680 = vadd.f32 %v666, %v679
        %681 = vdwg.mxu0
        %682 = vmatpush.bf16.msra.mxu0 %v559
        %683 = vmatpush.bf16.msra.mxu0 %v557
        %684 = vmatpush.bf16.msra.mxu0 %v555
        %685 = vmatpush.bf16.msra.mxu0 %v553
        %686 = vmatpush.bf16.msra.mxu0 %v551
        %687 = vmatpush.bf16.msra.mxu0 %v549
        %688 = vmatpush.bf16.msra.mxu0 %v547
        %689 = vmatpush.bf16.msra.mxu0 %v545
        %690 = vmatmul.bf16.gmra.mxu0 %v343
        %v691 = vpop.f32.mrf.mxu0
        %v692 = vadd.f32 %v397, %v691
        %v693 = vpop.f32.mrf.mxu0
        %v694 = vadd.f32 %v397, %v693
        %695 = vdwg.mxu0
        %696 = vmatpush.bf16.msra.mxu0 %v575
        %697 = vmatpush.bf16.msra.mxu0 %v573
        %698 = vmatpush.bf16.msra.mxu0 %v571
        %699 = vmatpush.bf16.msra.mxu0 %v569
        %700 = vmatpush.bf16.msra.mxu0 %v567
        %701 = vmatpush.bf16.msra.mxu0 %v565
        %702 = vmatpush.bf16.msra.mxu0 %v563
        %703 = vmatpush.bf16.msra.mxu0 %v561
        %704 = vmatmul.bf16.gmra.mxu0 %v344
        %v705 = vpop.f32.mrf.mxu0
        %v706 = vadd.f32 %v692, %v705
        %v707 = vpop.f32.mrf.mxu0
        %v708 = vadd.f32 %v694, %v707
        %709 = vdwg.mxu0
        %710 = vmatpush.bf16.msra.mxu0 %v591
        %711 = vmatpush.bf16.msra.mxu0 %v589
        %712 = vmatpush.bf16.msra.mxu0 %v587
        %713 = vmatpush.bf16.msra.mxu0 %v585
        %714 = vmatpush.bf16.msra.mxu0 %v583
        %715 = vmatpush.bf16.msra.mxu0 %v581
        %716 = vmatpush.bf16.msra.mxu0 %v579
        %717 = vmatpush.bf16.msra.mxu0 %v577
        %718 = vmatmul.bf16.gmra.mxu0 %v345
        %v719 = vpop.f32.mrf.mxu0
        %v720 = vadd.f32 %v706, %v719
        %v721 = vpop.f32.mrf.mxu0
        %v722 = vadd.f32 %v708, %v721
        %723 = vdwg.mxu0
        %v724 = vxor.u32 %v678, 2147483648
        %v725 = vxor.u32 %v680, 2147483648
        %v726 = vmul.f32 %v724, 1.442695
        %v727 = vpow.pop %v726
        %v728 = vmul.f32 %v725, 1.442695
        %v729 = vpow.pop %v728
        %v730 = vadd.f32 %v727, 1.0
        %v731 = vadd.f32 %v729, 1.0
        %v732 = vrcp.pop %v730
        %v733 = vmul.f32 %v730, %v732
        %v734 = vsub.f32 1.0, %v733
        %v735 = vmul.f32 %v732, %v734
        %v736 = vadd.f32 %v732, %v735
        %vm737 = vweird.f32 %v730
        %vm738 = vweird.f32 %v732
        %vm739 = vmor %vm737, %vm738
        %v740 = vsel %vm739, %v732, %v736
        %v741 = vand.u32 2147483647, %v730
        %vm742 = vcmp.eq.f32.partialorder %v741, 8.507059e+37
        %v743 = vand.u32 %v730, 2147483648
        %v744 = vor.u32 1.1754944e-38, %v743
        %v745 = vsel %vm742, %v744, %v740
        %v746 = vmul.f32 1.0, %v745
        %v747 = vrcp.pop %v731
        %v748 = vmul.f32 %v731, %v747
        %v749 = vsub.f32 1.0, %v748
        %v750 = vmul.f32 %v747, %v749
        %v751 = vadd.f32 %v747, %v750
        %vm752 = vweird.f32 %v731
        %vm753 = vweird.f32 %v747
        %vm754 = vmor %vm752, %vm753
        %v755 = vsel %vm754, %v747, %v751
        %v756 = vand.u32 2147483647, %v731
        %vm757 = vcmp.eq.f32.partialorder %v756, 8.507059e+37
        %v758 = vand.u32 %v731, 2147483648
        %v759 = vor.u32 1.1754944e-38, %v758
        %v760 = vsel %vm757, %v759, %v755
        %v761 = vmul.f32 1.0, %v760
        %v762 = vsub.f32 %v720, %v333
        %v763 = vsub.f32 %v722, %v334
        %v764 = vmul.f32 %v746, %v762
        %v765 = vmul.f32 %v761, %v763
        %v766 = vadd.f32 %v333, %v764
        %v767 = vadd.f32 %v334, %v765
        %768 = vst [vmem:[#allocation2 + $0x8] sm:$0xff] %v766
        %769 = vst [vmem:[#allocation2 + $0x10] sm:$0xff] %v767
        %v770 = vld [vmem:[#allocation2 + $0x5] sm:$0xff]
        %v771 = vld [vmem:[#allocation2 + $0xd] sm:$0xff]
        %v772 = vld [vmem:[#allocation2 + $0x8] sm:$0xff]
        %v773 = vld [vmem:[#allocation2 + $0x10] sm:$0xff]
        %v774 = vld [vmem:[#allocation2 + $0xb] sm:$0xff]
        %v775 = vld [vmem:[#allocation2 + $0x13] sm:$0xff]
        %v776 = vpack.c.bf16 %v771, %v770
        %v777 = vpack.c.bf16 %v773, %v772
        %v778 = vpack.c.bf16 %v775, %v774
        %v779 = vld [vmem:[#allocation5] sm:$0xff]
        %v780 = vld [vmem:[#allocation5 + $0x8] sm:$0xff]
        %v781 = vld [vmem:[#allocation5 + $0x10] sm:$0xff]
        %v782 = vld [vmem:[#allocation5 + $0x18] sm:$0xff]
        %v783 = vld [vmem:[#allocation5 + $0x20] sm:$0xff]
        %v784 = vld [vmem:[#allocation5 + $0x28] sm:$0xff]
        %v785 = vld [vmem:[#allocation5 + $0x30] sm:$0xff]
        %v786 = vld [vmem:[#allocation5 + $0x38] sm:$0xff]
        %v787 = vld [vmem:[#allocation5 + $0x40] sm:$0xff]
        %v788 = vld [vmem:[#allocation5 + $0x48] sm:$0xff]
        %v789 = vld [vmem:[#allocation5 + $0x50] sm:$0xff]
        %v790 = vld [vmem:[#allocation5 + $0x58] sm:$0xff]
        %v791 = vld [vmem:[#allocation5 + $0x60] sm:$0xff]
        %v792 = vld [vmem:[#allocation5 + $0x68] sm:$0xff]
        %v793 = vld [vmem:[#allocation5 + $0x70] sm:$0xff]
        %v794 = vld [vmem:[#allocation5 + $0x78] sm:$0xff]
        %v795 = vld [vmem:[#allocation5 + $0x80] sm:$0xff]
        %v796 = vld [vmem:[#allocation5 + $0x88] sm:$0xff]
        %v797 = vld [vmem:[#allocation5 + $0x90] sm:$0xff]
        %v798 = vld [vmem:[#allocation5 + $0x98] sm:$0xff]
        %v799 = vld [vmem:[#allocation5 + $0xa0] sm:$0xff]
        %v800 = vld [vmem:[#allocation5 + $0xa8] sm:$0xff]
        %v801 = vld [vmem:[#allocation5 + $0xb0] sm:$0xff]
        %v802 = vld [vmem:[#allocation5 + $0xb8] sm:$0xff]
        %v803 = vld [vmem:[#allocation5 + $0xc0] sm:$0xff]
        %v804 = vld [vmem:[#allocation5 + $0xc8] sm:$0xff]
        %v805 = vld [vmem:[#allocation5 + $0xd0] sm:$0xff]
        %v806 = vld [vmem:[#allocation5 + $0xd8] sm:$0xff]
        %v807 = vld [vmem:[#allocation5 + $0xe0] sm:$0xff]
        %v808 = vld [vmem:[#allocation5 + $0xe8] sm:$0xff]
        %v809 = vld [vmem:[#allocation5 + $0xf0] sm:$0xff]
        %v810 = vld [vmem:[#allocation5 + $0xf8] sm:$0xff]
        %v811 = vld [vmem:[#allocation5 + $0x100] sm:$0xff]
        %v812 = vld [vmem:[#allocation5 + $0x108] sm:$0xff]
        %v813 = vld [vmem:[#allocation5 + $0x110] sm:$0xff]
        %v814 = vld [vmem:[#allocation5 + $0x118] sm:$0xff]
        %v815 = vld [vmem:[#allocation5 + $0x120] sm:$0xff]
        %v816 = vld [vmem:[#allocation5 + $0x128] sm:$0xff]
        %v817 = vld [vmem:[#allocation5 + $0x130] sm:$0xff]
        %v818 = vld [vmem:[#allocation5 + $0x138] sm:$0xff]
        %v819 = vld [vmem:[#allocation5 + $0x140] sm:$0xff]
        %v820 = vld [vmem:[#allocation5 + $0x148] sm:$0xff]
        %v821 = vld [vmem:[#allocation5 + $0x150] sm:$0xff]
        %v822 = vld [vmem:[#allocation5 + $0x158] sm:$0xff]
        %v823 = vld [vmem:[#allocation5 + $0x160] sm:$0xff]
        %v824 = vld [vmem:[#allocation5 + $0x168] sm:$0xff]
        %v825 = vld [vmem:[#allocation5 + $0x170] sm:$0xff]
        %v826 = vld [vmem:[#allocation5 + $0x178] sm:$0xff]
        %v827 = vld [vmem:[%s4] sm:$0x3]
        %v829 = vperm.slane %v827, 0
        %v830 = vperm.slane %v827, 1
        %v881 = vunpack.c.l.b16 %v779
        %v882 = vunpack.c.h.b16 %v779
        %v883 = vunpack.c.l.b16 %v780
        %v884 = vunpack.c.h.b16 %v780
        %v885 = vunpack.c.l.b16 %v781
        %v886 = vunpack.c.h.b16 %v781
        %v887 = vunpack.c.l.b16 %v782
        %v888 = vunpack.c.h.b16 %v782
        %v889 = vunpack.c.l.b16 %v783
        %v890 = vunpack.c.h.b16 %v783
        %v891 = vunpack.c.l.b16 %v784
        %v892 = vunpack.c.h.b16 %v784
        %v893 = vunpack.c.l.b16 %v785
        %v894 = vunpack.c.h.b16 %v785
        %v895 = vunpack.c.l.b16 %v786
        %v896 = vunpack.c.h.b16 %v786
        %v897 = vunpack.c.l.b16 %v787
        %v898 = vunpack.c.h.b16 %v787
        %v899 = vunpack.c.l.b16 %v788
        %v900 = vunpack.c.h.b16 %v788
        %v901 = vunpack.c.l.b16 %v789
        %v902 = vunpack.c.h.b16 %v789
        %v903 = vunpack.c.l.b16 %v790
        %v904 = vunpack.c.h.b16 %v790
        %v905 = vunpack.c.l.b16 %v791
        %v906 = vunpack.c.h.b16 %v791
        %v907 = vunpack.c.l.b16 %v792
        %v908 = vunpack.c.h.b16 %v792
        %v909 = vunpack.c.l.b16 %v793
        %v910 = vunpack.c.h.b16 %v793
        %v911 = vunpack.c.l.b16 %v794
        %v912 = vunpack.c.h.b16 %v794
        %v913 = vunpack.c.l.b16 %v795
        %v914 = vunpack.c.h.b16 %v795
        %v915 = vunpack.c.l.b16 %v796
        %v916 = vunpack.c.h.b16 %v796
        %v917 = vunpack.c.l.b16 %v797
        %v918 = vunpack.c.h.b16 %v797
        %v919 = vunpack.c.l.b16 %v798
        %v920 = vunpack.c.h.b16 %v798
        %v921 = vunpack.c.l.b16 %v799
        %v922 = vunpack.c.h.b16 %v799
        %v923 = vunpack.c.l.b16 %v800
        %v924 = vunpack.c.h.b16 %v800
        %v925 = vunpack.c.l.b16 %v801
        %v926 = vunpack.c.h.b16 %v801
        %v927 = vunpack.c.l.b16 %v802
        %v928 = vunpack.c.h.b16 %v802
        %v929 = vunpack.c.l.b16 %v803
        %v930 = vunpack.c.h.b16 %v803
        %v931 = vunpack.c.l.b16 %v804
        %v932 = vunpack.c.h.b16 %v804
        %v933 = vunpack.c.l.b16 %v805
        %v934 = vunpack.c.h.b16 %v805
        %v935 = vunpack.c.l.b16 %v806
        %v936 = vunpack.c.h.b16 %v806
        %v937 = vunpack.c.l.b16 %v807
        %v938 = vunpack.c.h.b16 %v807
        %v939 = vunpack.c.l.b16 %v808
        %v940 = vunpack.c.h.b16 %v808
        %v941 = vunpack.c.l.b16 %v809
        %v942 = vunpack.c.h.b16 %v809
        %v943 = vunpack.c.l.b16 %v810
        %v944 = vunpack.c.h.b16 %v810
        %v945 = vunpack.c.l.b16 %v811
        %v946 = vunpack.c.h.b16 %v811
        %v947 = vunpack.c.l.b16 %v812
        %v948 = vunpack.c.h.b16 %v812
        %v949 = vunpack.c.l.b16 %v813
        %v950 = vunpack.c.h.b16 %v813
        %v951 = vunpack.c.l.b16 %v814
        %v952 = vunpack.c.h.b16 %v814
        %v953 = vunpack.c.l.b16 %v815
        %v954 = vunpack.c.h.b16 %v815
        %v955 = vunpack.c.l.b16 %v816
        %v956 = vunpack.c.h.b16 %v816
        %v957 = vunpack.c.l.b16 %v817
        %v958 = vunpack.c.h.b16 %v817
        %v959 = vunpack.c.l.b16 %v818
        %v960 = vunpack.c.h.b16 %v818
        %v961 = vunpack.c.l.b16 %v819
        %v962 = vunpack.c.h.b16 %v819
        %v963 = vunpack.c.l.b16 %v820
        %v964 = vunpack.c.h.b16 %v820
        %v965 = vunpack.c.l.b16 %v821
        %v966 = vunpack.c.h.b16 %v821
        %v967 = vunpack.c.l.b16 %v822
        %v968 = vunpack.c.h.b16 %v822
        %v969 = vunpack.c.l.b16 %v823
        %v970 = vunpack.c.h.b16 %v823
        %v971 = vunpack.c.l.b16 %v824
        %v972 = vunpack.c.h.b16 %v824
        %v973 = vunpack.c.l.b16 %v825
        %v974 = vunpack.c.h.b16 %v825
        %v975 = vunpack.c.l.b16 %v826
        %v976 = vunpack.c.h.b16 %v826
        %v977 = vpack.c.b16 %v883, %v881
        %v978 = vpack.c.b16 %v884, %v882
        %v979 = vpack.c.b16 %v887, %v885
        %v980 = vpack.c.b16 %v888, %v886
        %v981 = vpack.c.b16 %v891, %v889
        %v982 = vpack.c.b16 %v892, %v890
        %v983 = vpack.c.b16 %v895, %v893
        %v984 = vpack.c.b16 %v896, %v894
        %v985 = vpack.c.b16 %v899, %v897
        %v986 = vpack.c.b16 %v900, %v898
        %v987 = vpack.c.b16 %v903, %v901
        %v988 = vpack.c.b16 %v904, %v902
        %v989 = vpack.c.b16 %v907, %v905
        %v990 = vpack.c.b16 %v908, %v906
        %v991 = vpack.c.b16 %v911, %v909
        %v992 = vpack.c.b16 %v912, %v910
        %v993 = vpack.c.b16 %v915, %v913
        %v994 = vpack.c.b16 %v916, %v914
        %v995 = vpack.c.b16 %v919, %v917
        %v996 = vpack.c.b16 %v920, %v918
        %v997 = vpack.c.b16 %v923, %v921
        %v998 = vpack.c.b16 %v924, %v922
        %v999 = vpack.c.b16 %v927, %v925
        %v1000 = vpack.c.b16 %v928, %v926
        %v1001 = vpack.c.b16 %v931, %v929
        %v1002 = vpack.c.b16 %v932, %v930
        %v1003 = vpack.c.b16 %v935, %v933
        %v1004 = vpack.c.b16 %v936, %v934
        %v1005 = vpack.c.b16 %v939, %v937
        %v1006 = vpack.c.b16 %v940, %v938
        %v1007 = vpack.c.b16 %v943, %v941
        %v1008 = vpack.c.b16 %v944, %v942
        %v1009 = vpack.c.b16 %v947, %v945
        %v1010 = vpack.c.b16 %v948, %v946
        %v1011 = vpack.c.b16 %v951, %v949
        %v1012 = vpack.c.b16 %v952, %v950
        %v1013 = vpack.c.b16 %v955, %v953
        %v1014 = vpack.c.b16 %v956, %v954
        %v1015 = vpack.c.b16 %v959, %v957
        %v1016 = vpack.c.b16 %v960, %v958
        %v1017 = vpack.c.b16 %v963, %v961
        %v1018 = vpack.c.b16 %v964, %v962
        %v1019 = vpack.c.b16 %v967, %v965
        %v1020 = vpack.c.b16 %v968, %v966
        %v1021 = vpack.c.b16 %v971, %v969
        %v1022 = vpack.c.b16 %v972, %v970
        %v1023 = vpack.c.b16 %v975, %v973
        %v1024 = vpack.c.b16 %v976, %v974
        %1073 = vmatpush.bf16.msra.mxu0 %v991
        %1074 = vmatpush.bf16.msra.mxu0 %v989
        %1075 = vmatpush.bf16.msra.mxu0 %v987
        %1076 = vmatpush.bf16.msra.mxu0 %v985
        %1077 = vmatpush.bf16.msra.mxu0 %v983
        %1078 = vmatpush.bf16.msra.mxu0 %v981
        %1079 = vmatpush.bf16.msra.mxu0 %v979
        %1080 = vmatpush.bf16.msra.mxu0 %v977
        %1081 = vmatmul.bf16.gmra.mxu0 %v776
        %v1082 = vpop.f32.mrf.mxu0
        %v1083 = vadd.f32 %v829, %v1082
        %v1084 = vpop.f32.mrf.mxu0
        %v1085 = vadd.f32 %v829, %v1084
        %1086 = vdwg.mxu0
        %1087 = vmatpush.bf16.msra.mxu0 %v1007
        %1088 = vmatpush.bf16.msra.mxu0 %v1005
        %1089 = vmatpush.bf16.msra.mxu0 %v1003
        %1090 = vmatpush.bf16.msra.mxu0 %v1001
        %1091 = vmatpush.bf16.msra.mxu0 %v999
        %1092 = vmatpush.bf16.msra.mxu0 %v997
        %1093 = vmatpush.bf16.msra.mxu0 %v995
        %1094 = vmatpush.bf16.msra.mxu0 %v993
        %1095 = vmatmul.bf16.gmra.mxu0 %v777
        %v1096 = vpop.f32.mrf.mxu0
        %v1097 = vadd.f32 %v1083, %v1096
        %v1098 = vpop.f32.mrf.mxu0
        %v1099 = vadd.f32 %v1085, %v1098
        %1100 = vdwg.mxu0
        %1101 = vmatpush.bf16.msra.mxu0 %v1023
        %1102 = vmatpush.bf16.msra.mxu0 %v1021
        %1103 = vmatpush.bf16.msra.mxu0 %v1019
        %1104 = vmatpush.bf16.msra.mxu0 %v1017
        %1105 = vmatpush.bf16.msra.mxu0 %v1015
        %1106 = vmatpush.bf16.msra.mxu0 %v1013
        %1107 = vmatpush.bf16.msra.mxu0 %v1011
        %1108 = vmatpush.bf16.msra.mxu0 %v1009
        %1109 = vmatmul.bf16.gmra.mxu0 %v778
        %v1110 = vpop.f32.mrf.mxu0
        %v1111 = vadd.f32 %v1097, %v1110
        %v1112 = vpop.f32.mrf.mxu0
        %v1113 = vadd.f32 %v1099, %v1112
        %1114 = vdwg.mxu0
        %1115 = vmatpush.bf16.msra.mxu0 %v992
        %1116 = vmatpush.bf16.msra.mxu0 %v990
        %1117 = vmatpush.bf16.msra.mxu0 %v988
        %1118 = vmatpush.bf16.msra.mxu0 %v986
        %1119 = vmatpush.bf16.msra.mxu0 %v984
        %1120 = vmatpush.bf16.msra.mxu0 %v982
        %1121 = vmatpush.bf16.msra.mxu0 %v980
        %1122 = vmatpush.bf16.msra.mxu0 %v978
        %1123 = vmatmul.bf16.gmra.mxu0 %v776
        %v1124 = vpop.f32.mrf.mxu0
        %v1125 = vadd.f32 %v830, %v1124
        %v1126 = vpop.f32.mrf.mxu0
        %v1127 = vadd.f32 %v830, %v1126
        %1128 = vdwg.mxu0
        %1129 = vmatpush.bf16.msra.mxu0 %v1008
        %1130 = vmatpush.bf16.msra.mxu0 %v1006
        %1131 = vmatpush.bf16.msra.mxu0 %v1004
        %1132 = vmatpush.bf16.msra.mxu0 %v1002
        %1133 = vmatpush.bf16.msra.mxu0 %v1000
        %1134 = vmatpush.bf16.msra.mxu0 %v998
        %1135 = vmatpush.bf16.msra.mxu0 %v996
        %1136 = vmatpush.bf16.msra.mxu0 %v994
        %1137 = vmatmul.bf16.gmra.mxu0 %v777
        %v1138 = vpop.f32.mrf.mxu0
        %v1139 = vadd.f32 %v1125, %v1138
        %v1140 = vpop.f32.mrf.mxu0
        %v1141 = vadd.f32 %v1127, %v1140
        %1142 = vdwg.mxu0
        %1143 = vmatpush.bf16.msra.mxu0 %v1024
        %1144 = vmatpush.bf16.msra.mxu0 %v1022
        %1145 = vmatpush.bf16.msra.mxu0 %v1020
        %1146 = vmatpush.bf16.msra.mxu0 %v1018
        %1147 = vmatpush.bf16.msra.mxu0 %v1016
        %1148 = vmatpush.bf16.msra.mxu0 %v1014
        %1149 = vmatpush.bf16.msra.mxu0 %v1012
        %1150 = vmatpush.bf16.msra.mxu0 %v1010
        %1151 = vmatmul.bf16.gmra.mxu0 %v778
        %v1152 = vpop.f32.mrf.mxu0
        %v1153 = vadd.f32 %v1139, %v1152
        %v1154 = vpop.f32.mrf.mxu0
        %v1155 = vadd.f32 %v1141, %v1154
        %1156 = vdwg.mxu0
        %v1157 = vxor.u32 %v1111, 2147483648
        %v1158 = vxor.u32 %v1113, 2147483648
        %v1159 = vmul.f32 %v1157, 1.442695
        %v1160 = vpow.pop %v1159
        %v1161 = vmul.f32 %v1158, 1.442695
        %v1162 = vpow.pop %v1161
        %v1163 = vadd.f32 %v1160, 1.0
        %v1164 = vadd.f32 %v1162, 1.0
        %v1165 = vrcp.pop %v1163
        %v1166 = vmul.f32 %v1163, %v1165
        %v1167 = vsub.f32 1.0, %v1166
        %v1168 = vmul.f32 %v1165, %v1167
        %v1169 = vadd.f32 %v1165, %v1168
        %vm1170 = vweird.f32 %v1163
        %vm1171 = vweird.f32 %v1165
        %vm1172 = vmor %vm1170, %vm1171
        %v1173 = vsel %vm1172, %v1165, %v1169
        %v1174 = vand.u32 2147483647, %v1163
        %vm1175 = vcmp.eq.f32.partialorder %v1174, 8.507059e+37
        %v1176 = vand.u32 %v1163, 2147483648
        %v1177 = vor.u32 1.1754944e-38, %v1176
        %v1178 = vsel %vm1175, %v1177, %v1173
        %v1179 = vmul.f32 1.0, %v1178
        %v1180 = vrcp.pop %v1164
        %v1181 = vmul.f32 %v1164, %v1180
        %v1182 = vsub.f32 1.0, %v1181
        %v1183 = vmul.f32 %v1180, %v1182
        %v1184 = vadd.f32 %v1180, %v1183
        %vm1185 = vweird.f32 %v1164
        %vm1186 = vweird.f32 %v1180
        %vm1187 = vmor %vm1185, %vm1186
        %v1188 = vsel %vm1187, %v1180, %v1184
        %v1189 = vand.u32 2147483647, %v1164
        %vm1190 = vcmp.eq.f32.partialorder %v1189, 8.507059e+37
        %v1191 = vand.u32 %v1164, 2147483648
        %v1192 = vor.u32 1.1754944e-38, %v1191
        %v1193 = vsel %vm1190, %v1192, %v1188
        %v1194 = vmul.f32 1.0, %v1193
        %v1195 = vsub.f32 %v1153, %v766
        %v1196 = vsub.f32 %v1155, %v767
        %v1197 = vmul.f32 %v1179, %v1195
        %v1198 = vmul.f32 %v1194, %v1196
        %v1199 = vadd.f32 %v766, %v1197
        %v1200 = vadd.f32 %v767, %v1198
        %v1201 = vpack.c.bf16 %v1200, %v1199
        %v1202 = vld [vmem:[#allocation7] sm:$0xff]
        %v1203 = vld [vmem:[#allocation7 + $0x8] sm:$0xff]
        %v1204 = vld [vmem:[#allocation7 + $0x10] sm:$0xff]
        %v1205 = vld [vmem:[#allocation7 + $0x18] sm:$0xff]
        %v1206 = vld [vmem:[#allocation7 + $0x20] sm:$0xff]
        %v1207 = vld [vmem:[#allocation7 + $0x28] sm:$0xff]
        %v1208 = vld [vmem:[#allocation7 + $0x30] sm:$0xff]
        %v1209 = vld [vmem:[#allocation7 + $0x38] sm:$0xff]
        %v1210 = vld [vmem:[#allocation7 + $0x40] sm:$0xff]
        %v1211 = vld [vmem:[#allocation7 + $0x48] sm:$0xff]
        %v1212 = vld [vmem:[#allocation7 + $0x50] sm:$0xff]
        %v1213 = vld [vmem:[#allocation7 + $0x58] sm:$0xff]
        %v1214 = vld [vmem:[#allocation7 + $0x60] sm:$0xff]
        %v1215 = vld [vmem:[#allocation7 + $0x68] sm:$0xff]
        %v1216 = vld [vmem:[#allocation7 + $0x70] sm:$0xff]
        %v1217 = vld [vmem:[#allocation7 + $0x78] sm:$0xff]
        %v1218 = vld [vmem:[%s6] sm:$0x3]
        %v1220 = vperm.slane %v1218, 0
        %v1221 = vperm.slane %v1218, 1
        %v1240 = vunpack.c.l.b16 %v1202
        %v1241 = vunpack.c.h.b16 %v1202
        %v1242 = vunpack.c.l.b16 %v1203
        %v1243 = vunpack.c.h.b16 %v1203
        %v1244 = vunpack.c.l.b16 %v1204
        %v1245 = vunpack.c.h.b16 %v1204
        %v1246 = vunpack.c.l.b16 %v1205
        %v1247 = vunpack.c.h.b16 %v1205
        %v1248 = vunpack.c.l.b16 %v1206
        %v1249 = vunpack.c.h.b16 %v1206
        %v1250 = vunpack.c.l.b16 %v1207
        %v1251 = vunpack.c.h.b16 %v1207
        %v1252 = vunpack.c.l.b16 %v1208
        %v1253 = vunpack.c.h.b16 %v1208
        %v1254 = vunpack.c.l.b16 %v1209
        %v1255 = vunpack.c.h.b16 %v1209
        %v1256 = vunpack.c.l.b16 %v1210
        %v1257 = vunpack.c.h.b16 %v1210
        %v1258 = vunpack.c.l.b16 %v1211
        %v1259 = vunpack.c.h.b16 %v1211
        %v1260 = vunpack.c.l.b16 %v1212
        %v1261 = vunpack.c.h.b16 %v1212
        %v1262 = vunpack.c.l.b16 %v1213
        %v1263 = vunpack.c.h.b16 %v1213
        %v1264 = vunpack.c.l.b16 %v1214
        %v1265 = vunpack.c.h.b16 %v1214
        %v1266 = vunpack.c.l.b16 %v1215
        %v1267 = vunpack.c.h.b16 %v1215
        %v1268 = vunpack.c.l.b16 %v1216
        %v1269 = vunpack.c.h.b16 %v1216
        %v1270 = vunpack.c.l.b16 %v1217
        %v1271 = vunpack.c.h.b16 %v1217
        %v1272 = vpack.c.b16 %v1242, %v1240
        %v1273 = vpack.c.b16 %v1243, %v1241
        %v1274 = vpack.c.b16 %v1246, %v1244
        %v1275 = vpack.c.b16 %v1247, %v1245
        %v1276 = vpack.c.b16 %v1250, %v1248
        %v1277 = vpack.c.b16 %v1251, %v1249
        %v1278 = vpack.c.b16 %v1254, %v1252
        %v1279 = vpack.c.b16 %v1255, %v1253
        %v1280 = vpack.c.b16 %v1258, %v1256
        %v1281 = vpack.c.b16 %v1259, %v1257
        %v1282 = vpack.c.b16 %v1262, %v1260
        %v1283 = vpack.c.b16 %v1263, %v1261
        %v1284 = vpack.c.b16 %v1266, %v1264
        %v1285 = vpack.c.b16 %v1267, %v1265
        %v1286 = vpack.c.b16 %v1270, %v1268
        %v1287 = vpack.c.b16 %v1271, %v1269
        %1304 = vmatpush.bf16.msra.mxu0 %v1286
        %1305 = vmatpush.bf16.msra.mxu0 %v1284
        %1306 = vmatpush.bf16.msra.mxu0 %v1282
        %1307 = vmatpush.bf16.msra.mxu0 %v1280
        %1308 = vmatpush.bf16.msra.mxu0 %v1278
        %1309 = vmatpush.bf16.msra.mxu0 %v1276
        %1310 = vmatpush.bf16.msra.mxu0 %v1274
        %1311 = vmatpush.bf16.msra.mxu0 %v1272
        %1312 = vmatmul.bf16.gmra.mxu0 %v1201
        %v1313 = vpop.f32.mrf.mxu0
        %v1314 = vadd.f32 %v1220, %v1313
        %v1315 = vpop.f32.mrf.mxu0
        %v1316 = vadd.f32 %v1220, %v1315
        %1317 = vdwg.mxu0
        %1318 = vmatpush.bf16.msra.mxu0 %v1287
        %1319 = vmatpush.bf16.msra.mxu0 %v1285
        %1320 = vmatpush.bf16.msra.mxu0 %v1283
        %1321 = vmatpush.bf16.msra.mxu0 %v1281
        %1322 = vmatpush.bf16.msra.mxu0 %v1279
        %1323 = vmatpush.bf16.msra.mxu0 %v1277
        %1324 = vmatpush.bf16.msra.mxu0 %v1275
        %1325 = vmatpush.bf16.msra.mxu0 %v1273
        %1326 = vmatmul.bf16.gmra.mxu0 %v1201
        %v1327 = vpop.f32.mrf.mxu0
        %v1328 = vadd.f32 %v1221, %v1327
        %v1329 = vpop.f32.mrf.mxu0
        %v1330 = vadd.f32 %v1221, %v1329
        %1331 = vdwg.mxu0
        %v1332 = vpack.c.bf16 %v1328, %v1314
        %v1333 = vpack.c.bf16 %v1330, %v1316
        %1334 = vst [vmem:[%s328] sm:$0xff] %v1332
        %1335 = vst [vmem:[%s328 + $0x8] sm:$0xff] %v1333
        %p1336 = scmp.lt.s32.totalorder %s20, 1
        %s1337 = scalar_select %p1336, %s20, 1
        %s1338 = smul.addr %s1337, 4
        %s1339 = smul.addr %s1338, 4
        %s1340 = scalar_lea.vmem %s7, %s1339
        // Predicated region
        $region61: #{_lambda_.4} parent=47 // pred_check
          %p1341 = pneg %p190
        $region62: #{_lambda_.4} parent=47 // pred_check_branch
          %1343 = sbr.rel (%p1341) target = $region64
        $region63: #{_lambda_.4} parent=47 // pred_region
          _
        $region64: #{_lambda_.4} parent=47 // pred_fallthru
          _
      $region48: #{_lambda_.4} parent=5 // pred_fallthru
        _
      %p1344 = scmp.le.s32.totalorder 2, %s15
      // Predicated region
      $region65: #{_lambda_.4} parent=5 // pred_check
        %p1345 = pneg %p1344
      $region66: #{_lambda_.4} parent=5 // pred_check_branch
        %1347 = sbr.rel (%p1345) target = $region68
      $region67: #{_lambda_.4} parent=5 // pred_region
        %s1348 = ssub.s32 %s15, 2
        // Predicated region
        $region69: #{_lambda_.4} parent=67 // pred_check
          %p1349 = pneg %p196
        $region70: #{_lambda_.4} parent=67 // pred_check_branch
          %1351 = sbr.rel (%p1349) target = $region72
        $region71: #{_lambda_.4} parent=67 // pred_region
          %p1352 = scmp.lt.s32.totalorder %s21, 1
          %s1353 = scalar_select %p1352, %s21, 1
          %s1354 = smul.addr %s1353, 4
          %s1355 = smul.addr %s1354, 4
          %s1356 = scalar_lea.vmem %s7, %s1355
        $region72: #{_lambda_.4} parent=67 // pred_fallthru
          _
      $region68: #{_lambda_.4} parent=5 // pred_fallthru
        _
    $region6: #{_lambda_.4} parent=1 // loop_footer
      %s19 = sadd.s32 1, %s15
    $region7: #{_lambda_.4} parent=1 // loop_footer_branch
      %14 = sbr.rel target = $region3
    $region8: #{_lambda_.4} parent=1 // loop_exit
      _
    %1357 = vsyncpa [#allocation4], 1
    %s1358 = scalar_lea.sflag [#allocation4], 1
    %1359 = vsyncpa %s1358, 1
    %1360 = vsyncpa [#allocation6], 1

// kernel: _lambda_.5
$region0: #{_lambda_.5}
  #allocation0 [shape = 'u32[]', space=smem, size = 0x4, offset = 0x4, fixed_abs, tag = 'smem constant byte address 0x4 - core index']
  #allocation1 [shape = 'u32[72,128]{1,0:T(1,128)}', space=vmem, size = 0x9000, scoped, tag = 'internal scratch']
  #allocation2 [shape = 'f32[48,128]{1,0:T(8,128)}', space=vmem, size = 0x6000, scoped, tag = 'scratch operand']
  %s0 = inlined_call_operand.vmem [shape: bf16[2,32,128], index: 0, kind: input, shape index: {}]
  %s1 = inlined_call_operand.hbm [shape: bf16[384,256], index: 1, kind: input, shape index: {}]
  %s2 = inlined_call_operand.vmem [shape: f32[1,256], index: 2, kind: input, shape index: {}]
  %s3 = inlined_call_operand.hbm [shape: bf16[384,256], index: 3, kind: input, shape index: {}]
  %s4 = inlined_call_operand.vmem [shape: f32[1,256], index: 4, kind: input, shape index: {}]
  %s5 = inlined_call_operand.hbm [shape: bf16[128,128], index: 5, kind: input, shape index: {}]
  %s6 = inlined_call_operand.hbm [shape: f32[1,128], index: 6, kind: input, shape index: {}]
  %s7 = inlined_call_operand.hbm [shape: bf16[384,256], index: 7, kind: input, shape index: {}]
  %s8 = inlined_call_operand.vmem [shape: f32[1,256], index: 8, kind: input, shape index: {}]
  %s9 = inlined_call_operand.hbm [shape: bf16[384,256], index: 9, kind: input, shape index: {}]
  %s10 = inlined_call_operand.vmem [shape: f32[1,256], index: 10, kind: input, shape index: {}]
  %s11 = inlined_call_operand.hbm [shape: bf16[128,128], index: 11, kind: input, shape index: {}]
  %s12 = inlined_call_operand.hbm [shape: f32[1,128], index: 12, kind: input, shape index: {}]
  %s13 = inlined_call_operand.vmem [shape: bf16[128,256], index: 13, kind: input, shape index: {}]
  %s14 = inlined_call_operand.vmem [shape: f32[1,256], index: 14, kind: input, shape index: {}]
  %s15 = inlined_call_operand.hbm [shape: bf16[128,128], index: 15, kind: input, shape index: {}]
  %s16 = inlined_call_operand.hbm [shape: f32[1,128], index: 16, kind: input, shape index: {}]
  %s17 = inlined_call_operand.vmem [shape: f32[2,32,128], index: 17, kind: output, shape index: {0}]
  %s18 = inlined_call_operand.vmem [shape: f32[2,32,128], index: 18, kind: output, shape index: {1}]
  %19 = xla_tuple %s17, %s18
  %s20 = sld [smem:[#allocation0]]
  $region149: #{_lambda_.5} parent=0
    _
  %s22 = ssub.s32 1, %s20
  %s23 = scalar_select 0, %s22, %s20
  $region1: #{_lambda_.5} parent=0
    #allocation3 [shape = 'u8[196608]{0}', space=vmem, size = 0x30000, scoped, tag = 'input window, operand 1, single buffered']
    #allocation4 [shape = 's32[2]{0}', space=sflag, size = 0x8, scoped, tag = 'scoped memory for _lambda_.5']
    #allocation5 [shape = 'u8[196608]{0}', space=vmem, size = 0x30000, scoped, tag = 'input window, operand 3, single buffered']
    #allocation6 [shape = 's32[1]{0}', space=sflag, size = 0x4, scoped, tag = 'scoped memory for _lambda_.5']
    #allocation7 [shape = 'u8[32768]{0}', space=vmem, size = 0x8000, scoped, tag = 'input window, operand 5, single buffered']
    #allocation8 [shape = 'u8[512]{0}', space=vmem, size = 0x400, scoped, tag = 'input window, operand 6, single buffered']
    #allocation9 [shape = 's32[1]{0}', space=sflag, size = 0x4, scoped, tag = 'scoped memory for _lambda_.5']
    #allocation10 [shape = 'u8[196608]{0}', space=vmem, size = 0x30000, scoped, tag = 'input window, operand 7, single buffered']
    #allocation11 [shape = 'u8[196608]{0}', space=vmem, size = 0x30000, scoped, tag = 'input window, operand 9, single buffered']
    #allocation12 [shape = 's32[1]{0}', space=sflag, size = 0x4, scoped, tag = 'scoped memory for _lambda_.5']
    #allocation13 [shape = 'u8[32768]{0}', space=vmem, size = 0x8000, scoped, tag = 'input window, operand 11, single buffered']
    #allocation14 [shape = 'u8[512]{0}', space=vmem, size = 0x400, scoped, tag = 'input window, operand 12, single buffered']
    #allocation15 [shape = 's32[1]{0}', space=sflag, size = 0x4, scoped, tag = 'scoped memory for _lambda_.5']
    #allocation16 [shape = 'u8[32768]{0}', space=vmem, size = 0x8000, scoped, tag = 'input window, operand 15, single buffered']
    #allocation17 [shape = 'u8[512]{0}', space=vmem, size = 0x400, scoped, tag = 'input window, operand 16, single buffered']
    #allocation18 [shape = 's32[1]{0}', space=sflag, size = 0x4, scoped, tag = 'scoped memory for _lambda_.5']
    %24 = vsyncpa [#allocation4], 0
    %25 = vsyncpa [#allocation6], 0
    %26 = vsyncpa [#allocation9], 0
    %27 = vsyncpa [#allocation12], 0
    %28 = vsyncpa [#allocation15], 0
    %29 = vsyncpa [#allocation18], 0
    loop: start=0, step=1, limit=4
    $region2: #{_lambda_.5} parent=1 // loop_pre_header
      _
    $region3: #{_lambda_.5} parent=1 // loop_header
      %s31 = sphi 0, %s35
      %p32 = scmp.ge.s32.totalorder %s31, 4
      %s41 = sphi 0, %s43
      %s44 = sphi 0, %s41
      %s45 = sphi 0, %s44
      %s61 = sphi 0, %s45
      %s65 = sphi 0, %s65
      %s67 = sphi 0, %s65
      %s68 = sphi 0, %s67
      %s82 = sphi 0, %s68
      %s86 = sphi 0, %s86
      %s88 = sphi 0, %s86
      %s89 = sphi 0, %s88
      %s103 = sphi 0, %s89
      %s107 = sphi 0, %s107
      %s109 = sphi 0, %s107
      %s110 = sphi 0, %s109
      %s124 = sphi 0, %s110
      %s128 = sphi 0, %s128
      %s130 = sphi 0, %s128
      %s131 = sphi 0, %s130
      %s145 = sphi 0, %s131
      %s149 = sphi 0, %s149
      %s151 = sphi 0, %s149
      %s152 = sphi 0, %s151
      %s166 = sphi 0, %s152
      %s170 = sphi 0, %s170
      %s172 = sphi 0, %s170
      %s173 = sphi 0, %s172
      %s187 = sphi 0, %s173
      %s191 = sphi 0, %s191
      %s193 = sphi 0, %s191
      %s194 = sphi 0, %s193
      %s208 = sphi 0, %s194
      %s212 = sphi 0, %s212
      %s214 = sphi 0, %s212
      %s215 = sphi 0, %s214
      %s229 = sphi 0, %s215
      %s233 = sphi 0, %s233
      %s235 = sphi 0, %s233
      %s236 = sphi 0, %s235
      %s250 = sphi 0, %s236
      %s254 = sphi 0, %s254
      %s256 = sphi 0, %s254
      %s257 = sphi 0, %s256
      %s271 = sphi 0, %s257
      %s275 = sphi 0, %s275
      %s277 = sphi 0, %s275
      %s278 = sphi 0, %s277
      %s292 = sphi 0, %s278
      %s296 = sphi 0, %s296
      %s298 = sphi 0, %s296
      %s299 = sphi 0, %s298
      %s313 = sphi 0, %s299
      %s317 = sphi 0, %s317
      %s319 = sphi 0, %s317
      %s320 = sphi 0, %s319
      %s334 = sphi 0, %s320
      %s338 = sphi 0, %s338
      %s340 = sphi 0, %s338
      %s341 = sphi 0, %s340
      %s355 = sphi 0, %s341
      %s359 = sphi 0, %s359
      %s361 = sphi 0, %s359
      %s362 = sphi 0, %s361
      %s376 = sphi 0, %s362
      %s380 = sphi 0, %s380
      %s382 = sphi 0, %s380
      %s383 = sphi 0, %s382
      %s397 = sphi 0, %s383
      %s403 = sphi 0, %s405
      %s406 = sphi 0, %s403
      %s407 = sphi 0, %s406
      %s423 = sphi 0, %s407
      %s429 = sphi 0, %s431
      %s432 = sphi 0, %s429
      %s433 = sphi 0, %s432
      %s449 = sphi 0, %s433
    $region4: #{_lambda_.5} parent=1 // loop_header_branch
      %34 = sbr.rel (%p32) target = $region8
    $region5: #{_lambda_.5} parent=1 // loop_body
      %s36 = ssub.s32 %s31, 1
      %s37 = ssub.s32 %s31, 2
      %s38 = sadd.s32 %s31, 1
      %s39 = ssub.s32 %s31, %s38
      %p40 = scmp.eq.s32.totalorder %s39, 0
      %s42 = sadd.s32 %s41, 1
      %s43 = scalar_select %p40, %s41, %s42
      %p46 = pneg %p40
      %p47 = scmp.eq.s32.totalorder %s31, 1
      %p48 = por %p46, %p47
      %p49 = scmp.ne.s32.totalorder %s41, %s44
      %p50 = scmp.eq.s32.totalorder %s31, 0
      %p51 = por %p49, %p50
      %p52 = scmp.ne.s32.totalorder %s41, %s44
      %p53 = scmp.eq.s32.totalorder %s36, 1
      %p54 = por %p52, %p53
      %p55 = scmp.ne.s32.totalorder %s44, %s45
      %p56 = scmp.eq.s32.totalorder %s36, 0
      %p57 = por %p55, %p56
      %p58 = scmp.ne.s32.totalorder %s44, %s45
      %p59 = scmp.eq.s32.totalorder %s37, 1
      %p60 = por %p58, %p59
      %p62 = scmp.ne.s32.totalorder %s45, %s61
      %p63 = scmp.eq.s32.totalorder %s37, 0
      %p64 = por %p62, %p63
      %s66 = sadd.s32 %s65, 1
      %p69 = scmp.eq.s32.totalorder %s31, 1
      %p70 = scmp.ne.s32.totalorder %s65, %s67
      %p71 = scmp.eq.s32.totalorder %s31, 0
      %p72 = por %p70, %p71
      %p73 = scmp.ne.s32.totalorder %s65, %s67
      %p74 = scmp.eq.s32.totalorder %s36, 1
      %p75 = por %p73, %p74
      %p76 = scmp.ne.s32.totalorder %s67, %s68
      %p77 = scmp.eq.s32.totalorder %s36, 0
      %p78 = por %p76, %p77
      %p79 = scmp.ne.s32.totalorder %s67, %s68
      %p80 = scmp.eq.s32.totalorder %s37, 1
      %p81 = por %p79, %p80
      %p83 = scmp.ne.s32.totalorder %s68, %s82
      %p84 = scmp.eq.s32.totalorder %s37, 0
      %p85 = por %p83, %p84
      %s87 = sadd.s32 %s86, 1
      %p90 = scmp.eq.s32.totalorder %s31, 1
      %p91 = scmp.ne.s32.totalorder %s86, %s88
      %p92 = scmp.eq.s32.totalorder %s31, 0
      %p93 = por %p91, %p92
      %p94 = scmp.ne.s32.totalorder %s86, %s88
      %p95 = scmp.eq.s32.totalorder %s36, 1
      %p96 = por %p94, %p95
      %p97 = scmp.ne.s32.totalorder %s88, %s89
      %p98 = scmp.eq.s32.totalorder %s36, 0
      %p99 = por %p97, %p98
      %p100 = scmp.ne.s32.totalorder %s88, %s89
      %p101 = scmp.eq.s32.totalorder %s37, 1
      %p102 = por %p100, %p101
      %p104 = scmp.ne.s32.totalorder %s89, %s103
      %p105 = scmp.eq.s32.totalorder %s37, 0
      %p106 = por %p104, %p105
      %s108 = sadd.s32 %s107, 1
      %p111 = scmp.eq.s32.totalorder %s31, 1
      %p112 = scmp.ne.s32.totalorder %s107, %s109
      %p113 = scmp.eq.s32.totalorder %s31, 0
      %p114 = por %p112, %p113
      %p115 = scmp.ne.s32.totalorder %s107, %s109
      %p116 = scmp.eq.s32.totalorder %s36, 1
      %p117 = por %p115, %p116
      %p118 = scmp.ne.s32.totalorder %s109, %s110
      %p119 = scmp.eq.s32.totalorder %s36, 0
      %p120 = por %p118, %p119
      %p121 = scmp.ne.s32.totalorder %s109, %s110
      %p122 = scmp.eq.s32.totalorder %s37, 1
      %p123 = por %p121, %p122
      %p125 = scmp.ne.s32.totalorder %s110, %s124
      %p126 = scmp.eq.s32.totalorder %s37, 0
      %p127 = por %p125, %p126
      %s129 = sadd.s32 %s128, 1
      %p132 = scmp.eq.s32.totalorder %s31, 1
      %p133 = scmp.ne.s32.totalorder %s128, %s130
      %p134 = scmp.eq.s32.totalorder %s31, 0
      %p135 = por %p133, %p134
      %p136 = scmp.ne.s32.totalorder %s128, %s130
      %p137 = scmp.eq.s32.totalorder %s36, 1
      %p138 = por %p136, %p137
      %p139 = scmp.ne.s32.totalorder %s130, %s131
      %p140 = scmp.eq.s32.totalorder %s36, 0
      %p141 = por %p139, %p140
      %p142 = scmp.ne.s32.totalorder %s130, %s131
      %p143 = scmp.eq.s32.totalorder %s37, 1
      %p144 = por %p142, %p143
      %p146 = scmp.ne.s32.totalorder %s131, %s145
      %p147 = scmp.eq.s32.totalorder %s37, 0
      %p148 = por %p146, %p147
      %s150 = sadd.s32 %s149, 1
      %p153 = scmp.eq.s32.totalorder %s31, 1
      %p154 = scmp.ne.s32.totalorder %s149, %s151
      %p155 = scmp.eq.s32.totalorder %s31, 0
      %p156 = por %p154, %p155
      %p157 = scmp.ne.s32.totalorder %s149, %s151
      %p158 = scmp.eq.s32.totalorder %s36, 1
      %p159 = por %p157, %p158
      %p160 = scmp.ne.s32.totalorder %s151, %s152
      %p161 = scmp.eq.s32.totalorder %s36, 0
      %p162 = por %p160, %p161
      %p163 = scmp.ne.s32.totalorder %s151, %s152
      %p164 = scmp.eq.s32.totalorder %s37, 1
      %p165 = por %p163, %p164
      %p167 = scmp.ne.s32.totalorder %s152, %s166
      %p168 = scmp.eq.s32.totalorder %s37, 0
      %p169 = por %p167, %p168
      %s171 = sadd.s32 %s170, 1
      %p174 = scmp.eq.s32.totalorder %s31, 1
      %p175 = scmp.ne.s32.totalorder %s170, %s172
      %p176 = scmp.eq.s32.totalorder %s31, 0
      %p177 = por %p175, %p176
      %p178 = scmp.ne.s32.totalorder %s170, %s172
      %p179 = scmp.eq.s32.totalorder %s36, 1
      %p180 = por %p178, %p179
      %p181 = scmp.ne.s32.totalorder %s172, %s173
      %p182 = scmp.eq.s32.totalorder %s36, 0
      %p183 = por %p181, %p182
      %p184 = scmp.ne.s32.totalorder %s172, %s173
      %p185 = scmp.eq.s32.totalorder %s37, 1
      %p186 = por %p184, %p185
      %p188 = scmp.ne.s32.totalorder %s173, %s187
      %p189 = scmp.eq.s32.totalorder %s37, 0
      %p190 = por %p188, %p189
      %s192 = sadd.s32 %s191, 1
      %p195 = scmp.eq.s32.totalorder %s31, 1
      %p196 = scmp.ne.s32.totalorder %s191, %s193
      %p197 = scmp.eq.s32.totalorder %s31, 0
      %p198 = por %p196, %p197
      %p199 = scmp.ne.s32.totalorder %s191, %s193
      %p200 = scmp.eq.s32.totalorder %s36, 1
      %p201 = por %p199, %p200
      %p202 = scmp.ne.s32.totalorder %s193, %s194
      %p203 = scmp.eq.s32.totalorder %s36, 0
      %p204 = por %p202, %p203
      %p205 = scmp.ne.s32.totalorder %s193, %s194
      %p206 = scmp.eq.s32.totalorder %s37, 1
      %p207 = por %p205, %p206
      %p209 = scmp.ne.s32.totalorder %s194, %s208
      %p210 = scmp.eq.s32.totalorder %s37, 0
      %p211 = por %p209, %p210
      %s213 = sadd.s32 %s212, 1
      %p216 = scmp.eq.s32.totalorder %s31, 1
      %p217 = scmp.ne.s32.totalorder %s212, %s214
      %p218 = scmp.eq.s32.totalorder %s31, 0
      %p219 = por %p217, %p218
      %p220 = scmp.ne.s32.totalorder %s212, %s214
      %p221 = scmp.eq.s32.totalorder %s36, 1
      %p222 = por %p220, %p221
      %p223 = scmp.ne.s32.totalorder %s214, %s215
      %p224 = scmp.eq.s32.totalorder %s36, 0
      %p225 = por %p223, %p224
      %p226 = scmp.ne.s32.totalorder %s214, %s215
      %p227 = scmp.eq.s32.totalorder %s37, 1
      %p228 = por %p226, %p227
      %p230 = scmp.ne.s32.totalorder %s215, %s229
      %p231 = scmp.eq.s32.totalorder %s37, 0
      %p232 = por %p230, %p231
      %s234 = sadd.s32 %s233, 1
      %p237 = scmp.eq.s32.totalorder %s31, 1
      %p238 = scmp.ne.s32.totalorder %s233, %s235
      %p239 = scmp.eq.s32.totalorder %s31, 0
      %p240 = por %p238, %p239
      %p241 = scmp.ne.s32.totalorder %s233, %s235
      %p242 = scmp.eq.s32.totalorder %s36, 1
      %p243 = por %p241, %p242
      %p244 = scmp.ne.s32.totalorder %s235, %s236
      %p245 = scmp.eq.s32.totalorder %s36, 0
      %p246 = por %p244, %p245
      %p247 = scmp.ne.s32.totalorder %s235, %s236
      %p248 = scmp.eq.s32.totalorder %s37, 1
      %p249 = por %p247, %p248
      %p251 = scmp.ne.s32.totalorder %s236, %s250
      %p252 = scmp.eq.s32.totalorder %s37, 0
      %p253 = por %p251, %p252
      %s255 = sadd.s32 %s254, 1
      %p258 = scmp.eq.s32.totalorder %s31, 1
      %p259 = scmp.ne.s32.totalorder %s254, %s256
      %p260 = scmp.eq.s32.totalorder %s31, 0
      %p261 = por %p259, %p260
      %p262 = scmp.ne.s32.totalorder %s254, %s256
      %p263 = scmp.eq.s32.totalorder %s36, 1
      %p264 = por %p262, %p263
      %p265 = scmp.ne.s32.totalorder %s256, %s257
      %p266 = scmp.eq.s32.totalorder %s36, 0
      %p267 = por %p265, %p266
      %p268 = scmp.ne.s32.totalorder %s256, %s257
      %p269 = scmp.eq.s32.totalorder %s37, 1
      %p270 = por %p268, %p269
      %p272 = scmp.ne.s32.totalorder %s257, %s271
      %p273 = scmp.eq.s32.totalorder %s37, 0
      %p274 = por %p272, %p273
      %s276 = sadd.s32 %s275, 1
      %p279 = scmp.eq.s32.totalorder %s31, 1
      %p280 = scmp.ne.s32.totalorder %s275, %s277
      %p281 = scmp.eq.s32.totalorder %s31, 0
      %p282 = por %p280, %p281
      %p283 = scmp.ne.s32.totalorder %s275, %s277
      %p284 = scmp.eq.s32.totalorder %s36, 1
      %p285 = por %p283, %p284
      %p286 = scmp.ne.s32.totalorder %s277, %s278
      %p287 = scmp.eq.s32.totalorder %s36, 0
      %p288 = por %p286, %p287
      %p289 = scmp.ne.s32.totalorder %s277, %s278
      %p290 = scmp.eq.s32.totalorder %s37, 1
      %p291 = por %p289, %p290
      %p293 = scmp.ne.s32.totalorder %s278, %s292
      %p294 = scmp.eq.s32.totalorder %s37, 0
      %p295 = por %p293, %p294
      %s297 = sadd.s32 %s296, 1
      %p300 = scmp.eq.s32.totalorder %s31, 1
      %p301 = scmp.ne.s32.totalorder %s296, %s298
      %p302 = scmp.eq.s32.totalorder %s31, 0
      %p303 = por %p301, %p302
      %p304 = scmp.ne.s32.totalorder %s296, %s298
      %p305 = scmp.eq.s32.totalorder %s36, 1
      %p306 = por %p304, %p305
      %p307 = scmp.ne.s32.totalorder %s298, %s299
      %p308 = scmp.eq.s32.totalorder %s36, 0
      %p309 = por %p307, %p308
      %p310 = scmp.ne.s32.totalorder %s298, %s299
      %p311 = scmp.eq.s32.totalorder %s37, 1
      %p312 = por %p310, %p311
      %p314 = scmp.ne.s32.totalorder %s299, %s313
      %p315 = scmp.eq.s32.totalorder %s37, 0
      %p316 = por %p314, %p315
      %s318 = sadd.s32 %s317, 1
      %p321 = scmp.eq.s32.totalorder %s31, 1
      %p322 = scmp.ne.s32.totalorder %s317, %s319
      %p323 = scmp.eq.s32.totalorder %s31, 0
      %p324 = por %p322, %p323
      %p325 = scmp.ne.s32.totalorder %s317, %s319
      %p326 = scmp.eq.s32.totalorder %s36, 1
      %p327 = por %p325, %p326
      %p328 = scmp.ne.s32.totalorder %s319, %s320
      %p329 = scmp.eq.s32.totalorder %s36, 0
      %p330 = por %p328, %p329
      %p331 = scmp.ne.s32.totalorder %s319, %s320
      %p332 = scmp.eq.s32.totalorder %s37, 1
      %p333 = por %p331, %p332
      %p335 = scmp.ne.s32.totalorder %s320, %s334
      %p336 = scmp.eq.s32.totalorder %s37, 0
      %p337 = por %p335, %p336
      %s339 = sadd.s32 %s338, 1
      %p342 = scmp.eq.s32.totalorder %s31, 1
      %p343 = scmp.ne.s32.totalorder %s338, %s340
      %p344 = scmp.eq.s32.totalorder %s31, 0
      %p345 = por %p343, %p344
      %p346 = scmp.ne.s32.totalorder %s338, %s340
      %p347 = scmp.eq.s32.totalorder %s36, 1
      %p348 = por %p346, %p347
      %p349 = scmp.ne.s32.totalorder %s340, %s341
      %p350 = scmp.eq.s32.totalorder %s36, 0
      %p351 = por %p349, %p350
      %p352 = scmp.ne.s32.totalorder %s340, %s341
      %p353 = scmp.eq.s32.totalorder %s37, 1
      %p354 = por %p352, %p353
      %p356 = scmp.ne.s32.totalorder %s341, %s355
      %p357 = scmp.eq.s32.totalorder %s37, 0
      %p358 = por %p356, %p357
      %s360 = sadd.s32 %s359, 1
      %p363 = scmp.eq.s32.totalorder %s31, 1
      %p364 = scmp.ne.s32.totalorder %s359, %s361
      %p365 = scmp.eq.s32.totalorder %s31, 0
      %p366 = por %p364, %p365
      %p367 = scmp.ne.s32.totalorder %s359, %s361
      %p368 = scmp.eq.s32.totalorder %s36, 1
      %p369 = por %p367, %p368
      %p370 = scmp.ne.s32.totalorder %s361, %s362
      %p371 = scmp.eq.s32.totalorder %s36, 0
      %p372 = por %p370, %p371
      %p373 = scmp.ne.s32.totalorder %s361, %s362
      %p374 = scmp.eq.s32.totalorder %s37, 1
      %p375 = por %p373, %p374
      %p377 = scmp.ne.s32.totalorder %s362, %s376
      %p378 = scmp.eq.s32.totalorder %s37, 0
      %p379 = por %p377, %p378
      %s381 = sadd.s32 %s380, 1
      %p384 = scmp.eq.s32.totalorder %s31, 1
      %p385 = scmp.ne.s32.totalorder %s380, %s382
      %p386 = scmp.eq.s32.totalorder %s31, 0
      %p387 = por %p385, %p386
      %p388 = scmp.ne.s32.totalorder %s380, %s382
      %p389 = scmp.eq.s32.totalorder %s36, 1
      %p390 = por %p388, %p389
      %p391 = scmp.ne.s32.totalorder %s382, %s383
      %p392 = scmp.eq.s32.totalorder %s36, 0
      %p393 = por %p391, %p392
      %p394 = scmp.ne.s32.totalorder %s382, %s383
      %p395 = scmp.eq.s32.totalorder %s37, 1
      %p396 = por %p394, %p395
      %p398 = scmp.ne.s32.totalorder %s383, %s397
      %p399 = scmp.eq.s32.totalorder %s37, 0
      %p400 = por %p398, %p399
      %s401 = ssub.s32 %s31, %s38
      %p402 = scmp.eq.s32.totalorder %s401, 0
      %s404 = sadd.s32 %s403, 1
      %s405 = scalar_select %p402, %s403, %s404
      %p408 = pneg %p402
      %p409 = scmp.eq.s32.totalorder %s31, 1
      %p410 = por %p408, %p409
      %p411 = scmp.ne.s32.totalorder %s403, %s406
      %p412 = scmp.eq.s32.totalorder %s31, 0
      %p413 = por %p411, %p412
      %p414 = scmp.ne.s32.totalorder %s403, %s406
      %p415 = scmp.eq.s32.totalorder %s36, 1
      %p416 = por %p414, %p415
      %p417 = scmp.ne.s32.totalorder %s406, %s407
      %p418 = scmp.eq.s32.totalorder %s36, 0
      %p419 = por %p417, %p418
      %p420 = scmp.ne.s32.totalorder %s406, %s407
      %p421 = scmp.eq.s32.totalorder %s37, 1
      %p422 = por %p420, %p421
      %p424 = scmp.ne.s32.totalorder %s407, %s423
      %p425 = scmp.eq.s32.totalorder %s37, 0
      %p426 = por %p424, %p425
      %s427 = ssub.s32 %s31, %s38
      %p428 = scmp.eq.s32.totalorder %s427, 0
      %s430 = sadd.s32 %s429, 1
      %s431 = scalar_select %p428, %s429, %s430
      %p434 = pneg %p428
      %p435 = scmp.eq.s32.totalorder %s31, 1
      %p436 = por %p434, %p435
      %p437 = scmp.ne.s32.totalorder %s429, %s432
      %p438 = scmp.eq.s32.totalorder %s31, 0
      %p439 = por %p437, %p438
      %p440 = scmp.ne.s32.totalorder %s429, %s432
      %p441 = scmp.eq.s32.totalorder %s36, 1
      %p442 = por %p440, %p441
      %p443 = scmp.ne.s32.totalorder %s432, %s433
      %p444 = scmp.eq.s32.totalorder %s36, 0
      %p445 = por %p443, %p444
      %p446 = scmp.ne.s32.totalorder %s432, %s433
      %p447 = scmp.eq.s32.totalorder %s37, 1
      %p448 = por %p446, %p447
      %p450 = scmp.ne.s32.totalorder %s433, %s449
      %p451 = scmp.eq.s32.totalorder %s37, 0
      %p452 = por %p450, %p451
      %p453 = scmp.le.s32.totalorder 1, %s31
      %p454 = scmp.lt.s32.totalorder %s31, 3
      %p455 = pnand %p453, %p454
      %p456 = pneg %p455
      // Predicated region
      $region9: #{_lambda_.5} parent=5 // pred_check
        _
      $region10: #{_lambda_.5} parent=5 // pred_check_branch
        %458 = sbr.rel (%p455) target = $region12
      $region11: #{_lambda_.5} parent=5 // pred_region
        %s459 = ssub.s32 %s31, 1
        // Predicated region
        $region13: #{_lambda_.5} parent=11 // pred_check
          %p460 = pneg %p78
        $region14: #{_lambda_.5} parent=11 // pred_check_branch
          %462 = sbr.rel (%p460) target = $region16
        $region15: #{_lambda_.5} parent=11 // pred_region
          %464 = vsyncadd [#allocation4], 0
          %s465 = sshll.u32 %s1, 4
          %s466 = int_to_ptr.hbm [resolvable:$true] %s465
          %s467 = sshll.u32 [#allocation3], 4
          %s468 = int_to_ptr.vmem [resolvable:$true] %s467
          %473 = dma.hbm_to_vmem [thread:$0]  %s466, 6144, %s468, [#allocation4], 128, 128, 8
        $region16: #{_lambda_.5} parent=11 // pred_fallthru
          _
        // Predicated region
        $region17: #{_lambda_.5} parent=11 // pred_check
          %p474 = pneg %p99
        $region18: #{_lambda_.5} parent=11 // pred_check_branch
          %476 = sbr.rel (%p474) target = $region20
        $region19: #{_lambda_.5} parent=11 // pred_region
          _
        $region20: #{_lambda_.5} parent=11 // pred_fallthru
          _
        // Predicated region
        $region21: #{_lambda_.5} parent=11 // pred_check
          %p477 = pneg %p120
        $region22: #{_lambda_.5} parent=11 // pred_check_branch
          %479 = sbr.rel (%p477) target = $region24
        $region23: #{_lambda_.5} parent=11 // pred_region
          %481 = vsyncadd [#allocation6], 0
          %s482 = sshll.u32 %s3, 4
          %s483 = int_to_ptr.hbm [resolvable:$true] %s482
          %s484 = sshll.u32 [#allocation5], 4
          %s485 = int_to_ptr.vmem [resolvable:$true] %s484
          %490 = dma.hbm_to_vmem [thread:$0]  %s483, 6144, %s485, [#allocation6], 128, 128, 8
        $region24: #{_lambda_.5} parent=11 // pred_fallthru
          _
        // Predicated region
        $region25: #{_lambda_.5} parent=11 // pred_check
          %p491 = pneg %p141
        $region26: #{_lambda_.5} parent=11 // pred_check_branch
          %493 = sbr.rel (%p491) target = $region28
        $region27: #{_lambda_.5} parent=11 // pred_region
          _
        $region28: #{_lambda_.5} parent=11 // pred_fallthru
          _
        // Predicated region
        $region29: #{_lambda_.5} parent=11 // pred_check
          %p494 = pneg %p162
        $region30: #{_lambda_.5} parent=11 // pred_check_branch
          %496 = sbr.rel (%p494) target = $region32
        $region31: #{_lambda_.5} parent=11 // pred_region
          %498 = vsyncadd [#allocation6], 0
          %s499 = sshll.u32 %s5, 4
          %s500 = int_to_ptr.hbm [resolvable:$true] %s499
          %s501 = sshll.u32 [#allocation7], 4
          %s502 = int_to_ptr.vmem [resolvable:$true] %s501
          %507 = dma.hbm_to_vmem [thread:$0]  %s500, 1024, %s502, [#allocation6], 64, 64, 4
        $region32: #{_lambda_.5} parent=11 // pred_fallthru
          _
        // Predicated region
        $region33: #{_lambda_.5} parent=11 // pred_check
          %p508 = pneg %p183
        $region34: #{_lambda_.5} parent=11 // pred_check_branch
          %510 = sbr.rel (%p508) target = $region36
        $region35: #{_lambda_.5} parent=11 // pred_region
          %512 = vsyncadd [#allocation9], 0
          %s514 = sshll.u32 %s6, 4
          %s515 = int_to_ptr.hbm [resolvable:$true] %s514
          %s516 = sshll.u32 [#allocation8], 4
          %s517 = int_to_ptr.vmem [resolvable:$true] %s516
          %519 = dma.hbm_to_vmem [thread:$0]  %s515, 16, %s517, [#allocation9]
        $region36: #{_lambda_.5} parent=11 // pred_fallthru
          _
        // Predicated region
        $region37: #{_lambda_.5} parent=11 // pred_check
          %p520 = pneg %p204
        $region38: #{_lambda_.5} parent=11 // pred_check_branch
          %522 = sbr.rel (%p520) target = $region40
        $region39: #{_lambda_.5} parent=11 // pred_region
          %524 = vsyncadd [#allocation9], 0
          %s525 = sshll.u32 %s7, 4
          %s526 = int_to_ptr.hbm [resolvable:$true] %s525
          %s527 = sshll.u32 [#allocation10], 4
          %s528 = int_to_ptr.vmem [resolvable:$true] %s527
          %533 = dma.hbm_to_vmem [thread:$0]  %s526, 6144, %s528, [#allocation9], 128, 128, 8
        $region40: #{_lambda_.5} parent=11 // pred_fallthru
          _
        // Predicated region
        $region41: #{_lambda_.5} parent=11 // pred_check
          %p534 = pneg %p225
        $region42: #{_lambda_.5} parent=11 // pred_check_branch
          %536 = sbr.rel (%p534) target = $region44
        $region43: #{_lambda_.5} parent=11 // pred_region
          _
        $region44: #{_lambda_.5} parent=11 // pred_fallthru
          _
        // Predicated region
        $region45: #{_lambda_.5} parent=11 // pred_check
          %p537 = pneg %p246
        $region46: #{_lambda_.5} parent=11 // pred_check_branch
          %539 = sbr.rel (%p537) target = $region48
        $region47: #{_lambda_.5} parent=11 // pred_region
          %541 = vsyncadd [#allocation12], 0
          %s542 = sshll.u32 %s9, 4
          %s543 = int_to_ptr.hbm [resolvable:$true] %s542
          %s544 = sshll.u32 [#allocation11], 4
          %s545 = int_to_ptr.vmem [resolvable:$true] %s544
          %550 = dma.hbm_to_vmem [thread:$0]  %s543, 6144, %s545, [#allocation12], 128, 128, 8
        $region48: #{_lambda_.5} parent=11 // pred_fallthru
          _
        // Predicated region
        $region49: #{_lambda_.5} parent=11 // pred_check
          %p551 = pneg %p267
        $region50: #{_lambda_.5} parent=11 // pred_check_branch
          %553 = sbr.rel (%p551) target = $region52
        $region51: #{_lambda_.5} parent=11 // pred_region
          _
        $region52: #{_lambda_.5} parent=11 // pred_fallthru
          _
        // Predicated region
        $region53: #{_lambda_.5} parent=11 // pred_check
          %p554 = pneg %p288
        $region54: #{_lambda_.5} parent=11 // pred_check_branch
          %556 = sbr.rel (%p554) target = $region56
        $region55: #{_lambda_.5} parent=11 // pred_region
          %558 = vsyncadd [#allocation12], 0
          %s559 = sshll.u32 %s11, 4
          %s560 = int_to_ptr.hbm [resolvable:$true] %s559
          %s561 = sshll.u32 [#allocation13], 4
          %s562 = int_to_ptr.vmem [resolvable:$true] %s561
          %567 = dma.hbm_to_vmem [thread:$0]  %s560, 1024, %s562, [#allocation12], 64, 64, 4
        $region56: #{_lambda_.5} parent=11 // pred_fallthru
          _
        // Predicated region
        $region57: #{_lambda_.5} parent=11 // pred_check
          %p568 = pneg %p309
        $region58: #{_lambda_.5} parent=11 // pred_check_branch
          %570 = sbr.rel (%p568) target = $region60
        $region59: #{_lambda_.5} parent=11 // pred_region
          %572 = vsyncadd [#allocation15], 0
          %s574 = sshll.u32 %s12, 4
          %s575 = int_to_ptr.hbm [resolvable:$true] %s574
          %s576 = sshll.u32 [#allocation14], 4
          %s577 = int_to_ptr.vmem [resolvable:$true] %s576
          %579 = dma.hbm_to_vmem [thread:$0]  %s575, 16, %s577, [#allocation15]
        $region60: #{_lambda_.5} parent=11 // pred_fallthru
          _
        // Predicated region
        $region61: #{_lambda_.5} parent=11 // pred_check
          %p580 = pneg %p330
        $region62: #{_lambda_.5} parent=11 // pred_check_branch
          %582 = sbr.rel (%p580) target = $region64
        $region63: #{_lambda_.5} parent=11 // pred_region
          _
        $region64: #{_lambda_.5} parent=11 // pred_fallthru
          _
        // Predicated region
        $region65: #{_lambda_.5} parent=11 // pred_check
          %p583 = pneg %p351
        $region66: #{_lambda_.5} parent=11 // pred_check_branch
          %585 = sbr.rel (%p583) target = $region68
        $region67: #{_lambda_.5} parent=11 // pred_region
          _
        $region68: #{_lambda_.5} parent=11 // pred_fallthru
          _
        // Predicated region
        $region69: #{_lambda_.5} parent=11 // pred_check
          %p586 = pneg %p372
        $region70: #{_lambda_.5} parent=11 // pred_check_branch
          %588 = sbr.rel (%p586) target = $region72
        $region71: #{_lambda_.5} parent=11 // pred_region
          %590 = vsyncadd [#allocation15], 0
          %s591 = sshll.u32 %s15, 4
          %s592 = int_to_ptr.hbm [resolvable:$true] %s591
          %s593 = sshll.u32 [#allocation16], 4
          %s594 = int_to_ptr.vmem [resolvable:$true] %s593
          %599 = dma.hbm_to_vmem [thread:$0]  %s592, 1024, %s594, [#allocation15], 64, 64, 4
        $region72: #{_lambda_.5} parent=11 // pred_fallthru
          _
        // Predicated region
        $region73: #{_lambda_.5} parent=11 // pred_check
          %p600 = pneg %p393
        $region74: #{_lambda_.5} parent=11 // pred_check_branch
          %602 = sbr.rel (%p600) target = $region76
        $region75: #{_lambda_.5} parent=11 // pred_region
          %604 = vsyncadd [#allocation18], 0
          %s606 = sshll.u32 %s16, 4
          %s607 = int_to_ptr.hbm [resolvable:$true] %s606
          %s608 = sshll.u32 [#allocation17], 4
          %s609 = int_to_ptr.vmem [resolvable:$true] %s608
          %611 = dma.hbm_to_vmem [thread:$0]  %s607, 16, %s609, [#allocation18]
        $region76: #{_lambda_.5} parent=11 // pred_fallthru
          _
      $region12: #{_lambda_.5} parent=5 // pred_fallthru
        _
      %p612 = scmp.lt.s32.totalorder %s31, 2
      // Predicated region
      $region77: #{_lambda_.5} parent=5 // pred_check
        %p613 = pneg %p612
      $region78: #{_lambda_.5} parent=5 // pred_check_branch
        %615 = sbr.rel (%p613) target = $region80
      $region79: #{_lambda_.5} parent=5 // pred_region
        // Predicated region
        $region81: #{_lambda_.5} parent=79 // pred_check
          %p616 = pneg %p51
        $region82: #{_lambda_.5} parent=79 // pred_check_branch
          %618 = sbr.rel (%p616) target = $region84
        $region83: #{_lambda_.5} parent=79 // pred_region
          %p619 = scmp.lt.s32.totalorder %s31, 1
          %s620 = scalar_select %p619, %s31, 1
          %s621 = smul.addr %s620, 4
          %s622 = smul.addr %s621, 4
          %s623 = scalar_lea.vmem %s0, %s622
        $region84: #{_lambda_.5} parent=79 // pred_fallthru
          _
      $region80: #{_lambda_.5} parent=5 // pred_fallthru
        _
      %p624 = scmp.le.s32.totalorder 1, %s31
      %p625 = scmp.lt.s32.totalorder %s31, 3
      %p626 = pnand %p624, %p625
      %p627 = pneg %p626
      // Predicated region
      $region85: #{_lambda_.5} parent=5 // pred_check
        _
      $region86: #{_lambda_.5} parent=5 // pred_check_branch
        %629 = sbr.rel (%p626) target = $region88
      $region87: #{_lambda_.5} parent=5 // pred_region
        %s630 = ssub.s32 %s31, 1
        // Predicated region
        $region89: #{_lambda_.5} parent=87 // pred_check
          %p631 = pneg %p78
        $region90: #{_lambda_.5} parent=87 // pred_check_branch
          %633 = sbr.rel (%p631) target = $region92
        $region91: #{_lambda_.5} parent=87 // pred_region
          %635 = dma.done [#allocation4], 6144
        $region92: #{_lambda_.5} parent=87 // pred_fallthru
          _
        // Predicated region
        $region93: #{_lambda_.5} parent=87 // pred_check
          %p636 = pneg %p120
        $region94: #{_lambda_.5} parent=87 // pred_check_branch
          %638 = sbr.rel (%p636) target = $region96
        $region95: #{_lambda_.5} parent=87 // pred_region
          %640 = dma.done [#allocation6], 6144
        $region96: #{_lambda_.5} parent=87 // pred_fallthru
          _
        // Predicated region
        $region97: #{_lambda_.5} parent=87 // pred_check
          %p641 = pneg %p162
        $region98: #{_lambda_.5} parent=87 // pred_check_branch
          %643 = sbr.rel (%p641) target = $region100
        $region99: #{_lambda_.5} parent=87 // pred_region
          %645 = dma.done [#allocation6], 1024
        $region100: #{_lambda_.5} parent=87 // pred_fallthru
          _
        // Predicated region
        $region101: #{_lambda_.5} parent=87 // pred_check
          %p646 = pneg %p183
        $region102: #{_lambda_.5} parent=87 // pred_check_branch
          %648 = sbr.rel (%p646) target = $region104
        $region103: #{_lambda_.5} parent=87 // pred_region
          %650 = dma.done [#allocation9], 16
        $region104: #{_lambda_.5} parent=87 // pred_fallthru
          _
        // Predicated region
        $region105: #{_lambda_.5} parent=87 // pred_check
          %p651 = pneg %p204
        $region106: #{_lambda_.5} parent=87 // pred_check_branch
          %653 = sbr.rel (%p651) target = $region108
        $region107: #{_lambda_.5} parent=87 // pred_region
          %655 = dma.done [#allocation9], 6144
        $region108: #{_lambda_.5} parent=87 // pred_fallthru
          _
        // Predicated region
        $region109: #{_lambda_.5} parent=87 // pred_check
          %p656 = pneg %p246
        $region110: #{_lambda_.5} parent=87 // pred_check_branch
          %658 = sbr.rel (%p656) target = $region112
        $region111: #{_lambda_.5} parent=87 // pred_region
          %660 = dma.done [#allocation12], 6144
        $region112: #{_lambda_.5} parent=87 // pred_fallthru
          _
        // Predicated region
        $region113: #{_lambda_.5} parent=87 // pred_check
          %p661 = pneg %p288
        $region114: #{_lambda_.5} parent=87 // pred_check_branch
          %663 = sbr.rel (%p661) target = $region116
        $region115: #{_lambda_.5} parent=87 // pred_region
          %665 = dma.done [#allocation12], 1024
        $region116: #{_lambda_.5} parent=87 // pred_fallthru
          _
        // Predicated region
        $region117: #{_lambda_.5} parent=87 // pred_check
          %p666 = pneg %p309
        $region118: #{_lambda_.5} parent=87 // pred_check_branch
          %668 = sbr.rel (%p666) target = $region120
        $region119: #{_lambda_.5} parent=87 // pred_region
          %670 = dma.done [#allocation15], 16
        $region120: #{_lambda_.5} parent=87 // pred_fallthru
          _
        // Predicated region
        $region121: #{_lambda_.5} parent=87 // pred_check
          %p671 = pneg %p372
        $region122: #{_lambda_.5} parent=87 // pred_check_branch
          %673 = sbr.rel (%p671) target = $region124
        $region123: #{_lambda_.5} parent=87 // pred_region
          %675 = dma.done [#allocation15], 1024
        $region124: #{_lambda_.5} parent=87 // pred_fallthru
          _
        // Predicated region
        $region125: #{_lambda_.5} parent=87 // pred_check
          %p676 = pneg %p393
        $region126: #{_lambda_.5} parent=87 // pred_check_branch
          %678 = sbr.rel (%p676) target = $region128
        $region127: #{_lambda_.5} parent=87 // pred_region
          %680 = dma.done [#allocation18], 16
        $region128: #{_lambda_.5} parent=87 // pred_fallthru
          _
        %p681 = scmp.lt.s32.totalorder %s36, 1
        %s682 = scalar_select %p681, %s36, 1
        %s683 = smul.addr %s682, 4
        %s684 = smul.addr %s683, 4
        %s685 = scalar_lea.vmem %s0, %s684
        %p686 = pneg %p57
        %p687 = pneg %p54
        %p688 = pneg %p78
        %p689 = pneg %p75
        %p690 = pneg %p99
        %p691 = pneg %p96
        %p692 = pneg %p120
        %p693 = pneg %p117
        %p694 = pneg %p141
        %p695 = pneg %p138
        %p696 = pneg %p162
        %p697 = pneg %p159
        %p698 = pneg %p183
        %p699 = pneg %p180
        %p700 = pneg %p204
        %p701 = pneg %p201
        %p702 = pneg %p225
        %p703 = pneg %p222
        %p704 = pneg %p246
        %p705 = pneg %p243
        %p706 = pneg %p267
        %p707 = pneg %p264
        %p708 = pneg %p288
        %p709 = pneg %p285
        %p710 = pneg %p309
        %p711 = pneg %p306
        %p712 = pneg %p330
        %p713 = pneg %p327
        %p714 = pneg %p351
        %p715 = pneg %p348
        %p716 = pneg %p372
        %p717 = pneg %p369
        %p718 = pneg %p393
        %p719 = pneg %p390
        %p720 = pneg %p419
        %p721 = pneg %p416
        %p722 = scmp.lt.s32.totalorder %s36, 1
        %s723 = scalar_select %p722, %s36, 1
        %s724 = smul.addr %s723, 4
        %s725 = smul.addr %s724, 8
        %s726 = scalar_lea.vmem %s17, %s725
        %p727 = pneg %p445
        %p728 = pneg %p442
        %p729 = scmp.lt.s32.totalorder %s36, 1
        %s730 = scalar_select %p729, %s36, 1
        %s731 = smul.addr %s730, 4
        %s732 = smul.addr %s731, 8
        %s733 = scalar_lea.vmem %s18, %s732
        %p734 = scmp.lt.s32.totalorder %s36, 1
        %s735 = scalar_select %p734, %s36, 1
        %s736 = smul.addr %s735, 4
        %s737 = smul.addr %s736, 4
        %s738 = scalar_lea.vmem %s0, %s737
        %p739 = scmp.lt.s32.totalorder %s36, 1
        %s740 = scalar_select %p739, %s36, 1
        %s741 = smul.addr %s740, 4
        %s742 = smul.addr %s741, 8
        %s743 = scalar_lea.vmem %s17, %s742
        %p744 = scmp.lt.s32.totalorder %s36, 1
        %s745 = scalar_select %p744, %s36, 1
        %s746 = smul.addr %s745, 4
        %s747 = smul.addr %s746, 8
        %s748 = scalar_lea.vmem %s18, %s747
        %749 = vst [vmem:[#allocation2 + $0x5] sm:$0x7] 0.0
        %750 = vst [vmem:[#allocation2 + $0x28] sm:$0x7] 0.0
        %v751 = vld [vmem:[%s738] sm:$0xf]
        %v752 = vld [vmem:[%s738 + $0x4] sm:$0xf]
        %v753 = vld [vmem:[%s738 + $0x8] sm:$0xf]
        %v754 = vld [vmem:[%s738 + $0xc] sm:$0xf]
        %v755 = vunpack.c.l.bf16 %v751
        %v756 = vunpack.c.l.bf16 %v752
        %v757 = vunpack.c.l.bf16 %v753
        %v758 = vunpack.c.l.bf16 %v754
        %759 = vst [vmem:[#allocation2 + $0x8] sm:$0xff] %v755
        %760 = vst [vmem:[#allocation2 + $0x10] sm:$0xff] %v756
        %761 = vst [vmem:[#allocation2 + $0x18] sm:$0xff] %v757
        %762 = vst [vmem:[#allocation2 + $0x20] sm:$0xff] %v758
        %v763 = vld [vmem:[#allocation2 + $0x7] sm:$0xff]
        %v764 = vld [vmem:[#allocation2 + $0xf] sm:$0xff]
        %v765 = vld [vmem:[#allocation2 + $0x17] sm:$0xff]
        %v766 = vld [vmem:[#allocation2 + $0x1f] sm:$0xff]
        %v767 = vld [vmem:[#allocation2 + $0x8] sm:$0xff]
        %v768 = vld [vmem:[#allocation2 + $0x10] sm:$0xff]
        %v769 = vld [vmem:[#allocation2 + $0x18] sm:$0xff]
        %v770 = vld [vmem:[#allocation2 + $0x20] sm:$0xff]
        %v771 = vld [vmem:[#allocation2 + $0x9] sm:$0xff]
        %v772 = vld [vmem:[#allocation2 + $0x11] sm:$0xff]
        %v773 = vld [vmem:[#allocation2 + $0x19] sm:$0xff]
        %v774 = vld [vmem:[#allocation2 + $0x21] sm:$0xff]
        %v775 = vpack.c.bf16 %v764, %v763
        %v776 = vpack.c.bf16 %v768, %v767
        %v777 = vpack.c.bf16 %v772, %v771
        %v778 = vpack.c.bf16 %v766, %v765
        %v779 = vpack.c.bf16 %v770, %v769
        %v780 = vpack.c.bf16 %v774, %v773
        %v781 = vld [vmem:[#allocation3] sm:$0xff]
        %v782 = vld [vmem:[#allocation3 + $0x8] sm:$0xff]
        %v783 = vld [vmem:[#allocation3 + $0x10] sm:$0xff]
        %v784 = vld [vmem:[#allocation3 + $0x18] sm:$0xff]
        %v785 = vld [vmem:[#allocation3 + $0x20] sm:$0xff]
        %v786 = vld [vmem:[#allocation3 + $0x28] sm:$0xff]
        %v787 = vld [vmem:[#allocation3 + $0x30] sm:$0xff]
        %v788 = vld [vmem:[#allocation3 + $0x38] sm:$0xff]
        %v789 = vld [vmem:[#allocation3 + $0x40] sm:$0xff]
        %v790 = vld [vmem:[#allocation3 + $0x48] sm:$0xff]
        %v791 = vld [vmem:[#allocation3 + $0x50] sm:$0xff]
        %v792 = vld [vmem:[#allocation3 + $0x58] sm:$0xff]
        %v793 = vld [vmem:[#allocation3 + $0x60] sm:$0xff]
        %v794 = vld [vmem:[#allocation3 + $0x68] sm:$0xff]
        %v795 = vld [vmem:[#allocation3 + $0x70] sm:$0xff]
        %v796 = vld [vmem:[#allocation3 + $0x78] sm:$0xff]
        %v797 = vld [vmem:[#allocation3 + $0x80] sm:$0xff]
        %v798 = vld [vmem:[#allocation3 + $0x88] sm:$0xff]
        %v799 = vld [vmem:[#allocation3 + $0x90] sm:$0xff]
        %v800 = vld [vmem:[#allocation3 + $0x98] sm:$0xff]
        %v801 = vld [vmem:[#allocation3 + $0xa0] sm:$0xff]
        %v802 = vld [vmem:[#allocation3 + $0xa8] sm:$0xff]
        %v803 = vld [vmem:[#allocation3 + $0xb0] sm:$0xff]
        %v804 = vld [vmem:[#allocation3 + $0xb8] sm:$0xff]
        %v805 = vld [vmem:[#allocation3 + $0xc0] sm:$0xff]
        %v806 = vld [vmem:[#allocation3 + $0xc8] sm:$0xff]
        %v807 = vld [vmem:[#allocation3 + $0xd0] sm:$0xff]
        %v808 = vld [vmem:[#allocation3 + $0xd8] sm:$0xff]
        %v809 = vld [vmem:[#allocation3 + $0xe0] sm:$0xff]
        %v810 = vld [vmem:[#allocation3 + $0xe8] sm:$0xff]
        %v811 = vld [vmem:[#allocation3 + $0xf0] sm:$0xff]
        %v812 = vld [vmem:[#allocation3 + $0xf8] sm:$0xff]
        %v813 = vld [vmem:[#allocation3 + $0x100] sm:$0xff]
        %v814 = vld [vmem:[#allocation3 + $0x108] sm:$0xff]
        %v815 = vld [vmem:[#allocation3 + $0x110] sm:$0xff]
        %v816 = vld [vmem:[#allocation3 + $0x118] sm:$0xff]
        %v817 = vld [vmem:[#allocation3 + $0x120] sm:$0xff]
        %v818 = vld [vmem:[#allocation3 + $0x128] sm:$0xff]
        %v819 = vld [vmem:[#allocation3 + $0x130] sm:$0xff]
        %v820 = vld [vmem:[#allocation3 + $0x138] sm:$0xff]
        %v821 = vld [vmem:[#allocation3 + $0x140] sm:$0xff]
        %v822 = vld [vmem:[#allocation3 + $0x148] sm:$0xff]
        %v823 = vld [vmem:[#allocation3 + $0x150] sm:$0xff]
        %v824 = vld [vmem:[#allocation3 + $0x158] sm:$0xff]
        %v825 = vld [vmem:[#allocation3 + $0x160] sm:$0xff]
        %v826 = vld [vmem:[#allocation3 + $0x168] sm:$0xff]
        %v827 = vld [vmem:[#allocation3 + $0x170] sm:$0xff]
        %v828 = vld [vmem:[#allocation3 + $0x178] sm:$0xff]
        %v829 = vld [vmem:[%s2] sm:$0x3]
        %v831 = vperm.slane %v829, 0
        %v832 = vperm.slane %v829, 1
        %v883 = vunpack.c.l.b16 %v781
        %v884 = vunpack.c.h.b16 %v781
        %v885 = vunpack.c.l.b16 %v782
        %v886 = vunpack.c.h.b16 %v782
        %v887 = vunpack.c.l.b16 %v783
        %v888 = vunpack.c.h.b16 %v783
        %v889 = vunpack.c.l.b16 %v784
        %v890 = vunpack.c.h.b16 %v784
        %v891 = vunpack.c.l.b16 %v785
        %v892 = vunpack.c.h.b16 %v785
        %v893 = vunpack.c.l.b16 %v786
        %v894 = vunpack.c.h.b16 %v786
        %v895 = vunpack.c.l.b16 %v787
        %v896 = vunpack.c.h.b16 %v787
        %v897 = vunpack.c.l.b16 %v788
        %v898 = vunpack.c.h.b16 %v788
        %v899 = vunpack.c.l.b16 %v789
        %v900 = vunpack.c.h.b16 %v789
        %v901 = vunpack.c.l.b16 %v790
        %v902 = vunpack.c.h.b16 %v790
        %v903 = vunpack.c.l.b16 %v791
        %v904 = vunpack.c.h.b16 %v791
        %v905 = vunpack.c.l.b16 %v792
        %v906 = vunpack.c.h.b16 %v792
        %v907 = vunpack.c.l.b16 %v793
        %v908 = vunpack.c.h.b16 %v793
        %v909 = vunpack.c.l.b16 %v794
        %v910 = vunpack.c.h.b16 %v794
        %v911 = vunpack.c.l.b16 %v795
        %v912 = vunpack.c.h.b16 %v795
        %v913 = vunpack.c.l.b16 %v796
        %v914 = vunpack.c.h.b16 %v796
        %v915 = vunpack.c.l.b16 %v797
        %v916 = vunpack.c.h.b16 %v797
        %v917 = vunpack.c.l.b16 %v798
        %v918 = vunpack.c.h.b16 %v798
        %v919 = vunpack.c.l.b16 %v799
        %v920 = vunpack.c.h.b16 %v799
        %v921 = vunpack.c.l.b16 %v800
        %v922 = vunpack.c.h.b16 %v800
        %v923 = vunpack.c.l.b16 %v801
        %v924 = vunpack.c.h.b16 %v801
        %v925 = vunpack.c.l.b16 %v802
        %v926 = vunpack.c.h.b16 %v802
        %v927 = vunpack.c.l.b16 %v803
        %v928 = vunpack.c.h.b16 %v803
        %v929 = vunpack.c.l.b16 %v804
        %v930 = vunpack.c.h.b16 %v804
        %v931 = vunpack.c.l.b16 %v805
        %v932 = vunpack.c.h.b16 %v805
        %v933 = vunpack.c.l.b16 %v806
        %v934 = vunpack.c.h.b16 %v806
        %v935 = vunpack.c.l.b16 %v807
        %v936 = vunpack.c.h.b16 %v807
        %v937 = vunpack.c.l.b16 %v808
        %v938 = vunpack.c.h.b16 %v808
        %v939 = vunpack.c.l.b16 %v809
        %v940 = vunpack.c.h.b16 %v809
        %v941 = vunpack.c.l.b16 %v810
        %v942 = vunpack.c.h.b16 %v810
        %v943 = vunpack.c.l.b16 %v811
        %v944 = vunpack.c.h.b16 %v811
        %v945 = vunpack.c.l.b16 %v812
        %v946 = vunpack.c.h.b16 %v812
        %v947 = vunpack.c.l.b16 %v813
        %v948 = vunpack.c.h.b16 %v813
        %v949 = vunpack.c.l.b16 %v814
        %v950 = vunpack.c.h.b16 %v814
        %v951 = vunpack.c.l.b16 %v815
        %v952 = vunpack.c.h.b16 %v815
        %v953 = vunpack.c.l.b16 %v816
        %v954 = vunpack.c.h.b16 %v816
        %v955 = vunpack.c.l.b16 %v817
        %v956 = vunpack.c.h.b16 %v817
        %v957 = vunpack.c.l.b16 %v818
        %v958 = vunpack.c.h.b16 %v818
        %v959 = vunpack.c.l.b16 %v819
        %v960 = vunpack.c.h.b16 %v819
        %v961 = vunpack.c.l.b16 %v820
        %v962 = vunpack.c.h.b16 %v820
        %v963 = vunpack.c.l.b16 %v821
        %v964 = vunpack.c.h.b16 %v821
        %v965 = vunpack.c.l.b16 %v822
        %v966 = vunpack.c.h.b16 %v822
        %v967 = vunpack.c.l.b16 %v823
        %v968 = vunpack.c.h.b16 %v823
        %v969 = vunpack.c.l.b16 %v824
        %v970 = vunpack.c.h.b16 %v824
        %v971 = vunpack.c.l.b16 %v825
        %v972 = vunpack.c.h.b16 %v825
        %v973 = vunpack.c.l.b16 %v826
        %v974 = vunpack.c.h.b16 %v826
        %v975 = vunpack.c.l.b16 %v827
        %v976 = vunpack.c.h.b16 %v827
        %v977 = vunpack.c.l.b16 %v828
        %v978 = vunpack.c.h.b16 %v828
        %v979 = vpack.c.b16 %v885, %v883
        %v980 = vpack.c.b16 %v886, %v884
        %v981 = vpack.c.b16 %v889, %v887
        %v982 = vpack.c.b16 %v890, %v888
        %v983 = vpack.c.b16 %v893, %v891
        %v984 = vpack.c.b16 %v894, %v892
        %v985 = vpack.c.b16 %v897, %v895
        %v986 = vpack.c.b16 %v898, %v896
        %v987 = vpack.c.b16 %v901, %v899
        %v988 = vpack.c.b16 %v902, %v900
        %v989 = vpack.c.b16 %v905, %v903
        %v990 = vpack.c.b16 %v906, %v904
        %v991 = vpack.c.b16 %v909, %v907
        %v992 = vpack.c.b16 %v910, %v908
        %v993 = vpack.c.b16 %v913, %v911
        %v994 = vpack.c.b16 %v914, %v912
        %v995 = vpack.c.b16 %v917, %v915
        %v996 = vpack.c.b16 %v918, %v916
        %v997 = vpack.c.b16 %v921, %v919
        %v998 = vpack.c.b16 %v922, %v920
        %v999 = vpack.c.b16 %v925, %v923
        %v1000 = vpack.c.b16 %v926, %v924
        %v1001 = vpack.c.b16 %v929, %v927
        %v1002 = vpack.c.b16 %v930, %v928
        %v1003 = vpack.c.b16 %v933, %v931
        %v1004 = vpack.c.b16 %v934, %v932
        %v1005 = vpack.c.b16 %v937, %v935
        %v1006 = vpack.c.b16 %v938, %v936
        %v1007 = vpack.c.b16 %v941, %v939
        %v1008 = vpack.c.b16 %v942, %v940
        %v1009 = vpack.c.b16 %v945, %v943
        %v1010 = vpack.c.b16 %v946, %v944
        %v1011 = vpack.c.b16 %v949, %v947
        %v1012 = vpack.c.b16 %v950, %v948
        %v1013 = vpack.c.b16 %v953, %v951
        %v1014 = vpack.c.b16 %v954, %v952
        %v1015 = vpack.c.b16 %v957, %v955
        %v1016 = vpack.c.b16 %v958, %v956
        %v1017 = vpack.c.b16 %v961, %v959
        %v1018 = vpack.c.b16 %v962, %v960
        %v1019 = vpack.c.b16 %v965, %v963
        %v1020 = vpack.c.b16 %v966, %v964
        %v1021 = vpack.c.b16 %v969, %v967
        %v1022 = vpack.c.b16 %v970, %v968
        %v1023 = vpack.c.b16 %v973, %v971
        %v1024 = vpack.c.b16 %v974, %v972
        %v1025 = vpack.c.b16 %v977, %v975
        %v1026 = vpack.c.b16 %v978, %v976
        %1075 = vmatpush.bf16.msra.mxu0 %v993
        %1076 = vmatpush.bf16.msra.mxu0 %v991
        %1077 = vmatpush.bf16.msra.mxu0 %v989
        %1078 = vmatpush.bf16.msra.mxu0 %v987
        %1079 = vmatpush.bf16.msra.mxu0 %v985
        %1080 = vmatpush.bf16.msra.mxu0 %v983
        %1081 = vmatpush.bf16.msra.mxu0 %v981
        %1082 = vmatpush.bf16.msra.mxu0 %v979
        %1083 = vmatmul.bf16.gmra.mxu0 %v775
        %v1084 = vpop.f32.mrf.mxu0
        %v1085 = vadd.f32 %v831, %v1084
        %v1086 = vpop.f32.mrf.mxu0
        %v1087 = vadd.f32 %v831, %v1086
        %1088 = vmatmul.bf16.gmra.mxu0 %v778
        %v1089 = vpop.f32.mrf.mxu0
        %v1090 = vadd.f32 %v831, %v1089
        %v1091 = vpop.f32.mrf.mxu0
        %v1092 = vadd.f32 %v831, %v1091
        %1093 = vdwg.mxu0
        %1094 = vmatpush.bf16.msra.mxu0 %v1009
        %1095 = vmatpush.bf16.msra.mxu0 %v1007
        %1096 = vmatpush.bf16.msra.mxu0 %v1005
        %1097 = vmatpush.bf16.msra.mxu0 %v1003
        %1098 = vmatpush.bf16.msra.mxu0 %v1001
        %1099 = vmatpush.bf16.msra.mxu0 %v999
        %1100 = vmatpush.bf16.msra.mxu0 %v997
        %1101 = vmatpush.bf16.msra.mxu0 %v995
        %1102 = vmatmul.bf16.gmra.mxu0 %v776
        %v1103 = vpop.f32.mrf.mxu0
        %v1104 = vadd.f32 %v1085, %v1103
        %v1105 = vpop.f32.mrf.mxu0
        %v1106 = vadd.f32 %v1087, %v1105
        %1107 = vmatmul.bf16.gmra.mxu0 %v779
        %v1108 = vpop.f32.mrf.mxu0
        %v1109 = vadd.f32 %v1090, %v1108
        %v1110 = vpop.f32.mrf.mxu0
        %v1111 = vadd.f32 %v1092, %v1110
        %1112 = vdwg.mxu0
        %1113 = vmatpush.bf16.msra.mxu0 %v1025
        %1114 = vmatpush.bf16.msra.mxu0 %v1023
        %1115 = vmatpush.bf16.msra.mxu0 %v1021
        %1116 = vmatpush.bf16.msra.mxu0 %v1019
        %1117 = vmatpush.bf16.msra.mxu0 %v1017
        %1118 = vmatpush.bf16.msra.mxu0 %v1015
        %1119 = vmatpush.bf16.msra.mxu0 %v1013
        %1120 = vmatpush.bf16.msra.mxu0 %v1011
        %1121 = vmatmul.bf16.gmra.mxu0 %v777
        %v1122 = vpop.f32.mrf.mxu0
        %v1123 = vadd.f32 %v1104, %v1122
        %v1124 = vpop.f32.mrf.mxu0
        %v1125 = vadd.f32 %v1106, %v1124
        %1126 = vmatmul.bf16.gmra.mxu0 %v780
        %v1127 = vpop.f32.mrf.mxu0
        %v1128 = vadd.f32 %v1109, %v1127
        %v1129 = vpop.f32.mrf.mxu0
        %v1130 = vadd.f32 %v1111, %v1129
        %1131 = vdwg.mxu0
        %1132 = vmatpush.bf16.msra.mxu0 %v994
        %1133 = vmatpush.bf16.msra.mxu0 %v992
        %1134 = vmatpush.bf16.msra.mxu0 %v990
        %1135 = vmatpush.bf16.msra.mxu0 %v988
        %1136 = vmatpush.bf16.msra.mxu0 %v986
        %1137 = vmatpush.bf16.msra.mxu0 %v984
        %1138 = vmatpush.bf16.msra.mxu0 %v982
        %1139 = vmatpush.bf16.msra.mxu0 %v980
        %1140 = vmatmul.bf16.gmra.mxu0 %v775
        %v1141 = vpop.f32.mrf.mxu0
        %v1142 = vadd.f32 %v832, %v1141
        %v1143 = vpop.f32.mrf.mxu0
        %v1144 = vadd.f32 %v832, %v1143
        %1145 = vmatmul.bf16.gmra.mxu0 %v778
        %v1146 = vpop.f32.mrf.mxu0
        %v1147 = vadd.f32 %v832, %v1146
        %v1148 = vpop.f32.mrf.mxu0
        %v1149 = vadd.f32 %v832, %v1148
        %1150 = vdwg.mxu0
        %1151 = vmatpush.bf16.msra.mxu0 %v1010
        %1152 = vmatpush.bf16.msra.mxu0 %v1008
        %1153 = vmatpush.bf16.msra.mxu0 %v1006
        %1154 = vmatpush.bf16.msra.mxu0 %v1004
        %1155 = vmatpush.bf16.msra.mxu0 %v1002
        %1156 = vmatpush.bf16.msra.mxu0 %v1000
        %1157 = vmatpush.bf16.msra.mxu0 %v998
        %1158 = vmatpush.bf16.msra.mxu0 %v996
        %1159 = vmatmul.bf16.gmra.mxu0 %v776
        %v1160 = vpop.f32.mrf.mxu0
        %v1161 = vadd.f32 %v1142, %v1160
        %v1162 = vpop.f32.mrf.mxu0
        %v1163 = vadd.f32 %v1144, %v1162
        %1164 = vmatmul.bf16.gmra.mxu0 %v779
        %v1165 = vpop.f32.mrf.mxu0
        %v1166 = vadd.f32 %v1147, %v1165
        %v1167 = vpop.f32.mrf.mxu0
        %v1168 = vadd.f32 %v1149, %v1167
        %1169 = vdwg.mxu0
        %1170 = vmatpush.bf16.msra.mxu0 %v1026
        %1171 = vmatpush.bf16.msra.mxu0 %v1024
        %1172 = vmatpush.bf16.msra.mxu0 %v1022
        %1173 = vmatpush.bf16.msra.mxu0 %v1020
        %1174 = vmatpush.bf16.msra.mxu0 %v1018
        %1175 = vmatpush.bf16.msra.mxu0 %v1016
        %1176 = vmatpush.bf16.msra.mxu0 %v1014
        %1177 = vmatpush.bf16.msra.mxu0 %v1012
        %1178 = vmatmul.bf16.gmra.mxu0 %v777
        %v1179 = vpop.f32.mrf.mxu0
        %v1180 = vadd.f32 %v1161, %v1179
        %v1181 = vpop.f32.mrf.mxu0
        %v1182 = vadd.f32 %v1163, %v1181
        %1183 = vmatmul.bf16.gmra.mxu0 %v780
        %v1184 = vpop.f32.mrf.mxu0
        %v1185 = vadd.f32 %v1166, %v1184
        %v1186 = vpop.f32.mrf.mxu0
        %v1187 = vadd.f32 %v1168, %v1186
        %1188 = vdwg.mxu0
        %v1189 = vxor.u32 %v1123, 2147483648
        %v1190 = vxor.u32 %v1125, 2147483648
        %v1191 = vxor.u32 %v1128, 2147483648
        %v1192 = vxor.u32 %v1130, 2147483648
        %v1193 = vmul.f32 %v1189, 1.442695
        %v1194 = vpow.pop %v1193
        %v1195 = vmul.f32 %v1190, 1.442695
        %v1196 = vpow.pop %v1195
        %v1197 = vmul.f32 %v1191, 1.442695
        %v1198 = vpow.pop %v1197
        %v1199 = vmul.f32 %v1192, 1.442695
        %v1200 = vpow.pop %v1199
        %v1201 = vadd.f32 %v1194, 1.0
        %v1202 = vadd.f32 %v1196, 1.0
        %v1203 = vadd.f32 %v1198, 1.0
        %v1204 = vadd.f32 %v1200, 1.0
        %v1205 = vrcp.pop %v1201
        %v1206 = vmul.f32 %v1201, %v1205
        %v1207 = vsub.f32 1.0, %v1206
        %v1208 = vmul.f32 %v1205, %v1207
        %v1209 = vadd.f32 %v1205, %v1208
        %vm1210 = vweird.f32 %v1201
        %vm1211 = vweird.f32 %v1205
        %vm1212 = vmor %vm1210, %vm1211
        %v1213 = vsel %vm1212, %v1205, %v1209
        %v1214 = vand.u32 2147483647, %v1201
        %vm1215 = vcmp.eq.f32.partialorder %v1214, 8.507059e+37
        %v1216 = vand.u32 %v1201, 2147483648
        %v1217 = vor.u32 1.1754944e-38, %v1216
        %v1218 = vsel %vm1215, %v1217, %v1213
        %v1219 = vmul.f32 1.0, %v1218
        %v1220 = vrcp.pop %v1202
        %v1221 = vmul.f32 %v1202, %v1220
        %v1222 = vsub.f32 1.0, %v1221
        %v1223 = vmul.f32 %v1220, %v1222
        %v1224 = vadd.f32 %v1220, %v1223
        %vm1225 = vweird.f32 %v1202
        %vm1226 = vweird.f32 %v1220
        %vm1227 = vmor %vm1225, %vm1226
        %v1228 = vsel %vm1227, %v1220, %v1224
        %v1229 = vand.u32 2147483647, %v1202
        %vm1230 = vcmp.eq.f32.partialorder %v1229, 8.507059e+37
        %v1231 = vand.u32 %v1202, 2147483648
        %v1232 = vor.u32 1.1754944e-38, %v1231
        %v1233 = vsel %vm1230, %v1232, %v1228
        %v1234 = vmul.f32 1.0, %v1233
        %v1235 = vrcp.pop %v1203
        %v1236 = vmul.f32 %v1203, %v1235
        %v1237 = vsub.f32 1.0, %v1236
        %v1238 = vmul.f32 %v1235, %v1237
        %v1239 = vadd.f32 %v1235, %v1238
        %vm1240 = vweird.f32 %v1203
        %vm1241 = vweird.f32 %v1235
        %vm1242 = vmor %vm1240, %vm1241
        %v1243 = vsel %vm1242, %v1235, %v1239
        %v1244 = vand.u32 2147483647, %v1203
        %vm1245 = vcmp.eq.f32.partialorder %v1244, 8.507059e+37
        %v1246 = vand.u32 %v1203, 2147483648
        %v1247 = vor.u32 1.1754944e-38, %v1246
        %v1248 = vsel %vm1245, %v1247, %v1243
        %v1249 = vmul.f32 1.0, %v1248
        %v1250 = vrcp.pop %v1204
        %v1251 = vmul.f32 %v1204, %v1250
        %v1252 = vsub.f32 1.0, %v1251
        %v1253 = vmul.f32 %v1250, %v1252
        %v1254 = vadd.f32 %v1250, %v1253
        %vm1255 = vweird.f32 %v1204
        %vm1256 = vweird.f32 %v1250
        %vm1257 = vmor %vm1255, %vm1256
        %v1258 = vsel %vm1257, %v1250, %v1254
        %v1259 = vand.u32 2147483647, %v1204
        %vm1260 = vcmp.eq.f32.partialorder %v1259, 8.507059e+37
        %v1261 = vand.u32 %v1204, 2147483648
        %v1262 = vor.u32 1.1754944e-38, %v1261
        %v1263 = vsel %vm1260, %v1262, %v1258
        %v1264 = vmul.f32 1.0, %v1263
        %v1265 = vsub.f32 %v1180, %v755
        %v1266 = vsub.f32 %v1182, %v756
        %v1267 = vsub.f32 %v1185, %v757
        %v1268 = vsub.f32 %v1187, %v758
        %v1269 = vmul.f32 %v1219, %v1265
        %v1270 = vmul.f32 %v1234, %v1266
        %v1271 = vmul.f32 %v1249, %v1267
        %v1272 = vmul.f32 %v1264, %v1268
        %v1273 = vadd.f32 %v755, %v1269
        %v1274 = vadd.f32 %v756, %v1270
        %v1275 = vadd.f32 %v757, %v1271
        %v1276 = vadd.f32 %v758, %v1272
        %1277 = vst [vmem:[#allocation2 + $0x8] sm:$0xff] %v1273
        %1278 = vst [vmem:[#allocation2 + $0x10] sm:$0xff] %v1274
        %1279 = vst [vmem:[#allocation2 + $0x18] sm:$0xff] %v1275
        %1280 = vst [vmem:[#allocation2 + $0x20] sm:$0xff] %v1276
        %v1281 = vld [vmem:[#allocation2 + $0x5] sm:$0xff]
        %v1282 = vld [vmem:[#allocation2 + $0xd] sm:$0xff]
        %v1283 = vld [vmem:[#allocation2 + $0x15] sm:$0xff]
        %v1284 = vld [vmem:[#allocation2 + $0x1d] sm:$0xff]
        %v1285 = vld [vmem:[#allocation2 + $0x8] sm:$0xff]
        %v1286 = vld [vmem:[#allocation2 + $0x10] sm:$0xff]
        %v1287 = vld [vmem:[#allocation2 + $0x18] sm:$0xff]
        %v1288 = vld [vmem:[#allocation2 + $0x20] sm:$0xff]
        %v1289 = vld [vmem:[#allocation2 + $0xb] sm:$0xff]
        %v1290 = vld [vmem:[#allocation2 + $0x13] sm:$0xff]
        %v1291 = vld [vmem:[#allocation2 + $0x1b] sm:$0xff]
        %v1292 = vld [vmem:[#allocation2 + $0x23] sm:$0xff]
        %v1293 = vpack.c.bf16 %v1282, %v1281
        %v1294 = vpack.c.bf16 %v1286, %v1285
        %v1295 = vpack.c.bf16 %v1290, %v1289
        %v1296 = vpack.c.bf16 %v1284, %v1283
        %v1297 = vpack.c.bf16 %v1288, %v1287
        %v1298 = vpack.c.bf16 %v1292, %v1291
        %v1299 = vld [vmem:[#allocation5] sm:$0xff]
        %v1300 = vld [vmem:[#allocation5 + $0x8] sm:$0xff]
        %v1301 = vld [vmem:[#allocation5 + $0x10] sm:$0xff]
        %v1302 = vld [vmem:[#allocation5 + $0x18] sm:$0xff]
        %v1303 = vld [vmem:[#allocation5 + $0x20] sm:$0xff]
        %v1304 = vld [vmem:[#allocation5 + $0x28] sm:$0xff]
        %v1305 = vld [vmem:[#allocation5 + $0x30] sm:$0xff]
        %v1306 = vld [vmem:[#allocation5 + $0x38] sm:$0xff]
        %v1307 = vld [vmem:[#allocation5 + $0x40] sm:$0xff]
        %v1308 = vld [vmem:[#allocation5 + $0x48] sm:$0xff]
        %v1309 = vld [vmem:[#allocation5 + $0x50] sm:$0xff]
        %v1310 = vld [vmem:[#allocation5 + $0x58] sm:$0xff]
        %v1311 = vld [vmem:[#allocation5 + $0x60] sm:$0xff]
        %v1312 = vld [vmem:[#allocation5 + $0x68] sm:$0xff]
        %v1313 = vld [vmem:[#allocation5 + $0x70] sm:$0xff]
        %v1314 = vld [vmem:[#allocation5 + $0x78] sm:$0xff]
        %v1315 = vld [vmem:[#allocation5 + $0x80] sm:$0xff]
        %v1316 = vld [vmem:[#allocation5 + $0x88] sm:$0xff]
        %v1317 = vld [vmem:[#allocation5 + $0x90] sm:$0xff]
        %v1318 = vld [vmem:[#allocation5 + $0x98] sm:$0xff]
        %v1319 = vld [vmem:[#allocation5 + $0xa0] sm:$0xff]
        %v1320 = vld [vmem:[#allocation5 + $0xa8] sm:$0xff]
        %v1321 = vld [vmem:[#allocation5 + $0xb0] sm:$0xff]
        %v1322 = vld [vmem:[#allocation5 + $0xb8] sm:$0xff]
        %v1323 = vld [vmem:[#allocation5 + $0xc0] sm:$0xff]
        %v1324 = vld [vmem:[#allocation5 + $0xc8] sm:$0xff]
        %v1325 = vld [vmem:[#allocation5 + $0xd0] sm:$0xff]
        %v1326 = vld [vmem:[#allocation5 + $0xd8] sm:$0xff]
        %v1327 = vld [vmem:[#allocation5 + $0xe0] sm:$0xff]
        %v1328 = vld [vmem:[#allocation5 + $0xe8] sm:$0xff]
        %v1329 = vld [vmem:[#allocation5 + $0xf0] sm:$0xff]
        %v1330 = vld [vmem:[#allocation5 + $0xf8] sm:$0xff]
        %v1331 = vld [vmem:[#allocation5 + $0x100] sm:$0xff]
        %v1332 = vld [vmem:[#allocation5 + $0x108] sm:$0xff]
        %v1333 = vld [vmem:[#allocation5 + $0x110] sm:$0xff]
        %v1334 = vld [vmem:[#allocation5 + $0x118] sm:$0xff]
        %v1335 = vld [vmem:[#allocation5 + $0x120] sm:$0xff]
        %v1336 = vld [vmem:[#allocation5 + $0x128] sm:$0xff]
        %v1337 = vld [vmem:[#allocation5 + $0x130] sm:$0xff]
        %v1338 = vld [vmem:[#allocation5 + $0x138] sm:$0xff]
        %v1339 = vld [vmem:[#allocation5 + $0x140] sm:$0xff]
        %v1340 = vld [vmem:[#allocation5 + $0x148] sm:$0xff]
        %v1341 = vld [vmem:[#allocation5 + $0x150] sm:$0xff]
        %v1342 = vld [vmem:[#allocation5 + $0x158] sm:$0xff]
        %v1343 = vld [vmem:[#allocation5 + $0x160] sm:$0xff]
        %v1344 = vld [vmem:[#allocation5 + $0x168] sm:$0xff]
        %v1345 = vld [vmem:[#allocation5 + $0x170] sm:$0xff]
        %v1346 = vld [vmem:[#allocation5 + $0x178] sm:$0xff]
        %v1347 = vld [vmem:[%s4] sm:$0x3]
        %v1349 = vperm.slane %v1347, 0
        %v1350 = vperm.slane %v1347, 1
        %v1401 = vunpack.c.l.b16 %v1299
        %v1402 = vunpack.c.h.b16 %v1299
        %v1403 = vunpack.c.l.b16 %v1300
        %v1404 = vunpack.c.h.b16 %v1300
        %v1405 = vunpack.c.l.b16 %v1301
        %v1406 = vunpack.c.h.b16 %v1301
        %v1407 = vunpack.c.l.b16 %v1302
        %v1408 = vunpack.c.h.b16 %v1302
        %v1409 = vunpack.c.l.b16 %v1303
        %v1410 = vunpack.c.h.b16 %v1303
        %v1411 = vunpack.c.l.b16 %v1304
        %v1412 = vunpack.c.h.b16 %v1304
        %v1413 = vunpack.c.l.b16 %v1305
        %v1414 = vunpack.c.h.b16 %v1305
        %v1415 = vunpack.c.l.b16 %v1306
        %v1416 = vunpack.c.h.b16 %v1306
        %v1417 = vunpack.c.l.b16 %v1307
        %v1418 = vunpack.c.h.b16 %v1307
        %v1419 = vunpack.c.l.b16 %v1308
        %v1420 = vunpack.c.h.b16 %v1308
        %v1421 = vunpack.c.l.b16 %v1309
        %v1422 = vunpack.c.h.b16 %v1309
        %v1423 = vunpack.c.l.b16 %v1310
        %v1424 = vunpack.c.h.b16 %v1310
        %v1425 = vunpack.c.l.b16 %v1311
        %v1426 = vunpack.c.h.b16 %v1311
        %v1427 = vunpack.c.l.b16 %v1312
        %v1428 = vunpack.c.h.b16 %v1312
        %v1429 = vunpack.c.l.b16 %v1313
        %v1430 = vunpack.c.h.b16 %v1313
        %v1431 = vunpack.c.l.b16 %v1314
        %v1432 = vunpack.c.h.b16 %v1314
        %v1433 = vunpack.c.l.b16 %v1315
        %v1434 = vunpack.c.h.b16 %v1315
        %v1435 = vunpack.c.l.b16 %v1316
        %v1436 = vunpack.c.h.b16 %v1316
        %v1437 = vunpack.c.l.b16 %v1317
        %v1438 = vunpack.c.h.b16 %v1317
        %v1439 = vunpack.c.l.b16 %v1318
        %v1440 = vunpack.c.h.b16 %v1318
        %v1441 = vunpack.c.l.b16 %v1319
        %v1442 = vunpack.c.h.b16 %v1319
        %v1443 = vunpack.c.l.b16 %v1320
        %v1444 = vunpack.c.h.b16 %v1320
        %v1445 = vunpack.c.l.b16 %v1321
        %v1446 = vunpack.c.h.b16 %v1321
        %v1447 = vunpack.c.l.b16 %v1322
        %v1448 = vunpack.c.h.b16 %v1322
        %v1449 = vunpack.c.l.b16 %v1323
        %v1450 = vunpack.c.h.b16 %v1323
        %v1451 = vunpack.c.l.b16 %v1324
        %v1452 = vunpack.c.h.b16 %v1324
        %v1453 = vunpack.c.l.b16 %v1325
        %v1454 = vunpack.c.h.b16 %v1325
        %v1455 = vunpack.c.l.b16 %v1326
        %v1456 = vunpack.c.h.b16 %v1326
        %v1457 = vunpack.c.l.b16 %v1327
        %v1458 = vunpack.c.h.b16 %v1327
        %v1459 = vunpack.c.l.b16 %v1328
        %v1460 = vunpack.c.h.b16 %v1328
        %v1461 = vunpack.c.l.b16 %v1329
        %v1462 = vunpack.c.h.b16 %v1329
        %v1463 = vunpack.c.l.b16 %v1330
        %v1464 = vunpack.c.h.b16 %v1330
        %v1465 = vunpack.c.l.b16 %v1331
        %v1466 = vunpack.c.h.b16 %v1331
        %v1467 = vunpack.c.l.b16 %v1332
        %v1468 = vunpack.c.h.b16 %v1332
        %v1469 = vunpack.c.l.b16 %v1333
        %v1470 = vunpack.c.h.b16 %v1333
        %v1471 = vunpack.c.l.b16 %v1334
        %v1472 = vunpack.c.h.b16 %v1334
        %v1473 = vunpack.c.l.b16 %v1335
        %v1474 = vunpack.c.h.b16 %v1335
        %v1475 = vunpack.c.l.b16 %v1336
        %v1476 = vunpack.c.h.b16 %v1336
        %v1477 = vunpack.c.l.b16 %v1337
        %v1478 = vunpack.c.h.b16 %v1337
        %v1479 = vunpack.c.l.b16 %v1338
        %v1480 = vunpack.c.h.b16 %v1338
        %v1481 = vunpack.c.l.b16 %v1339
        %v1482 = vunpack.c.h.b16 %v1339
        %v1483 = vunpack.c.l.b16 %v1340
        %v1484 = vunpack.c.h.b16 %v1340
        %v1485 = vunpack.c.l.b16 %v1341
        %v1486 = vunpack.c.h.b16 %v1341
        %v1487 = vunpack.c.l.b16 %v1342
        %v1488 = vunpack.c.h.b16 %v1342
        %v1489 = vunpack.c.l.b16 %v1343
        %v1490 = vunpack.c.h.b16 %v1343
        %v1491 = vunpack.c.l.b16 %v1344
        %v1492 = vunpack.c.h.b16 %v1344
        %v1493 = vunpack.c.l.b16 %v1345
        %v1494 = vunpack.c.h.b16 %v1345
        %v1495 = vunpack.c.l.b16 %v1346
        %v1496 = vunpack.c.h.b16 %v1346
        %v1497 = vpack.c.b16 %v1403, %v1401
        %v1498 = vpack.c.b16 %v1404, %v1402
        %v1499 = vpack.c.b16 %v1407, %v1405
        %v1500 = vpack.c.b16 %v1408, %v1406
        %v1501 = vpack.c.b16 %v1411, %v1409
        %v1502 = vpack.c.b16 %v1412, %v1410
        %v1503 = vpack.c.b16 %v1415, %v1413
        %v1504 = vpack.c.b16 %v1416, %v1414
        %v1505 = vpack.c.b16 %v1419, %v1417
        %v1506 = vpack.c.b16 %v1420, %v1418
        %v1507 = vpack.c.b16 %v1423, %v1421
        %v1508 = vpack.c.b16 %v1424, %v1422
        %v1509 = vpack.c.b16 %v1427, %v1425
        %v1510 = vpack.c.b16 %v1428, %v1426
        %v1511 = vpack.c.b16 %v1431, %v1429
        %v1512 = vpack.c.b16 %v1432, %v1430
        %v1513 = vpack.c.b16 %v1435, %v1433
        %v1514 = vpack.c.b16 %v1436, %v1434
        %v1515 = vpack.c.b16 %v1439, %v1437
        %v1516 = vpack.c.b16 %v1440, %v1438
        %v1517 = vpack.c.b16 %v1443, %v1441
        %v1518 = vpack.c.b16 %v1444, %v1442
        %v1519 = vpack.c.b16 %v1447, %v1445
        %v1520 = vpack.c.b16 %v1448, %v1446
        %v1521 = vpack.c.b16 %v1451, %v1449
        %v1522 = vpack.c.b16 %v1452, %v1450
        %v1523 = vpack.c.b16 %v1455, %v1453
        %v1524 = vpack.c.b16 %v1456, %v1454
        %v1525 = vpack.c.b16 %v1459, %v1457
        %v1526 = vpack.c.b16 %v1460, %v1458
        %v1527 = vpack.c.b16 %v1463, %v1461
        %v1528 = vpack.c.b16 %v1464, %v1462
        %v1529 = vpack.c.b16 %v1467, %v1465
        %v1530 = vpack.c.b16 %v1468, %v1466
        %v1531 = vpack.c.b16 %v1471, %v1469
        %v1532 = vpack.c.b16 %v1472, %v1470
        %v1533 = vpack.c.b16 %v1475, %v1473
        %v1534 = vpack.c.b16 %v1476, %v1474
        %v1535 = vpack.c.b16 %v1479, %v1477
        %v1536 = vpack.c.b16 %v1480, %v1478
        %v1537 = vpack.c.b16 %v1483, %v1481
        %v1538 = vpack.c.b16 %v1484, %v1482
        %v1539 = vpack.c.b16 %v1487, %v1485
        %v1540 = vpack.c.b16 %v1488, %v1486
        %v1541 = vpack.c.b16 %v1491, %v1489
        %v1542 = vpack.c.b16 %v1492, %v1490
        %v1543 = vpack.c.b16 %v1495, %v1493
        %v1544 = vpack.c.b16 %v1496, %v1494
        %1593 = vmatpush.bf16.msra.mxu0 %v1511
        %1594 = vmatpush.bf16.msra.mxu0 %v1509
        %1595 = vmatpush.bf16.msra.mxu0 %v1507
        %1596 = vmatpush.bf16.msra.mxu0 %v1505
        %1597 = vmatpush.bf16.msra.mxu0 %v1503
        %1598 = vmatpush.bf16.msra.mxu0 %v1501
        %1599 = vmatpush.bf16.msra.mxu0 %v1499
        %1600 = vmatpush.bf16.msra.mxu0 %v1497
        %1601 = vmatmul.bf16.gmra.mxu0 %v1293
        %v1602 = vpop.f32.mrf.mxu0
        %v1603 = vadd.f32 %v1349, %v1602
        %v1604 = vpop.f32.mrf.mxu0
        %v1605 = vadd.f32 %v1349, %v1604
        %1606 = vmatmul.bf16.gmra.mxu0 %v1296
        %v1607 = vpop.f32.mrf.mxu0
        %v1608 = vadd.f32 %v1349, %v1607
        %v1609 = vpop.f32.mrf.mxu0
        %v1610 = vadd.f32 %v1349, %v1609
        %1611 = vdwg.mxu0
        %1612 = vmatpush.bf16.msra.mxu0 %v1527
        %1613 = vmatpush.bf16.msra.mxu0 %v1525
        %1614 = vmatpush.bf16.msra.mxu0 %v1523
        %1615 = vmatpush.bf16.msra.mxu0 %v1521
        %1616 = vmatpush.bf16.msra.mxu0 %v1519
        %1617 = vmatpush.bf16.msra.mxu0 %v1517
        %1618 = vmatpush.bf16.msra.mxu0 %v1515
        %1619 = vmatpush.bf16.msra.mxu0 %v1513
        %1620 = vmatmul.bf16.gmra.mxu0 %v1294
        %v1621 = vpop.f32.mrf.mxu0
        %v1622 = vadd.f32 %v1603, %v1621
        %v1623 = vpop.f32.mrf.mxu0
        %v1624 = vadd.f32 %v1605, %v1623
        %1625 = vmatmul.bf16.gmra.mxu0 %v1297
        %v1626 = vpop.f32.mrf.mxu0
        %v1627 = vadd.f32 %v1608, %v1626
        %v1628 = vpop.f32.mrf.mxu0
        %v1629 = vadd.f32 %v1610, %v1628
        %1630 = vdwg.mxu0
        %1631 = vmatpush.bf16.msra.mxu0 %v1543
        %1632 = vmatpush.bf16.msra.mxu0 %v1541
        %1633 = vmatpush.bf16.msra.mxu0 %v1539
        %1634 = vmatpush.bf16.msra.mxu0 %v1537
        %1635 = vmatpush.bf16.msra.mxu0 %v1535
        %1636 = vmatpush.bf16.msra.mxu0 %v1533
        %1637 = vmatpush.bf16.msra.mxu0 %v1531
        %1638 = vmatpush.bf16.msra.mxu0 %v1529
        %1639 = vmatmul.bf16.gmra.mxu0 %v1295
        %v1640 = vpop.f32.mrf.mxu0
        %v1641 = vadd.f32 %v1622, %v1640
        %v1642 = vpop.f32.mrf.mxu0
        %v1643 = vadd.f32 %v1624, %v1642
        %1644 = vmatmul.bf16.gmra.mxu0 %v1298
        %v1645 = vpop.f32.mrf.mxu0
        %v1646 = vadd.f32 %v1627, %v1645
        %v1647 = vpop.f32.mrf.mxu0
        %v1648 = vadd.f32 %v1629, %v1647
        %1649 = vdwg.mxu0
        %1650 = vmatpush.bf16.msra.mxu0 %v1512
        %1651 = vmatpush.bf16.msra.mxu0 %v1510
        %1652 = vmatpush.bf16.msra.mxu0 %v1508
        %1653 = vmatpush.bf16.msra.mxu0 %v1506
        %1654 = vmatpush.bf16.msra.mxu0 %v1504
        %1655 = vmatpush.bf16.msra.mxu0 %v1502
        %1656 = vmatpush.bf16.msra.mxu0 %v1500
        %1657 = vmatpush.bf16.msra.mxu0 %v1498
        %1658 = vmatmul.bf16.gmra.mxu0 %v1293
        %v1659 = vpop.f32.mrf.mxu0
        %v1660 = vadd.f32 %v1350, %v1659
        %v1661 = vpop.f32.mrf.mxu0
        %v1662 = vadd.f32 %v1350, %v1661
        %1663 = vmatmul.bf16.gmra.mxu0 %v1296
        %v1664 = vpop.f32.mrf.mxu0
        %v1665 = vadd.f32 %v1350, %v1664
        %v1666 = vpop.f32.mrf.mxu0
        %v1667 = vadd.f32 %v1350, %v1666
        %1668 = vdwg.mxu0
        %1669 = vmatpush.bf16.msra.mxu0 %v1528
        %1670 = vmatpush.bf16.msra.mxu0 %v1526
        %1671 = vmatpush.bf16.msra.mxu0 %v1524
        %1672 = vmatpush.bf16.msra.mxu0 %v1522
        %1673 = vmatpush.bf16.msra.mxu0 %v1520
        %1674 = vmatpush.bf16.msra.mxu0 %v1518
        %1675 = vmatpush.bf16.msra.mxu0 %v1516
        %1676 = vmatpush.bf16.msra.mxu0 %v1514
        %1677 = vmatmul.bf16.gmra.mxu0 %v1294
        %v1678 = vpop.f32.mrf.mxu0
        %v1679 = vadd.f32 %v1660, %v1678
        %v1680 = vpop.f32.mrf.mxu0
        %v1681 = vadd.f32 %v1662, %v1680
        %1682 = vmatmul.bf16.gmra.mxu0 %v1297
        %v1683 = vpop.f32.mrf.mxu0
        %v1684 = vadd.f32 %v1665, %v1683
        %v1685 = vpop.f32.mrf.mxu0
        %v1686 = vadd.f32 %v1667, %v1685
        %1687 = vdwg.mxu0
        %1688 = vmatpush.bf16.msra.mxu0 %v1544
        %1689 = vmatpush.bf16.msra.mxu0 %v1542
        %1690 = vmatpush.bf16.msra.mxu0 %v1540
        %1691 = vmatpush.bf16.msra.mxu0 %v1538
        %1692 = vmatpush.bf16.msra.mxu0 %v1536
        %1693 = vmatpush.bf16.msra.mxu0 %v1534
        %1694 = vmatpush.bf16.msra.mxu0 %v1532
        %1695 = vmatpush.bf16.msra.mxu0 %v1530
        %1696 = vmatmul.bf16.gmra.mxu0 %v1295
        %v1697 = vpop.f32.mrf.mxu0
        %v1698 = vadd.f32 %v1679, %v1697
        %v1699 = vpop.f32.mrf.mxu0
        %v1700 = vadd.f32 %v1681, %v1699
        %1701 = vmatmul.bf16.gmra.mxu0 %v1298
        %v1702 = vpop.f32.mrf.mxu0
        %v1703 = vadd.f32 %v1684, %v1702
        %v1704 = vpop.f32.mrf.mxu0
        %v1705 = vadd.f32 %v1686, %v1704
        %1706 = vdwg.mxu0
        %v1707 = vxor.u32 %v1641, 2147483648
        %v1708 = vxor.u32 %v1643, 2147483648
        %v1709 = vxor.u32 %v1646, 2147483648
        %v1710 = vxor.u32 %v1648, 2147483648
        %v1711 = vmul.f32 %v1707, 1.442695
        %v1712 = vpow.pop %v1711
        %v1713 = vmul.f32 %v1708, 1.442695
        %v1714 = vpow.pop %v1713
        %v1715 = vmul.f32 %v1709, 1.442695
        %v1716 = vpow.pop %v1715
        %v1717 = vmul.f32 %v1710, 1.442695
        %v1718 = vpow.pop %v1717
        %v1719 = vadd.f32 %v1712, 1.0
        %v1720 = vadd.f32 %v1714, 1.0
        %v1721 = vadd.f32 %v1716, 1.0
        %v1722 = vadd.f32 %v1718, 1.0
        %v1723 = vrcp.pop %v1719
        %v1724 = vmul.f32 %v1719, %v1723
        %v1725 = vsub.f32 1.0, %v1724
        %v1726 = vmul.f32 %v1723, %v1725
        %v1727 = vadd.f32 %v1723, %v1726
        %vm1728 = vweird.f32 %v1719
        %vm1729 = vweird.f32 %v1723
        %vm1730 = vmor %vm1728, %vm1729
        %v1731 = vsel %vm1730, %v1723, %v1727
        %v1732 = vand.u32 2147483647, %v1719
        %vm1733 = vcmp.eq.f32.partialorder %v1732, 8.507059e+37
        %v1734 = vand.u32 %v1719, 2147483648
        %v1735 = vor.u32 1.1754944e-38, %v1734
        %v1736 = vsel %vm1733, %v1735, %v1731
        %v1737 = vmul.f32 1.0, %v1736
        %v1738 = vrcp.pop %v1720
        %v1739 = vmul.f32 %v1720, %v1738
        %v1740 = vsub.f32 1.0, %v1739
        %v1741 = vmul.f32 %v1738, %v1740
        %v1742 = vadd.f32 %v1738, %v1741
        %vm1743 = vweird.f32 %v1720
        %vm1744 = vweird.f32 %v1738
        %vm1745 = vmor %vm1743, %vm1744
        %v1746 = vsel %vm1745, %v1738, %v1742
        %v1747 = vand.u32 2147483647, %v1720
        %vm1748 = vcmp.eq.f32.partialorder %v1747, 8.507059e+37
        %v1749 = vand.u32 %v1720, 2147483648
        %v1750 = vor.u32 1.1754944e-38, %v1749
        %v1751 = vsel %vm1748, %v1750, %v1746
        %v1752 = vmul.f32 1.0, %v1751
        %v1753 = vrcp.pop %v1721
        %v1754 = vmul.f32 %v1721, %v1753
        %v1755 = vsub.f32 1.0, %v1754
        %v1756 = vmul.f32 %v1753, %v1755
        %v1757 = vadd.f32 %v1753, %v1756
        %vm1758 = vweird.f32 %v1721
        %vm1759 = vweird.f32 %v1753
        %vm1760 = vmor %vm1758, %vm1759
        %v1761 = vsel %vm1760, %v1753, %v1757
        %v1762 = vand.u32 2147483647, %v1721
        %vm1763 = vcmp.eq.f32.partialorder %v1762, 8.507059e+37
        %v1764 = vand.u32 %v1721, 2147483648
        %v1765 = vor.u32 1.1754944e-38, %v1764
        %v1766 = vsel %vm1763, %v1765, %v1761
        %v1767 = vmul.f32 1.0, %v1766
        %v1768 = vrcp.pop %v1722
        %v1769 = vmul.f32 %v1722, %v1768
        %v1770 = vsub.f32 1.0, %v1769
        %v1771 = vmul.f32 %v1768, %v1770
        %v1772 = vadd.f32 %v1768, %v1771
        %vm1773 = vweird.f32 %v1722
        %vm1774 = vweird.f32 %v1768
        %vm1775 = vmor %vm1773, %vm1774
        %v1776 = vsel %vm1775, %v1768, %v1772
        %v1777 = vand.u32 2147483647, %v1722
        %vm1778 = vcmp.eq.f32.partialorder %v1777, 8.507059e+37
        %v1779 = vand.u32 %v1722, 2147483648
        %v1780 = vor.u32 1.1754944e-38, %v1779
        %v1781 = vsel %vm1778, %v1780, %v1776
        %v1782 = vmul.f32 1.0, %v1781
        %v1783 = vsub.f32 %v1698, %v1273
        %v1784 = vsub.f32 %v1700, %v1274
        %v1785 = vsub.f32 %v1703, %v1275
        %v1786 = vsub.f32 %v1705, %v1276
        %v1787 = vmul.f32 %v1737, %v1783
        %v1788 = vmul.f32 %v1752, %v1784
        %v1789 = vmul.f32 %v1767, %v1785
        %v1790 = vmul.f32 %v1782, %v1786
        %v1791 = vadd.f32 %v1273, %v1787
        %v1792 = vadd.f32 %v1274, %v1788
        %v1793 = vadd.f32 %v1275, %v1789
        %v1794 = vadd.f32 %v1276, %v1790
        %v1795 = vpack.c.bf16 %v1792, %v1791
        %v1796 = vpack.c.bf16 %v1794, %v1793
        %v1797 = vld [vmem:[#allocation7] sm:$0xf]
        %v1798 = vld [vmem:[#allocation7 + $0x4] sm:$0xf]
        %v1799 = vld [vmem:[#allocation7 + $0x8] sm:$0xf]
        %v1800 = vld [vmem:[#allocation7 + $0xc] sm:$0xf]
        %v1801 = vld [vmem:[#allocation7 + $0x10] sm:$0xf]
        %v1802 = vld [vmem:[#allocation7 + $0x14] sm:$0xf]
        %v1803 = vld [vmem:[#allocation7 + $0x18] sm:$0xf]
        %v1804 = vld [vmem:[#allocation7 + $0x1c] sm:$0xf]
        %v1805 = vld [vmem:[#allocation7 + $0x20] sm:$0xf]
        %v1806 = vld [vmem:[#allocation7 + $0x24] sm:$0xf]
        %v1807 = vld [vmem:[#allocation7 + $0x28] sm:$0xf]
        %v1808 = vld [vmem:[#allocation7 + $0x2c] sm:$0xf]
        %v1809 = vld [vmem:[#allocation7 + $0x30] sm:$0xf]
        %v1810 = vld [vmem:[#allocation7 + $0x34] sm:$0xf]
        %v1811 = vld [vmem:[#allocation7 + $0x38] sm:$0xf]
        %v1812 = vld [vmem:[#allocation7 + $0x3c] sm:$0xf]
        %v1813 = vld [vmem:[#allocation8] sm:$0x1]
        %v1815 = vperm.slane %v1813, 0
        %v1833 = vunpack.c.l.b16 %v1797
        %v1834 = vunpack.c.l.b16 %v1798
        %v1835 = vunpack.c.l.b16 %v1799
        %v1836 = vunpack.c.l.b16 %v1800
        %v1837 = vunpack.c.l.b16 %v1801
        %v1838 = vunpack.c.l.b16 %v1802
        %v1839 = vunpack.c.l.b16 %v1803
        %v1840 = vunpack.c.l.b16 %v1804
        %v1841 = vunpack.c.l.b16 %v1805
        %v1842 = vunpack.c.l.b16 %v1806
        %v1843 = vunpack.c.l.b16 %v1807
        %v1844 = vunpack.c.l.b16 %v1808
        %v1845 = vunpack.c.l.b16 %v1809
        %v1846 = vunpack.c.l.b16 %v1810
        %v1847 = vunpack.c.l.b16 %v1811
        %v1848 = vunpack.c.l.b16 %v1812
        %v1849 = vpack.c.b16 %v1834, %v1833
        %v1850 = vpack.c.b16 %v1836, %v1835
        %v1851 = vpack.c.b16 %v1838, %v1837
        %v1852 = vpack.c.b16 %v1840, %v1839
        %v1853 = vpack.c.b16 %v1842, %v1841
        %v1854 = vpack.c.b16 %v1844, %v1843
        %v1855 = vpack.c.b16 %v1846, %v1845
        %v1856 = vpack.c.b16 %v1848, %v1847
        %1865 = vmatpush.bf16.msra.mxu0 %v1856
        %1866 = vmatpush.bf16.msra.mxu0 %v1855
        %1867 = vmatpush.bf16.msra.mxu0 %v1854
        %1868 = vmatpush.bf16.msra.mxu0 %v1853
        %1869 = vmatpush.bf16.msra.mxu0 %v1852
        %1870 = vmatpush.bf16.msra.mxu0 %v1851
        %1871 = vmatpush.bf16.msra.mxu0 %v1850
        %1872 = vmatpush.bf16.msra.mxu0 %v1849
        %1873 = vmatmul.bf16.gmra.mxu0 %v1795
        %v1874 = vpop.f32.mrf.mxu0
        %v1875 = vadd.f32 %v1815, %v1874
        %v1876 = vpop.f32.mrf.mxu0
        %v1877 = vadd.f32 %v1815, %v1876
        %1878 = vmatmul.bf16.gmra.mxu0 %v1796
        %v1879 = vpop.f32.mrf.mxu0
        %v1880 = vadd.f32 %v1815, %v1879
        %v1881 = vpop.f32.mrf.mxu0
        %v1882 = vadd.f32 %v1815, %v1881
        %1883 = vdwg.mxu0
        %1884 = vst [vmem:[#allocation2 + $0x8] sm:$0xff] %v1875
        %1885 = vst [vmem:[#allocation2 + $0x10] sm:$0xff] %v1877
        %1886 = vst [vmem:[#allocation2 + $0x18] sm:$0xff] %v1880
        %1887 = vst [vmem:[#allocation2 + $0x20] sm:$0xff] %v1882
        %v1888 = vld [vmem:[#allocation2 + $0x7] sm:$0xff]
        %v1889 = vld [vmem:[#allocation2 + $0xf] sm:$0xff]
        %v1890 = vld [vmem:[#allocation2 + $0x17] sm:$0xff]
        %v1891 = vld [vmem:[#allocation2 + $0x1f] sm:$0xff]
        %v1892 = vld [vmem:[#allocation2 + $0x8] sm:$0xff]
        %v1893 = vld [vmem:[#allocation2 + $0x10] sm:$0xff]
        %v1894 = vld [vmem:[#allocation2 + $0x18] sm:$0xff]
        %v1895 = vld [vmem:[#allocation2 + $0x20] sm:$0xff]
        %v1896 = vld [vmem:[#allocation2 + $0x9] sm:$0xff]
        %v1897 = vld [vmem:[#allocation2 + $0x11] sm:$0xff]
        %v1898 = vld [vmem:[#allocation2 + $0x19] sm:$0xff]
        %v1899 = vld [vmem:[#allocation2 + $0x21] sm:$0xff]
        %v1900 = vpack.c.bf16 %v1889, %v1888
        %v1901 = vpack.c.bf16 %v1893, %v1892
        %v1902 = vpack.c.bf16 %v1897, %v1896
        %v1903 = vpack.c.bf16 %v1891, %v1890
        %v1904 = vpack.c.bf16 %v1895, %v1894
        %v1905 = vpack.c.bf16 %v1899, %v1898
        %v1906 = vld [vmem:[#allocation10] sm:$0xff]
        %v1907 = vld [vmem:[#allocation10 + $0x8] sm:$0xff]
        %v1908 = vld [vmem:[#allocation10 + $0x10] sm:$0xff]
        %v1909 = vld [vmem:[#allocation10 + $0x18] sm:$0xff]
        %v1910 = vld [vmem:[#allocation10 + $0x20] sm:$0xff]
        %v1911 = vld [vmem:[#allocation10 + $0x28] sm:$0xff]
        %v1912 = vld [vmem:[#allocation10 + $0x30] sm:$0xff]
        %v1913 = vld [vmem:[#allocation10 + $0x38] sm:$0xff]
        %v1914 = vld [vmem:[#allocation10 + $0x40] sm:$0xff]
        %v1915 = vld [vmem:[#allocation10 + $0x48] sm:$0xff]
        %v1916 = vld [vmem:[#allocation10 + $0x50] sm:$0xff]
        %v1917 = vld [vmem:[#allocation10 + $0x58] sm:$0xff]
        %v1918 = vld [vmem:[#allocation10 + $0x60] sm:$0xff]
        %v1919 = vld [vmem:[#allocation10 + $0x68] sm:$0xff]
        %v1920 = vld [vmem:[#allocation10 + $0x70] sm:$0xff]
        %v1921 = vld [vmem:[#allocation10 + $0x78] sm:$0xff]
        %v1922 = vld [vmem:[#allocation10 + $0x80] sm:$0xff]
        %v1923 = vld [vmem:[#allocation10 + $0x88] sm:$0xff]
        %v1924 = vld [vmem:[#allocation10 + $0x90] sm:$0xff]
        %v1925 = vld [vmem:[#allocation10 + $0x98] sm:$0xff]
        %v1926 = vld [vmem:[#allocation10 + $0xa0] sm:$0xff]
        %v1927 = vld [vmem:[#allocation10 + $0xa8] sm:$0xff]
        %v1928 = vld [vmem:[#allocation10 + $0xb0] sm:$0xff]
        %v1929 = vld [vmem:[#allocation10 + $0xb8] sm:$0xff]
        %v1930 = vld [vmem:[#allocation10 + $0xc0] sm:$0xff]
        %v1931 = vld [vmem:[#allocation10 + $0xc8] sm:$0xff]
        %v1932 = vld [vmem:[#allocation10 + $0xd0] sm:$0xff]
        %v1933 = vld [vmem:[#allocation10 + $0xd8] sm:$0xff]
        %v1934 = vld [vmem:[#allocation10 + $0xe0] sm:$0xff]
        %v1935 = vld [vmem:[#allocation10 + $0xe8] sm:$0xff]
        %v1936 = vld [vmem:[#allocation10 + $0xf0] sm:$0xff]
        %v1937 = vld [vmem:[#allocation10 + $0xf8] sm:$0xff]
        %v1938 = vld [vmem:[#allocation10 + $0x100] sm:$0xff]
        %v1939 = vld [vmem:[#allocation10 + $0x108] sm:$0xff]
        %v1940 = vld [vmem:[#allocation10 + $0x110] sm:$0xff]
        %v1941 = vld [vmem:[#allocation10 + $0x118] sm:$0xff]
        %v1942 = vld [vmem:[#allocation10 + $0x120] sm:$0xff]
        %v1943 = vld [vmem:[#allocation10 + $0x128] sm:$0xff]
        %v1944 = vld [vmem:[#allocation10 + $0x130] sm:$0xff]
        %v1945 = vld [vmem:[#allocation10 + $0x138] sm:$0xff]
        %v1946 = vld [vmem:[#allocation10 + $0x140] sm:$0xff]
        %v1947 = vld [vmem:[#allocation10 + $0x148] sm:$0xff]
        %v1948 = vld [vmem:[#allocation10 + $0x150] sm:$0xff]
        %v1949 = vld [vmem:[#allocation10 + $0x158] sm:$0xff]
        %v1950 = vld [vmem:[#allocation10 + $0x160] sm:$0xff]
        %v1951 = vld [vmem:[#allocation10 + $0x168] sm:$0xff]
        %v1952 = vld [vmem:[#allocation10 + $0x170] sm:$0xff]
        %v1953 = vld [vmem:[#allocation10 + $0x178] sm:$0xff]
        %v1954 = vld [vmem:[%s8] sm:$0x3]
        %v1956 = vperm.slane %v1954, 0
        %v1957 = vperm.slane %v1954, 1
        %v2008 = vunpack.c.l.b16 %v1906
        %v2009 = vunpack.c.h.b16 %v1906
        %v2010 = vunpack.c.l.b16 %v1907
        %v2011 = vunpack.c.h.b16 %v1907
        %v2012 = vunpack.c.l.b16 %v1908
        %v2013 = vunpack.c.h.b16 %v1908
        %v2014 = vunpack.c.l.b16 %v1909
        %v2015 = vunpack.c.h.b16 %v1909
        %v2016 = vunpack.c.l.b16 %v1910
        %v2017 = vunpack.c.h.b16 %v1910
        %v2018 = vunpack.c.l.b16 %v1911
        %v2019 = vunpack.c.h.b16 %v1911
        %v2020 = vunpack.c.l.b16 %v1912
        %v2021 = vunpack.c.h.b16 %v1912
        %v2022 = vunpack.c.l.b16 %v1913
        %v2023 = vunpack.c.h.b16 %v1913
        %v2024 = vunpack.c.l.b16 %v1914
        %v2025 = vunpack.c.h.b16 %v1914
        %v2026 = vunpack.c.l.b16 %v1915
        %v2027 = vunpack.c.h.b16 %v1915
        %v2028 = vunpack.c.l.b16 %v1916
        %v2029 = vunpack.c.h.b16 %v1916
        %v2030 = vunpack.c.l.b16 %v1917
        %v2031 = vunpack.c.h.b16 %v1917
        %v2032 = vunpack.c.l.b16 %v1918
        %v2033 = vunpack.c.h.b16 %v1918
        %v2034 = vunpack.c.l.b16 %v1919
        %v2035 = vunpack.c.h.b16 %v1919
        %v2036 = vunpack.c.l.b16 %v1920
        %v2037 = vunpack.c.h.b16 %v1920
        %v2038 = vunpack.c.l.b16 %v1921
        %v2039 = vunpack.c.h.b16 %v1921
        %v2040 = vunpack.c.l.b16 %v1922
        %v2041 = vunpack.c.h.b16 %v1922
        %v2042 = vunpack.c.l.b16 %v1923
        %v2043 = vunpack.c.h.b16 %v1923
        %v2044 = vunpack.c.l.b16 %v1924
        %v2045 = vunpack.c.h.b16 %v1924
        %v2046 = vunpack.c.l.b16 %v1925
        %v2047 = vunpack.c.h.b16 %v1925
        %v2048 = vunpack.c.l.b16 %v1926
        %v2049 = vunpack.c.h.b16 %v1926
        %v2050 = vunpack.c.l.b16 %v1927
        %v2051 = vunpack.c.h.b16 %v1927
        %v2052 = vunpack.c.l.b16 %v1928
        %v2053 = vunpack.c.h.b16 %v1928
        %v2054 = vunpack.c.l.b16 %v1929
        %v2055 = vunpack.c.h.b16 %v1929
        %v2056 = vunpack.c.l.b16 %v1930
        %v2057 = vunpack.c.h.b16 %v1930
        %v2058 = vunpack.c.l.b16 %v1931
        %v2059 = vunpack.c.h.b16 %v1931
        %v2060 = vunpack.c.l.b16 %v1932
        %v2061 = vunpack.c.h.b16 %v1932
        %v2062 = vunpack.c.l.b16 %v1933
        %v2063 = vunpack.c.h.b16 %v1933
        %v2064 = vunpack.c.l.b16 %v1934
        %v2065 = vunpack.c.h.b16 %v1934
        %v2066 = vunpack.c.l.b16 %v1935
        %v2067 = vunpack.c.h.b16 %v1935
        %v2068 = vunpack.c.l.b16 %v1936
        %v2069 = vunpack.c.h.b16 %v1936
        %v2070 = vunpack.c.l.b16 %v1937
        %v2071 = vunpack.c.h.b16 %v1937
        %v2072 = vunpack.c.l.b16 %v1938
        %v2073 = vunpack.c.h.b16 %v1938
        %v2074 = vunpack.c.l.b16 %v1939
        %v2075 = vunpack.c.h.b16 %v1939
        %v2076 = vunpack.c.l.b16 %v1940
        %v2077 = vunpack.c.h.b16 %v1940
        %v2078 = vunpack.c.l.b16 %v1941
        %v2079 = vunpack.c.h.b16 %v1941
        %v2080 = vunpack.c.l.b16 %v1942
        %v2081 = vunpack.c.h.b16 %v1942
        %v2082 = vunpack.c.l.b16 %v1943
        %v2083 = vunpack.c.h.b16 %v1943
        %v2084 = vunpack.c.l.b16 %v1944
        %v2085 = vunpack.c.h.b16 %v1944
        %v2086 = vunpack.c.l.b16 %v1945
        %v2087 = vunpack.c.h.b16 %v1945
        %v2088 = vunpack.c.l.b16 %v1946
        %v2089 = vunpack.c.h.b16 %v1946
        %v2090 = vunpack.c.l.b16 %v1947
        %v2091 = vunpack.c.h.b16 %v1947
        %v2092 = vunpack.c.l.b16 %v1948
        %v2093 = vunpack.c.h.b16 %v1948
        %v2094 = vunpack.c.l.b16 %v1949
        %v2095 = vunpack.c.h.b16 %v1949
        %v2096 = vunpack.c.l.b16 %v1950
        %v2097 = vunpack.c.h.b16 %v1950
        %v2098 = vunpack.c.l.b16 %v1951
        %v2099 = vunpack.c.h.b16 %v1951
        %v2100 = vunpack.c.l.b16 %v1952
        %v2101 = vunpack.c.h.b16 %v1952
        %v2102 = vunpack.c.l.b16 %v1953
        %v2103 = vunpack.c.h.b16 %v1953
        %v2104 = vpack.c.b16 %v2010, %v2008
        %v2105 = vpack.c.b16 %v2011, %v2009
        %v2106 = vpack.c.b16 %v2014, %v2012
        %v2107 = vpack.c.b16 %v2015, %v2013
        %v2108 = vpack.c.b16 %v2018, %v2016
        %v2109 = vpack.c.b16 %v2019, %v2017
        %v2110 = vpack.c.b16 %v2022, %v2020
        %v2111 = vpack.c.b16 %v2023, %v2021
        %v2112 = vpack.c.b16 %v2026, %v2024
        %v2113 = vpack.c.b16 %v2027, %v2025
        %v2114 = vpack.c.b16 %v2030, %v2028
        %v2115 = vpack.c.b16 %v2031, %v2029
        %v2116 = vpack.c.b16 %v2034, %v2032
        %v2117 = vpack.c.b16 %v2035, %v2033
        %v2118 = vpack.c.b16 %v2038, %v2036
        %v2119 = vpack.c.b16 %v2039, %v2037
        %v2120 = vpack.c.b16 %v2042, %v2040
        %v2121 = vpack.c.b16 %v2043, %v2041
        %v2122 = vpack.c.b16 %v2046, %v2044
        %v2123 = vpack.c.b16 %v2047, %v2045
        %v2124 = vpack.c.b16 %v2050, %v2048
        %v2125 = vpack.c.b16 %v2051, %v2049
        %v2126 = vpack.c.b16 %v2054, %v2052
        %v2127 = vpack.c.b16 %v2055, %v2053
        %v2128 = vpack.c.b16 %v2058, %v2056
        %v2129 = vpack.c.b16 %v2059, %v2057
        %v2130 = vpack.c.b16 %v2062, %v2060
        %v2131 = vpack.c.b16 %v2063, %v2061
        %v2132 = vpack.c.b16 %v2066, %v2064
        %v2133 = vpack.c.b16 %v2067, %v2065
        %v2134 = vpack.c.b16 %v2070, %v2068
        %v2135 = vpack.c.b16 %v2071, %v2069
        %v2136 = vpack.c.b16 %v2074, %v2072
        %v2137 = vpack.c.b16 %v2075, %v2073
        %v2138 = vpack.c.b16 %v2078, %v2076
        %v2139 = vpack.c.b16 %v2079, %v2077
        %v2140 = vpack.c.b16 %v2082, %v2080
        %v2141 = vpack.c.b16 %v2083, %v2081
        %v2142 = vpack.c.b16 %v2086, %v2084
        %v2143 = vpack.c.b16 %v2087, %v2085
        %v2144 = vpack.c.b16 %v2090, %v2088
        %v2145 = vpack.c.b16 %v2091, %v2089
        %v2146 = vpack.c.b16 %v2094, %v2092
        %v2147 = vpack.c.b16 %v2095, %v2093
        %v2148 = vpack.c.b16 %v2098, %v2096
        %v2149 = vpack.c.b16 %v2099, %v2097
        %v2150 = vpack.c.b16 %v2102, %v2100
        %v2151 = vpack.c.b16 %v2103, %v2101
        %2200 = vmatpush.bf16.msra.mxu0 %v2118
        %2201 = vmatpush.bf16.msra.mxu0 %v2116
        %2202 = vmatpush.bf16.msra.mxu0 %v2114
        %2203 = vmatpush.bf16.msra.mxu0 %v2112
        %2204 = vmatpush.bf16.msra.mxu0 %v2110
        %2205 = vmatpush.bf16.msra.mxu0 %v2108
        %2206 = vmatpush.bf16.msra.mxu0 %v2106
        %2207 = vmatpush.bf16.msra.mxu0 %v2104
        %2208 = vmatmul.bf16.gmra.mxu0 %v1900
        %v2209 = vpop.f32.mrf.mxu0
        %v2210 = vadd.f32 %v1956, %v2209
        %v2211 = vpop.f32.mrf.mxu0
        %v2212 = vadd.f32 %v1956, %v2211
        %2213 = vmatmul.bf16.gmra.mxu0 %v1903
        %v2214 = vpop.f32.mrf.mxu0
        %v2215 = vadd.f32 %v1956, %v2214
        %v2216 = vpop.f32.mrf.mxu0
        %v2217 = vadd.f32 %v1956, %v2216
        %2218 = vdwg.mxu0
        %2219 = vmatpush.bf16.msra.mxu0 %v2134
        %2220 = vmatpush.bf16.msra.mxu0 %v2132
        %2221 = vmatpush.bf16.msra.mxu0 %v2130
        %2222 = vmatpush.bf16.msra.mxu0 %v2128
        %2223 = vmatpush.bf16.msra.mxu0 %v2126
        %2224 = vmatpush.bf16.msra.mxu0 %v2124
        %2225 = vmatpush.bf16.msra.mxu0 %v2122
        %2226 = vmatpush.bf16.msra.mxu0 %v2120
        %2227 = vmatmul.bf16.gmra.mxu0 %v1901
        %v2228 = vpop.f32.mrf.mxu0
        %v2229 = vadd.f32 %v2210, %v2228
        %v2230 = vpop.f32.mrf.mxu0
        %v2231 = vadd.f32 %v2212, %v2230
        %2232 = vmatmul.bf16.gmra.mxu0 %v1904
        %v2233 = vpop.f32.mrf.mxu0
        %v2234 = vadd.f32 %v2215, %v2233
        %v2235 = vpop.f32.mrf.mxu0
        %v2236 = vadd.f32 %v2217, %v2235
        %2237 = vdwg.mxu0
        %2238 = vmatpush.bf16.msra.mxu0 %v2150
        %2239 = vmatpush.bf16.msra.mxu0 %v2148
        %2240 = vmatpush.bf16.msra.mxu0 %v2146
        %2241 = vmatpush.bf16.msra.mxu0 %v2144
        %2242 = vmatpush.bf16.msra.mxu0 %v2142
        %2243 = vmatpush.bf16.msra.mxu0 %v2140
        %2244 = vmatpush.bf16.msra.mxu0 %v2138
        %2245 = vmatpush.bf16.msra.mxu0 %v2136
        %2246 = vmatmul.bf16.gmra.mxu0 %v1902
        %v2247 = vpop.f32.mrf.mxu0
        %v2248 = vadd.f32 %v2229, %v2247
        %v2249 = vpop.f32.mrf.mxu0
        %v2250 = vadd.f32 %v2231, %v2249
        %2251 = vmatmul.bf16.gmra.mxu0 %v1905
        %v2252 = vpop.f32.mrf.mxu0
        %v2253 = vadd.f32 %v2234, %v2252
        %v2254 = vpop.f32.mrf.mxu0
        %v2255 = vadd.f32 %v2236, %v2254
        %2256 = vdwg.mxu0
        %2257 = vmatpush.bf16.msra.mxu0 %v2119
        %2258 = vmatpush.bf16.msra.mxu0 %v2117
        %2259 = vmatpush.bf16.msra.mxu0 %v2115
        %2260 = vmatpush.bf16.msra.mxu0 %v2113
        %2261 = vmatpush.bf16.msra.mxu0 %v2111
        %2262 = vmatpush.bf16.msra.mxu0 %v2109
        %2263 = vmatpush.bf16.msra.mxu0 %v2107
        %2264 = vmatpush.bf16.msra.mxu0 %v2105
        %2265 = vmatmul.bf16.gmra.mxu0 %v1900
        %v2266 = vpop.f32.mrf.mxu0
        %v2267 = vadd.f32 %v1957, %v2266
        %v2268 = vpop.f32.mrf.mxu0
        %v2269 = vadd.f32 %v1957, %v2268
        %2270 = vmatmul.bf16.gmra.mxu0 %v1903
        %v2271 = vpop.f32.mrf.mxu0
        %v2272 = vadd.f32 %v1957, %v2271
        %v2273 = vpop.f32.mrf.mxu0
        %v2274 = vadd.f32 %v1957, %v2273
        %2275 = vdwg.mxu0
        %2276 = vmatpush.bf16.msra.mxu0 %v2135
        %2277 = vmatpush.bf16.msra.mxu0 %v2133
        %2278 = vmatpush.bf16.msra.mxu0 %v2131
        %2279 = vmatpush.bf16.msra.mxu0 %v2129
        %2280 = vmatpush.bf16.msra.mxu0 %v2127
        %2281 = vmatpush.bf16.msra.mxu0 %v2125
        %2282 = vmatpush.bf16.msra.mxu0 %v2123
        %2283 = vmatpush.bf16.msra.mxu0 %v2121
        %2284 = vmatmul.bf16.gmra.mxu0 %v1901
        %v2285 = vpop.f32.mrf.mxu0
        %v2286 = vadd.f32 %v2267, %v2285
        %v2287 = vpop.f32.mrf.mxu0
        %v2288 = vadd.f32 %v2269, %v2287
        %2289 = vmatmul.bf16.gmra.mxu0 %v1904
        %v2290 = vpop.f32.mrf.mxu0
        %v2291 = vadd.f32 %v2272, %v2290
        %v2292 = vpop.f32.mrf.mxu0
        %v2293 = vadd.f32 %v2274, %v2292
        %2294 = vdwg.mxu0
        %2295 = vmatpush.bf16.msra.mxu0 %v2151
        %2296 = vmatpush.bf16.msra.mxu0 %v2149
        %2297 = vmatpush.bf16.msra.mxu0 %v2147
        %2298 = vmatpush.bf16.msra.mxu0 %v2145
        %2299 = vmatpush.bf16.msra.mxu0 %v2143
        %2300 = vmatpush.bf16.msra.mxu0 %v2141
        %2301 = vmatpush.bf16.msra.mxu0 %v2139
        %2302 = vmatpush.bf16.msra.mxu0 %v2137
        %2303 = vmatmul.bf16.gmra.mxu0 %v1902
        %v2304 = vpop.f32.mrf.mxu0
        %v2305 = vadd.f32 %v2286, %v2304
        %v2306 = vpop.f32.mrf.mxu0
        %v2307 = vadd.f32 %v2288, %v2306
        %2308 = vmatmul.bf16.gmra.mxu0 %v1905
        %v2309 = vpop.f32.mrf.mxu0
        %v2310 = vadd.f32 %v2291, %v2309
        %v2311 = vpop.f32.mrf.mxu0
        %v2312 = vadd.f32 %v2293, %v2311
        %2313 = vdwg.mxu0
        %v2314 = vxor.u32 %v2248, 2147483648
        %v2315 = vxor.u32 %v2250, 2147483648
        %v2316 = vxor.u32 %v2253, 2147483648
        %v2317 = vxor.u32 %v2255, 2147483648
        %v2318 = vmul.f32 %v2314, 1.442695
        %v2319 = vpow.pop %v2318
        %v2320 = vmul.f32 %v2315, 1.442695
        %v2321 = vpow.pop %v2320
        %v2322 = vmul.f32 %v2316, 1.442695
        %v2323 = vpow.pop %v2322
        %v2324 = vmul.f32 %v2317, 1.442695
        %v2325 = vpow.pop %v2324
        %v2326 = vadd.f32 %v2319, 1.0
        %v2327 = vadd.f32 %v2321, 1.0
        %v2328 = vadd.f32 %v2323, 1.0
        %v2329 = vadd.f32 %v2325, 1.0
        %v2330 = vrcp.pop %v2326
        %v2331 = vmul.f32 %v2326, %v2330
        %v2332 = vsub.f32 1.0, %v2331
        %v2333 = vmul.f32 %v2330, %v2332
        %v2334 = vadd.f32 %v2330, %v2333
        %vm2335 = vweird.f32 %v2326
        %vm2336 = vweird.f32 %v2330
        %vm2337 = vmor %vm2335, %vm2336
        %v2338 = vsel %vm2337, %v2330, %v2334
        %v2339 = vand.u32 2147483647, %v2326
        %vm2340 = vcmp.eq.f32.partialorder %v2339, 8.507059e+37
        %v2341 = vand.u32 %v2326, 2147483648
        %v2342 = vor.u32 1.1754944e-38, %v2341
        %v2343 = vsel %vm2340, %v2342, %v2338
        %v2344 = vmul.f32 1.0, %v2343
        %v2345 = vrcp.pop %v2327
        %v2346 = vmul.f32 %v2327, %v2345
        %v2347 = vsub.f32 1.0, %v2346
        %v2348 = vmul.f32 %v2345, %v2347
        %v2349 = vadd.f32 %v2345, %v2348
        %vm2350 = vweird.f32 %v2327
        %vm2351 = vweird.f32 %v2345
        %vm2352 = vmor %vm2350, %vm2351
        %v2353 = vsel %vm2352, %v2345, %v2349
        %v2354 = vand.u32 2147483647, %v2327
        %vm2355 = vcmp.eq.f32.partialorder %v2354, 8.507059e+37
        %v2356 = vand.u32 %v2327, 2147483648
        %v2357 = vor.u32 1.1754944e-38, %v2356
        %v2358 = vsel %vm2355, %v2357, %v2353
        %v2359 = vmul.f32 1.0, %v2358
        %v2360 = vrcp.pop %v2328
        %v2361 = vmul.f32 %v2328, %v2360
        %v2362 = vsub.f32 1.0, %v2361
        %v2363 = vmul.f32 %v2360, %v2362
        %v2364 = vadd.f32 %v2360, %v2363
        %vm2365 = vweird.f32 %v2328
        %vm2366 = vweird.f32 %v2360
        %vm2367 = vmor %vm2365, %vm2366
        %v2368 = vsel %vm2367, %v2360, %v2364
        %v2369 = vand.u32 2147483647, %v2328
        %vm2370 = vcmp.eq.f32.partialorder %v2369, 8.507059e+37
        %v2371 = vand.u32 %v2328, 2147483648
        %v2372 = vor.u32 1.1754944e-38, %v2371
        %v2373 = vsel %vm2370, %v2372, %v2368
        %v2374 = vmul.f32 1.0, %v2373
        %v2375 = vrcp.pop %v2329
        %v2376 = vmul.f32 %v2329, %v2375
        %v2377 = vsub.f32 1.0, %v2376
        %v2378 = vmul.f32 %v2375, %v2377
        %v2379 = vadd.f32 %v2375, %v2378
        %vm2380 = vweird.f32 %v2329
        %vm2381 = vweird.f32 %v2375
        %vm2382 = vmor %vm2380, %vm2381
        %v2383 = vsel %vm2382, %v2375, %v2379
        %v2384 = vand.u32 2147483647, %v2329
        %vm2385 = vcmp.eq.f32.partialorder %v2384, 8.507059e+37
        %v2386 = vand.u32 %v2329, 2147483648
        %v2387 = vor.u32 1.1754944e-38, %v2386
        %v2388 = vsel %vm2385, %v2387, %v2383
        %v2389 = vmul.f32 1.0, %v2388
        %v2390 = vsub.f32 %v2305, %v1875
        %v2391 = vsub.f32 %v2307, %v1877
        %v2392 = vsub.f32 %v2310, %v1880
        %v2393 = vsub.f32 %v2312, %v1882
        %v2394 = vmul.f32 %v2344, %v2390
        %v2395 = vmul.f32 %v2359, %v2391
        %v2396 = vmul.f32 %v2374, %v2392
        %v2397 = vmul.f32 %v2389, %v2393
        %v2398 = vadd.f32 %v1875, %v2394
        %v2399 = vadd.f32 %v1877, %v2395
        %v2400 = vadd.f32 %v1880, %v2396
        %v2401 = vadd.f32 %v1882, %v2397
        %2402 = vst [vmem:[#allocation2 + $0x8] sm:$0xff] %v2398
        %2403 = vst [vmem:[#allocation2 + $0x10] sm:$0xff] %v2399
        %2404 = vst [vmem:[#allocation2 + $0x18] sm:$0xff] %v2400
        %2405 = vst [vmem:[#allocation2 + $0x20] sm:$0xff] %v2401
        %v2406 = vld [vmem:[#allocation2 + $0x7] sm:$0xff]
        %v2407 = vld [vmem:[#allocation2 + $0xf] sm:$0xff]
        %v2408 = vld [vmem:[#allocation2 + $0x17] sm:$0xff]
        %v2409 = vld [vmem:[#allocation2 + $0x1f] sm:$0xff]
        %v2410 = vld [vmem:[#allocation2 + $0x8] sm:$0xff]
        %v2411 = vld [vmem:[#allocation2 + $0x10] sm:$0xff]
        %v2412 = vld [vmem:[#allocation2 + $0x18] sm:$0xff]
        %v2413 = vld [vmem:[#allocation2 + $0x20] sm:$0xff]
        %v2414 = vld [vmem:[#allocation2 + $0x9] sm:$0xff]
        %v2415 = vld [vmem:[#allocation2 + $0x11] sm:$0xff]
        %v2416 = vld [vmem:[#allocation2 + $0x19] sm:$0xff]
        %v2417 = vld [vmem:[#allocation2 + $0x21] sm:$0xff]
        %v2418 = vpack.c.bf16 %v2407, %v2406
        %v2419 = vpack.c.bf16 %v2411, %v2410
        %v2420 = vpack.c.bf16 %v2415, %v2414
        %v2421 = vpack.c.bf16 %v2409, %v2408
        %v2422 = vpack.c.bf16 %v2413, %v2412
        %v2423 = vpack.c.bf16 %v2417, %v2416
        %v2424 = vld [vmem:[#allocation11] sm:$0xff]
        %v2425 = vld [vmem:[#allocation11 + $0x8] sm:$0xff]
        %v2426 = vld [vmem:[#allocation11 + $0x10] sm:$0xff]
        %v2427 = vld [vmem:[#allocation11 + $0x18] sm:$0xff]
        %v2428 = vld [vmem:[#allocation11 + $0x20] sm:$0xff]
        %v2429 = vld [vmem:[#allocation11 + $0x28] sm:$0xff]
        %v2430 = vld [vmem:[#allocation11 + $0x30] sm:$0xff]
        %v2431 = vld [vmem:[#allocation11 + $0x38] sm:$0xff]
        %v2432 = vld [vmem:[#allocation11 + $0x40] sm:$0xff]
        %v2433 = vld [vmem:[#allocation11 + $0x48] sm:$0xff]
        %v2434 = vld [vmem:[#allocation11 + $0x50] sm:$0xff]
        %v2435 = vld [vmem:[#allocation11 + $0x58] sm:$0xff]
        %v2436 = vld [vmem:[#allocation11 + $0x60] sm:$0xff]
        %v2437 = vld [vmem:[#allocation11 + $0x68] sm:$0xff]
        %v2438 = vld [vmem:[#allocation11 + $0x70] sm:$0xff]
        %v2439 = vld [vmem:[#allocation11 + $0x78] sm:$0xff]
        %v2440 = vld [vmem:[#allocation11 + $0x80] sm:$0xff]
        %v2441 = vld [vmem:[#allocation11 + $0x88] sm:$0xff]
        %v2442 = vld [vmem:[#allocation11 + $0x90] sm:$0xff]
        %v2443 = vld [vmem:[#allocation11 + $0x98] sm:$0xff]
        %v2444 = vld [vmem:[#allocation11 + $0xa0] sm:$0xff]
        %v2445 = vld [vmem:[#allocation11 + $0xa8] sm:$0xff]
        %v2446 = vld [vmem:[#allocation11 + $0xb0] sm:$0xff]
        %v2447 = vld [vmem:[#allocation11 + $0xb8] sm:$0xff]
        %v2448 = vld [vmem:[#allocation11 + $0xc0] sm:$0xff]
        %v2449 = vld [vmem:[#allocation11 + $0xc8] sm:$0xff]
        %v2450 = vld [vmem:[#allocation11 + $0xd0] sm:$0xff]
        %v2451 = vld [vmem:[#allocation11 + $0xd8] sm:$0xff]
        %v2452 = vld [vmem:[#allocation11 + $0xe0] sm:$0xff]
        %v2453 = vld [vmem:[#allocation11 + $0xe8] sm:$0xff]
        %v2454 = vld [vmem:[#allocation11 + $0xf0] sm:$0xff]
        %v2455 = vld [vmem:[#allocation11 + $0xf8] sm:$0xff]
        %v2456 = vld [vmem:[#allocation11 + $0x100] sm:$0xff]
        %v2457 = vld [vmem:[#allocation11 + $0x108] sm:$0xff]
        %v2458 = vld [vmem:[#allocation11 + $0x110] sm:$0xff]
        %v2459 = vld [vmem:[#allocation11 + $0x118] sm:$0xff]
        %v2460 = vld [vmem:[#allocation11 + $0x120] sm:$0xff]
        %v2461 = vld [vmem:[#allocation11 + $0x128] sm:$0xff]
        %v2462 = vld [vmem:[#allocation11 + $0x130] sm:$0xff]
        %v2463 = vld [vmem:[#allocation11 + $0x138] sm:$0xff]
        %v2464 = vld [vmem:[#allocation11 + $0x140] sm:$0xff]
        %v2465 = vld [vmem:[#allocation11 + $0x148] sm:$0xff]
        %v2466 = vld [vmem:[#allocation11 + $0x150] sm:$0xff]
        %v2467 = vld [vmem:[#allocation11 + $0x158] sm:$0xff]
        %v2468 = vld [vmem:[#allocation11 + $0x160] sm:$0xff]
        %v2469 = vld [vmem:[#allocation11 + $0x168] sm:$0xff]
        %v2470 = vld [vmem:[#allocation11 + $0x170] sm:$0xff]
        %v2471 = vld [vmem:[#allocation11 + $0x178] sm:$0xff]
        %v2472 = vld [vmem:[%s10] sm:$0x3]
        %v2474 = vperm.slane %v2472, 0
        %v2475 = vperm.slane %v2472, 1
        %v2526 = vunpack.c.l.b16 %v2424
        %v2527 = vunpack.c.h.b16 %v2424
        %v2528 = vunpack.c.l.b16 %v2425
        %v2529 = vunpack.c.h.b16 %v2425
        %v2530 = vunpack.c.l.b16 %v2426
        %v2531 = vunpack.c.h.b16 %v2426
        %v2532 = vunpack.c.l.b16 %v2427
        %v2533 = vunpack.c.h.b16 %v2427
        %v2534 = vunpack.c.l.b16 %v2428
        %v2535 = vunpack.c.h.b16 %v2428
        %v2536 = vunpack.c.l.b16 %v2429
        %v2537 = vunpack.c.h.b16 %v2429
        %v2538 = vunpack.c.l.b16 %v2430
        %v2539 = vunpack.c.h.b16 %v2430
        %v2540 = vunpack.c.l.b16 %v2431
        %v2541 = vunpack.c.h.b16 %v2431
        %v2542 = vunpack.c.l.b16 %v2432
        %v2543 = vunpack.c.h.b16 %v2432
        %v2544 = vunpack.c.l.b16 %v2433
        %v2545 = vunpack.c.h.b16 %v2433
        %v2546 = vunpack.c.l.b16 %v2434
        %v2547 = vunpack.c.h.b16 %v2434
        %v2548 = vunpack.c.l.b16 %v2435
        %v2549 = vunpack.c.h.b16 %v2435
        %v2550 = vunpack.c.l.b16 %v2436
        %v2551 = vunpack.c.h.b16 %v2436
        %v2552 = vunpack.c.l.b16 %v2437
        %v2553 = vunpack.c.h.b16 %v2437
        %v2554 = vunpack.c.l.b16 %v2438
        %v2555 = vunpack.c.h.b16 %v2438
        %v2556 = vunpack.c.l.b16 %v2439
        %v2557 = vunpack.c.h.b16 %v2439
        %v2558 = vunpack.c.l.b16 %v2440
        %v2559 = vunpack.c.h.b16 %v2440
        %v2560 = vunpack.c.l.b16 %v2441
        %v2561 = vunpack.c.h.b16 %v2441
        %v2562 = vunpack.c.l.b16 %v2442
        %v2563 = vunpack.c.h.b16 %v2442
        %v2564 = vunpack.c.l.b16 %v2443
        %v2565 = vunpack.c.h.b16 %v2443
        %v2566 = vunpack.c.l.b16 %v2444
        %v2567 = vunpack.c.h.b16 %v2444
        %v2568 = vunpack.c.l.b16 %v2445
        %v2569 = vunpack.c.h.b16 %v2445
        %v2570 = vunpack.c.l.b16 %v2446
        %v2571 = vunpack.c.h.b16 %v2446
        %v2572 = vunpack.c.l.b16 %v2447
        %v2573 = vunpack.c.h.b16 %v2447
        %v2574 = vunpack.c.l.b16 %v2448
        %v2575 = vunpack.c.h.b16 %v2448
        %v2576 = vunpack.c.l.b16 %v2449
        %v2577 = vunpack.c.h.b16 %v2449
        %v2578 = vunpack.c.l.b16 %v2450
        %v2579 = vunpack.c.h.b16 %v2450
        %v2580 = vunpack.c.l.b16 %v2451
        %v2581 = vunpack.c.h.b16 %v2451
        %v2582 = vunpack.c.l.b16 %v2452
        %v2583 = vunpack.c.h.b16 %v2452
        %v2584 = vunpack.c.l.b16 %v2453
        %v2585 = vunpack.c.h.b16 %v2453
        %v2586 = vunpack.c.l.b16 %v2454
        %v2587 = vunpack.c.h.b16 %v2454
        %v2588 = vunpack.c.l.b16 %v2455
        %v2589 = vunpack.c.h.b16 %v2455
        %v2590 = vunpack.c.l.b16 %v2456
        %v2591 = vunpack.c.h.b16 %v2456
        %v2592 = vunpack.c.l.b16 %v2457
        %v2593 = vunpack.c.h.b16 %v2457
        %v2594 = vunpack.c.l.b16 %v2458
        %v2595 = vunpack.c.h.b16 %v2458
        %v2596 = vunpack.c.l.b16 %v2459
        %v2597 = vunpack.c.h.b16 %v2459
        %v2598 = vunpack.c.l.b16 %v2460
        %v2599 = vunpack.c.h.b16 %v2460
        %v2600 = vunpack.c.l.b16 %v2461
        %v2601 = vunpack.c.h.b16 %v2461
        %v2602 = vunpack.c.l.b16 %v2462
        %v2603 = vunpack.c.h.b16 %v2462
        %v2604 = vunpack.c.l.b16 %v2463
        %v2605 = vunpack.c.h.b16 %v2463
        %v2606 = vunpack.c.l.b16 %v2464
        %v2607 = vunpack.c.h.b16 %v2464
        %v2608 = vunpack.c.l.b16 %v2465
        %v2609 = vunpack.c.h.b16 %v2465
        %v2610 = vunpack.c.l.b16 %v2466
        %v2611 = vunpack.c.h.b16 %v2466
        %v2612 = vunpack.c.l.b16 %v2467
        %v2613 = vunpack.c.h.b16 %v2467
        %v2614 = vunpack.c.l.b16 %v2468
        %v2615 = vunpack.c.h.b16 %v2468
        %v2616 = vunpack.c.l.b16 %v2469
        %v2617 = vunpack.c.h.b16 %v2469
        %v2618 = vunpack.c.l.b16 %v2470
        %v2619 = vunpack.c.h.b16 %v2470
        %v2620 = vunpack.c.l.b16 %v2471
        %v2621 = vunpack.c.h.b16 %v2471
        %v2622 = vpack.c.b16 %v2528, %v2526
        %v2623 = vpack.c.b16 %v2529, %v2527
        %v2624 = vpack.c.b16 %v2532, %v2530
        %v2625 = vpack.c.b16 %v2533, %v2531
        %v2626 = vpack.c.b16 %v2536, %v2534
        %v2627 = vpack.c.b16 %v2537, %v2535
        %v2628 = vpack.c.b16 %v2540, %v2538
        %v2629 = vpack.c.b16 %v2541, %v2539
        %v2630 = vpack.c.b16 %v2544, %v2542
        %v2631 = vpack.c.b16 %v2545, %v2543
        %v2632 = vpack.c.b16 %v2548, %v2546
        %v2633 = vpack.c.b16 %v2549, %v2547
        %v2634 = vpack.c.b16 %v2552, %v2550
        %v2635 = vpack.c.b16 %v2553, %v2551
        %v2636 = vpack.c.b16 %v2556, %v2554
        %v2637 = vpack.c.b16 %v2557, %v2555
        %v2638 = vpack.c.b16 %v2560, %v2558
        %v2639 = vpack.c.b16 %v2561, %v2559
        %v2640 = vpack.c.b16 %v2564, %v2562
        %v2641 = vpack.c.b16 %v2565, %v2563
        %v2642 = vpack.c.b16 %v2568, %v2566
        %v2643 = vpack.c.b16 %v2569, %v2567
        %v2644 = vpack.c.b16 %v2572, %v2570
        %v2645 = vpack.c.b16 %v2573, %v2571
        %v2646 = vpack.c.b16 %v2576, %v2574
        %v2647 = vpack.c.b16 %v2577, %v2575
        %v2648 = vpack.c.b16 %v2580, %v2578
        %v2649 = vpack.c.b16 %v2581, %v2579
        %v2650 = vpack.c.b16 %v2584, %v2582
        %v2651 = vpack.c.b16 %v2585, %v2583
        %v2652 = vpack.c.b16 %v2588, %v2586
        %v2653 = vpack.c.b16 %v2589, %v2587
        %v2654 = vpack.c.b16 %v2592, %v2590
        %v2655 = vpack.c.b16 %v2593, %v2591
        %v2656 = vpack.c.b16 %v2596, %v2594
        %v2657 = vpack.c.b16 %v2597, %v2595
        %v2658 = vpack.c.b16 %v2600, %v2598
        %v2659 = vpack.c.b16 %v2601, %v2599
        %v2660 = vpack.c.b16 %v2604, %v2602
        %v2661 = vpack.c.b16 %v2605, %v2603
        %v2662 = vpack.c.b16 %v2608, %v2606
        %v2663 = vpack.c.b16 %v2609, %v2607
        %v2664 = vpack.c.b16 %v2612, %v2610
        %v2665 = vpack.c.b16 %v2613, %v2611
        %v2666 = vpack.c.b16 %v2616, %v2614
        %v2667 = vpack.c.b16 %v2617, %v2615
        %v2668 = vpack.c.b16 %v2620, %v2618
        %v2669 = vpack.c.b16 %v2621, %v2619
        %2718 = vmatpush.bf16.msra.mxu0 %v2636
        %2719 = vmatpush.bf16.msra.mxu0 %v2634
        %2720 = vmatpush.bf16.msra.mxu0 %v2632
        %2721 = vmatpush.bf16.msra.mxu0 %v2630
        %2722 = vmatpush.bf16.msra.mxu0 %v2628
        %2723 = vmatpush.bf16.msra.mxu0 %v2626
        %2724 = vmatpush.bf16.msra.mxu0 %v2624
        %2725 = vmatpush.bf16.msra.mxu0 %v2622
        %2726 = vmatmul.bf16.gmra.mxu0 %v2418
        %v2727 = vpop.f32.mrf.mxu0
        %v2728 = vadd.f32 %v2474, %v2727
        %v2729 = vpop.f32.mrf.mxu0
        %v2730 = vadd.f32 %v2474, %v2729
        %2731 = vmatmul.bf16.gmra.mxu0 %v2421
        %v2732 = vpop.f32.mrf.mxu0
        %v2733 = vadd.f32 %v2474, %v2732
        %v2734 = vpop.f32.mrf.mxu0
        %v2735 = vadd.f32 %v2474, %v2734
        %2736 = vdwg.mxu0
        %2737 = vmatpush.bf16.msra.mxu0 %v2652
        %2738 = vmatpush.bf16.msra.mxu0 %v2650
        %2739 = vmatpush.bf16.msra.mxu0 %v2648
        %2740 = vmatpush.bf16.msra.mxu0 %v2646
        %2741 = vmatpush.bf16.msra.mxu0 %v2644
        %2742 = vmatpush.bf16.msra.mxu0 %v2642
        %2743 = vmatpush.bf16.msra.mxu0 %v2640
        %2744 = vmatpush.bf16.msra.mxu0 %v2638
        %2745 = vmatmul.bf16.gmra.mxu0 %v2419
        %v2746 = vpop.f32.mrf.mxu0
        %v2747 = vadd.f32 %v2728, %v2746
        %v2748 = vpop.f32.mrf.mxu0
        %v2749 = vadd.f32 %v2730, %v2748
        %2750 = vmatmul.bf16.gmra.mxu0 %v2422
        %v2751 = vpop.f32.mrf.mxu0
        %v2752 = vadd.f32 %v2733, %v2751
        %v2753 = vpop.f32.mrf.mxu0
        %v2754 = vadd.f32 %v2735, %v2753
        %2755 = vdwg.mxu0
        %2756 = vmatpush.bf16.msra.mxu0 %v2668
        %2757 = vmatpush.bf16.msra.mxu0 %v2666
        %2758 = vmatpush.bf16.msra.mxu0 %v2664
        %2759 = vmatpush.bf16.msra.mxu0 %v2662
        %2760 = vmatpush.bf16.msra.mxu0 %v2660
        %2761 = vmatpush.bf16.msra.mxu0 %v2658
        %2762 = vmatpush.bf16.msra.mxu0 %v2656
        %2763 = vmatpush.bf16.msra.mxu0 %v2654
        %2764 = vmatmul.bf16.gmra.mxu0 %v2420
        %v2765 = vpop.f32.mrf.mxu0
        %v2766 = vadd.f32 %v2747, %v2765
        %v2767 = vpop.f32.mrf.mxu0
        %v2768 = vadd.f32 %v2749, %v2767
        %2769 = vmatmul.bf16.gmra.mxu0 %v2423
        %v2770 = vpop.f32.mrf.mxu0
        %v2771 = vadd.f32 %v2752, %v2770
        %v2772 = vpop.f32.mrf.mxu0
        %v2773 = vadd.f32 %v2754, %v2772
        %2774 = vdwg.mxu0
        %2775 = vmatpush.bf16.msra.mxu0 %v2637
        %2776 = vmatpush.bf16.msra.mxu0 %v2635
        %2777 = vmatpush.bf16.msra.mxu0 %v2633
        %2778 = vmatpush.bf16.msra.mxu0 %v2631
        %2779 = vmatpush.bf16.msra.mxu0 %v2629
        %2780 = vmatpush.bf16.msra.mxu0 %v2627
        %2781 = vmatpush.bf16.msra.mxu0 %v2625
        %2782 = vmatpush.bf16.msra.mxu0 %v2623
        %2783 = vmatmul.bf16.gmra.mxu0 %v2418
        %v2784 = vpop.f32.mrf.mxu0
        %v2785 = vadd.f32 %v2475, %v2784
        %v2786 = vpop.f32.mrf.mxu0
        %v2787 = vadd.f32 %v2475, %v2786
        %2788 = vmatmul.bf16.gmra.mxu0 %v2421
        %v2789 = vpop.f32.mrf.mxu0
        %v2790 = vadd.f32 %v2475, %v2789
        %v2791 = vpop.f32.mrf.mxu0
        %v2792 = vadd.f32 %v2475, %v2791
        %2793 = vdwg.mxu0
        %2794 = vmatpush.bf16.msra.mxu0 %v2653
        %2795 = vmatpush.bf16.msra.mxu0 %v2651
        %2796 = vmatpush.bf16.msra.mxu0 %v2649
        %2797 = vmatpush.bf16.msra.mxu0 %v2647
        %2798 = vmatpush.bf16.msra.mxu0 %v2645
        %2799 = vmatpush.bf16.msra.mxu0 %v2643
        %2800 = vmatpush.bf16.msra.mxu0 %v2641
        %2801 = vmatpush.bf16.msra.mxu0 %v2639
        %2802 = vmatmul.bf16.gmra.mxu0 %v2419
        %v2803 = vpop.f32.mrf.mxu0
        %v2804 = vadd.f32 %v2785, %v2803
        %v2805 = vpop.f32.mrf.mxu0
        %v2806 = vadd.f32 %v2787, %v2805
        %2807 = vmatmul.bf16.gmra.mxu0 %v2422
        %v2808 = vpop.f32.mrf.mxu0
        %v2809 = vadd.f32 %v2790, %v2808
        %v2810 = vpop.f32.mrf.mxu0
        %v2811 = vadd.f32 %v2792, %v2810
        %2812 = vdwg.mxu0
        %2813 = vmatpush.bf16.msra.mxu0 %v2669
        %2814 = vmatpush.bf16.msra.mxu0 %v2667
        %2815 = vmatpush.bf16.msra.mxu0 %v2665
        %2816 = vmatpush.bf16.msra.mxu0 %v2663
        %2817 = vmatpush.bf16.msra.mxu0 %v2661
        %2818 = vmatpush.bf16.msra.mxu0 %v2659
        %2819 = vmatpush.bf16.msra.mxu0 %v2657
        %2820 = vmatpush.bf16.msra.mxu0 %v2655
        %2821 = vmatmul.bf16.gmra.mxu0 %v2420
        %v2822 = vpop.f32.mrf.mxu0
        %v2823 = vadd.f32 %v2804, %v2822
        %v2824 = vpop.f32.mrf.mxu0
        %v2825 = vadd.f32 %v2806, %v2824
        %2826 = vmatmul.bf16.gmra.mxu0 %v2423
        %v2827 = vpop.f32.mrf.mxu0
        %v2828 = vadd.f32 %v2809, %v2827
        %v2829 = vpop.f32.mrf.mxu0
        %v2830 = vadd.f32 %v2811, %v2829
        %2831 = vdwg.mxu0
        %v2832 = vxor.u32 %v2766, 2147483648
        %v2833 = vxor.u32 %v2768, 2147483648
        %v2834 = vxor.u32 %v2771, 2147483648
        %v2835 = vxor.u32 %v2773, 2147483648
        %v2836 = vmul.f32 %v2832, 1.442695
        %v2837 = vpow.pop %v2836
        %v2838 = vmul.f32 %v2833, 1.442695
        %v2839 = vpow.pop %v2838
        %v2840 = vmul.f32 %v2834, 1.442695
        %v2841 = vpow.pop %v2840
        %v2842 = vmul.f32 %v2835, 1.442695
        %v2843 = vpow.pop %v2842
        %v2844 = vadd.f32 %v2837, 1.0
        %v2845 = vadd.f32 %v2839, 1.0
        %v2846 = vadd.f32 %v2841, 1.0
        %v2847 = vadd.f32 %v2843, 1.0
        %v2848 = vrcp.pop %v2844
        %v2849 = vmul.f32 %v2844, %v2848
        %v2850 = vsub.f32 1.0, %v2849
        %v2851 = vmul.f32 %v2848, %v2850
        %v2852 = vadd.f32 %v2848, %v2851
        %vm2853 = vweird.f32 %v2844
        %vm2854 = vweird.f32 %v2848
        %vm2855 = vmor %vm2853, %vm2854
        %v2856 = vsel %vm2855, %v2848, %v2852
        %v2857 = vand.u32 2147483647, %v2844
        %vm2858 = vcmp.eq.f32.partialorder %v2857, 8.507059e+37
        %v2859 = vand.u32 %v2844, 2147483648
        %v2860 = vor.u32 1.1754944e-38, %v2859
        %v2861 = vsel %vm2858, %v2860, %v2856
        %v2862 = vmul.f32 1.0, %v2861
        %v2863 = vrcp.pop %v2845
        %v2864 = vmul.f32 %v2845, %v2863
        %v2865 = vsub.f32 1.0, %v2864
        %v2866 = vmul.f32 %v2863, %v2865
        %v2867 = vadd.f32 %v2863, %v2866
        %vm2868 = vweird.f32 %v2845
        %vm2869 = vweird.f32 %v2863
        %vm2870 = vmor %vm2868, %vm2869
        %v2871 = vsel %vm2870, %v2863, %v2867
        %v2872 = vand.u32 2147483647, %v2845
        %vm2873 = vcmp.eq.f32.partialorder %v2872, 8.507059e+37
        %v2874 = vand.u32 %v2845, 2147483648
        %v2875 = vor.u32 1.1754944e-38, %v2874
        %v2876 = vsel %vm2873, %v2875, %v2871
        %v2877 = vmul.f32 1.0, %v2876
        %v2878 = vrcp.pop %v2846
        %v2879 = vmul.f32 %v2846, %v2878
        %v2880 = vsub.f32 1.0, %v2879
        %v2881 = vmul.f32 %v2878, %v2880
        %v2882 = vadd.f32 %v2878, %v2881
        %vm2883 = vweird.f32 %v2846
        %vm2884 = vweird.f32 %v2878
        %vm2885 = vmor %vm2883, %vm2884
        %v2886 = vsel %vm2885, %v2878, %v2882
        %v2887 = vand.u32 2147483647, %v2846
        %vm2888 = vcmp.eq.f32.partialorder %v2887, 8.507059e+37
        %v2889 = vand.u32 %v2846, 2147483648
        %v2890 = vor.u32 1.1754944e-38, %v2889
        %v2891 = vsel %vm2888, %v2890, %v2886
        %v2892 = vmul.f32 1.0, %v2891
        %v2893 = vrcp.pop %v2847
        %v2894 = vmul.f32 %v2847, %v2893
        %v2895 = vsub.f32 1.0, %v2894
        %v2896 = vmul.f32 %v2893, %v2895
        %v2897 = vadd.f32 %v2893, %v2896
        %vm2898 = vweird.f32 %v2847
        %vm2899 = vweird.f32 %v2893
        %vm2900 = vmor %vm2898, %vm2899
        %v2901 = vsel %vm2900, %v2893, %v2897
        %v2902 = vand.u32 2147483647, %v2847
        %vm2903 = vcmp.eq.f32.partialorder %v2902, 8.507059e+37
        %v2904 = vand.u32 %v2847, 2147483648
        %v2905 = vor.u32 1.1754944e-38, %v2904
        %v2906 = vsel %vm2903, %v2905, %v2901
        %v2907 = vmul.f32 1.0, %v2906
        %v2908 = vsub.f32 %v2823, %v2398
        %v2909 = vsub.f32 %v2825, %v2399
        %v2910 = vsub.f32 %v2828, %v2400
        %v2911 = vsub.f32 %v2830, %v2401
        %v2912 = vmul.f32 %v2862, %v2908
        %v2913 = vmul.f32 %v2877, %v2909
        %v2914 = vmul.f32 %v2892, %v2910
        %v2915 = vmul.f32 %v2907, %v2911
        %v2916 = vadd.f32 %v2398, %v2912
        %v2917 = vadd.f32 %v2399, %v2913
        %v2918 = vadd.f32 %v2400, %v2914
        %v2919 = vadd.f32 %v2401, %v2915
        %v2920 = vpack.c.bf16 %v2917, %v2916
        %v2921 = vpack.c.bf16 %v2919, %v2918
        %v2922 = vld [vmem:[#allocation13] sm:$0xf]
        %v2923 = vld [vmem:[#allocation13 + $0x4] sm:$0xf]
        %v2924 = vld [vmem:[#allocation13 + $0x8] sm:$0xf]
        %v2925 = vld [vmem:[#allocation13 + $0xc] sm:$0xf]
        %v2926 = vld [vmem:[#allocation13 + $0x10] sm:$0xf]
        %v2927 = vld [vmem:[#allocation13 + $0x14] sm:$0xf]
        %v2928 = vld [vmem:[#allocation13 + $0x18] sm:$0xf]
        %v2929 = vld [vmem:[#allocation13 + $0x1c] sm:$0xf]
        %v2930 = vld [vmem:[#allocation13 + $0x20] sm:$0xf]
        %v2931 = vld [vmem:[#allocation13 + $0x24] sm:$0xf]
        %v2932 = vld [vmem:[#allocation13 + $0x28] sm:$0xf]
        %v2933 = vld [vmem:[#allocation13 + $0x2c] sm:$0xf]
        %v2934 = vld [vmem:[#allocation13 + $0x30] sm:$0xf]
        %v2935 = vld [vmem:[#allocation13 + $0x34] sm:$0xf]
        %v2936 = vld [vmem:[#allocation13 + $0x38] sm:$0xf]
        %v2937 = vld [vmem:[#allocation13 + $0x3c] sm:$0xf]
        %v2938 = vld [vmem:[#allocation14] sm:$0x1]
        %v2940 = vperm.slane %v2938, 0
        %v2958 = vunpack.c.l.b16 %v2922
        %v2959 = vunpack.c.l.b16 %v2923
        %v2960 = vunpack.c.l.b16 %v2924
        %v2961 = vunpack.c.l.b16 %v2925
        %v2962 = vunpack.c.l.b16 %v2926
        %v2963 = vunpack.c.l.b16 %v2927
        %v2964 = vunpack.c.l.b16 %v2928
        %v2965 = vunpack.c.l.b16 %v2929
        %v2966 = vunpack.c.l.b16 %v2930
        %v2967 = vunpack.c.l.b16 %v2931
        %v2968 = vunpack.c.l.b16 %v2932
        %v2969 = vunpack.c.l.b16 %v2933
        %v2970 = vunpack.c.l.b16 %v2934
        %v2971 = vunpack.c.l.b16 %v2935
        %v2972 = vunpack.c.l.b16 %v2936
        %v2973 = vunpack.c.l.b16 %v2937
        %v2974 = vpack.c.b16 %v2959, %v2958
        %v2975 = vpack.c.b16 %v2961, %v2960
        %v2976 = vpack.c.b16 %v2963, %v2962
        %v2977 = vpack.c.b16 %v2965, %v2964
        %v2978 = vpack.c.b16 %v2967, %v2966
        %v2979 = vpack.c.b16 %v2969, %v2968
        %v2980 = vpack.c.b16 %v2971, %v2970
        %v2981 = vpack.c.b16 %v2973, %v2972
        %2990 = vmatpush.bf16.msra.mxu0 %v2981
        %2991 = vmatpush.bf16.msra.mxu0 %v2980
        %2992 = vmatpush.bf16.msra.mxu0 %v2979
        %2993 = vmatpush.bf16.msra.mxu0 %v2978
        %2994 = vmatpush.bf16.msra.mxu0 %v2977
        %2995 = vmatpush.bf16.msra.mxu0 %v2976
        %2996 = vmatpush.bf16.msra.mxu0 %v2975
        %2997 = vmatpush.bf16.msra.mxu0 %v2974
        %2998 = vmatmul.bf16.gmra.mxu0 %v2920
        %v2999 = vpop.f32.mrf.mxu0
        %v3000 = vadd.f32 %v2940, %v2999
        %v3001 = vpop.f32.mrf.mxu0
        %v3002 = vadd.f32 %v2940, %v3001
        %3003 = vmatmul.bf16.gmra.mxu0 %v2921
        %v3004 = vpop.f32.mrf.mxu0
        %v3005 = vadd.f32 %v2940, %v3004
        %v3006 = vpop.f32.mrf.mxu0
        %v3007 = vadd.f32 %v2940, %v3006
        %3008 = vdwg.mxu0
        %v3009 = vpack.c.bf16 %v3002, %v3000
        %v3010 = vpack.c.bf16 %v3007, %v3005
        %v3011 = vld [vmem:[%s13] sm:$0xff]
        %v3012 = vld [vmem:[%s13 + $0x8] sm:$0xff]
        %v3013 = vld [vmem:[%s13 + $0x10] sm:$0xff]
        %v3014 = vld [vmem:[%s13 + $0x18] sm:$0xff]
        %v3015 = vld [vmem:[%s13 + $0x20] sm:$0xff]
        %v3016 = vld [vmem:[%s13 + $0x28] sm:$0xff]
        %v3017 = vld [vmem:[%s13 + $0x30] sm:$0xff]
        %v3018 = vld [vmem:[%s13 + $0x38] sm:$0xff]
        %v3019 = vld [vmem:[%s13 + $0x40] sm:$0xff]
        %v3020 = vld [vmem:[%s13 + $0x48] sm:$0xff]
        %v3021 = vld [vmem:[%s13 + $0x50] sm:$0xff]
        %v3022 = vld [vmem:[%s13 + $0x58] sm:$0xff]
        %v3023 = vld [vmem:[%s13 + $0x60] sm:$0xff]
        %v3024 = vld [vmem:[%s13 + $0x68] sm:$0xff]
        %v3025 = vld [vmem:[%s13 + $0x70] sm:$0xff]
        %v3026 = vld [vmem:[%s13 + $0x78] sm:$0xff]
        %v3027 = vld [vmem:[%s14] sm:$0x3]
        %v3029 = vperm.slane %v3027, 0
        %v3030 = vperm.slane %v3027, 1
        %v3049 = vunpack.c.l.b16 %v3011
        %v3050 = vunpack.c.h.b16 %v3011
        %v3051 = vunpack.c.l.b16 %v3012
        %v3052 = vunpack.c.h.b16 %v3012
        %v3053 = vunpack.c.l.b16 %v3013
        %v3054 = vunpack.c.h.b16 %v3013
        %v3055 = vunpack.c.l.b16 %v3014
        %v3056 = vunpack.c.h.b16 %v3014
        %v3057 = vunpack.c.l.b16 %v3015
        %v3058 = vunpack.c.h.b16 %v3015
        %v3059 = vunpack.c.l.b16 %v3016
        %v3060 = vunpack.c.h.b16 %v3016
        %v3061 = vunpack.c.l.b16 %v3017
        %v3062 = vunpack.c.h.b16 %v3017
        %v3063 = vunpack.c.l.b16 %v3018
        %v3064 = vunpack.c.h.b16 %v3018
        %v3065 = vunpack.c.l.b16 %v3019
        %v3066 = vunpack.c.h.b16 %v3019
        %v3067 = vunpack.c.l.b16 %v3020
        %v3068 = vunpack.c.h.b16 %v3020
        %v3069 = vunpack.c.l.b16 %v3021
        %v3070 = vunpack.c.h.b16 %v3021
        %v3071 = vunpack.c.l.b16 %v3022
        %v3072 = vunpack.c.h.b16 %v3022
        %v3073 = vunpack.c.l.b16 %v3023
        %v3074 = vunpack.c.h.b16 %v3023
        %v3075 = vunpack.c.l.b16 %v3024
        %v3076 = vunpack.c.h.b16 %v3024
        %v3077 = vunpack.c.l.b16 %v3025
        %v3078 = vunpack.c.h.b16 %v3025
        %v3079 = vunpack.c.l.b16 %v3026
        %v3080 = vunpack.c.h.b16 %v3026
        %v3081 = vpack.c.b16 %v3051, %v3049
        %v3082 = vpack.c.b16 %v3052, %v3050
        %v3083 = vpack.c.b16 %v3055, %v3053
        %v3084 = vpack.c.b16 %v3056, %v3054
        %v3085 = vpack.c.b16 %v3059, %v3057
        %v3086 = vpack.c.b16 %v3060, %v3058
        %v3087 = vpack.c.b16 %v3063, %v3061
        %v3088 = vpack.c.b16 %v3064, %v3062
        %v3089 = vpack.c.b16 %v3067, %v3065
        %v3090 = vpack.c.b16 %v3068, %v3066
        %v3091 = vpack.c.b16 %v3071, %v3069
        %v3092 = vpack.c.b16 %v3072, %v3070
        %v3093 = vpack.c.b16 %v3075, %v3073
        %v3094 = vpack.c.b16 %v3076, %v3074
        %v3095 = vpack.c.b16 %v3079, %v3077
        %v3096 = vpack.c.b16 %v3080, %v3078
        %3113 = vmatpush.bf16.msra.mxu0 %v3095
        %3114 = vmatpush.bf16.msra.mxu0 %v3093
        %3115 = vmatpush.bf16.msra.mxu0 %v3091
        %3116 = vmatpush.bf16.msra.mxu0 %v3089
        %3117 = vmatpush.bf16.msra.mxu0 %v3087
        %3118 = vmatpush.bf16.msra.mxu0 %v3085
        %3119 = vmatpush.bf16.msra.mxu0 %v3083
        %3120 = vmatpush.bf16.msra.mxu0 %v3081
        %3121 = vmatmul.bf16.gmra.mxu0 %v3009
        %v3122 = vpop.f32.mrf.mxu0
        %v3123 = vadd.f32 %v3029, %v3122
        %v3124 = vpop.f32.mrf.mxu0
        %v3125 = vadd.f32 %v3029, %v3124
        %3126 = vmatmul.bf16.gmra.mxu0 %v3010
        %v3127 = vpop.f32.mrf.mxu0
        %v3128 = vadd.f32 %v3029, %v3127
        %v3129 = vpop.f32.mrf.mxu0
        %v3130 = vadd.f32 %v3029, %v3129
        %3131 = vdwg.mxu0
        %3132 = vmatpush.bf16.msra.mxu0 %v3096
        %3133 = vmatpush.bf16.msra.mxu0 %v3094
        %3134 = vmatpush.bf16.msra.mxu0 %v3092
        %3135 = vmatpush.bf16.msra.mxu0 %v3090
        %3136 = vmatpush.bf16.msra.mxu0 %v3088
        %3137 = vmatpush.bf16.msra.mxu0 %v3086
        %3138 = vmatpush.bf16.msra.mxu0 %v3084
        %3139 = vmatpush.bf16.msra.mxu0 %v3082
        %3140 = vmatmul.bf16.gmra.mxu0 %v3009
        %v3141 = vpop.f32.mrf.mxu0
        %v3142 = vadd.f32 %v3030, %v3141
        %v3143 = vpop.f32.mrf.mxu0
        %v3144 = vadd.f32 %v3030, %v3143
        %3145 = vmatmul.bf16.gmra.mxu0 %v3010
        %v3146 = vpop.f32.mrf.mxu0
        %v3147 = vadd.f32 %v3030, %v3146
        %v3148 = vpop.f32.mrf.mxu0
        %v3149 = vadd.f32 %v3030, %v3148
        %3150 = vdwg.mxu0
        %v3151 = vxor.u32 %v3123, 2147483648
        %v3152 = vxor.u32 %v3125, 2147483648
        %v3153 = vxor.u32 %v3128, 2147483648
        %v3154 = vxor.u32 %v3130, 2147483648
        %v3155 = vmul.f32 %v3151, 1.442695
        %v3156 = vpow.pop %v3155
        %v3157 = vmul.f32 %v3152, 1.442695
        %v3158 = vpow.pop %v3157
        %v3159 = vmul.f32 %v3153, 1.442695
        %v3160 = vpow.pop %v3159
        %v3161 = vmul.f32 %v3154, 1.442695
        %v3162 = vpow.pop %v3161
        %v3163 = vadd.f32 %v3156, 1.0
        %v3164 = vadd.f32 %v3158, 1.0
        %v3165 = vadd.f32 %v3160, 1.0
        %v3166 = vadd.f32 %v3162, 1.0
        %v3167 = vrcp.pop %v3163
        %v3168 = vmul.f32 %v3163, %v3167
        %v3169 = vsub.f32 1.0, %v3168
        %v3170 = vmul.f32 %v3167, %v3169
        %v3171 = vadd.f32 %v3167, %v3170
        %vm3172 = vweird.f32 %v3163
        %vm3173 = vweird.f32 %v3167
        %vm3174 = vmor %vm3172, %vm3173
        %v3175 = vsel %vm3174, %v3167, %v3171
        %v3176 = vand.u32 2147483647, %v3163
        %vm3177 = vcmp.eq.f32.partialorder %v3176, 8.507059e+37
        %v3178 = vand.u32 %v3163, 2147483648
        %v3179 = vor.u32 1.1754944e-38, %v3178
        %v3180 = vsel %vm3177, %v3179, %v3175
        %v3181 = vmul.f32 1.0, %v3180
        %v3182 = vrcp.pop %v3164
        %v3183 = vmul.f32 %v3164, %v3182
        %v3184 = vsub.f32 1.0, %v3183
        %v3185 = vmul.f32 %v3182, %v3184
        %v3186 = vadd.f32 %v3182, %v3185
        %vm3187 = vweird.f32 %v3164
        %vm3188 = vweird.f32 %v3182
        %vm3189 = vmor %vm3187, %vm3188
        %v3190 = vsel %vm3189, %v3182, %v3186
        %v3191 = vand.u32 2147483647, %v3164
        %vm3192 = vcmp.eq.f32.partialorder %v3191, 8.507059e+37
        %v3193 = vand.u32 %v3164, 2147483648
        %v3194 = vor.u32 1.1754944e-38, %v3193
        %v3195 = vsel %vm3192, %v3194, %v3190
        %v3196 = vmul.f32 1.0, %v3195
        %v3197 = vrcp.pop %v3165
        %v3198 = vmul.f32 %v3165, %v3197
        %v3199 = vsub.f32 1.0, %v3198
        %v3200 = vmul.f32 %v3197, %v3199
        %v3201 = vadd.f32 %v3197, %v3200
        %vm3202 = vweird.f32 %v3165
        %vm3203 = vweird.f32 %v3197
        %vm3204 = vmor %vm3202, %vm3203
        %v3205 = vsel %vm3204, %v3197, %v3201
        %v3206 = vand.u32 2147483647, %v3165
        %vm3207 = vcmp.eq.f32.partialorder %v3206, 8.507059e+37
        %v3208 = vand.u32 %v3165, 2147483648
        %v3209 = vor.u32 1.1754944e-38, %v3208
        %v3210 = vsel %vm3207, %v3209, %v3205
        %v3211 = vmul.f32 1.0, %v3210
        %v3212 = vrcp.pop %v3166
        %v3213 = vmul.f32 %v3166, %v3212
        %v3214 = vsub.f32 1.0, %v3213
        %v3215 = vmul.f32 %v3212, %v3214
        %v3216 = vadd.f32 %v3212, %v3215
        %vm3217 = vweird.f32 %v3166
        %vm3218 = vweird.f32 %v3212
        %vm3219 = vmor %vm3217, %vm3218
        %v3220 = vsel %vm3219, %v3212, %v3216
        %v3221 = vand.u32 2147483647, %v3166
        %vm3222 = vcmp.eq.f32.partialorder %v3221, 8.507059e+37
        %v3223 = vand.u32 %v3166, 2147483648
        %v3224 = vor.u32 1.1754944e-38, %v3223
        %v3225 = vsel %vm3222, %v3224, %v3220
        %v3226 = vmul.f32 1.0, %v3225
        %v3227 = vsub.f32 %v3142, %v3000
        %v3228 = vsub.f32 %v3144, %v3002
        %v3229 = vsub.f32 %v3147, %v3005
        %v3230 = vsub.f32 %v3149, %v3007
        %v3231 = vmul.f32 %v3181, %v3227
        %v3232 = vmul.f32 %v3196, %v3228
        %v3233 = vmul.f32 %v3211, %v3229
        %v3234 = vmul.f32 %v3226, %v3230
        %v3235 = vadd.f32 %v3000, %v3231
        %v3236 = vadd.f32 %v3002, %v3232
        %v3237 = vadd.f32 %v3005, %v3233
        %v3238 = vadd.f32 %v3007, %v3234
        %v3239 = vpack.c.bf16 %v3236, %v3235
        %v3240 = vpack.c.bf16 %v3238, %v3237
        %v3241 = vld [vmem:[#allocation16] sm:$0xf]
        %v3242 = vld [vmem:[#allocation16 + $0x4] sm:$0xf]
        %v3243 = vld [vmem:[#allocation16 + $0x8] sm:$0xf]
        %v3244 = vld [vmem:[#allocation16 + $0xc] sm:$0xf]
        %v3245 = vld [vmem:[#allocation16 + $0x10] sm:$0xf]
        %v3246 = vld [vmem:[#allocation16 + $0x14] sm:$0xf]
        %v3247 = vld [vmem:[#allocation16 + $0x18] sm:$0xf]
        %v3248 = vld [vmem:[#allocation16 + $0x1c] sm:$0xf]
        %v3249 = vld [vmem:[#allocation16 + $0x20] sm:$0xf]
        %v3250 = vld [vmem:[#allocation16 + $0x24] sm:$0xf]
        %v3251 = vld [vmem:[#allocation16 + $0x28] sm:$0xf]
        %v3252 = vld [vmem:[#allocation16 + $0x2c] sm:$0xf]
        %v3253 = vld [vmem:[#allocation16 + $0x30] sm:$0xf]
        %v3254 = vld [vmem:[#allocation16 + $0x34] sm:$0xf]
        %v3255 = vld [vmem:[#allocation16 + $0x38] sm:$0xf]
        %v3256 = vld [vmem:[#allocation16 + $0x3c] sm:$0xf]
        %v3257 = vld [vmem:[#allocation17] sm:$0x1]
        %v3259 = vperm.slane %v3257, 0
        %v3277 = vunpack.c.l.b16 %v3241
        %v3278 = vunpack.c.l.b16 %v3242
        %v3279 = vunpack.c.l.b16 %v3243
        %v3280 = vunpack.c.l.b16 %v3244
        %v3281 = vunpack.c.l.b16 %v3245
        %v3282 = vunpack.c.l.b16 %v3246
        %v3283 = vunpack.c.l.b16 %v3247
        %v3284 = vunpack.c.l.b16 %v3248
        %v3285 = vunpack.c.l.b16 %v3249
        %v3286 = vunpack.c.l.b16 %v3250
        %v3287 = vunpack.c.l.b16 %v3251
        %v3288 = vunpack.c.l.b16 %v3252
        %v3289 = vunpack.c.l.b16 %v3253
        %v3290 = vunpack.c.l.b16 %v3254
        %v3291 = vunpack.c.l.b16 %v3255
        %v3292 = vunpack.c.l.b16 %v3256
        %v3293 = vpack.c.b16 %v3278, %v3277
        %v3294 = vpack.c.b16 %v3280, %v3279
        %v3295 = vpack.c.b16 %v3282, %v3281
        %v3296 = vpack.c.b16 %v3284, %v3283
        %v3297 = vpack.c.b16 %v3286, %v3285
        %v3298 = vpack.c.b16 %v3288, %v3287
        %v3299 = vpack.c.b16 %v3290, %v3289
        %v3300 = vpack.c.b16 %v3292, %v3291
        %3309 = vmatpush.bf16.msra.mxu0 %v3300
        %3310 = vmatpush.bf16.msra.mxu0 %v3299
        %3311 = vmatpush.bf16.msra.mxu0 %v3298
        %3312 = vmatpush.bf16.msra.mxu0 %v3297
        %3313 = vmatpush.bf16.msra.mxu0 %v3296
        %3314 = vmatpush.bf16.msra.mxu0 %v3295
        %3315 = vmatpush.bf16.msra.mxu0 %v3294
        %3316 = vmatpush.bf16.msra.mxu0 %v3293
        %3317 = vmatmul.bf16.gmra.mxu0 %v3239
        %v3318 = vpop.f32.mrf.mxu0
        %v3319 = vadd.f32 %v3259, %v3318
        %v3320 = vpop.f32.mrf.mxu0
        %v3321 = vadd.f32 %v3259, %v3320
        %3322 = vmatmul.bf16.gmra.mxu0 %v3240
        %v3323 = vpop.f32.mrf.mxu0
        %v3324 = vadd.f32 %v3259, %v3323
        %v3325 = vpop.f32.mrf.mxu0
        %v3326 = vadd.f32 %v3259, %v3325
        %3327 = vdwg.mxu0
        %3328 = vst [vmem:[%s743] sm:$0xff] %v3319
        %3329 = vst [vmem:[%s743 + $0x8] sm:$0xff] %v3321
        %3330 = vst [vmem:[%s743 + $0x10] sm:$0xff] %v3324
        %3331 = vst [vmem:[%s743 + $0x18] sm:$0xff] %v3326
        %v3332 = vxor.u32 %v3319, 2147483648
        %v3333 = vxor.u32 %v3321, 2147483648
        %v3334 = vxor.u32 %v3324, 2147483648
        %v3335 = vxor.u32 %v3326, 2147483648
        %v3336 = vmul.f32 %v3332, 1.442695
        %v3337 = vpow.pop %v3336
        %v3338 = vmul.f32 %v3333, 1.442695
        %v3339 = vpow.pop %v3338
        %v3340 = vmul.f32 %v3334, 1.442695
        %v3341 = vpow.pop %v3340
        %v3342 = vmul.f32 %v3335, 1.442695
        %v3343 = vpow.pop %v3342
        %v3344 = vadd.f32 %v3337, 1.0
        %v3345 = vadd.f32 %v3339, 1.0
        %v3346 = vadd.f32 %v3341, 1.0
        %v3347 = vadd.f32 %v3343, 1.0
        %v3348 = vrcp.pop %v3344
        %v3349 = vmul.f32 %v3344, %v3348
        %v3350 = vsub.f32 1.0, %v3349
        %v3351 = vmul.f32 %v3348, %v3350
        %v3352 = vadd.f32 %v3348, %v3351
        %vm3353 = vweird.f32 %v3344
        %vm3354 = vweird.f32 %v3348
        %vm3355 = vmor %vm3353, %vm3354
        %v3356 = vsel %vm3355, %v3348, %v3352
        %v3357 = vand.u32 2147483647, %v3344
        %vm3358 = vcmp.eq.f32.partialorder %v3357, 8.507059e+37
        %v3359 = vand.u32 %v3344, 2147483648
        %v3360 = vor.u32 1.1754944e-38, %v3359
        %v3361 = vsel %vm3358, %v3360, %v3356
        %v3362 = vmul.f32 1.0, %v3361
        %v3363 = vrcp.pop %v3345
        %v3364 = vmul.f32 %v3345, %v3363
        %v3365 = vsub.f32 1.0, %v3364
        %v3366 = vmul.f32 %v3363, %v3365
        %v3367 = vadd.f32 %v3363, %v3366
        %vm3368 = vweird.f32 %v3345
        %vm3369 = vweird.f32 %v3363
        %vm3370 = vmor %vm3368, %vm3369
        %v3371 = vsel %vm3370, %v3363, %v3367
        %v3372 = vand.u32 2147483647, %v3345
        %vm3373 = vcmp.eq.f32.partialorder %v3372, 8.507059e+37
        %v3374 = vand.u32 %v3345, 2147483648
        %v3375 = vor.u32 1.1754944e-38, %v3374
        %v3376 = vsel %vm3373, %v3375, %v3371
        %v3377 = vmul.f32 1.0, %v3376
        %v3378 = vrcp.pop %v3346
        %v3379 = vmul.f32 %v3346, %v3378
        %v3380 = vsub.f32 1.0, %v3379
        %v3381 = vmul.f32 %v3378, %v3380
        %v3382 = vadd.f32 %v3378, %v3381
        %vm3383 = vweird.f32 %v3346
        %vm3384 = vweird.f32 %v3378
        %vm3385 = vmor %vm3383, %vm3384
        %v3386 = vsel %vm3385, %v3378, %v3382
        %v3387 = vand.u32 2147483647, %v3346
        %vm3388 = vcmp.eq.f32.partialorder %v3387, 8.507059e+37
        %v3389 = vand.u32 %v3346, 2147483648
        %v3390 = vor.u32 1.1754944e-38, %v3389
        %v3391 = vsel %vm3388, %v3390, %v3386
        %v3392 = vmul.f32 1.0, %v3391
        %v3393 = vrcp.pop %v3347
        %v3394 = vmul.f32 %v3347, %v3393
        %v3395 = vsub.f32 1.0, %v3394
        %v3396 = vmul.f32 %v3393, %v3395
        %v3397 = vadd.f32 %v3393, %v3396
        %vm3398 = vweird.f32 %v3347
        %vm3399 = vweird.f32 %v3393
        %vm3400 = vmor %vm3398, %vm3399
        %v3401 = vsel %vm3400, %v3393, %v3397
        %v3402 = vand.u32 2147483647, %v3347
        %vm3403 = vcmp.eq.f32.partialorder %v3402, 8.507059e+37
        %v3404 = vand.u32 %v3347, 2147483648
        %v3405 = vor.u32 1.1754944e-38, %v3404
        %v3406 = vsel %vm3403, %v3405, %v3401
        %v3407 = vmul.f32 1.0, %v3406
        %3408 = vst [vmem:[%s748] sm:$0xff] %v3362
        %3409 = vst [vmem:[%s748 + $0x8] sm:$0xff] %v3377
        %3410 = vst [vmem:[%s748 + $0x10] sm:$0xff] %v3392
        %3411 = vst [vmem:[%s748 + $0x18] sm:$0xff] %v3407
        %p3412 = scmp.lt.s32.totalorder %s36, 1
        %s3413 = scalar_select %p3412, %s36, 1
        %s3414 = smul.addr %s3413, 4
        %s3415 = smul.addr %s3414, 8
        %s3416 = scalar_lea.vmem %s17, %s3415
        %p3417 = scmp.lt.s32.totalorder %s36, 1
        %s3418 = scalar_select %p3417, %s36, 1
        %s3419 = smul.addr %s3418, 4
        %s3420 = smul.addr %s3419, 8
        %s3421 = scalar_lea.vmem %s18, %s3420
        // Predicated region
        $region129: #{_lambda_.5} parent=87 // pred_check
          %p3422 = pneg %p416
        $region130: #{_lambda_.5} parent=87 // pred_check_branch
          %3424 = sbr.rel (%p3422) target = $region132
        $region131: #{_lambda_.5} parent=87 // pred_region
          _
        $region132: #{_lambda_.5} parent=87 // pred_fallthru
          _
        // Predicated region
        $region133: #{_lambda_.5} parent=87 // pred_check
          %p3425 = pneg %p442
        $region134: #{_lambda_.5} parent=87 // pred_check_branch
          %3427 = sbr.rel (%p3425) target = $region136
        $region135: #{_lambda_.5} parent=87 // pred_region
          _
        $region136: #{_lambda_.5} parent=87 // pred_fallthru
          _
      $region88: #{_lambda_.5} parent=5 // pred_fallthru
        _
      %p3428 = scmp.le.s32.totalorder 2, %s31
      // Predicated region
      $region137: #{_lambda_.5} parent=5 // pred_check
        %p3429 = pneg %p3428
      $region138: #{_lambda_.5} parent=5 // pred_check_branch
        %3431 = sbr.rel (%p3429) target = $region140
      $region139: #{_lambda_.5} parent=5 // pred_region
        %s3432 = ssub.s32 %s31, 2
        // Predicated region
        $region141: #{_lambda_.5} parent=139 // pred_check
          %p3433 = pneg %p422
        $region142: #{_lambda_.5} parent=139 // pred_check_branch
          %3435 = sbr.rel (%p3433) target = $region144
        $region143: #{_lambda_.5} parent=139 // pred_region
          %p3436 = scmp.lt.s32.totalorder %s37, 1
          %s3437 = scalar_select %p3436, %s37, 1
          %s3438 = smul.addr %s3437, 4
          %s3439 = smul.addr %s3438, 8
          %s3440 = scalar_lea.vmem %s17, %s3439
        $region144: #{_lambda_.5} parent=139 // pred_fallthru
          _
        // Predicated region
        $region145: #{_lambda_.5} parent=139 // pred_check
          %p3441 = pneg %p448
        $region146: #{_lambda_.5} parent=139 // pred_check_branch
          %3443 = sbr.rel (%p3441) target = $region148
        $region147: #{_lambda_.5} parent=139 // pred_region
          %p3444 = scmp.lt.s32.totalorder %s37, 1
          %s3445 = scalar_select %p3444, %s37, 1
          %s3446 = smul.addr %s3445, 4
          %s3447 = smul.addr %s3446, 8
          %s3448 = scalar_lea.vmem %s18, %s3447
        $region148: #{_lambda_.5} parent=139 // pred_fallthru
          _
      $region140: #{_lambda_.5} parent=5 // pred_fallthru
        _
    $region6: #{_lambda_.5} parent=1 // loop_footer
      %s35 = sadd.s32 1, %s31
    $region7: #{_lambda_.5} parent=1 // loop_footer_branch
      %30 = sbr.rel target = $region3
    $region8: #{_lambda_.5} parent=1 // loop_exit
      _
    %3449 = vsyncpa [#allocation4], 1
    %s3450 = scalar_lea.sflag [#allocation4], 1
    %3451 = vsyncpa %s3450, 1
    %3452 = vsyncpa [#allocation6], 1
    %3453 = vsyncpa [#allocation9], 1
    %3454 = vsyncpa [#allocation12], 1
    %3455 = vsyncpa [#allocation15], 1
    %3456 = vsyncpa [#allocation18], 1

</llo_original>
